<compile_context>
chip_gen: v6e
topology: v6e:2x2x1
jax: 0.10.0
libtpu: 0.0.40
codegen_flags: <defaults>
</compile_context>

<pallas_src>
import functools

import jax
import jax.numpy as jnp
from jax.experimental import pallas as pl
from jax.experimental.pallas import tpu as pltpu

EPS = 1e-5

# (cin, cout, kernel, stride, pad) — ConvNet traced with 1 input channel
# (the reference builds final_conv_size from torch.zeros(1, 1, image_dim, image_dim)).
CONV_CFG = [(1, 32, 7, 2, 3), (32, 64, 5, 2, 2), (64, 64, 5, 2, 2), (64, 64, 3, 1, 1)]


def _vmem_specs(n):
    return [pl.BlockSpec(memory_space=pltpu.MemorySpace.VMEM) for _ in range(n)]


def _bn_relu(y, gamma, beta):
    # Training-mode BatchNorm over rows (biased variance, eps=1e-5), two-pass
    # centered variance for numerical robustness, folded into one scale/shift.
    inv_m = 1.0 / y.shape[0]
    mean = jnp.sum(y, axis=0, keepdims=True) * inv_m
    yc = y - mean
    var = jnp.sum(yc * yc, axis=0, keepdims=True) * inv_m
    return jnp.maximum(yc * (gamma * jax.lax.rsqrt(var + EPS)) + beta, 0.0)


# ---------------------------------------------------------------------------
# Pallas kernels
# ---------------------------------------------------------------------------
def conv_gemm_bn_relu_kernel(col_ref, w_ref, b_ref, g_ref, beta_ref, o_ref):
    # col: (M, K) bf16, w: (K, cout) bf16 -> MXU bf16 with f32 accumulation.
    y = jnp.dot(col_ref[...], w_ref[...], preferred_element_type=jnp.float32)
    o_ref[...] = _bn_relu(y + b_ref[...], g_ref[...], beta_ref[...]).astype(o_ref.dtype)


def make_tail_kernel(batch, h_sp, w_sp):
    """Fused conv3 + conv4 + fc + (actor, critic1, critic2) heads.

    batch: batch size; h_sp/w_sp: conv3 (== conv4) output spatial size.
    conv3's im2col rows must be ordered (h, w, b) so every spatial position is a
    contiguous block of `batch` rows.
    """
    P = h_sp * w_sp
    H = 256

    def kernel(col3_ref, state_ref,
               c3w_ref, c3b_ref, c3g_ref, c3be_ref,
               c4w_ref, c4b_ref, c4g_ref, c4be_ref,
               fcwf_ref, fcws_ref, fcb_ref,
               w1_ref, b1_ref, g1_ref, be1_ref,
               w2_ref, b2_ref, g2_ref, be2_ref,
               w3h_ref, b3h_ref,
               o_ref):
        f32 = jnp.float32
        cout4 = c4w_ref.shape[2]

        # ---- conv3: one GEMM on the host-built im2col, rows ordered (h, w, b) ----
        y3 = jnp.dot(col3_ref[...], c3w_ref[...], preferred_element_type=f32)
        y3 = _bn_relu(y3 + c3b_ref[...], c3g_ref[...], c3be_ref[...])
        y3 = y3.astype(jnp.bfloat16)                                   # (P*B, 64)

        # ---- conv4 (3x3, s=1, p=1) fused with no strided gather: every output
        #      position is a sum of per-input-position dots with the right tap.
        blocks = []
        for ho in range(h_sp):
            for wo in range(w_sp):
                acc = jnp.zeros((batch, cout4), f32)
                for ki in range(3):
                    hi = ho - 1 + ki
                    if hi < 0 or hi >= h_sp:
                        continue
                    for kj in range(3):
                        wi = wo - 1 + kj
                        if wi < 0 or wi >= w_sp:
                            continue
                        q = hi * w_sp + wi
                        acc = acc + jnp.dot(y3[q * batch:(q + 1) * batch, :],
                                            c4w_ref[ki * 3 + kj],
                                            preferred_element_type=f32)
                blocks.append(acc)
        y4 = jnp.concatenate(blocks, axis=0)                           # (P*B, 64)
        y4 = _bn_relu(y4 + c4b_ref[...], c4g_ref[...], c4be_ref[...])
        y4 = y4.astype(jnp.bfloat16)

        # ---- flatten + fc folded into per-position dots (no reshape/concat, aligned K)
        x = jnp.dot(state_ref[...].astype(jnp.bfloat16), fcws_ref[...],
                    preferred_element_type=f32)
        for p in range(P):
            x = x + jnp.dot(y4[p * batch:(p + 1) * batch, :], fcwf_ref[p],
                            preferred_element_type=f32)
        x = (x + fcb_ref[...]).astype(jnp.bfloat16)                    # (B, 512)

        # ---- heads, layer 1: one fused (512, 3*256) GEMM (per-column BN == 3 BN1d's)
        h1 = _bn_relu(jnp.dot(x, w1_ref[...], preferred_element_type=f32) + b1_ref[...],
                      g1_ref[...], be1_ref[...]).astype(jnp.bfloat16)  # (B, 768)

        # ---- layers 2/3: one dot per head from stacked weights ----
        for i in range(3):                                             # actor, c1, c2
            h1_i = h1[:, i * H:(i + 1) * H]
            z2 = jnp.dot(h1_i, w2_ref[i], preferred_element_type=f32) + b2_ref[i]
            h2 = _bn_relu(z2, g2_ref[i], be2_ref[i]).astype(jnp.bfloat16)
            o_ref[i] = jnp.dot(h2, w3h_ref[i], preferred_element_type=f32) + b3h_ref[i]

    return kernel


# ---------------------------------------------------------------------------
# Conv glue: NHWC im2col (host/XLA side) + single-block Pallas GEMM
# ---------------------------------------------------------------------------
def _im2col_nhwc(x, k, stride, pad):
    # x: (B, H, W, C). Patch column order: ((ki * k + kj) * C + c).
    b, h, w, c = x.shape
    ho = (h + 2 * pad - k) // stride + 1
    wo = (w + 2 * pad - k) // stride + 1
    xp = jnp.pad(x, ((0, 0), (pad, pad), (pad, pad), (0, 0)))
    cols = [xp[:, i:i + stride * ho:stride, j:j + stride * wo:stride, :]
            for i in range(k) for j in range(k)]
    return jnp.concatenate(cols, axis=-1), ho, wo       # (B, Ho, Wo, k*k*C)


def _conv_call(col, w, b, g, be, cout):
    return pl.pallas_call(
        conv_gemm_bn_relu_kernel,
        out_shape=jax.ShapeDtypeStruct((col.shape[0], cout), jnp.bfloat16),
        in_specs=_vmem_specs(5),
        out_specs=pl.BlockSpec(memory_space=pltpu.MemorySpace.VMEM),
    )(col, w, b, g, be)


# ---------------------------------------------------------------------------
# Parameter construction (deterministic; PyTorch-default-like BN affine)
# ---------------------------------------------------------------------------
def init_params(key, state_dim, image_dim, num_actions):
    num_hidden = 256
    s = image_dim
    for (_, _, k, st, pd) in CONV_CFG:
        s = (s + 2 * pd - k) // st + 1
    s_out = s                                   # conv4 (== conv3) output spatial size
    P = s_out * s_out
    cout4 = CONV_CFG[3][1]
    final_conv_size = cout4 * P

    keys = iter(jax.random.split(key, 32))

    def nrm(shape, scale):
        return jax.random.normal(next(keys), shape, jnp.float32) * scale

    p = {}
    # conv1/conv2/conv3: im2col weight (K, cout), rows ordered ((ki*k + kj)*cin + c).
    for idx in (1, 2, 3):
        cin, cout, ksz, _, _ = CONV_CFG[idx - 1]
        K = ksz * ksz * cin
        p[f'c{idx}w'] = nrm((K, cout), 1.0 / float(K) ** 0.5).astype(jnp.bfloat16)
        p[f'c{idx}b'] = nrm((1, cout), 0.01)
        p[f'c{idx}g'] = jnp.ones((1, cout), jnp.float32)
        p[f'c{idx}be'] = jnp.zeros((1, cout), jnp.float32)

    # conv4: stacked per-tap weights (k*k, cin, cout).
    cin, cout, ksz, _, _ = CONV_CFG[3]
    p['c4w'] = nrm((ksz * ksz, cin, cout),
                   1.0 / float(ksz * ksz * cin) ** 0.5).astype(jnp.bfloat16)
    p['c4b'] = nrm((1, cout), 0.01)
    p['c4g'] = jnp.ones((1, cout), jnp.float32)
    p['c4be'] = jnp.zeros((1, cout), jnp.float32)

    # fc: feature part stacked per conv4 spatial position; state part separate.
    sc = 1.0 / float(state_dim + final_conv_size) ** 0.5
    p['fcwf'] = nrm((P, cout4, 512), sc).astype(jnp.bfloat16)
    p['fcws'] = nrm((state_dim, 512), sc).astype(jnp.bfloat16)
    p['fcb'] = nrm((1, 512), 0.01)

    # Heads (actor, critic1, critic2): layer 1 fused along N; layers 2/3 stacked.
    H, A = num_hidden, num_actions
    p['w1'] = nrm((512, 3 * H), 512 ** -0.5).astype(jnp.bfloat16)
    p['b1'] = nrm((1, 3 * H), 0.01)
    p['g1'] = jnp.ones((1, 3 * H), jnp.float32)
    p['be1'] = jnp.zeros((1, 3 * H), jnp.float32)
    p['w2'] = nrm((3, H, H), float(H) ** -0.5).astype(jnp.bfloat16)
    p['b2'] = nrm((3, 1, H), 0.01)
    p['g2'] = jnp.ones((3, 1, H), jnp.float32)
    p['be2'] = jnp.zeros((3, 1, H), jnp.float32)
    p['w3h'] = nrm((3, H, A), float(H) ** -0.5).astype(jnp.bfloat16)
    p['b3h'] = nrm((3, 1, A), 0.01)
    return p


# ---------------------------------------------------------------------------
# SAC forward
# ---------------------------------------------------------------------------
def sac_forward(params, state, ss):
    p = params
    bsz = ss.shape[0]
    num_actions = p['b3h'].shape[2]

    # NCHW input -> NHWC once at the boundary.
    x = jnp.transpose(ss, (0, 2, 3, 1)).astype(jnp.bfloat16)

    # conv1, conv2: host-side im2col (tiny glue) + Pallas GEMM+BN+ReLU.
    for idx in (1, 2):
        _, cout, k, s, pd = CONV_CFG[idx - 1]
        col, ho, wo = _im2col_nhwc(x, k, s, pd)
        y = _conv_call(col.reshape(bsz * ho * wo, -1),
                       p[f'c{idx}w'], p[f'c{idx}b'], p[f'c{idx}g'], p[f'c{idx}be'], cout)
        x = y.reshape(bsz, ho, wo, cout)

    # conv3 im2col with rows ordered (h, w, b) so the fused tail kernel can address
    # per-spatial-position blocks with contiguous static slices.
    _, _, k, s, pd = CONV_CFG[2]
    col, ho3, wo3 = _im2col_nhwc(x, k, s, pd)
    col3 = jnp.transpose(col, (1, 2, 0, 3)).reshape(ho3 * wo3 * bsz, -1)

    tail = make_tail_kernel(bsz, ho3, wo3)
    out = pl.pallas_call(
        tail,
        out_shape=jax.ShapeDtypeStruct((3, bsz, num_actions), jnp.float32),
        in_specs=_vmem_specs(23),
        out_specs=pl.BlockSpec(memory_space=pltpu.MemorySpace.VMEM),
    )(col3, state,
      p['c3w'], p['c3b'], p['c3g'], p['c3be'],
      p['c4w'], p['c4b'], p['c4g'], p['c4be'],
      p['fcwf'], p['fcws'], p['fcb'],
      p['w1'], p['b1'], p['g1'], p['be1'],
      p['w2'], p['b2'], p['g2'], p['be2'],
      p['w3h'], p['b3h'])

    return out[0], out[1], out[2]      # actor, critic1, critic2


# ---------------------------------------------------------------------------
if __name__ == "__main__":
    batch = 2
    state_dim = 8
    image_dim = 16
    num_actions = 4

    key = jax.random.PRNGKey(0)
    kp, ks, ki = jax.random.split(key, 3)
    params = init_params(kp, state_dim, image_dim, num_actions)
    state = jax.random.normal(ks, (batch, state_dim), jnp.float32)
    ss = jax.random.normal(ki, (batch, 1, image_dim, image_dim), jnp.float32)  # NCHW grayscale

    fwd = jax.jit(functools.partial(sac_forward, params))
    actor, critic1, critic2 = fwd(state, ss)
    jax.block_until_ready((actor, critic1, critic2))

    assert actor.shape == (batch, num_actions)
    assert critic1.shape == (batch, num_actions)
    assert critic2.shape == (batch, num_actions)
    print("KERNEL_OK")
</pallas_src>

<mosaic_0001>
module attributes {stable_mosaic.version = 11 : i64} {
  func.func @conv_gemm_bn_relu_kernel(%arg0: memref<128x49xbf16, #tpu.memory_space<vmem>>, %arg1: memref<49x32xbf16, #tpu.memory_space<vmem>>, %arg2: memref<1x32xf32, #tpu.memory_space<vmem>>, %arg3: memref<1x32xf32, #tpu.memory_space<vmem>>, %arg4: memref<1x32xf32, #tpu.memory_space<vmem>>, %arg5: memref<128x32xbf16, #tpu.memory_space<vmem>>) attributes {dimension_semantics = [], scalar_prefetch = 0 : i64, scratch_operands = 0 : i64, tpu.core_type = #tpu.core_type<tc>} {
    %c0 = arith.constant 0 : index
    %c0_0 = arith.constant 0 : index
    %0 = vector.load %arg0[%c0, %c0_0] : memref<128x49xbf16, #tpu.memory_space<vmem>>, vector<128x49xbf16>
    %c0_1 = arith.constant 0 : index
    %c0_2 = arith.constant 0 : index
    %1 = vector.load %arg1[%c0_1, %c0_2] : memref<49x32xbf16, #tpu.memory_space<vmem>>, vector<49x32xbf16>
    %cst = arith.constant dense<0.000000e+00> : vector<128x32xf32>
    %2 = tpu.matmul %0, %1, %cst {dimension_numbers = #tpu.dot_dimension_numbers<[1], [0], [0], [1], [0, 0, 1, 1], [], []>} : vector<128x49xbf16>, vector<49x32xbf16>, vector<128x32xf32> -> vector<128x32xf32>
    %c0_3 = arith.constant 0 : index
    %c0_4 = arith.constant 0 : index
    %3 = vector.load %arg2[%c0_3, %c0_4] : memref<1x32xf32, #tpu.memory_space<vmem>>, vector<1x32xf32>
    %4 = vector.broadcast %3 : vector<1x32xf32> to vector<128x32xf32>
    %5 = arith.addf %2, %4 : vector<128x32xf32>
    %c0_5 = arith.constant 0 : index
    %c0_6 = arith.constant 0 : index
    %6 = vector.load %arg3[%c0_5, %c0_6] : memref<1x32xf32, #tpu.memory_space<vmem>>, vector<1x32xf32>
    %c0_7 = arith.constant 0 : index
    %c0_8 = arith.constant 0 : index
    %7 = vector.load %arg4[%c0_7, %c0_8] : memref<1x32xf32, #tpu.memory_space<vmem>>, vector<1x32xf32>
    %cst_9 = arith.constant dense<0.000000e+00> : vector<32xf32>
    %8 = vector.multi_reduction <add>, %5, %cst_9 [0] : vector<128x32xf32> to vector<32xf32>
    %9 = vector.shape_cast %8 : vector<32xf32> to vector<1x32xf32>
    %cst_10 = arith.constant 7.812500e-03 : f32
    %10 = vector.broadcast %cst_10 : f32 to vector<1x32xf32>
    %11 = arith.mulf %9, %10 : vector<1x32xf32>
    %12 = vector.broadcast %11 : vector<1x32xf32> to vector<128x32xf32>
    %13 = arith.subf %5, %12 : vector<128x32xf32>
    %14 = arith.mulf %13, %13 : vector<128x32xf32>
    %cst_11 = arith.constant dense<0.000000e+00> : vector<32xf32>
    %15 = vector.multi_reduction <add>, %14, %cst_11 [0] : vector<128x32xf32> to vector<32xf32>
    %16 = vector.shape_cast %15 : vector<32xf32> to vector<1x32xf32>
    %cst_12 = arith.constant 7.812500e-03 : f32
    %17 = vector.broadcast %cst_12 : f32 to vector<1x32xf32>
    %18 = arith.mulf %16, %17 : vector<1x32xf32>
    %cst_13 = arith.constant 9.99999974E-6 : f32
    %19 = vector.broadcast %cst_13 : f32 to vector<1x32xf32>
    %20 = arith.addf %18, %19 : vector<1x32xf32>
    %21 = math.rsqrt %20 : vector<1x32xf32>
    %22 = arith.mulf %6, %21 : vector<1x32xf32>
    %23 = vector.broadcast %22 : vector<1x32xf32> to vector<128x32xf32>
    %24 = arith.mulf %13, %23 : vector<128x32xf32>
    %25 = vector.broadcast %7 : vector<1x32xf32> to vector<128x32xf32>
    %26 = arith.addf %24, %25 : vector<128x32xf32>
    %cst_14 = arith.constant 0.000000e+00 : f32
    %27 = vector.broadcast %cst_14 : f32 to vector<128x32xf32>
    %28 = arith.maximumf %26, %27 : vector<128x32xf32>
    %29 = arith.truncf %28 : vector<128x32xf32> to vector<128x32xbf16>
    %c0_15 = arith.constant 0 : index
    %c0_16 = arith.constant 0 : index
    %30 = vector.load %arg5[%c0_15, %c0_16] : memref<128x32xbf16, #tpu.memory_space<vmem>>, vector<128x32xbf16>
    tpu.vector_store %arg5[%c0_15, %c0_16], %29 {strides = array<i32>} : memref<128x32xbf16, #tpu.memory_space<vmem>>, vector<128x32xbf16>,
    return
  }
}

module attributes {stable_mosaic.version = 11 : i64} {
  func.func @conv_gemm_bn_relu_kernel(%arg0: memref<32x800xbf16, #tpu.memory_space<vmem>>, %arg1: memref<800x64xbf16, #tpu.memory_space<vmem>>, %arg2: memref<1x64xf32, #tpu.memory_space<vmem>>, %arg3: memref<1x64xf32, #tpu.memory_space<vmem>>, %arg4: memref<1x64xf32, #tpu.memory_space<vmem>>, %arg5: memref<32x64xbf16, #tpu.memory_space<vmem>>) attributes {dimension_semantics = [], scalar_prefetch = 0 : i64, scratch_operands = 0 : i64, tpu.core_type = #tpu.core_type<tc>} {
    %c0 = arith.constant 0 : index
    %c0_0 = arith.constant 0 : index
    %0 = vector.load %arg0[%c0, %c0_0] : memref<32x800xbf16, #tpu.memory_space<vmem>>, vector<32x800xbf16>
    %c0_1 = arith.constant 0 : index
    %c0_2 = arith.constant 0 : index
    %1 = vector.load %arg1[%c0_1, %c0_2] : memref<800x64xbf16, #tpu.memory_space<vmem>>, vector<800x64xbf16>
    %cst = arith.constant dense<0.000000e+00> : vector<32x64xf32>
    %2 = tpu.matmul %0, %1, %cst {dimension_numbers = #tpu.dot_dimension_numbers<[1], [0], [0], [1], [0, 0, 1, 1], [], []>} : vector<32x800xbf16>, vector<800x64xbf16>, vector<32x64xf32> -> vector<32x64xf32>
    %c0_3 = arith.constant 0 : index
    %c0_4 = arith.constant 0 : index
    %3 = vector.load %arg2[%c0_3, %c0_4] : memref<1x64xf32, #tpu.memory_space<vmem>>, vector<1x64xf32>
    %4 = vector.broadcast %3 : vector<1x64xf32> to vector<32x64xf32>
    %5 = arith.addf %2, %4 : vector<32x64xf32>
    %c0_5 = arith.constant 0 : index
    %c0_6 = arith.constant 0 : index
    %6 = vector.load %arg3[%c0_5, %c0_6] : memref<1x64xf32, #tpu.memory_space<vmem>>, vector<1x64xf32>
    %c0_7 = arith.constant 0 : index
    %c0_8 = arith.constant 0 : index
    %7 = vector.load %arg4[%c0_7, %c0_8] : memref<1x64xf32, #tpu.memory_space<vmem>>, vector<1x64xf32>
    %cst_9 = arith.constant dense<0.000000e+00> : vector<64xf32>
    %8 = vector.multi_reduction <add>, %5, %cst_9 [0] : vector<32x64xf32> to vector<64xf32>
    %9 = vector.shape_cast %8 : vector<64xf32> to vector<1x64xf32>
    %cst_10 = arith.constant 3.125000e-02 : f32
    %10 = vector.broadcast %cst_10 : f32 to vector<1x64xf32>
    %11 = arith.mulf %9, %10 : vector<1x64xf32>
    %12 = vector.broadcast %11 : vector<1x64xf32> to vector<32x64xf32>
    %13 = arith.subf %5, %12 : vector<32x64xf32>
    %14 = arith.mulf %13, %13 : vector<32x64xf32>
    %cst_11 = arith.constant dense<0.000000e+00> : vector<64xf32>
    %15 = vector.multi_reduction <add>, %14, %cst_11 [0] : vector<32x64xf32> to vector<64xf32>
    %16 = vector.shape_cast %15 : vector<64xf32> to vector<1x64xf32>
    %cst_12 = arith.constant 3.125000e-02 : f32
    %17 = vector.broadcast %cst_12 : f32 to vector<1x64xf32>
    %18 = arith.mulf %16, %17 : vector<1x64xf32>
    %cst_13 = arith.constant 9.99999974E-6 : f32
    %19 = vector.broadcast %cst_13 : f32 to vector<1x64xf32>
    %20 = arith.addf %18, %19 : vector<1x64xf32>
    %21 = math.rsqrt %20 : vector<1x64xf32>
    %22 = arith.mulf %6, %21 : vector<1x64xf32>
    %23 = vector.broadcast %22 : vector<1x64xf32> to vector<32x64xf32>
    %24 = arith.mulf %13, %23 : vector<32x64xf32>
    %25 = vector.broadcast %7 : vector<1x64xf32> to vector<32x64xf32>
    %26 = arith.addf %24, %25 : vector<32x64xf32>
    %cst_14 = arith.constant 0.000000e+00 : f32
    %27 = vector.broadcast %cst_14 : f32 to vector<32x64xf32>
    %28 = arith.maximumf %26, %27 : vector<32x64xf32>
    %29 = arith.truncf %28 : vector<32x64xf32> to vector<32x64xbf16>
    %c0_15 = arith.constant 0 : index
    %c0_16 = arith.constant 0 : index
    %30 = vector.load %arg5[%c0_15, %c0_16] : memref<32x64xbf16, #tpu.memory_space<vmem>>, vector<32x64xbf16>
    tpu.vector_store %arg5[%c0_15, %c0_16], %29 {strides = array<i32>} : memref<32x64xbf16, #tpu.memory_space<vmem>>, vector<32x64xbf16>,
    return
  }
}

module attributes {stable_mosaic.version = 11 : i64} {
  func.func @kernel(%arg0: memref<8x1600xbf16, #tpu.memory_space<vmem>>, %arg1: memref<2x8xf32, #tpu.memory_space<vmem>>, %arg2: memref<1600x64xbf16, #tpu.memory_space<vmem>>, %arg3: memref<1x64xf32, #tpu.memory_space<vmem>>, %arg4: memref<1x64xf32, #tpu.memory_space<vmem>>, %arg5: memref<1x64xf32, #tpu.memory_space<vmem>>, %arg6: memref<9x64x64xbf16, #tpu.memory_space<vmem>>, %arg7: memref<1x64xf32, #tpu.memory_space<vmem>>, %arg8: memref<1x64xf32, #tpu.memory_space<vmem>>, %arg9: memref<1x64xf32, #tpu.memory_space<vmem>>, %arg10: memref<4x64x512xbf16, #tpu.memory_space<vmem>>, %arg11: memref<8x512xbf16, #tpu.memory_space<vmem>>, %arg12: memref<1x512xf32, #tpu.memory_space<vmem>>, %arg13: memref<512x768xbf16, #tpu.memory_space<vmem>>, %arg14: memref<1x768xf32, #tpu.memory_space<vmem>>, %arg15: memref<1x768xf32, #tpu.memory_space<vmem>>, %arg16: memref<1x768xf32, #tpu.memory_space<vmem>>, %arg17: memref<3x256x256xbf16, #tpu.memory_space<vmem>>, %arg18: memref<3x1x256xf32, #tpu.memory_space<vmem>>, %arg19: memref<3x1x256xf32, #tpu.memory_space<vmem>>, %arg20: memref<3x1x256xf32, #tpu.memory_space<vmem>>, %arg21: memref<3x256x4xbf16, #tpu.memory_space<vmem>>, %arg22: memref<3x1x4xf32, #tpu.memory_space<vmem>>, %arg23: memref<3x2x4xf32, #tpu.memory_space<vmem>>) attributes {dimension_semantics = [], scalar_prefetch = 0 : i64, scratch_operands = 0 : i64, tpu.core_type = #tpu.core_type<tc>} {
    %c0 = arith.constant 0 : index
    %c0_0 = arith.constant 0 : index
    %0 = vector.load %arg0[%c0, %c0_0] : memref<8x1600xbf16, #tpu.memory_space<vmem>>, vector<8x1600xbf16>
    %c0_1 = arith.constant 0 : index
    %c0_2 = arith.constant 0 : index
    %1 = vector.load %arg2[%c0_1, %c0_2] : memref<1600x64xbf16, #tpu.memory_space<vmem>>, vector<1600x64xbf16>
    %cst = arith.constant dense<0.000000e+00> : vector<8x64xf32>
    %2 = tpu.matmul %0, %1, %cst {dimension_numbers = #tpu.dot_dimension_numbers<[1], [0], [0], [1], [0, 0, 1, 1], [], []>} : vector<8x1600xbf16>, vector<1600x64xbf16>, vector<8x64xf32> -> vector<8x64xf32>
    %c0_3 = arith.constant 0 : index
    %c0_4 = arith.constant 0 : index
    %3 = vector.load %arg3[%c0_3, %c0_4] : memref<1x64xf32, #tpu.memory_space<vmem>>, vector<1x64xf32>
    %4 = vector.broadcast %3 : vector<1x64xf32> to vector<8x64xf32>
    %5 = arith.addf %2, %4 : vector<8x64xf32>
    %c0_5 = arith.constant 0 : index
    %c0_6 = arith.constant 0 : index
    %6 = vector.load %arg4[%c0_5, %c0_6] : memref<1x64xf32, #tpu.memory_space<vmem>>, vector<1x64xf32>
    %c0_7 = arith.constant 0 : index
    %c0_8 = arith.constant 0 : index
    %7 = vector.load %arg5[%c0_7, %c0_8] : memref<1x64xf32, #tpu.memory_space<vmem>>, vector<1x64xf32>
    %cst_9 = arith.constant dense<0.000000e+00> : vector<64xf32>
    %8 = vector.multi_reduction <add>, %5, %cst_9 [0] : vector<8x64xf32> to vector<64xf32>
    %9 = vector.shape_cast %8 : vector<64xf32> to vector<1x64xf32>
    %cst_10 = arith.constant 1.250000e-01 : f32
    %10 = vector.broadcast %cst_10 : f32 to vector<1x64xf32>
    %11 = arith.mulf %9, %10 : vector<1x64xf32>
    %12 = vector.broadcast %11 : vector<1x64xf32> to vector<8x64xf32>
    %13 = arith.subf %5, %12 : vector<8x64xf32>
    %14 = arith.mulf %13, %13 : vector<8x64xf32>
    %cst_11 = arith.constant dense<0.000000e+00> : vector<64xf32>
    %15 = vector.multi_reduction <add>, %14, %cst_11 [0] : vector<8x64xf32> to vector<64xf32>
    %16 = vector.shape_cast %15 : vector<64xf32> to vector<1x64xf32>
    %cst_12 = arith.constant 1.250000e-01 : f32
    %17 = vector.broadcast %cst_12 : f32 to vector<1x64xf32>
    %18 = arith.mulf %16, %17 : vector<1x64xf32>
    %cst_13 = arith.constant 9.99999974E-6 : f32
    %19 = vector.broadcast %cst_13 : f32 to vector<1x64xf32>
    %20 = arith.addf %18, %19 : vector<1x64xf32>
    %21 = math.rsqrt %20 : vector<1x64xf32>
    %22 = arith.mulf %6, %21 : vector<1x64xf32>
    %23 = vector.broadcast %22 : vector<1x64xf32> to vector<8x64xf32>
    %24 = arith.mulf %13, %23 : vector<8x64xf32>
    %25 = vector.broadcast %7 : vector<1x64xf32> to vector<8x64xf32>
    %26 = arith.addf %24, %25 : vector<8x64xf32>
    %cst_14 = arith.constant 0.000000e+00 : f32
    %27 = vector.broadcast %cst_14 : f32 to vector<8x64xf32>
    %28 = arith.maximumf %26, %27 : vector<8x64xf32>
    %29 = arith.truncf %28 : vector<8x64xf32> to vector<8x64xbf16>
    %cst_15 = arith.constant 0.000000e+00 : f32
    %30 = vector.broadcast %cst_15 : f32 to vector<2x64xf32>
    %31 = vector.extract_strided_slice %29 {offsets = [0, 0], sizes = [2, 64], strides = [1, 1]} : vector<8x64xbf16> to vector<2x64xbf16>
    %c4 = arith.constant 4 : index
    %c0_16 = arith.constant 0 : index
    %c0_17 = arith.constant 0 : index
    %32 = vector.load %arg6[%c4, %c0_16, %c0_17] : memref<9x64x64xbf16, #tpu.memory_space<vmem>>, vector<1x64x64xbf16>
    %33 = vector.shape_cast %32 : vector<1x64x64xbf16> to vector<64x64xbf16>
    %cst_18 = arith.constant dense<0.000000e+00> : vector<2x64xf32>
    %34 = tpu.matmul %31, %33, %cst_18 {dimension_numbers = #tpu.dot_dimension_numbers<[1], [0], [0], [1], [0, 0, 1, 1], [], []>} : vector<2x64xbf16>, vector<64x64xbf16>, vector<2x64xf32> -> vector<2x64xf32>
    %35 = arith.addf %30, %34 : vector<2x64xf32>
    %36 = vector.extract_strided_slice %29 {offsets = [2, 0], sizes = [2, 64], strides = [1, 1]} : vector<8x64xbf16> to vector<2x64xbf16>
    %c5 = arith.constant 5 : index
    %c0_19 = arith.constant 0 : index
    %c0_20 = arith.constant 0 : index
    %37 = vector.load %arg6[%c5, %c0_19, %c0_20] : memref<9x64x64xbf16, #tpu.memory_space<vmem>>, vector<1x64x64xbf16>
    %38 = vector.shape_cast %37 : vector<1x64x64xbf16> to vector<64x64xbf16>
    %cst_21 = arith.constant dense<0.000000e+00> : vector<2x64xf32>
    %39 = tpu.matmul %36, %38, %cst_21 {dimension_numbers = #tpu.dot_dimension_numbers<[1], [0], [0], [1], [0, 0, 1, 1], [], []>} : vector<2x64xbf16>, vector<64x64xbf16>, vector<2x64xf32> -> vector<2x64xf32>
    %40 = arith.addf %35, %39 : vector<2x64xf32>
    %41 = vector.extract_strided_slice %29 {offsets = [4, 0], sizes = [2, 64], strides = [1, 1]} : vector<8x64xbf16> to vector<2x64xbf16>
    %c7 = arith.constant 7 : index
    %c0_22 = arith.constant 0 : index
    %c0_23 = arith.constant 0 : index
    %42 = vector.load %arg6[%c7, %c0_22, %c0_23] : memref<9x64x64xbf16, #tpu.memory_space<vmem>>, vector<1x64x64xbf16>
    %43 = vector.shape_cast %42 : vector<1x64x64xbf16> to vector<64x64xbf16>
    %cst_24 = arith.constant dense<0.000000e+00> : vector<2x64xf32>
    %44 = tpu.matmul %41, %43, %cst_24 {dimension_numbers = #tpu.dot_dimension_numbers<[1], [0], [0], [1], [0, 0, 1, 1], [], []>} : vector<2x64xbf16>, vector<64x64xbf16>, vector<2x64xf32> -> vector<2x64xf32>
    %45 = arith.addf %40, %44 : vector<2x64xf32>
    %46 = vector.extract_strided_slice %29 {offsets = [6, 0], sizes = [2, 64], strides = [1, 1]} : vector<8x64xbf16> to vector<2x64xbf16>
    %c8 = arith.constant 8 : index
    %c0_25 = arith.constant 0 : index
    %c0_26 = arith.constant 0 : index
    %47 = vector.load %arg6[%c8, %c0_25, %c0_26] : memref<9x64x64xbf16, #tpu.memory_space<vmem>>, vector<1x64x64xbf16>
    %48 = vector.shape_cast %47 : vector<1x64x64xbf16> to vector<64x64xbf16>
    %cst_27 = arith.constant dense<0.000000e+00> : vector<2x64xf32>
    %49 = tpu.matmul %46, %48, %cst_27 {dimension_numbers = #tpu.dot_dimension_numbers<[1], [0], [0], [1], [0, 0, 1, 1], [], []>} : vector<2x64xbf16>, vector<64x64xbf16>, vector<2x64xf32> -> vector<2x64xf32>
    %50 = arith.addf %45, %49 : vector<2x64xf32>
    %cst_28 = arith.constant 0.000000e+00 : f32
    %51 = vector.broadcast %cst_28 : f32 to vector<2x64xf32>
    %52 = vector.extract_strided_slice %29 {offsets = [0, 0], sizes = [2, 64], strides = [1, 1]} : vector<8x64xbf16> to vector<2x64xbf16>
    %c3 = arith.constant 3 : index
    %c0_29 = arith.constant 0 : index
    %c0_30 = arith.constant 0 : index
    %53 = vector.load %arg6[%c3, %c0_29, %c0_30] : memref<9x64x64xbf16, #tpu.memory_space<vmem>>, vector<1x64x64xbf16>
    %54 = vector.shape_cast %53 : vector<1x64x64xbf16> to vector<64x64xbf16>
    %cst_31 = arith.constant dense<0.000000e+00> : vector<2x64xf32>
    %55 = tpu.matmul %52, %54, %cst_31 {dimension_numbers = #tpu.dot_dimension_numbers<[1], [0], [0], [1], [0, 0, 1, 1], [], []>} : vector<2x64xbf16>, vector<64x64xbf16>, vector<2x64xf32> -> vector<2x64xf32>
    %56 = arith.addf %51, %55 : vector<2x64xf32>
    %57 = vector.extract_strided_slice %29 {offsets = [2, 0], sizes = [2, 64], strides = [1, 1]} : vector<8x64xbf16> to vector<2x64xbf16>
    %c4_32 = arith.constant 4 : index
    %c0_33 = arith.constant 0 : index
    %c0_34 = arith.constant 0 : index
    %58 = vector.load %arg6[%c4_32, %c0_33, %c0_34] : memref<9x64x64xbf16, #tpu.memory_space<vmem>>, vector<1x64x64xbf16>
    %59 = vector.shape_cast %58 : vector<1x64x64xbf16> to vector<64x64xbf16>
    %cst_35 = arith.constant dense<0.000000e+00> : vector<2x64xf32>
    %60 = tpu.matmul %57, %59, %cst_35 {dimension_numbers = #tpu.dot_dimension_numbers<[1], [0], [0], [1], [0, 0, 1, 1], [], []>} : vector<2x64xbf16>, vector<64x64xbf16>, vector<2x64xf32> -> vector<2x64xf32>
    %61 = arith.addf %56, %60 : vector<2x64xf32>
    %62 = vector.extract_strided_slice %29 {offsets = [4, 0], sizes = [2, 64], strides = [1, 1]} : vector<8x64xbf16> to vector<2x64xbf16>
    %c6 = arith.constant 6 : index
    %c0_36 = arith.constant 0 : index
    %c0_37 = arith.constant 0 : index
    %63 = vector.load %arg6[%c6, %c0_36, %c0_37] : memref<9x64x64xbf16, #tpu.memory_space<vmem>>, vector<1x64x64xbf16>
    %64 = vector.shape_cast %63 : vector<1x64x64xbf16> to vector<64x64xbf16>
    %cst_38 = arith.constant dense<0.000000e+00> : vector<2x64xf32>
    %65 = tpu.matmul %62, %64, %cst_38 {dimension_numbers = #tpu.dot_dimension_numbers<[1], [0], [0], [1], [0, 0, 1, 1], [], []>} : vector<2x64xbf16>, vector<64x64xbf16>, vector<2x64xf32> -> vector<2x64xf32>
    %66 = arith.addf %61, %65 : vector<2x64xf32>
    %67 = vector.extract_strided_slice %29 {offsets = [6, 0], sizes = [2, 64], strides = [1, 1]} : vector<8x64xbf16> to vector<2x64xbf16>
    %c7_39 = arith.constant 7 : index
    %c0_40 = arith.constant 0 : index
    %c0_41 = arith.constant 0 : index
    %68 = vector.load %arg6[%c7_39, %c0_40, %c0_41] : memref<9x64x64xbf16, #tpu.memory_space<vmem>>, vector<1x64x64xbf16>
    %69 = vector.shape_cast %68 : vector<1x64x64xbf16> to vector<64x64xbf16>
    %cst_42 = arith.constant dense<0.000000e+00> : vector<2x64xf32>
    %70 = tpu.matmul %67, %69, %cst_42 {dimension_numbers = #tpu.dot_dimension_numbers<[1], [0], [0], [1], [0, 0, 1, 1], [], []>} : vector<2x64xbf16>, vector<64x64xbf16>, vector<2x64xf32> -> vector<2x64xf32>
    %71 = arith.addf %66, %70 : vector<2x64xf32>
    %cst_43 = arith.constant 0.000000e+00 : f32
    %72 = vector.broadcast %cst_43 : f32 to vector<2x64xf32>
    %73 = vector.extract_strided_slice %29 {offsets = [0, 0], sizes = [2, 64], strides = [1, 1]} : vector<8x64xbf16> to vector<2x64xbf16>
    %c1 = arith.constant 1 : index
    %c0_44 = arith.constant 0 : index
    %c0_45 = arith.constant 0 : index
    %74 = vector.load %arg6[%c1, %c0_44, %c0_45] : memref<9x64x64xbf16, #tpu.memory_space<vmem>>, vector<1x64x64xbf16>
    %75 = vector.shape_cast %74 : vector<1x64x64xbf16> to vector<64x64xbf16>
    %cst_46 = arith.constant dense<0.000000e+00> : vector<2x64xf32>
    %76 = tpu.matmul %73, %75, %cst_46 {dimension_numbers = #tpu.dot_dimension_numbers<[1], [0], [0], [1], [0, 0, 1, 1], [], []>} : vector<2x64xbf16>, vector<64x64xbf16>, vector<2x64xf32> -> vector<2x64xf32>
    %77 = arith.addf %72, %76 : vector<2x64xf32>
    %78 = vector.extract_strided_slice %29 {offsets = [2, 0], sizes = [2, 64], strides = [1, 1]} : vector<8x64xbf16> to vector<2x64xbf16>
    %c2 = arith.constant 2 : index
    %c0_47 = arith.constant 0 : index
    %c0_48 = arith.constant 0 : index
    %79 = vector.load %arg6[%c2, %c0_47, %c0_48] : memref<9x64x64xbf16, #tpu.memory_space<vmem>>, vector<1x64x64xbf16>
    %80 = vector.shape_cast %79 : vector<1x64x64xbf16> to vector<64x64xbf16>
    %cst_49 = arith.constant dense<0.000000e+00> : vector<2x64xf32>
    %81 = tpu.matmul %78, %80, %cst_49 {dimension_numbers = #tpu.dot_dimension_numbers<[1], [0], [0], [1], [0, 0, 1, 1], [], []>} : vector<2x64xbf16>, vector<64x64xbf16>, vector<2x64xf32> -> vector<2x64xf32>
    %82 = arith.addf %77, %81 : vector<2x64xf32>
    %83 = vector.extract_strided_slice %29 {offsets = [4, 0], sizes = [2, 64], strides = [1, 1]} : vector<8x64xbf16> to vector<2x64xbf16>
    %c4_50 = arith.constant 4 : index
    %c0_51 = arith.constant 0 : index
    %c0_52 = arith.constant 0 : index
    %84 = vector.load %arg6[%c4_50, %c0_51, %c0_52] : memref<9x64x64xbf16, #tpu.memory_space<vmem>>, vector<1x64x64xbf16>
    %85 = vector.shape_cast %84 : vector<1x64x64xbf16> to vector<64x64xbf16>
    %cst_53 = arith.constant dense<0.000000e+00> : vector<2x64xf32>
    %86 = tpu.matmul %83, %85, %cst_53 {dimension_numbers = #tpu.dot_dimension_numbers<[1], [0], [0], [1], [0, 0, 1, 1], [], []>} : vector<2x64xbf16>, vector<64x64xbf16>, vector<2x64xf32> -> vector<2x64xf32>
    %87 = arith.addf %82, %86 : vector<2x64xf32>
    %88 = vector.extract_strided_slice %29 {offsets = [6, 0], sizes = [2, 64], strides = [1, 1]} : vector<8x64xbf16> to vector<2x64xbf16>
    %c5_54 = arith.constant 5 : index
    %c0_55 = arith.constant 0 : index
    %c0_56 = arith.constant 0 : index
    %89 = vector.load %arg6[%c5_54, %c0_55, %c0_56] : memref<9x64x64xbf16, #tpu.memory_space<vmem>>, vector<1x64x64xbf16>
    %90 = vector.shape_cast %89 : vector<1x64x64xbf16> to vector<64x64xbf16>
    %cst_57 = arith.constant dense<0.000000e+00> : vector<2x64xf32>
    %91 = tpu.matmul %88, %90, %cst_57 {dimension_numbers = #tpu.dot_dimension_numbers<[1], [0], [0], [1], [0, 0, 1, 1], [], []>} : vector<2x64xbf16>, vector<64x64xbf16>, vector<2x64xf32> -> vector<2x64xf32>
    %92 = arith.addf %87, %91 : vector<2x64xf32>
    %cst_58 = arith.constant 0.000000e+00 : f32
    %93 = vector.broadcast %cst_58 : f32 to vector<2x64xf32>
    %94 = vector.extract_strided_slice %29 {offsets = [0, 0], sizes = [2, 64], strides = [1, 1]} : vector<8x64xbf16> to vector<2x64xbf16>
    %c0_59 = arith.constant 0 : index
    %c0_60 = arith.constant 0 : index
    %c0_61 = arith.constant 0 : index
    %95 = vector.load %arg6[%c0_59, %c0_60, %c0_61] : memref<9x64x64xbf16, #tpu.memory_space<vmem>>, vector<1x64x64xbf16>
    %96 = vector.shape_cast %95 : vector<1x64x64xbf16> to vector<64x64xbf16>
    %cst_62 = arith.constant dense<0.000000e+00> : vector<2x64xf32>
    %97 = tpu.matmul %94, %96, %cst_62 {dimension_numbers = #tpu.dot_dimension_numbers<[1], [0], [0], [1], [0, 0, 1, 1], [], []>} : vector<2x64xbf16>, vector<64x64xbf16>, vector<2x64xf32> -> vector<2x64xf32>
    %98 = arith.addf %93, %97 : vector<2x64xf32>
    %99 = vector.extract_strided_slice %29 {offsets = [2, 0], sizes = [2, 64], strides = [1, 1]} : vector<8x64xbf16> to vector<2x64xbf16>
    %c1_63 = arith.constant 1 : index
    %c0_64 = arith.constant 0 : index
    %c0_65 = arith.constant 0 : index
    %100 = vector.load %arg6[%c1_63, %c0_64, %c0_65] : memref<9x64x64xbf16, #tpu.memory_space<vmem>>, vector<1x64x64xbf16>
    %101 = vector.shape_cast %100 : vector<1x64x64xbf16> to vector<64x64xbf16>
    %cst_66 = arith.constant dense<0.000000e+00> : vector<2x64xf32>
    %102 = tpu.matmul %99, %101, %cst_66 {dimension_numbers = #tpu.dot_dimension_numbers<[1], [0], [0], [1], [0, 0, 1, 1], [], []>} : vector<2x64xbf16>, vector<64x64xbf16>, vector<2x64xf32> -> vector<2x64xf32>
    %103 = arith.addf %98, %102 : vector<2x64xf32>
    %104 = vector.extract_strided_slice %29 {offsets = [4, 0], sizes = [2, 64], strides = [1, 1]} : vector<8x64xbf16> to vector<2x64xbf16>
    %c3_67 = arith.constant 3 : index
    %c0_68 = arith.constant 0 : index
    %c0_69 = arith.constant 0 : index
    %105 = vector.load %arg6[%c3_67, %c0_68, %c0_69] : memref<9x64x64xbf16, #tpu.memory_space<vmem>>, vector<1x64x64xbf16>
    %106 = vector.shape_cast %105 : vector<1x64x64xbf16> to vector<64x64xbf16>
    %cst_70 = arith.constant dense<0.000000e+00> : vector<2x64xf32>
    %107 = tpu.matmul %104, %106, %cst_70 {dimension_numbers = #tpu.dot_dimension_numbers<[1], [0], [0], [1], [0, 0, 1, 1], [], []>} : vector<2x64xbf16>, vector<64x64xbf16>, vector<2x64xf32> -> vector<2x64xf32>
    %108 = arith.addf %103, %107 : vector<2x64xf32>
    %109 = vector.extract_strided_slice %29 {offsets = [6, 0], sizes = [2, 64], strides = [1, 1]} : vector<8x64xbf16> to vector<2x64xbf16>
    %c4_71 = arith.constant 4 : index
    %c0_72 = arith.constant 0 : index
    %c0_73 = arith.constant 0 : index
    %110 = vector.load %arg6[%c4_71, %c0_72, %c0_73] : memref<9x64x64xbf16, #tpu.memory_space<vmem>>, vector<1x64x64xbf16>
    %111 = vector.shape_cast %110 : vector<1x64x64xbf16> to vector<64x64xbf16>
    %cst_74 = arith.constant dense<0.000000e+00> : vector<2x64xf32>
    %112 = tpu.matmul %109, %111, %cst_74 {dimension_numbers = #tpu.dot_dimension_numbers<[1], [0], [0], [1], [0, 0, 1, 1], [], []>} : vector<2x64xbf16>, vector<64x64xbf16>, vector<2x64xf32> -> vector<2x64xf32>
    %113 = arith.addf %108, %112 : vector<2x64xf32>
    %114 = tpu.concatenate %50, %71, %92, %113 in 0 : vector<2x64xf32>, vector<2x64xf32>, vector<2x64xf32>, vector<2x64xf32> -> vector<8x64xf32>
    %c0_75 = arith.constant 0 : index
    %c0_76 = arith.constant 0 : index
    %115 = vector.load %arg7[%c0_75, %c0_76] : memref<1x64xf32, #tpu.memory_space<vmem>>, vector<1x64xf32>
    %116 = vector.broadcast %115 : vector<1x64xf32> to vector<8x64xf32>
    %117 = arith.addf %114, %116 : vector<8x64xf32>
    %c0_77 = arith.constant 0 : index
    %c0_78 = arith.constant 0 : index
    %118 = vector.load %arg8[%c0_77, %c0_78] : memref<1x64xf32, #tpu.memory_space<vmem>>, vector<1x64xf32>
    %c0_79 = arith.constant 0 : index
    %c0_80 = arith.constant 0 : index
    %119 = vector.load %arg9[%c0_79, %c0_80] : memref<1x64xf32, #tpu.memory_space<vmem>>, vector<1x64xf32>
    %cst_81 = arith.constant dense<0.000000e+00> : vector<64xf32>
    %120 = vector.multi_reduction <add>, %117, %cst_81 [0] : vector<8x64xf32> to vector<64xf32>
    %121 = vector.shape_cast %120 : vector<64xf32> to vector<1x64xf32>
    %cst_82 = arith.constant 1.250000e-01 : f32
    %122 = vector.broadcast %cst_82 : f32 to vector<1x64xf32>
    %123 = arith.mulf %121, %122 : vector<1x64xf32>
    %124 = vector.broadcast %123 : vector<1x64xf32> to vector<8x64xf32>
    %125 = arith.subf %117, %124 : vector<8x64xf32>
    %126 = arith.mulf %125, %125 : vector<8x64xf32>
    %cst_83 = arith.constant dense<0.000000e+00> : vector<64xf32>
    %127 = vector.multi_reduction <add>, %126, %cst_83 [0] : vector<8x64xf32> to vector<64xf32>
    %128 = vector.shape_cast %127 : vector<64xf32> to vector<1x64xf32>
    %cst_84 = arith.constant 1.250000e-01 : f32
    %129 = vector.broadcast %cst_84 : f32 to vector<1x64xf32>
    %130 = arith.mulf %128, %129 : vector<1x64xf32>
    %cst_85 = arith.constant 9.99999974E-6 : f32
    %131 = vector.broadcast %cst_85 : f32 to vector<1x64xf32>
    %132 = arith.addf %130, %131 : vector<1x64xf32>
    %133 = math.rsqrt %132 : vector<1x64xf32>
    %134 = arith.mulf %118, %133 : vector<1x64xf32>
    %135 = vector.broadcast %134 : vector<1x64xf32> to vector<8x64xf32>
    %136 = arith.mulf %125, %135 : vector<8x64xf32>
    %137 = vector.broadcast %119 : vector<1x64xf32> to vector<8x64xf32>
    %138 = arith.addf %136, %137 : vector<8x64xf32>
    %cst_86 = arith.constant 0.000000e+00 : f32
    %139 = vector.broadcast %cst_86 : f32 to vector<8x64xf32>
    %140 = arith.maximumf %138, %139 : vector<8x64xf32>
    %141 = arith.truncf %140 : vector<8x64xf32> to vector<8x64xbf16>
    %c0_87 = arith.constant 0 : index
    %c0_88 = arith.constant 0 : index
    %142 = vector.load %arg1[%c0_87, %c0_88] : memref<2x8xf32, #tpu.memory_space<vmem>>, vector<2x8xf32>
    %143 = arith.truncf %142 : vector<2x8xf32> to vector<2x8xbf16>
    %c0_89 = arith.constant 0 : index
    %c0_90 = arith.constant 0 : index
    %144 = vector.load %arg11[%c0_89, %c0_90] : memref<8x512xbf16, #tpu.memory_space<vmem>>, vector<8x512xbf16>
    %cst_91 = arith.constant dense<0.000000e+00> : vector<2x512xf32>
    %145 = tpu.matmul %143, %144, %cst_91 {dimension_numbers = #tpu.dot_dimension_numbers<[1], [0], [0], [1], [0, 0, 1, 1], [], []>} : vector<2x8xbf16>, vector<8x512xbf16>, vector<2x512xf32> -> vector<2x512xf32>
    %146 = vector.extract_strided_slice %141 {offsets = [0, 0], sizes = [2, 64], strides = [1, 1]} : vector<8x64xbf16> to vector<2x64xbf16>
    %c0_92 = arith.constant 0 : index
    %c0_93 = arith.constant 0 : index
    %c0_94 = arith.constant 0 : index
    %147 = vector.load %arg10[%c0_92, %c0_93, %c0_94] : memref<4x64x512xbf16, #tpu.memory_space<vmem>>, vector<1x64x512xbf16>
    %148 = vector.shape_cast %147 : vector<1x64x512xbf16> to vector<64x512xbf16>
    %cst_95 = arith.constant dense<0.000000e+00> : vector<2x512xf32>
    %149 = tpu.matmul %146, %148, %cst_95 {dimension_numbers = #tpu.dot_dimension_numbers<[1], [0], [0], [1], [0, 0, 1, 1], [], []>} : vector<2x64xbf16>, vector<64x512xbf16>, vector<2x512xf32> -> vector<2x512xf32>
    %150 = arith.addf %145, %149 : vector<2x512xf32>
    %151 = vector.extract_strided_slice %141 {offsets = [2, 0], sizes = [2, 64], strides = [1, 1]} : vector<8x64xbf16> to vector<2x64xbf16>
    %c1_96 = arith.constant 1 : index
    %c0_97 = arith.constant 0 : index
    %c0_98 = arith.constant 0 : index
    %152 = vector.load %arg10[%c1_96, %c0_97, %c0_98] : memref<4x64x512xbf16, #tpu.memory_space<vmem>>, vector<1x64x512xbf16>
    %153 = vector.shape_cast %152 : vector<1x64x512xbf16> to vector<64x512xbf16>
    %cst_99 = arith.constant dense<0.000000e+00> : vector<2x512xf32>
    %154 = tpu.matmul %151, %153, %cst_99 {dimension_numbers = #tpu.dot_dimension_numbers<[1], [0], [0], [1], [0, 0, 1, 1], [], []>} : vector<2x64xbf16>, vector<64x512xbf16>, vector<2x512xf32> -> vector<2x512xf32>
    %155 = arith.addf %150, %154 : vector<2x512xf32>
    %156 = vector.extract_strided_slice %141 {offsets = [4, 0], sizes = [2, 64], strides = [1, 1]} : vector<8x64xbf16> to vector<2x64xbf16>
    %c2_100 = arith.constant 2 : index
    %c0_101 = arith.constant 0 : index
    %c0_102 = arith.constant 0 : index
    %157 = vector.load %arg10[%c2_100, %c0_101, %c0_102] : memref<4x64x512xbf16, #tpu.memory_space<vmem>>, vector<1x64x512xbf16>
    %158 = vector.shape_cast %157 : vector<1x64x512xbf16> to vector<64x512xbf16>
    %cst_103 = arith.constant dense<0.000000e+00> : vector<2x512xf32>
    %159 = tpu.matmul %156, %158, %cst_103 {dimension_numbers = #tpu.dot_dimension_numbers<[1], [0], [0], [1], [0, 0, 1, 1], [], []>} : vector<2x64xbf16>, vector<64x512xbf16>, vector<2x512xf32> -> vector<2x512xf32>
    %160 = arith.addf %155, %159 : vector<2x512xf32>
    %161 = vector.extract_strided_slice %141 {offsets = [6, 0], sizes = [2, 64], strides = [1, 1]} : vector<8x64xbf16> to vector<2x64xbf16>
    %c3_104 = arith.constant 3 : index
    %c0_105 = arith.constant 0 : index
    %c0_106 = arith.constant 0 : index
    %162 = vector.load %arg10[%c3_104, %c0_105, %c0_106] : memref<4x64x512xbf16, #tpu.memory_space<vmem>>, vector<1x64x512xbf16>
    %163 = vector.shape_cast %162 : vector<1x64x512xbf16> to vector<64x512xbf16>
    %cst_107 = arith.constant dense<0.000000e+00> : vector<2x512xf32>
    %164 = tpu.matmul %161, %163, %cst_107 {dimension_numbers = #tpu.dot_dimension_numbers<[1], [0], [0], [1], [0, 0, 1, 1], [], []>} : vector<2x64xbf16>, vector<64x512xbf16>, vector<2x512xf32> -> vector<2x512xf32>
    %165 = arith.addf %160, %164 : vector<2x512xf32>
    %c0_108 = arith.constant 0 : index
    %c0_109 = arith.constant 0 : index
    %166 = vector.load %arg12[%c0_108, %c0_109] : memref<1x512xf32, #tpu.memory_space<vmem>>, vector<1x512xf32>
    %167 = vector.broadcast %166 : vector<1x512xf32> to vector<2x512xf32>
    %168 = arith.addf %165, %167 : vector<2x512xf32>
    %169 = arith.truncf %168 : vector<2x512xf32> to vector<2x512xbf16>
    %c0_110 = arith.constant 0 : index
    %c0_111 = arith.constant 0 : index
    %170 = vector.load %arg13[%c0_110, %c0_111] : memref<512x768xbf16, #tpu.memory_space<vmem>>, vector<512x768xbf16>
    %cst_112 = arith.constant dense<0.000000e+00> : vector<2x768xf32>
    %171 = tpu.matmul %169, %170, %cst_112 {dimension_numbers = #tpu.dot_dimension_numbers<[1], [0], [0], [1], [0, 0, 1, 1], [], []>} : vector<2x512xbf16>, vector<512x768xbf16>, vector<2x768xf32> -> vector<2x768xf32>
    %c0_113 = arith.constant 0 : index
    %c0_114 = arith.constant 0 : index
    %172 = vector.load %arg14[%c0_113, %c0_114] : memref<1x768xf32, #tpu.memory_space<vmem>>, vector<1x768xf32>
    %173 = vector.broadcast %172 : vector<1x768xf32> to vector<2x768xf32>
    %174 = arith.addf %171, %173 : vector<2x768xf32>
    %c0_115 = arith.constant 0 : index
    %c0_116 = arith.constant 0 : index
    %175 = vector.load %arg15[%c0_115, %c0_116] : memref<1x768xf32, #tpu.memory_space<vmem>>, vector<1x768xf32>
    %c0_117 = arith.constant 0 : index
    %c0_118 = arith.constant 0 : index
    %176 = vector.load %arg16[%c0_117, %c0_118] : memref<1x768xf32, #tpu.memory_space<vmem>>, vector<1x768xf32>
    %cst_119 = arith.constant dense<0.000000e+00> : vector<768xf32>
    %177 = vector.multi_reduction <add>, %174, %cst_119 [0] : vector<2x768xf32> to vector<768xf32>
    %178 = vector.shape_cast %177 : vector<768xf32> to vector<1x768xf32>
    %cst_120 = arith.constant 5.000000e-01 : f32
    %179 = vector.broadcast %cst_120 : f32 to vector<1x768xf32>
    %180 = arith.mulf %178, %179 : vector<1x768xf32>
    %181 = vector.broadcast %180 : vector<1x768xf32> to vector<2x768xf32>
    %182 = arith.subf %174, %181 : vector<2x768xf32>
    %183 = arith.mulf %182, %182 : vector<2x768xf32>
    %cst_121 = arith.constant dense<0.000000e+00> : vector<768xf32>
    %184 = vector.multi_reduction <add>, %183, %cst_121 [0] : vector<2x768xf32> to vector<768xf32>
    %185 = vector.shape_cast %184 : vector<768xf32> to vector<1x768xf32>
    %cst_122 = arith.constant 5.000000e-01 : f32
    %186 = vector.broadcast %cst_122 : f32 to vector<1x768xf32>
    %187 = arith.mulf %185, %186 : vector<1x768xf32>
    %cst_123 = arith.constant 9.99999974E-6 : f32
    %188 = vector.broadcast %cst_123 : f32 to vector<1x768xf32>
    %189 = arith.addf %187, %188 : vector<1x768xf32>
    %190 = math.rsqrt %189 : vector<1x768xf32>
    %191 = arith.mulf %175, %190 : vector<1x768xf32>
    %192 = vector.broadcast %191 : vector<1x768xf32> to vector<2x768xf32>
    %193 = arith.mulf %182, %192 : vector<2x768xf32>
    %194 = vector.broadcast %176 : vector<1x768xf32> to vector<2x768xf32>
    %195 = arith.addf %193, %194 : vector<2x768xf32>
    %cst_124 = arith.constant 0.000000e+00 : f32
    %196 = vector.broadcast %cst_124 : f32 to vector<2x768xf32>
    %197 = arith.maximumf %195, %196 : vector<2x768xf32>
    %198 = arith.truncf %197 : vector<2x768xf32> to vector<2x768xbf16>
    %199 = vector.extract_strided_slice %198 {offsets = [0, 0], sizes = [2, 256], strides = [1, 1]} : vector<2x768xbf16> to vector<2x256xbf16>
    %c0_125 = arith.constant 0 : index
    %c0_126 = arith.constant 0 : index
    %c0_127 = arith.constant 0 : index
    %200 = vector.load %arg17[%c0_125, %c0_126, %c0_127] : memref<3x256x256xbf16, #tpu.memory_space<vmem>>, vector<1x256x256xbf16>
    %201 = vector.shape_cast %200 : vector<1x256x256xbf16> to vector<256x256xbf16>
    %cst_128 = arith.constant dense<0.000000e+00> : vector<2x256xf32>
    %202 = tpu.matmul %199, %201, %cst_128 {dimension_numbers = #tpu.dot_dimension_numbers<[1], [0], [0], [1], [0, 0, 1, 1], [], []>} : vector<2x256xbf16>, vector<256x256xbf16>, vector<2x256xf32> -> vector<2x256xf32>
    %c0_129 = arith.constant 0 : index
    %c0_130 = arith.constant 0 : index
    %c0_131 = arith.constant 0 : index
    %203 = vector.load %arg18[%c0_129, %c0_130, %c0_131] : memref<3x1x256xf32, #tpu.memory_space<vmem>>, vector<1x1x256xf32>
    %204 = vector.shape_cast %203 : vector<1x1x256xf32> to vector<1x256xf32>
    %205 = vector.broadcast %204 : vector<1x256xf32> to vector<2x256xf32>
    %206 = arith.addf %202, %205 : vector<2x256xf32>
    %c0_132 = arith.constant 0 : index
    %c0_133 = arith.constant 0 : index
    %c0_134 = arith.constant 0 : index
    %207 = vector.load %arg19[%c0_132, %c0_133, %c0_134] : memref<3x1x256xf32, #tpu.memory_space<vmem>>, vector<1x1x256xf32>
    %208 = vector.shape_cast %207 : vector<1x1x256xf32> to vector<1x256xf32>
    %c0_135 = arith.constant 0 : index
    %c0_136 = arith.constant 0 : index
    %c0_137 = arith.constant 0 : index
    %209 = vector.load %arg20[%c0_135, %c0_136, %c0_137] : memref<3x1x256xf32, #tpu.memory_space<vmem>>, vector<1x1x256xf32>
    %210 = vector.shape_cast %209 : vector<1x1x256xf32> to vector<1x256xf32>
    %cst_138 = arith.constant dense<0.000000e+00> : vector<256xf32>
    %211 = vector.multi_reduction <add>, %206, %cst_138 [0] : vector<2x256xf32> to vector<256xf32>
    %212 = vector.shape_cast %211 : vector<256xf32> to vector<1x256xf32>
    %cst_139 = arith.constant 5.000000e-01 : f32
    %213 = vector.broadcast %cst_139 : f32 to vector<1x256xf32>
    %214 = arith.mulf %212, %213 : vector<1x256xf32>
    %215 = vector.broadcast %214 : vector<1x256xf32> to vector<2x256xf32>
    %216 = arith.subf %206, %215 : vector<2x256xf32>
    %217 = arith.mulf %216, %216 : vector<2x256xf32>
    %cst_140 = arith.constant dense<0.000000e+00> : vector<256xf32>
    %218 = vector.multi_reduction <add>, %217, %cst_140 [0] : vector<2x256xf32> to vector<256xf32>
    %219 = vector.shape_cast %218 : vector<256xf32> to vector<1x256xf32>
    %cst_141 = arith.constant 5.000000e-01 : f32
    %220 = vector.broadcast %cst_141 : f32 to vector<1x256xf32>
    %221 = arith.mulf %219, %220 : vector<1x256xf32>
    %cst_142 = arith.constant 9.99999974E-6 : f32
    %222 = vector.broadcast %cst_142 : f32 to vector<1x256xf32>
    %223 = arith.addf %221, %222 : vector<1x256xf32>
    %224 = math.rsqrt %223 : vector<1x256xf32>
    %225 = arith.mulf %208, %224 : vector<1x256xf32>
    %226 = vector.broadcast %225 : vector<1x256xf32> to vector<2x256xf32>
    %227 = arith.mulf %216, %226 : vector<2x256xf32>
    %228 = vector.broadcast %210 : vector<1x256xf32> to vector<2x256xf32>
    %229 = arith.addf %227, %228 : vector<2x256xf32>
    %cst_143 = arith.constant 0.000000e+00 : f32
    %230 = vector.broadcast %cst_143 : f32 to vector<2x256xf32>
    %231 = arith.maximumf %229, %230 : vector<2x256xf32>
    %232 = arith.truncf %231 : vector<2x256xf32> to vector<2x256xbf16>
    %c0_144 = arith.constant 0 : index
    %c0_145 = arith.constant 0 : index
    %c0_146 = arith.constant 0 : index
    %233 = vector.load %arg21[%c0_144, %c0_145, %c0_146] : memref<3x256x4xbf16, #tpu.memory_space<vmem>>, vector<1x256x4xbf16>
    %234 = vector.shape_cast %233 : vector<1x256x4xbf16> to vector<256x4xbf16>
    %cst_147 = arith.constant dense<0.000000e+00> : vector<2x4xf32>
    %235 = tpu.matmul %232, %234, %cst_147 {dimension_numbers = #tpu.dot_dimension_numbers<[1], [0], [0], [1], [0, 0, 1, 1], [], []>} : vector<2x256xbf16>, vector<256x4xbf16>, vector<2x4xf32> -> vector<2x4xf32>
    %c0_148 = arith.constant 0 : index
    %c0_149 = arith.constant 0 : index
    %c0_150 = arith.constant 0 : index
    %236 = vector.load %arg22[%c0_148, %c0_149, %c0_150] : memref<3x1x4xf32, #tpu.memory_space<vmem>>, vector<1x1x4xf32>
    %237 = vector.shape_cast %236 : vector<1x1x4xf32> to vector<1x4xf32>
    %238 = vector.broadcast %237 : vector<1x4xf32> to vector<2x4xf32>
    %239 = arith.addf %235, %238 : vector<2x4xf32>
    %c0_151 = arith.constant 0 : index
    %c0_152 = arith.constant 0 : index
    %c0_153 = arith.constant 0 : index
    %240 = vector.load %arg23[%c0_151, %c0_152, %c0_153] : memref<3x2x4xf32, #tpu.memory_space<vmem>>, vector<1x2x4xf32>
    %241 = vector.shape_cast %240 : vector<1x2x4xf32> to vector<2x4xf32>
    %242 = vector.shape_cast %239 : vector<2x4xf32> to vector<1x2x4xf32>
    tpu.vector_store %arg23[%c0_151, %c0_152, %c0_153], %242 {strides = array<i32>} : memref<3x2x4xf32, #tpu.memory_space<vmem>>, vector<1x2x4xf32>,
    %243 = vector.extract_strided_slice %198 {offsets = [0, 256], sizes = [2, 256], strides = [1, 1]} : vector<2x768xbf16> to vector<2x256xbf16>
    %c1_154 = arith.constant 1 : index
    %c0_155 = arith.constant 0 : index
    %c0_156 = arith.constant 0 : index
    %244 = vector.load %arg17[%c1_154, %c0_155, %c0_156] : memref<3x256x256xbf16, #tpu.memory_space<vmem>>, vector<1x256x256xbf16>
    %245 = vector.shape_cast %244 : vector<1x256x256xbf16> to vector<256x256xbf16>
    %cst_157 = arith.constant dense<0.000000e+00> : vector<2x256xf32>
    %246 = tpu.matmul %243, %245, %cst_157 {dimension_numbers = #tpu.dot_dimension_numbers<[1], [0], [0], [1], [0, 0, 1, 1], [], []>} : vector<2x256xbf16>, vector<256x256xbf16>, vector<2x256xf32> -> vector<2x256xf32>
    %c1_158 = arith.constant 1 : index
    %c0_159 = arith.constant 0 : index
    %c0_160 = arith.constant 0 : index
    %247 = vector.load %arg18[%c1_158, %c0_159, %c0_160] : memref<3x1x256xf32, #tpu.memory_space<vmem>>, vector<1x1x256xf32>
    %248 = vector.shape_cast %247 : vector<1x1x256xf32> to vector<1x256xf32>
    %249 = vector.broadcast %248 : vector<1x256xf32> to vector<2x256xf32>
    %250 = arith.addf %246, %249 : vector<2x256xf32>
    %c1_161 = arith.constant 1 : index
    %c0_162 = arith.constant 0 : index
    %c0_163 = arith.constant 0 : index
    %251 = vector.load %arg19[%c1_161, %c0_162, %c0_163] : memref<3x1x256xf32, #tpu.memory_space<vmem>>, vector<1x1x256xf32>
    %252 = vector.shape_cast %251 : vector<1x1x256xf32> to vector<1x256xf32>
    %c1_164 = arith.constant 1 : index
    %c0_165 = arith.constant 0 : index
    %c0_166 = arith.constant 0 : index
    %253 = vector.load %arg20[%c1_164, %c0_165, %c0_166] : memref<3x1x256xf32, #tpu.memory_space<vmem>>, vector<1x1x256xf32>
    %254 = vector.shape_cast %253 : vector<1x1x256xf32> to vector<1x256xf32>
    %cst_167 = arith.constant dense<0.000000e+00> : vector<256xf32>
    %255 = vector.multi_reduction <add>, %250, %cst_167 [0] : vector<2x256xf32> to vector<256xf32>
    %256 = vector.shape_cast %255 : vector<256xf32> to vector<1x256xf32>
    %cst_168 = arith.constant 5.000000e-01 : f32
    %257 = vector.broadcast %cst_168 : f32 to vector<1x256xf32>
    %258 = arith.mulf %256, %257 : vector<1x256xf32>
    %259 = vector.broadcast %258 : vector<1x256xf32> to vector<2x256xf32>
    %260 = arith.subf %250, %259 : vector<2x256xf32>
    %261 = arith.mulf %260, %260 : vector<2x256xf32>
    %cst_169 = arith.constant dense<0.000000e+00> : vector<256xf32>
    %262 = vector.multi_reduction <add>, %261, %cst_169 [0] : vector<2x256xf32> to vector<256xf32>
    %263 = vector.shape_cast %262 : vector<256xf32> to vector<1x256xf32>
    %cst_170 = arith.constant 5.000000e-01 : f32
    %264 = vector.broadcast %cst_170 : f32 to vector<1x256xf32>
    %265 = arith.mulf %263, %264 : vector<1x256xf32>
    %cst_171 = arith.constant 9.99999974E-6 : f32
    %266 = vector.broadcast %cst_171 : f32 to vector<1x256xf32>
    %267 = arith.addf %265, %266 : vector<1x256xf32>
    %268 = math.rsqrt %267 : vector<1x256xf32>
    %269 = arith.mulf %252, %268 : vector<1x256xf32>
    %270 = vector.broadcast %269 : vector<1x256xf32> to vector<2x256xf32>
    %271 = arith.mulf %260, %270 : vector<2x256xf32>
    %272 = vector.broadcast %254 : vector<1x256xf32> to vector<2x256xf32>
    %273 = arith.addf %271, %272 : vector<2x256xf32>
    %cst_172 = arith.constant 0.000000e+00 : f32
    %274 = vector.broadcast %cst_172 : f32 to vector<2x256xf32>
    %275 = arith.maximumf %273, %274 : vector<2x256xf32>
    %276 = arith.truncf %275 : vector<2x256xf32> to vector<2x256xbf16>
    %c1_173 = arith.constant 1 : index
    %c0_174 = arith.constant 0 : index
    %c0_175 = arith.constant 0 : index
    %277 = vector.load %arg21[%c1_173, %c0_174, %c0_175] : memref<3x256x4xbf16, #tpu.memory_space<vmem>>, vector<1x256x4xbf16>
    %278 = vector.shape_cast %277 : vector<1x256x4xbf16> to vector<256x4xbf16>
    %cst_176 = arith.constant dense<0.000000e+00> : vector<2x4xf32>
    %279 = tpu.matmul %276, %278, %cst_176 {dimension_numbers = #tpu.dot_dimension_numbers<[1], [0], [0], [1], [0, 0, 1, 1], [], []>} : vector<2x256xbf16>, vector<256x4xbf16>, vector<2x4xf32> -> vector<2x4xf32>
    %c1_177 = arith.constant 1 : index
    %c0_178 = arith.constant 0 : index
    %c0_179 = arith.constant 0 : index
    %280 = vector.load %arg22[%c1_177, %c0_178, %c0_179] : memref<3x1x4xf32, #tpu.memory_space<vmem>>, vector<1x1x4xf32>
    %281 = vector.shape_cast %280 : vector<1x1x4xf32> to vector<1x4xf32>
    %282 = vector.broadcast %281 : vector<1x4xf32> to vector<2x4xf32>
    %283 = arith.addf %279, %282 : vector<2x4xf32>
    %c1_180 = arith.constant 1 : index
    %c0_181 = arith.constant 0 : index
    %c0_182 = arith.constant 0 : index
    %284 = vector.load %arg23[%c1_180, %c0_181, %c0_182] : memref<3x2x4xf32, #tpu.memory_space<vmem>>, vector<1x2x4xf32>
    %285 = vector.shape_cast %284 : vector<1x2x4xf32> to vector<2x4xf32>
    %286 = vector.shape_cast %283 : vector<2x4xf32> to vector<1x2x4xf32>
    tpu.vector_store %arg23[%c1_180, %c0_181, %c0_182], %286 {strides = array<i32>} : memref<3x2x4xf32, #tpu.memory_space<vmem>>, vector<1x2x4xf32>,
    %287 = vector.extract_strided_slice %198 {offsets = [0, 512], sizes = [2, 256], strides = [1, 1]} : vector<2x768xbf16> to vector<2x256xbf16>
    %c2_183 = arith.constant 2 : index
    %c0_184 = arith.constant 0 : index
    %c0_185 = arith.constant 0 : index
    %288 = vector.load %arg17[%c2_183, %c0_184, %c0_185] : memref<3x256x256xbf16, #tpu.memory_space<vmem>>, vector<1x256x256xbf16>
    %289 = vector.shape_cast %288 : vector<1x256x256xbf16> to vector<256x256xbf16>
    %cst_186 = arith.constant dense<0.000000e+00> : vector<2x256xf32>
    %290 = tpu.matmul %287, %289, %cst_186 {dimension_numbers = #tpu.dot_dimension_numbers<[1], [0], [0], [1], [0, 0, 1, 1], [], []>} : vector<2x256xbf16>, vector<256x256xbf16>, vector<2x256xf32> -> vector<2x256xf32>
    %c2_187 = arith.constant 2 : index
    %c0_188 = arith.constant 0 : index
    %c0_189 = arith.constant 0 : index
    %291 = vector.load %arg18[%c2_187, %c0_188, %c0_189] : memref<3x1x256xf32, #tpu.memory_space<vmem>>, vector<1x1x256xf32>
    %292 = vector.shape_cast %291 : vector<1x1x256xf32> to vector<1x256xf32>
    %293 = vector.broadcast %292 : vector<1x256xf32> to vector<2x256xf32>
    %294 = arith.addf %290, %293 : vector<2x256xf32>
    %c2_190 = arith.constant 2 : index
    %c0_191 = arith.constant 0 : index
    %c0_192 = arith.constant 0 : index
    %295 = vector.load %arg19[%c2_190, %c0_191, %c0_192] : memref<3x1x256xf32, #tpu.memory_space<vmem>>, vector<1x1x256xf32>
    %296 = vector.shape_cast %295 : vector<1x1x256xf32> to vector<1x256xf32>
    %c2_193 = arith.constant 2 : index
    %c0_194 = arith.constant 0 : index
    %c0_195 = arith.constant 0 : index
    %297 = vector.load %arg20[%c2_193, %c0_194, %c0_195] : memref<3x1x256xf32, #tpu.memory_space<vmem>>, vector<1x1x256xf32>
    %298 = vector.shape_cast %297 : vector<1x1x256xf32> to vector<1x256xf32>
    %cst_196 = arith.constant dense<0.000000e+00> : vector<256xf32>
    %299 = vector.multi_reduction <add>, %294, %cst_196 [0] : vector<2x256xf32> to vector<256xf32>
    %300 = vector.shape_cast %299 : vector<256xf32> to vector<1x256xf32>
    %cst_197 = arith.constant 5.000000e-01 : f32
    %301 = vector.broadcast %cst_197 : f32 to vector<1x256xf32>
    %302 = arith.mulf %300, %301 : vector<1x256xf32>
    %303 = vector.broadcast %302 : vector<1x256xf32> to vector<2x256xf32>
    %304 = arith.subf %294, %303 : vector<2x256xf32>
    %305 = arith.mulf %304, %304 : vector<2x256xf32>
    %cst_198 = arith.constant dense<0.000000e+00> : vector<256xf32>
    %306 = vector.multi_reduction <add>, %305, %cst_198 [0] : vector<2x256xf32> to vector<256xf32>
    %307 = vector.shape_cast %306 : vector<256xf32> to vector<1x256xf32>
    %cst_199 = arith.constant 5.000000e-01 : f32
    %308 = vector.broadcast %cst_199 : f32 to vector<1x256xf32>
    %309 = arith.mulf %307, %308 : vector<1x256xf32>
    %cst_200 = arith.constant 9.99999974E-6 : f32
    %310 = vector.broadcast %cst_200 : f32 to vector<1x256xf32>
    %311 = arith.addf %309, %310 : vector<1x256xf32>
    %312 = math.rsqrt %311 : vector<1x256xf32>
    %313 = arith.mulf %296, %312 : vector<1x256xf32>
    %314 = vector.broadcast %313 : vector<1x256xf32> to vector<2x256xf32>
    %315 = arith.mulf %304, %314 : vector<2x256xf32>
    %316 = vector.broadcast %298 : vector<1x256xf32> to vector<2x256xf32>
    %317 = arith.addf %315, %316 : vector<2x256xf32>
    %cst_201 = arith.constant 0.000000e+00 : f32
    %318 = vector.broadcast %cst_201 : f32 to vector<2x256xf32>
    %319 = arith.maximumf %317, %318 : vector<2x256xf32>
    %320 = arith.truncf %319 : vector<2x256xf32> to vector<2x256xbf16>
    %c2_202 = arith.constant 2 : index
    %c0_203 = arith.constant 0 : index
    %c0_204 = arith.constant 0 : index
    %321 = vector.load %arg21[%c2_202, %c0_203, %c0_204] : memref<3x256x4xbf16, #tpu.memory_space<vmem>>, vector<1x256x4xbf16>
    %322 = vector.shape_cast %321 : vector<1x256x4xbf16> to vector<256x4xbf16>
    %cst_205 = arith.constant dense<0.000000e+00> : vector<2x4xf32>
    %323 = tpu.matmul %320, %322, %cst_205 {dimension_numbers = #tpu.dot_dimension_numbers<[1], [0], [0], [1], [0, 0, 1, 1], [], []>} : vector<2x256xbf16>, vector<256x4xbf16>, vector<2x4xf32> -> vector<2x4xf32>
    %c2_206 = arith.constant 2 : index
    %c0_207 = arith.constant 0 : index
    %c0_208 = arith.constant 0 : index
    %324 = vector.load %arg22[%c2_206, %c0_207, %c0_208] : memref<3x1x4xf32, #tpu.memory_space<vmem>>, vector<1x1x4xf32>
    %325 = vector.shape_cast %324 : vector<1x1x4xf32> to vector<1x4xf32>
    %326 = vector.broadcast %325 : vector<1x4xf32> to vector<2x4xf32>
    %327 = arith.addf %323, %326 : vector<2x4xf32>
    %c2_209 = arith.constant 2 : index
    %c0_210 = arith.constant 0 : index
    %c0_211 = arith.constant 0 : index
    %328 = vector.load %arg23[%c2_209, %c0_210, %c0_211] : memref<3x2x4xf32, #tpu.memory_space<vmem>>, vector<1x2x4xf32>
    %329 = vector.shape_cast %328 : vector<1x2x4xf32> to vector<2x4xf32>
    %330 = vector.shape_cast %327 : vector<2x4xf32> to vector<1x2x4xf32>
    tpu.vector_store %arg23[%c2_209, %c0_210, %c0_211], %330 {strides = array<i32>} : memref<3x2x4xf32, #tpu.memory_space<vmem>>, vector<1x2x4xf32>,
    return
  }
}

</mosaic_0001>

<llo_original>
// kernel: sac_forward.3
$region0: #{sac_forward.3}
  #allocation0 [shape = 'u32[]', space=smem, size = 0x4, offset = 0x4, fixed_abs, tag = 'smem constant byte address 0x4 - core index']
  #allocation1 [shape = 'u32[144,128]{1,0:T(1,128)}', space=vmem, size = 0x12000, scoped, tag = 'internal scratch']
  %s0 = inlined_call_operand.vmem [shape: bf16[128,49], index: 0, kind: input, shape index: {}]
  %s1 = inlined_call_operand.vmem [shape: bf16[49,32], index: 1, kind: input, shape index: {}]
  %s2 = inlined_call_operand.vmem [shape: f32[1,32], index: 2, kind: input, shape index: {}]
  %s3 = inlined_call_operand.vmem [shape: f32[1,32], index: 3, kind: input, shape index: {}]
  %s4 = inlined_call_operand.vmem [shape: f32[1,32], index: 4, kind: input, shape index: {}]
  %s5 = inlined_call_operand.vmem [shape: bf16[128,32], index: 5, kind: output, shape index: {}]
  %s6 = sld [smem:[#allocation0]]
  $region30: #{sac_forward.3} parent=0
    _
  %s8 = ssub.s32 1, %s6
  %s9 = scalar_select 0, %s8, %s6
  // Predicated region
  $region2: #{sac_forward.3} parent=0 // pred_check
    _
  $region3: #{sac_forward.3} parent=0 // pred_check_branch
    %11 = sbr.rel (0) target = $region5
  $region4: #{sac_forward.3} parent=0 // pred_region
    _
  $region5: #{sac_forward.3} parent=0 // pred_fallthru
    _
  // Predicated region
  $region6: #{sac_forward.3} parent=0 // pred_check
    _
  $region7: #{sac_forward.3} parent=0 // pred_check_branch
    %13 = sbr.rel (0) target = $region9
  $region8: #{sac_forward.3} parent=0 // pred_region
    _
  $region9: #{sac_forward.3} parent=0 // pred_fallthru
    _
  // Predicated region
  $region10: #{sac_forward.3} parent=0 // pred_check
    _
  $region11: #{sac_forward.3} parent=0 // pred_check_branch
    %15 = sbr.rel (0) target = $region13
  $region12: #{sac_forward.3} parent=0 // pred_region
    _
  $region13: #{sac_forward.3} parent=0 // pred_fallthru
    _
  // Predicated region
  $region14: #{sac_forward.3} parent=0 // pred_check
    _
  $region15: #{sac_forward.3} parent=0 // pred_check_branch
    %17 = sbr.rel (0) target = $region17
  $region16: #{sac_forward.3} parent=0 // pred_region
    _
  $region17: #{sac_forward.3} parent=0 // pred_fallthru
    _
  // Predicated region
  $region18: #{sac_forward.3} parent=0 // pred_check
    _
  $region19: #{sac_forward.3} parent=0 // pred_check_branch
    %19 = sbr.rel (0) target = $region21
  $region20: #{sac_forward.3} parent=0 // pred_region
    _
  $region21: #{sac_forward.3} parent=0 // pred_fallthru
    _
  %v21 = vld [vmem:[%s0] sm:$0xf]
  %v22 = vld [vmem:[%s0 + $0x4] sm:$0xf]
  %v23 = vld [vmem:[%s0 + $0x8] sm:$0xf]
  %v24 = vld [vmem:[%s0 + $0xc] sm:$0xf]
  %v25 = vld [vmem:[%s0 + $0x10] sm:$0xf]
  %v26 = vld [vmem:[%s0 + $0x14] sm:$0xf]
  %v27 = vld [vmem:[%s0 + $0x18] sm:$0xf]
  %v28 = vld [vmem:[%s0 + $0x1c] sm:$0xf]
  %v29 = vld [vmem:[%s0 + $0x20] sm:$0xf]
  %v30 = vld [vmem:[%s0 + $0x24] sm:$0xf]
  %v31 = vld [vmem:[%s0 + $0x28] sm:$0xf]
  %v32 = vld [vmem:[%s0 + $0x2c] sm:$0xf]
  %v33 = vld [vmem:[%s0 + $0x30] sm:$0xf]
  %v34 = vld [vmem:[%s0 + $0x34] sm:$0xf]
  %v35 = vld [vmem:[%s0 + $0x38] sm:$0xf]
  %v36 = vld [vmem:[%s0 + $0x3c] sm:$0xf]
  %v37 = vld [vmem:[%s1] sm:$0xf]
  %v38 = vld [vmem:[%s1 + $0x4] sm:$0xf]
  %v39 = vld [vmem:[%s1 + $0x8] sm:$0xf]
  %v40 = vld [vmem:[%s1 + $0xc] sm:$0xf]
  %v41 = vld [vmem:[%s1 + $0x10] sm:$0xf]
  %v42 = vld [vmem:[%s1 + $0x14] sm:$0xf]
  %v43 = vld [vmem:[%s1 + $0x18] sm:$0x1]
  %v44 = vld [vmem:[%s2] sm:$0x1]
  %v46 = vlaneseq
  %v47 = vshrl.u32 %v46, 7
  %v48 = vsub.s32 0, %v47
  %v49 = vrot.slane %v44, %v48
  %v67 = vunpack.c.l.b16 %v21
  %v68 = vunpack.c.l.b16 %v22
  %v69 = vunpack.c.l.b16 %v23
  %v70 = vunpack.c.l.b16 %v24
  %v71 = vunpack.c.l.b16 %v25
  %v72 = vunpack.c.l.b16 %v26
  %v73 = vunpack.c.l.b16 %v27
  %v74 = vunpack.c.l.b16 %v28
  %v75 = vunpack.c.l.b16 %v29
  %v76 = vunpack.c.l.b16 %v30
  %v77 = vunpack.c.l.b16 %v31
  %v78 = vunpack.c.l.b16 %v32
  %v79 = vunpack.c.l.b16 %v33
  %v80 = vunpack.c.l.b16 %v34
  %v81 = vunpack.c.l.b16 %v35
  %v82 = vunpack.c.l.b16 %v36
  %v83 = vpack.c.b16 %v68, %v67
  %v84 = vpack.c.b16 %v70, %v69
  %v85 = vpack.c.b16 %v72, %v71
  %v86 = vpack.c.b16 %v74, %v73
  %v87 = vpack.c.b16 %v76, %v75
  %v88 = vpack.c.b16 %v78, %v77
  %v89 = vpack.c.b16 %v80, %v79
  %v90 = vpack.c.b16 %v82, %v81
  %v98 = vunpack.c.l.b16 %v37
  %v99 = vunpack.c.l.b16 %v38
  %v100 = vunpack.c.l.b16 %v39
  %v101 = vunpack.c.l.b16 %v40
  %v102 = vunpack.c.l.b16 %v41
  %v103 = vunpack.c.l.b16 %v42
  %v104 = vunpack.c.l.b16 %v43
  %v105 = vpack.c.b16 %v99, %v98
  %v106 = vpack.c.b16 %v101, %v100
  %v107 = vpack.c.b16 %v103, %v102
  %v108 = vpack.c.b16 %v104, %v104
  %vm112 = vcmask 400384
  %v114 = vsel %vm112, %v83, 0
  %v117 = vsel %vm112, %v84, 0
  %v120 = vsel %vm112, %v85, 0
  %v123 = vsel %vm112, %v86, 0
  %v126 = vsel %vm112, %v87, 0
  %v129 = vsel %vm112, %v88, 0
  %v132 = vsel %vm112, %v89, 0
  %v135 = vsel %vm112, %v90, 0
  %vm137 = vcmask 1040384
  %v138 = vsel 0, 4294967295, 65535
  %v139 = vsel %vm137, %v138, 0
  %v141 = vand.u32 %v108, %v139
  %143 = vmatprep.subr.bf16.mxu0 0
  %144 = vmatpush1.bf16.msra.mxu0 0
  %145 = vmatprep.subr.bf16.mxu0 0
  %146 = vmatpush1.bf16.msra.mxu0 0
  %147 = vmatprep.subr.bf16.mxu0 0
  %148 = vmatpush1.bf16.msra.mxu0 0
  %149 = vmatprep.subr.bf16.mxu0 0
  %150 = vmatpush1.bf16.msra.mxu0 0
  %151 = vmatprep.subr.bf16.mxu0 0
  %152 = vmatpush1.bf16.msra.mxu0 %v141
  %153 = vmatprep.subr.bf16.mxu0 0
  %154 = vmatpush1.bf16.msra.mxu0 %v107
  %155 = vmatprep.subr.bf16.mxu0 0
  %156 = vmatpush1.bf16.msra.mxu0 %v106
  %157 = vmatprep.subr.bf16.mxu0 0
  %158 = vmatpush1.bf16.msra.mxu0 %v105
  %159 = vmatprep.subr.bf16.mxu0 0
  %160 = vmatpush2.bf16.msra.mxu0 0
  %161 = vmatprep.subr.bf16.mxu0 0
  %162 = vmatpush2.bf16.msra.mxu0 0
  %163 = vmatprep.subr.bf16.mxu0 0
  %164 = vmatpush2.bf16.msra.mxu0 0
  %165 = vmatprep.subr.bf16.mxu0 0
  %166 = vmatpush2.bf16.msra.mxu0 0
  %167 = vmatprep.subr.bf16.mxu0 0
  %168 = vmatpush2.bf16.msra.mxu0 0
  %169 = vmatprep.subr.bf16.mxu0 0
  %170 = vmatpush2.bf16.msra.mxu0 0
  %171 = vmatprep.subr.bf16.mxu0 0
  %172 = vmatpush2.bf16.msra.mxu0 0
  %173 = vmatprep.subr.bf16.mxu0 0
  %174 = vmatpush2.bf16.msra.mxu0 0
  %175 = vmatprep.mubr.bf16.mxu0 0
  %176 = vmatmul.mubr.bf16.gmra.mxu0 %v114
  %v177 = vpop.f32.mrf.mxu0
  %v178 = vadd.f32 %v49, %v177
  %v179 = vpop.f32.mrf.mxu0
  %v180 = vpop.f32.mrf.mxu0
  %v181 = vadd.f32 %v49, %v180
  %v182 = vpop.f32.mrf.mxu0
  %183 = vmatprep.mubr.bf16.mxu0 0
  %184 = vmatmul.mubr.bf16.gmra.mxu0 %v117
  %v185 = vpop.f32.mrf.mxu0
  %v186 = vadd.f32 %v49, %v185
  %v187 = vpop.f32.mrf.mxu0
  %v188 = vpop.f32.mrf.mxu0
  %v189 = vadd.f32 %v49, %v188
  %v190 = vpop.f32.mrf.mxu0
  %191 = vmatprep.mubr.bf16.mxu0 0
  %192 = vmatmul.mubr.bf16.gmra.mxu0 %v120
  %v193 = vpop.f32.mrf.mxu0
  %v194 = vadd.f32 %v49, %v193
  %v195 = vpop.f32.mrf.mxu0
  %v196 = vpop.f32.mrf.mxu0
  %v197 = vadd.f32 %v49, %v196
  %v198 = vpop.f32.mrf.mxu0
  %199 = vmatprep.mubr.bf16.mxu0 0
  %200 = vmatmul.mubr.bf16.gmra.mxu0 %v123
  %v201 = vpop.f32.mrf.mxu0
  %v202 = vadd.f32 %v49, %v201
  %v203 = vpop.f32.mrf.mxu0
  %v204 = vpop.f32.mrf.mxu0
  %v205 = vadd.f32 %v49, %v204
  %v206 = vpop.f32.mrf.mxu0
  %207 = vmatprep.mubr.bf16.mxu0 0
  %208 = vmatmul.mubr.bf16.gmra.mxu0 %v126
  %v209 = vpop.f32.mrf.mxu0
  %v210 = vadd.f32 %v49, %v209
  %v211 = vpop.f32.mrf.mxu0
  %v212 = vpop.f32.mrf.mxu0
  %v213 = vadd.f32 %v49, %v212
  %v214 = vpop.f32.mrf.mxu0
  %215 = vmatprep.mubr.bf16.mxu0 0
  %216 = vmatmul.mubr.bf16.gmra.mxu0 %v129
  %v217 = vpop.f32.mrf.mxu0
  %v218 = vadd.f32 %v49, %v217
  %v219 = vpop.f32.mrf.mxu0
  %v220 = vpop.f32.mrf.mxu0
  %v221 = vadd.f32 %v49, %v220
  %v222 = vpop.f32.mrf.mxu0
  %223 = vmatprep.mubr.bf16.mxu0 0
  %224 = vmatmul.mubr.bf16.gmra.mxu0 %v132
  %v225 = vpop.f32.mrf.mxu0
  %v226 = vadd.f32 %v49, %v225
  %v227 = vpop.f32.mrf.mxu0
  %v228 = vpop.f32.mrf.mxu0
  %v229 = vadd.f32 %v49, %v228
  %v230 = vpop.f32.mrf.mxu0
  %231 = vmatprep.mubr.bf16.mxu0 0
  %232 = vmatmul.mubr.bf16.gmra.mxu0 %v135
  %v233 = vpop.f32.mrf.mxu0
  %v234 = vadd.f32 %v49, %v233
  %v235 = vpop.f32.mrf.mxu0
  %v236 = vpop.f32.mrf.mxu0
  %v237 = vadd.f32 %v49, %v236
  %v238 = vpop.f32.mrf.mxu0
  %239 = vdwg.mxu0
  %v240 = vld [vmem:[%s3] sm:$0x1]
  %v241 = vld [vmem:[%s4] sm:$0x1]
  %vm242 = vcmask 261120
  %v243 = vsel %vm242, %v178, 0.0
  %v244 = vsel %vm242, %v181, 0.0
  %v245 = vadd.f32 %v243, %v244
  %v246 = vsel %vm242, %v186, 0.0
  %v247 = vadd.f32 %v245, %v246
  %v248 = vsel %vm242, %v189, 0.0
  %v249 = vadd.f32 %v247, %v248
  %v250 = vsel %vm242, %v194, 0.0
  %v251 = vadd.f32 %v249, %v250
  %v252 = vsel %vm242, %v197, 0.0
  %v253 = vadd.f32 %v251, %v252
  %v254 = vsel %vm242, %v202, 0.0
  %v255 = vadd.f32 %v253, %v254
  %v256 = vsel %vm242, %v205, 0.0
  %v257 = vadd.f32 %v255, %v256
  %v258 = vsel %vm242, %v210, 0.0
  %v259 = vadd.f32 %v257, %v258
  %v260 = vsel %vm242, %v213, 0.0
  %v261 = vadd.f32 %v259, %v260
  %v262 = vsel %vm242, %v218, 0.0
  %v263 = vadd.f32 %v261, %v262
  %v264 = vsel %vm242, %v221, 0.0
  %v265 = vadd.f32 %v263, %v264
  %v266 = vsel %vm242, %v226, 0.0
  %v267 = vadd.f32 %v265, %v266
  %v268 = vsel %vm242, %v229, 0.0
  %v269 = vadd.f32 %v267, %v268
  %v270 = vsel %vm242, %v234, 0.0
  %v271 = vadd.f32 %v269, %v270
  %v272 = vsel %vm242, %v237, 0.0
  %v273 = vadd.f32 %v271, %v272
  %v274 = vrot.slane %v273, 4
  %v275 = vadd.f32 %v273, %v274
  %v276 = vrot.slane %v275, 2
  %v277 = vadd.f32 %v275, %v276
  %v278 = vrot.slane %v277, 1
  %v279 = vadd.f32 %v277, %v278
  %v280 = vmul.f32 %v279, 0.0078125
  %v281 = vsub.f32 %v178, %v280
  %v282 = vsub.f32 %v181, %v280
  %v283 = vsub.f32 %v186, %v280
  %v284 = vsub.f32 %v189, %v280
  %v285 = vsub.f32 %v194, %v280
  %v286 = vsub.f32 %v197, %v280
  %v287 = vsub.f32 %v202, %v280
  %v288 = vsub.f32 %v205, %v280
  %v289 = vsub.f32 %v210, %v280
  %v290 = vsub.f32 %v213, %v280
  %v291 = vsub.f32 %v218, %v280
  %v292 = vsub.f32 %v221, %v280
  %v293 = vsub.f32 %v226, %v280
  %v294 = vsub.f32 %v229, %v280
  %v295 = vsub.f32 %v234, %v280
  %v296 = vsub.f32 %v237, %v280
  %v297 = vmul.f32 %v281, %v281
  %v298 = vmul.f32 %v282, %v282
  %v299 = vmul.f32 %v283, %v283
  %v300 = vmul.f32 %v284, %v284
  %v301 = vmul.f32 %v285, %v285
  %v302 = vmul.f32 %v286, %v286
  %v303 = vmul.f32 %v287, %v287
  %v304 = vmul.f32 %v288, %v288
  %v305 = vmul.f32 %v289, %v289
  %v306 = vmul.f32 %v290, %v290
  %v307 = vmul.f32 %v291, %v291
  %v308 = vmul.f32 %v292, %v292
  %v309 = vmul.f32 %v293, %v293
  %v310 = vmul.f32 %v294, %v294
  %v311 = vmul.f32 %v295, %v295
  %v312 = vmul.f32 %v296, %v296
  %v313 = vsel %vm242, %v297, 0.0
  %v314 = vsel %vm242, %v298, 0.0
  %v315 = vadd.f32 %v313, %v314
  %v316 = vsel %vm242, %v299, 0.0
  %v317 = vadd.f32 %v315, %v316
  %v318 = vsel %vm242, %v300, 0.0
  %v319 = vadd.f32 %v317, %v318
  %v320 = vsel %vm242, %v301, 0.0
  %v321 = vadd.f32 %v319, %v320
  %v322 = vsel %vm242, %v302, 0.0
  %v323 = vadd.f32 %v321, %v322
  %v324 = vsel %vm242, %v303, 0.0
  %v325 = vadd.f32 %v323, %v324
  %v326 = vsel %vm242, %v304, 0.0
  %v327 = vadd.f32 %v325, %v326
  %v328 = vsel %vm242, %v305, 0.0
  %v329 = vadd.f32 %v327, %v328
  %v330 = vsel %vm242, %v306, 0.0
  %v331 = vadd.f32 %v329, %v330
  %v332 = vsel %vm242, %v307, 0.0
  %v333 = vadd.f32 %v331, %v332
  %v334 = vsel %vm242, %v308, 0.0
  %v335 = vadd.f32 %v333, %v334
  %v336 = vsel %vm242, %v309, 0.0
  %v337 = vadd.f32 %v335, %v336
  %v338 = vsel %vm242, %v310, 0.0
  %v339 = vadd.f32 %v337, %v338
  %v340 = vsel %vm242, %v311, 0.0
  %v341 = vadd.f32 %v339, %v340
  %v342 = vsel %vm242, %v312, 0.0
  %v343 = vadd.f32 %v341, %v342
  %v344 = vrot.slane %v343, 4
  %v345 = vadd.f32 %v343, %v344
  %v346 = vrot.slane %v345, 2
  %v347 = vadd.f32 %v345, %v346
  %v348 = vrot.slane %v347, 1
  %v349 = vadd.f32 %v347, %v348
  %v350 = vmul.f32 %v349, 0.0078125
  %v351 = vadd.f32 %v350, 1e-05
  %v352 = vrsqrt.pop %v351
  %v353 = vmul.f32 %v240, %v352
  %v355 = vlaneseq
  %v356 = vshrl.u32 %v355, 7
  %v357 = vsub.s32 0, %v356
  %v358 = vrot.slane %v353, %v357
  %v360 = vmul.f32 %v281, %v358
  %v361 = vmul.f32 %v282, %v358
  %v362 = vmul.f32 %v283, %v358
  %v363 = vmul.f32 %v284, %v358
  %v364 = vmul.f32 %v285, %v358
  %v365 = vmul.f32 %v286, %v358
  %v366 = vmul.f32 %v287, %v358
  %v367 = vmul.f32 %v288, %v358
  %v368 = vmul.f32 %v289, %v358
  %v369 = vmul.f32 %v290, %v358
  %v370 = vmul.f32 %v291, %v358
  %v371 = vmul.f32 %v292, %v358
  %v372 = vmul.f32 %v293, %v358
  %v373 = vmul.f32 %v294, %v358
  %v374 = vmul.f32 %v295, %v358
  %v375 = vmul.f32 %v296, %v358
  %v377 = vlaneseq
  %v378 = vshrl.u32 %v377, 7
  %v379 = vsub.s32 0, %v378
  %v380 = vrot.slane %v241, %v379
  %v382 = vadd.f32 %v360, %v380
  %v383 = vadd.f32 %v361, %v380
  %v384 = vadd.f32 %v362, %v380
  %v385 = vadd.f32 %v363, %v380
  %v386 = vadd.f32 %v364, %v380
  %v387 = vadd.f32 %v365, %v380
  %v388 = vadd.f32 %v366, %v380
  %v389 = vadd.f32 %v367, %v380
  %v390 = vadd.f32 %v368, %v380
  %v391 = vadd.f32 %v369, %v380
  %v392 = vadd.f32 %v370, %v380
  %v393 = vadd.f32 %v371, %v380
  %v394 = vadd.f32 %v372, %v380
  %v395 = vadd.f32 %v373, %v380
  %v396 = vadd.f32 %v374, %v380
  %v397 = vadd.f32 %v375, %v380
  %v398 = vmax.f32 %v382, 0.0
  %v399 = vmax.f32 %v383, 0.0
  %v400 = vmax.f32 %v384, 0.0
  %v401 = vmax.f32 %v385, 0.0
  %v402 = vmax.f32 %v386, 0.0
  %v403 = vmax.f32 %v387, 0.0
  %v404 = vmax.f32 %v388, 0.0
  %v405 = vmax.f32 %v389, 0.0
  %v406 = vmax.f32 %v390, 0.0
  %v407 = vmax.f32 %v391, 0.0
  %v408 = vmax.f32 %v392, 0.0
  %v409 = vmax.f32 %v393, 0.0
  %v410 = vmax.f32 %v394, 0.0
  %v411 = vmax.f32 %v395, 0.0
  %v412 = vmax.f32 %v396, 0.0
  %v413 = vmax.f32 %v397, 0.0
  %v414 = vpack.c.bf16 %v399, %v398
  %v415 = vpack.c.bf16 %v401, %v400
  %v416 = vpack.c.bf16 %v403, %v402
  %v417 = vpack.c.bf16 %v405, %v404
  %v418 = vpack.c.bf16 %v407, %v406
  %v419 = vpack.c.bf16 %v409, %v408
  %v420 = vpack.c.bf16 %v411, %v410
  %v421 = vpack.c.bf16 %v413, %v412
  %v430 = vunpack.c.l.b16 %v414
  %v431 = vunpack.c.h.b16 %v414
  %v432 = vunpack.c.l.b16 %v415
  %v433 = vunpack.c.h.b16 %v415
  %v434 = vunpack.c.l.b16 %v416
  %v435 = vunpack.c.h.b16 %v416
  %v436 = vunpack.c.l.b16 %v417
  %v437 = vunpack.c.h.b16 %v417
  %v438 = vunpack.c.l.b16 %v418
  %v439 = vunpack.c.h.b16 %v418
  %v440 = vunpack.c.l.b16 %v419
  %v441 = vunpack.c.h.b16 %v419
  %v442 = vunpack.c.l.b16 %v420
  %v443 = vunpack.c.h.b16 %v420
  %v444 = vunpack.c.l.b16 %v421
  %v445 = vunpack.c.h.b16 %v421
  %v446 = vpack.c.b16 %v430, %v430
  %v447 = vpack.c.b16 %v431, %v431
  %v448 = vpack.c.b16 %v432, %v432
  %v449 = vpack.c.b16 %v433, %v433
  %v450 = vpack.c.b16 %v434, %v434
  %v451 = vpack.c.b16 %v435, %v435
  %v452 = vpack.c.b16 %v436, %v436
  %v453 = vpack.c.b16 %v437, %v437
  %v454 = vpack.c.b16 %v438, %v438
  %v455 = vpack.c.b16 %v439, %v439
  %v456 = vpack.c.b16 %v440, %v440
  %v457 = vpack.c.b16 %v441, %v441
  %v458 = vpack.c.b16 %v442, %v442
  %v459 = vpack.c.b16 %v443, %v443
  %v460 = vpack.c.b16 %v444, %v444
  %v461 = vpack.c.b16 %v445, %v445
  %vm478 = vcmask 257024
  %479 = vst.msk [vmem:[%s5] sm:$0xf] %vm478, %v446
  %480 = vst.msk [vmem:[%s5 + $0x4] sm:$0xf] %vm478, %v447
  %481 = vst.msk [vmem:[%s5 + $0x8] sm:$0xf] %vm478, %v448
  %482 = vst.msk [vmem:[%s5 + $0xc] sm:$0xf] %vm478, %v449
  %483 = vst.msk [vmem:[%s5 + $0x10] sm:$0xf] %vm478, %v450
  %484 = vst.msk [vmem:[%s5 + $0x14] sm:$0xf] %vm478, %v451
  %485 = vst.msk [vmem:[%s5 + $0x18] sm:$0xf] %vm478, %v452
  %486 = vst.msk [vmem:[%s5 + $0x1c] sm:$0xf] %vm478, %v453
  %487 = vst.msk [vmem:[%s5 + $0x20] sm:$0xf] %vm478, %v454
  %488 = vst.msk [vmem:[%s5 + $0x24] sm:$0xf] %vm478, %v455
  %489 = vst.msk [vmem:[%s5 + $0x28] sm:$0xf] %vm478, %v456
  %490 = vst.msk [vmem:[%s5 + $0x2c] sm:$0xf] %vm478, %v457
  %491 = vst.msk [vmem:[%s5 + $0x30] sm:$0xf] %vm478, %v458
  %492 = vst.msk [vmem:[%s5 + $0x34] sm:$0xf] %vm478, %v459
  %493 = vst.msk [vmem:[%s5 + $0x38] sm:$0xf] %vm478, %v460
  %494 = vst.msk [vmem:[%s5 + $0x3c] sm:$0xf] %vm478, %v461
  // Predicated region
  $region22: #{sac_forward.3} parent=0 // pred_check
    _
  $region23: #{sac_forward.3} parent=0 // pred_check_branch
    %496 = sbr.rel (0) target = $region25
  $region24: #{sac_forward.3} parent=0 // pred_region
    _
  $region25: #{sac_forward.3} parent=0 // pred_fallthru
    _
  // Predicated region
  $region26: #{sac_forward.3} parent=0 // pred_check
    _
  $region27: #{sac_forward.3} parent=0 // pred_check_branch
    %498 = sbr.rel (0) target = $region29
  $region28: #{sac_forward.3} parent=0 // pred_region
    _
  $region29: #{sac_forward.3} parent=0 // pred_fallthru
    _

// kernel: sac_forward.4
$region0: #{sac_forward.4}
  #allocation0 [shape = 'u32[]', space=smem, size = 0x4, offset = 0x4, fixed_abs, tag = 'smem constant byte address 0x4 - core index']
  #allocation1 [shape = 'u32[144,128]{1,0:T(1,128)}', space=vmem, size = 0x12000, scoped, tag = 'internal scratch']
  %s0 = inlined_call_operand.vmem [shape: bf16[32,800], index: 0, kind: input, shape index: {}]
  %s1 = inlined_call_operand.vmem [shape: bf16[800,64], index: 1, kind: input, shape index: {}]
  %s2 = inlined_call_operand.vmem [shape: f32[1,64], index: 2, kind: input, shape index: {}]
  %s3 = inlined_call_operand.vmem [shape: f32[1,64], index: 3, kind: input, shape index: {}]
  %s4 = inlined_call_operand.vmem [shape: f32[1,64], index: 4, kind: input, shape index: {}]
  %s5 = inlined_call_operand.vmem [shape: bf16[32,64], index: 5, kind: output, shape index: {}]
  %s6 = sld [smem:[#allocation0]]
  $region30: #{sac_forward.4} parent=0
    _
  %s8 = ssub.s32 1, %s6
  %s9 = scalar_select 0, %s8, %s6
  // Predicated region
  $region2: #{sac_forward.4} parent=0 // pred_check
    _
  $region3: #{sac_forward.4} parent=0 // pred_check_branch
    %11 = sbr.rel (0) target = $region5
  $region4: #{sac_forward.4} parent=0 // pred_region
    _
  $region5: #{sac_forward.4} parent=0 // pred_fallthru
    _
  // Predicated region
  $region6: #{sac_forward.4} parent=0 // pred_check
    _
  $region7: #{sac_forward.4} parent=0 // pred_check_branch
    %13 = sbr.rel (0) target = $region9
  $region8: #{sac_forward.4} parent=0 // pred_region
    _
  $region9: #{sac_forward.4} parent=0 // pred_fallthru
    _
  // Predicated region
  $region10: #{sac_forward.4} parent=0 // pred_check
    _
  $region11: #{sac_forward.4} parent=0 // pred_check_branch
    %15 = sbr.rel (0) target = $region13
  $region12: #{sac_forward.4} parent=0 // pred_region
    _
  $region13: #{sac_forward.4} parent=0 // pred_fallthru
    _
  // Predicated region
  $region14: #{sac_forward.4} parent=0 // pred_check
    _
  $region15: #{sac_forward.4} parent=0 // pred_check_branch
    %17 = sbr.rel (0) target = $region17
  $region16: #{sac_forward.4} parent=0 // pred_region
    _
  $region17: #{sac_forward.4} parent=0 // pred_fallthru
    _
  // Predicated region
  $region18: #{sac_forward.4} parent=0 // pred_check
    _
  $region19: #{sac_forward.4} parent=0 // pred_check_branch
    %19 = sbr.rel (0) target = $region21
  $region20: #{sac_forward.4} parent=0 // pred_region
    _
  $region21: #{sac_forward.4} parent=0 // pred_fallthru
    _
  %v21 = vld [vmem:[%s0] sm:$0xff]
  %v22 = vld [vmem:[%s0 + $0x8] sm:$0xff]
  %v23 = vld [vmem:[%s0 + $0x10] sm:$0xff]
  %v24 = vld [vmem:[%s0 + $0x18] sm:$0xf]
  %v25 = vld [vmem:[%s0 + $0x1c] sm:$0xff]
  %v26 = vld [vmem:[%s0 + $0x24] sm:$0xff]
  %v27 = vld [vmem:[%s0 + $0x2c] sm:$0xff]
  %v28 = vld [vmem:[%s0 + $0x34] sm:$0xf]
  %v29 = vld [vmem:[%s0 + $0x38] sm:$0xff]
  %v30 = vld [vmem:[%s0 + $0x40] sm:$0xff]
  %v31 = vld [vmem:[%s0 + $0x48] sm:$0xff]
  %v32 = vld [vmem:[%s0 + $0x50] sm:$0xf]
  %v33 = vld [vmem:[%s0 + $0x54] sm:$0xff]
  %v34 = vld [vmem:[%s0 + $0x5c] sm:$0xff]
  %v35 = vld [vmem:[%s0 + $0x64] sm:$0xff]
  %v36 = vld [vmem:[%s0 + $0x6c] sm:$0xf]
  %v37 = vld [vmem:[%s1] sm:$0xf]
  %v38 = vld [vmem:[%s1 + $0x4] sm:$0xf]
  %v39 = vld [vmem:[%s1 + $0x8] sm:$0xf]
  %v40 = vld [vmem:[%s1 + $0xc] sm:$0xf]
  %v41 = vld [vmem:[%s1 + $0x10] sm:$0xf]
  %v42 = vld [vmem:[%s1 + $0x14] sm:$0xf]
  %v43 = vld [vmem:[%s1 + $0x18] sm:$0xf]
  %v44 = vld [vmem:[%s1 + $0x1c] sm:$0xf]
  %v45 = vld [vmem:[%s1 + $0x20] sm:$0xf]
  %v46 = vld [vmem:[%s1 + $0x24] sm:$0xf]
  %v47 = vld [vmem:[%s1 + $0x28] sm:$0xf]
  %v48 = vld [vmem:[%s1 + $0x2c] sm:$0xf]
  %v49 = vld [vmem:[%s1 + $0x30] sm:$0xf]
  %v50 = vld [vmem:[%s1 + $0x34] sm:$0xf]
  %v51 = vld [vmem:[%s1 + $0x38] sm:$0xf]
  %v52 = vld [vmem:[%s1 + $0x3c] sm:$0xf]
  %v53 = vld [vmem:[%s1 + $0x40] sm:$0xf]
  %v54 = vld [vmem:[%s1 + $0x44] sm:$0xf]
  %v55 = vld [vmem:[%s1 + $0x48] sm:$0xf]
  %v56 = vld [vmem:[%s1 + $0x4c] sm:$0xf]
  %v57 = vld [vmem:[%s1 + $0x50] sm:$0xf]
  %v58 = vld [vmem:[%s1 + $0x54] sm:$0xf]
  %v59 = vld [vmem:[%s1 + $0x58] sm:$0xf]
  %v60 = vld [vmem:[%s1 + $0x5c] sm:$0xf]
  %v61 = vld [vmem:[%s1 + $0x60] sm:$0xf]
  %v62 = vld [vmem:[%s1 + $0x64] sm:$0xf]
  %v63 = vld [vmem:[%s1 + $0x68] sm:$0xf]
  %v64 = vld [vmem:[%s1 + $0x6c] sm:$0xf]
  %v65 = vld [vmem:[%s1 + $0x70] sm:$0xf]
  %v66 = vld [vmem:[%s1 + $0x74] sm:$0xf]
  %v67 = vld [vmem:[%s1 + $0x78] sm:$0xf]
  %v68 = vld [vmem:[%s1 + $0x7c] sm:$0xf]
  %v69 = vld [vmem:[%s1 + $0x80] sm:$0xf]
  %v70 = vld [vmem:[%s1 + $0x84] sm:$0xf]
  %v71 = vld [vmem:[%s1 + $0x88] sm:$0xf]
  %v72 = vld [vmem:[%s1 + $0x8c] sm:$0xf]
  %v73 = vld [vmem:[%s1 + $0x90] sm:$0xf]
  %v74 = vld [vmem:[%s1 + $0x94] sm:$0xf]
  %v75 = vld [vmem:[%s1 + $0x98] sm:$0xf]
  %v76 = vld [vmem:[%s1 + $0x9c] sm:$0xf]
  %v77 = vld [vmem:[%s1 + $0xa0] sm:$0xf]
  %v78 = vld [vmem:[%s1 + $0xa4] sm:$0xf]
  %v79 = vld [vmem:[%s1 + $0xa8] sm:$0xf]
  %v80 = vld [vmem:[%s1 + $0xac] sm:$0xf]
  %v81 = vld [vmem:[%s1 + $0xb0] sm:$0xf]
  %v82 = vld [vmem:[%s1 + $0xb4] sm:$0xf]
  %v83 = vld [vmem:[%s1 + $0xb8] sm:$0xf]
  %v84 = vld [vmem:[%s1 + $0xbc] sm:$0xf]
  %v85 = vld [vmem:[%s1 + $0xc0] sm:$0xf]
  %v86 = vld [vmem:[%s1 + $0xc4] sm:$0xf]
  %v87 = vld [vmem:[%s1 + $0xc8] sm:$0xf]
  %v88 = vld [vmem:[%s1 + $0xcc] sm:$0xf]
  %v89 = vld [vmem:[%s1 + $0xd0] sm:$0xf]
  %v90 = vld [vmem:[%s1 + $0xd4] sm:$0xf]
  %v91 = vld [vmem:[%s1 + $0xd8] sm:$0xf]
  %v92 = vld [vmem:[%s1 + $0xdc] sm:$0xf]
  %v93 = vld [vmem:[%s1 + $0xe0] sm:$0xf]
  %v94 = vld [vmem:[%s1 + $0xe4] sm:$0xf]
  %v95 = vld [vmem:[%s1 + $0xe8] sm:$0xf]
  %v96 = vld [vmem:[%s1 + $0xec] sm:$0xf]
  %v97 = vld [vmem:[%s1 + $0xf0] sm:$0xf]
  %v98 = vld [vmem:[%s1 + $0xf4] sm:$0xf]
  %v99 = vld [vmem:[%s1 + $0xf8] sm:$0xf]
  %v100 = vld [vmem:[%s1 + $0xfc] sm:$0xf]
  %v101 = vld [vmem:[%s1 + $0x100] sm:$0xf]
  %v102 = vld [vmem:[%s1 + $0x104] sm:$0xf]
  %v103 = vld [vmem:[%s1 + $0x108] sm:$0xf]
  %v104 = vld [vmem:[%s1 + $0x10c] sm:$0xf]
  %v105 = vld [vmem:[%s1 + $0x110] sm:$0xf]
  %v106 = vld [vmem:[%s1 + $0x114] sm:$0xf]
  %v107 = vld [vmem:[%s1 + $0x118] sm:$0xf]
  %v108 = vld [vmem:[%s1 + $0x11c] sm:$0xf]
  %v109 = vld [vmem:[%s1 + $0x120] sm:$0xf]
  %v110 = vld [vmem:[%s1 + $0x124] sm:$0xf]
  %v111 = vld [vmem:[%s1 + $0x128] sm:$0xf]
  %v112 = vld [vmem:[%s1 + $0x12c] sm:$0xf]
  %v113 = vld [vmem:[%s1 + $0x130] sm:$0xf]
  %v114 = vld [vmem:[%s1 + $0x134] sm:$0xf]
  %v115 = vld [vmem:[%s1 + $0x138] sm:$0xf]
  %v116 = vld [vmem:[%s1 + $0x13c] sm:$0xf]
  %v117 = vld [vmem:[%s1 + $0x140] sm:$0xf]
  %v118 = vld [vmem:[%s1 + $0x144] sm:$0xf]
  %v119 = vld [vmem:[%s1 + $0x148] sm:$0xf]
  %v120 = vld [vmem:[%s1 + $0x14c] sm:$0xf]
  %v121 = vld [vmem:[%s1 + $0x150] sm:$0xf]
  %v122 = vld [vmem:[%s1 + $0x154] sm:$0xf]
  %v123 = vld [vmem:[%s1 + $0x158] sm:$0xf]
  %v124 = vld [vmem:[%s1 + $0x15c] sm:$0xf]
  %v125 = vld [vmem:[%s1 + $0x160] sm:$0xf]
  %v126 = vld [vmem:[%s1 + $0x164] sm:$0xf]
  %v127 = vld [vmem:[%s1 + $0x168] sm:$0xf]
  %v128 = vld [vmem:[%s1 + $0x16c] sm:$0xf]
  %v129 = vld [vmem:[%s1 + $0x170] sm:$0xf]
  %v130 = vld [vmem:[%s1 + $0x174] sm:$0xf]
  %v131 = vld [vmem:[%s1 + $0x178] sm:$0xf]
  %v132 = vld [vmem:[%s1 + $0x17c] sm:$0xf]
  %v133 = vld [vmem:[%s1 + $0x180] sm:$0xf]
  %v134 = vld [vmem:[%s1 + $0x184] sm:$0xf]
  %v135 = vld [vmem:[%s1 + $0x188] sm:$0xf]
  %v136 = vld [vmem:[%s1 + $0x18c] sm:$0xf]
  %v137 = vld [vmem:[%s2] sm:$0x1]
  %v139 = vlaneseq
  %v140 = vshrl.u32 %v139, 7
  %v141 = vsub.s32 0, %v140
  %v142 = vrot.slane %v137, %v141
  %v160 = vunpack.c.l.b16 %v21
  %v161 = vunpack.c.h.b16 %v21
  %v162 = vunpack.c.l.b16 %v22
  %v163 = vunpack.c.h.b16 %v22
  %v164 = vunpack.c.l.b16 %v23
  %v165 = vunpack.c.h.b16 %v23
  %v166 = vunpack.c.l.b16 %v24
  %v167 = vunpack.c.l.b16 %v25
  %v168 = vunpack.c.h.b16 %v25
  %v169 = vunpack.c.l.b16 %v26
  %v170 = vunpack.c.h.b16 %v26
  %v171 = vunpack.c.l.b16 %v27
  %v172 = vunpack.c.h.b16 %v27
  %v173 = vunpack.c.l.b16 %v28
  %v174 = vunpack.c.l.b16 %v29
  %v175 = vunpack.c.h.b16 %v29
  %v176 = vunpack.c.l.b16 %v30
  %v177 = vunpack.c.h.b16 %v30
  %v178 = vunpack.c.l.b16 %v31
  %v179 = vunpack.c.h.b16 %v31
  %v180 = vunpack.c.l.b16 %v32
  %v181 = vunpack.c.l.b16 %v33
  %v182 = vunpack.c.h.b16 %v33
  %v183 = vunpack.c.l.b16 %v34
  %v184 = vunpack.c.h.b16 %v34
  %v185 = vunpack.c.l.b16 %v35
  %v186 = vunpack.c.h.b16 %v35
  %v187 = vunpack.c.l.b16 %v36
  %v188 = vpack.c.b16 %v167, %v160
  %v189 = vpack.c.b16 %v168, %v161
  %v190 = vpack.c.b16 %v169, %v162
  %v191 = vpack.c.b16 %v170, %v163
  %v192 = vpack.c.b16 %v171, %v164
  %v193 = vpack.c.b16 %v172, %v165
  %v194 = vpack.c.b16 %v173, %v166
  %v195 = vpack.c.b16 %v181, %v174
  %v196 = vpack.c.b16 %v182, %v175
  %v197 = vpack.c.b16 %v183, %v176
  %v198 = vpack.c.b16 %v184, %v177
  %v199 = vpack.c.b16 %v185, %v178
  %v200 = vpack.c.b16 %v186, %v179
  %v201 = vpack.c.b16 %v187, %v180
  %v314 = vunpack.c.l.b16 %v37
  %v315 = vunpack.c.l.b16 %v38
  %v316 = vunpack.c.l.b16 %v39
  %v317 = vunpack.c.l.b16 %v40
  %v318 = vunpack.c.l.b16 %v41
  %v319 = vunpack.c.l.b16 %v42
  %v320 = vunpack.c.l.b16 %v43
  %v321 = vunpack.c.l.b16 %v44
  %v322 = vunpack.c.l.b16 %v45
  %v323 = vunpack.c.l.b16 %v46
  %v324 = vunpack.c.l.b16 %v47
  %v325 = vunpack.c.l.b16 %v48
  %v326 = vunpack.c.l.b16 %v49
  %v327 = vunpack.c.l.b16 %v50
  %v328 = vunpack.c.l.b16 %v51
  %v329 = vunpack.c.l.b16 %v52
  %v330 = vunpack.c.l.b16 %v53
  %v331 = vunpack.c.l.b16 %v54
  %v332 = vunpack.c.l.b16 %v55
  %v333 = vunpack.c.l.b16 %v56
  %v334 = vunpack.c.l.b16 %v57
  %v335 = vunpack.c.l.b16 %v58
  %v336 = vunpack.c.l.b16 %v59
  %v337 = vunpack.c.l.b16 %v60
  %v338 = vunpack.c.l.b16 %v61
  %v339 = vunpack.c.l.b16 %v62
  %v340 = vunpack.c.l.b16 %v63
  %v341 = vunpack.c.l.b16 %v64
  %v342 = vunpack.c.l.b16 %v65
  %v343 = vunpack.c.l.b16 %v66
  %v344 = vunpack.c.l.b16 %v67
  %v345 = vunpack.c.l.b16 %v68
  %v346 = vunpack.c.l.b16 %v69
  %v347 = vunpack.c.l.b16 %v70
  %v348 = vunpack.c.l.b16 %v71
  %v349 = vunpack.c.l.b16 %v72
  %v350 = vunpack.c.l.b16 %v73
  %v351 = vunpack.c.l.b16 %v74
  %v352 = vunpack.c.l.b16 %v75
  %v353 = vunpack.c.l.b16 %v76
  %v354 = vunpack.c.l.b16 %v77
  %v355 = vunpack.c.l.b16 %v78
  %v356 = vunpack.c.l.b16 %v79
  %v357 = vunpack.c.l.b16 %v80
  %v358 = vunpack.c.l.b16 %v81
  %v359 = vunpack.c.l.b16 %v82
  %v360 = vunpack.c.l.b16 %v83
  %v361 = vunpack.c.l.b16 %v84
  %v362 = vunpack.c.l.b16 %v85
  %v363 = vunpack.c.l.b16 %v86
  %v364 = vunpack.c.l.b16 %v87
  %v365 = vunpack.c.l.b16 %v88
  %v366 = vunpack.c.l.b16 %v89
  %v367 = vunpack.c.l.b16 %v90
  %v368 = vunpack.c.l.b16 %v91
  %v369 = vunpack.c.l.b16 %v92
  %v370 = vunpack.c.l.b16 %v93
  %v371 = vunpack.c.l.b16 %v94
  %v372 = vunpack.c.l.b16 %v95
  %v373 = vunpack.c.l.b16 %v96
  %v374 = vunpack.c.l.b16 %v97
  %v375 = vunpack.c.l.b16 %v98
  %v376 = vunpack.c.l.b16 %v99
  %v377 = vunpack.c.l.b16 %v100
  %v378 = vunpack.c.l.b16 %v101
  %v379 = vunpack.c.l.b16 %v102
  %v380 = vunpack.c.l.b16 %v103
  %v381 = vunpack.c.l.b16 %v104
  %v382 = vunpack.c.l.b16 %v105
  %v383 = vunpack.c.l.b16 %v106
  %v384 = vunpack.c.l.b16 %v107
  %v385 = vunpack.c.l.b16 %v108
  %v386 = vunpack.c.l.b16 %v109
  %v387 = vunpack.c.l.b16 %v110
  %v388 = vunpack.c.l.b16 %v111
  %v389 = vunpack.c.l.b16 %v112
  %v390 = vunpack.c.l.b16 %v113
  %v391 = vunpack.c.l.b16 %v114
  %v392 = vunpack.c.l.b16 %v115
  %v393 = vunpack.c.l.b16 %v116
  %v394 = vunpack.c.l.b16 %v117
  %v395 = vunpack.c.l.b16 %v118
  %v396 = vunpack.c.l.b16 %v119
  %v397 = vunpack.c.l.b16 %v120
  %v398 = vunpack.c.l.b16 %v121
  %v399 = vunpack.c.l.b16 %v122
  %v400 = vunpack.c.l.b16 %v123
  %v401 = vunpack.c.l.b16 %v124
  %v402 = vunpack.c.l.b16 %v125
  %v403 = vunpack.c.l.b16 %v126
  %v404 = vunpack.c.l.b16 %v127
  %v405 = vunpack.c.l.b16 %v128
  %v406 = vunpack.c.l.b16 %v129
  %v407 = vunpack.c.l.b16 %v130
  %v408 = vunpack.c.l.b16 %v131
  %v409 = vunpack.c.l.b16 %v132
  %v410 = vunpack.c.l.b16 %v133
  %v411 = vunpack.c.l.b16 %v134
  %v412 = vunpack.c.l.b16 %v135
  %v413 = vunpack.c.l.b16 %v136
  %v414 = vpack.c.b16 %v315, %v314
  %v415 = vpack.c.b16 %v317, %v316
  %v416 = vpack.c.b16 %v319, %v318
  %v417 = vpack.c.b16 %v321, %v320
  %v418 = vpack.c.b16 %v323, %v322
  %v419 = vpack.c.b16 %v325, %v324
  %v420 = vpack.c.b16 %v327, %v326
  %v421 = vpack.c.b16 %v329, %v328
  %v422 = vpack.c.b16 %v331, %v330
  %v423 = vpack.c.b16 %v333, %v332
  %v424 = vpack.c.b16 %v335, %v334
  %v425 = vpack.c.b16 %v337, %v336
  %v426 = vpack.c.b16 %v339, %v338
  %v427 = vpack.c.b16 %v341, %v340
  %v428 = vpack.c.b16 %v343, %v342
  %v429 = vpack.c.b16 %v345, %v344
  %v430 = vpack.c.b16 %v347, %v346
  %v431 = vpack.c.b16 %v349, %v348
  %v432 = vpack.c.b16 %v351, %v350
  %v433 = vpack.c.b16 %v353, %v352
  %v434 = vpack.c.b16 %v355, %v354
  %v435 = vpack.c.b16 %v357, %v356
  %v436 = vpack.c.b16 %v359, %v358
  %v437 = vpack.c.b16 %v361, %v360
  %v438 = vpack.c.b16 %v363, %v362
  %v439 = vpack.c.b16 %v365, %v364
  %v440 = vpack.c.b16 %v367, %v366
  %v441 = vpack.c.b16 %v369, %v368
  %v442 = vpack.c.b16 %v371, %v370
  %v443 = vpack.c.b16 %v373, %v372
  %v444 = vpack.c.b16 %v375, %v374
  %v445 = vpack.c.b16 %v377, %v376
  %v446 = vpack.c.b16 %v379, %v378
  %v447 = vpack.c.b16 %v381, %v380
  %v448 = vpack.c.b16 %v383, %v382
  %v449 = vpack.c.b16 %v385, %v384
  %v450 = vpack.c.b16 %v387, %v386
  %v451 = vpack.c.b16 %v389, %v388
  %v452 = vpack.c.b16 %v391, %v390
  %v453 = vpack.c.b16 %v393, %v392
  %v454 = vpack.c.b16 %v395, %v394
  %v455 = vpack.c.b16 %v397, %v396
  %v456 = vpack.c.b16 %v399, %v398
  %v457 = vpack.c.b16 %v401, %v400
  %v458 = vpack.c.b16 %v403, %v402
  %v459 = vpack.c.b16 %v405, %v404
  %v460 = vpack.c.b16 %v407, %v406
  %v461 = vpack.c.b16 %v409, %v408
  %v462 = vpack.c.b16 %v411, %v410
  %v463 = vpack.c.b16 %v413, %v412
  %vm514 = vcmask 261120
  %v516 = vsel %vm514, %v194, 0
  %v519 = vsel %vm514, %v201, 0
  %521 = vmatprep.subr.bf16.mxu0 0
  %522 = vmatpush1.bf16.msra.mxu0 %v421
  %523 = vmatprep.subr.bf16.mxu0 0
  %524 = vmatpush1.bf16.msra.mxu0 %v420
  %525 = vmatprep.subr.bf16.mxu0 0
  %526 = vmatpush1.bf16.msra.mxu0 %v419
  %527 = vmatprep.subr.bf16.mxu0 0
  %528 = vmatpush1.bf16.msra.mxu0 %v418
  %529 = vmatprep.subr.bf16.mxu0 0
  %530 = vmatpush1.bf16.msra.mxu0 %v417
  %531 = vmatprep.subr.bf16.mxu0 0
  %532 = vmatpush1.bf16.msra.mxu0 %v416
  %533 = vmatprep.subr.bf16.mxu0 0
  %534 = vmatpush1.bf16.msra.mxu0 %v415
  %535 = vmatprep.subr.bf16.mxu0 0
  %536 = vmatpush1.bf16.msra.mxu0 %v414
  %537 = vmatprep.subr.bf16.mxu0 0
  %538 = vmatpush2.bf16.msra.mxu0 %v429
  %539 = vmatprep.subr.bf16.mxu0 0
  %540 = vmatpush2.bf16.msra.mxu0 %v428
  %541 = vmatprep.subr.bf16.mxu0 0
  %542 = vmatpush2.bf16.msra.mxu0 %v427
  %543 = vmatprep.subr.bf16.mxu0 0
  %544 = vmatpush2.bf16.msra.mxu0 %v426
  %545 = vmatprep.subr.bf16.mxu0 0
  %546 = vmatpush2.bf16.msra.mxu0 %v425
  %547 = vmatprep.subr.bf16.mxu0 0
  %548 = vmatpush2.bf16.msra.mxu0 %v424
  %549 = vmatprep.subr.bf16.mxu0 0
  %550 = vmatpush2.bf16.msra.mxu0 %v423
  %551 = vmatprep.subr.bf16.mxu0 0
  %552 = vmatpush2.bf16.msra.mxu0 %v422
  %553 = vmatprep.mubr.bf16.mxu0 %v189
  %554 = vmatmul.mubr.bf16.gmra.mxu0 %v188
  %v555 = vpop.f32.mrf.mxu0
  %v556 = vadd.f32 %v142, %v555
  %v557 = vpop.f32.mrf.mxu0
  %v558 = vpop.f32.mrf.mxu0
  %v559 = vadd.f32 %v142, %v558
  %v560 = vpop.f32.mrf.mxu0
  %561 = vmatprep.mubr.bf16.mxu0 %v196
  %562 = vmatmul.mubr.bf16.gmra.mxu0 %v195
  %v563 = vpop.f32.mrf.mxu0
  %v564 = vadd.f32 %v142, %v563
  %v565 = vpop.f32.mrf.mxu0
  %v566 = vpop.f32.mrf.mxu0
  %v567 = vadd.f32 %v142, %v566
  %v568 = vpop.f32.mrf.mxu0
  %569 = vdwg.mxu0
  %570 = vmatprep.subr.bf16.mxu0 0
  %571 = vmatpush1.bf16.msra.mxu0 %v437
  %572 = vmatprep.subr.bf16.mxu0 0
  %573 = vmatpush1.bf16.msra.mxu0 %v436
  %574 = vmatprep.subr.bf16.mxu0 0
  %575 = vmatpush1.bf16.msra.mxu0 %v435
  %576 = vmatprep.subr.bf16.mxu0 0
  %577 = vmatpush1.bf16.msra.mxu0 %v434
  %578 = vmatprep.subr.bf16.mxu0 0
  %579 = vmatpush1.bf16.msra.mxu0 %v433
  %580 = vmatprep.subr.bf16.mxu0 0
  %581 = vmatpush1.bf16.msra.mxu0 %v432
  %582 = vmatprep.subr.bf16.mxu0 0
  %583 = vmatpush1.bf16.msra.mxu0 %v431
  %584 = vmatprep.subr.bf16.mxu0 0
  %585 = vmatpush1.bf16.msra.mxu0 %v430
  %586 = vmatprep.subr.bf16.mxu0 0
  %587 = vmatpush2.bf16.msra.mxu0 %v445
  %588 = vmatprep.subr.bf16.mxu0 0
  %589 = vmatpush2.bf16.msra.mxu0 %v444
  %590 = vmatprep.subr.bf16.mxu0 0
  %591 = vmatpush2.bf16.msra.mxu0 %v443
  %592 = vmatprep.subr.bf16.mxu0 0
  %593 = vmatpush2.bf16.msra.mxu0 %v442
  %594 = vmatprep.subr.bf16.mxu0 0
  %595 = vmatpush2.bf16.msra.mxu0 %v441
  %596 = vmatprep.subr.bf16.mxu0 0
  %597 = vmatpush2.bf16.msra.mxu0 %v440
  %598 = vmatprep.subr.bf16.mxu0 0
  %599 = vmatpush2.bf16.msra.mxu0 %v439
  %600 = vmatprep.subr.bf16.mxu0 0
  %601 = vmatpush2.bf16.msra.mxu0 %v438
  %602 = vmatprep.mubr.bf16.mxu0 %v191
  %603 = vmatmul.mubr.bf16.gmra.mxu0 %v190
  %v604 = vpop.f32.mrf.mxu0
  %v605 = vadd.f32 %v556, %v604
  %v606 = vpop.f32.mrf.mxu0
  %v607 = vpop.f32.mrf.mxu0
  %v608 = vadd.f32 %v559, %v607
  %v609 = vpop.f32.mrf.mxu0
  %610 = vmatprep.mubr.bf16.mxu0 %v198
  %611 = vmatmul.mubr.bf16.gmra.mxu0 %v197
  %v612 = vpop.f32.mrf.mxu0
  %v613 = vadd.f32 %v564, %v612
  %v614 = vpop.f32.mrf.mxu0
  %v615 = vpop.f32.mrf.mxu0
  %v616 = vadd.f32 %v567, %v615
  %v617 = vpop.f32.mrf.mxu0
  %618 = vdwg.mxu0
  %619 = vmatprep.subr.bf16.mxu0 0
  %620 = vmatpush1.bf16.msra.mxu0 %v453
  %621 = vmatprep.subr.bf16.mxu0 0
  %622 = vmatpush1.bf16.msra.mxu0 %v452
  %623 = vmatprep.subr.bf16.mxu0 0
  %624 = vmatpush1.bf16.msra.mxu0 %v451
  %625 = vmatprep.subr.bf16.mxu0 0
  %626 = vmatpush1.bf16.msra.mxu0 %v450
  %627 = vmatprep.subr.bf16.mxu0 0
  %628 = vmatpush1.bf16.msra.mxu0 %v449
  %629 = vmatprep.subr.bf16.mxu0 0
  %630 = vmatpush1.bf16.msra.mxu0 %v448
  %631 = vmatprep.subr.bf16.mxu0 0
  %632 = vmatpush1.bf16.msra.mxu0 %v447
  %633 = vmatprep.subr.bf16.mxu0 0
  %634 = vmatpush1.bf16.msra.mxu0 %v446
  %635 = vmatprep.subr.bf16.mxu0 0
  %636 = vmatpush2.bf16.msra.mxu0 %v461
  %637 = vmatprep.subr.bf16.mxu0 0
  %638 = vmatpush2.bf16.msra.mxu0 %v460
  %639 = vmatprep.subr.bf16.mxu0 0
  %640 = vmatpush2.bf16.msra.mxu0 %v459
  %641 = vmatprep.subr.bf16.mxu0 0
  %642 = vmatpush2.bf16.msra.mxu0 %v458
  %643 = vmatprep.subr.bf16.mxu0 0
  %644 = vmatpush2.bf16.msra.mxu0 %v457
  %645 = vmatprep.subr.bf16.mxu0 0
  %646 = vmatpush2.bf16.msra.mxu0 %v456
  %647 = vmatprep.subr.bf16.mxu0 0
  %648 = vmatpush2.bf16.msra.mxu0 %v455
  %649 = vmatprep.subr.bf16.mxu0 0
  %650 = vmatpush2.bf16.msra.mxu0 %v454
  %651 = vmatprep.mubr.bf16.mxu0 %v193
  %652 = vmatmul.mubr.bf16.gmra.mxu0 %v192
  %v653 = vpop.f32.mrf.mxu0
  %v654 = vadd.f32 %v605, %v653
  %v655 = vpop.f32.mrf.mxu0
  %v656 = vpop.f32.mrf.mxu0
  %v657 = vadd.f32 %v608, %v656
  %v658 = vpop.f32.mrf.mxu0
  %659 = vmatprep.mubr.bf16.mxu0 %v200
  %660 = vmatmul.mubr.bf16.gmra.mxu0 %v199
  %v661 = vpop.f32.mrf.mxu0
  %v662 = vadd.f32 %v613, %v661
  %v663 = vpop.f32.mrf.mxu0
  %v664 = vpop.f32.mrf.mxu0
  %v665 = vadd.f32 %v616, %v664
  %v666 = vpop.f32.mrf.mxu0
  %667 = vdwg.mxu0
  %668 = vmatprep.subr.bf16.mxu0 0
  %669 = vmatpush1.bf16.msra.mxu0 0
  %670 = vmatprep.subr.bf16.mxu0 0
  %671 = vmatpush1.bf16.msra.mxu0 0
  %672 = vmatprep.subr.bf16.mxu0 0
  %673 = vmatpush1.bf16.msra.mxu0 0
  %674 = vmatprep.subr.bf16.mxu0 0
  %675 = vmatpush1.bf16.msra.mxu0 0
  %676 = vmatprep.subr.bf16.mxu0 0
  %677 = vmatpush1.bf16.msra.mxu0 0
  %678 = vmatprep.subr.bf16.mxu0 0
  %679 = vmatpush1.bf16.msra.mxu0 0
  %680 = vmatprep.subr.bf16.mxu0 0
  %681 = vmatpush1.bf16.msra.mxu0 %v463
  %682 = vmatprep.subr.bf16.mxu0 0
  %683 = vmatpush1.bf16.msra.mxu0 %v462
  %684 = vmatprep.subr.bf16.mxu0 0
  %685 = vmatpush2.bf16.msra.mxu0 0
  %686 = vmatprep.subr.bf16.mxu0 0
  %687 = vmatpush2.bf16.msra.mxu0 0
  %688 = vmatprep.subr.bf16.mxu0 0
  %689 = vmatpush2.bf16.msra.mxu0 0
  %690 = vmatprep.subr.bf16.mxu0 0
  %691 = vmatpush2.bf16.msra.mxu0 0
  %692 = vmatprep.subr.bf16.mxu0 0
  %693 = vmatpush2.bf16.msra.mxu0 0
  %694 = vmatprep.subr.bf16.mxu0 0
  %695 = vmatpush2.bf16.msra.mxu0 0
  %696 = vmatprep.subr.bf16.mxu0 0
  %697 = vmatpush2.bf16.msra.mxu0 0
  %698 = vmatprep.subr.bf16.mxu0 0
  %699 = vmatpush2.bf16.msra.mxu0 0
  %700 = vmatprep.mubr.bf16.mxu0 0
  %701 = vmatmul.mubr.bf16.gmra.mxu0 %v516
  %v702 = vpop.f32.mrf.mxu0
  %v703 = vadd.f32 %v654, %v702
  %v704 = vpop.f32.mrf.mxu0
  %v705 = vpop.f32.mrf.mxu0
  %v706 = vadd.f32 %v657, %v705
  %v707 = vpop.f32.mrf.mxu0
  %708 = vmatprep.mubr.bf16.mxu0 0
  %709 = vmatmul.mubr.bf16.gmra.mxu0 %v519
  %v710 = vpop.f32.mrf.mxu0
  %v711 = vadd.f32 %v662, %v710
  %v712 = vpop.f32.mrf.mxu0
  %v713 = vpop.f32.mrf.mxu0
  %v714 = vadd.f32 %v665, %v713
  %v715 = vpop.f32.mrf.mxu0
  %716 = vdwg.mxu0
  %v717 = vld [vmem:[%s3] sm:$0x1]
  %v718 = vld [vmem:[%s4] sm:$0x1]
  %vm719 = vcmask 523264
  %v720 = vsel %vm719, %v703, 0.0
  %v721 = vsel %vm719, %v706, 0.0
  %v722 = vadd.f32 %v720, %v721
  %v723 = vsel %vm719, %v711, 0.0
  %v724 = vadd.f32 %v722, %v723
  %v725 = vsel %vm719, %v714, 0.0
  %v726 = vadd.f32 %v724, %v725
  %v727 = vrot.slane %v726, 4
  %v728 = vadd.f32 %v726, %v727
  %v729 = vrot.slane %v728, 2
  %v730 = vadd.f32 %v728, %v729
  %v731 = vrot.slane %v730, 1
  %v732 = vadd.f32 %v730, %v731
  %v733 = vmul.f32 %v732, 0.03125
  %v734 = vsub.f32 %v703, %v733
  %v735 = vsub.f32 %v706, %v733
  %v736 = vsub.f32 %v711, %v733
  %v737 = vsub.f32 %v714, %v733
  %v738 = vmul.f32 %v734, %v734
  %v739 = vmul.f32 %v735, %v735
  %v740 = vmul.f32 %v736, %v736
  %v741 = vmul.f32 %v737, %v737
  %v742 = vsel %vm719, %v738, 0.0
  %v743 = vsel %vm719, %v739, 0.0
  %v744 = vadd.f32 %v742, %v743
  %v745 = vsel %vm719, %v740, 0.0
  %v746 = vadd.f32 %v744, %v745
  %v747 = vsel %vm719, %v741, 0.0
  %v748 = vadd.f32 %v746, %v747
  %v749 = vrot.slane %v748, 4
  %v750 = vadd.f32 %v748, %v749
  %v751 = vrot.slane %v750, 2
  %v752 = vadd.f32 %v750, %v751
  %v753 = vrot.slane %v752, 1
  %v754 = vadd.f32 %v752, %v753
  %v755 = vmul.f32 %v754, 0.03125
  %v756 = vadd.f32 %v755, 1e-05
  %v757 = vrsqrt.pop %v756
  %v758 = vmul.f32 %v717, %v757
  %v760 = vlaneseq
  %v761 = vshrl.u32 %v760, 7
  %v762 = vsub.s32 0, %v761
  %v763 = vrot.slane %v758, %v762
  %v765 = vmul.f32 %v734, %v763
  %v766 = vmul.f32 %v735, %v763
  %v767 = vmul.f32 %v736, %v763
  %v768 = vmul.f32 %v737, %v763
  %v770 = vlaneseq
  %v771 = vshrl.u32 %v770, 7
  %v772 = vsub.s32 0, %v771
  %v773 = vrot.slane %v718, %v772
  %v775 = vadd.f32 %v765, %v773
  %v776 = vadd.f32 %v766, %v773
  %v777 = vadd.f32 %v767, %v773
  %v778 = vadd.f32 %v768, %v773
  %v779 = vmax.f32 %v775, 0.0
  %v780 = vmax.f32 %v776, 0.0
  %v781 = vmax.f32 %v777, 0.0
  %v782 = vmax.f32 %v778, 0.0
  %v783 = vpack.c.bf16 %v780, %v779
  %v784 = vpack.c.bf16 %v782, %v781
  %v787 = vunpack.c.l.b16 %v783
  %v788 = vunpack.c.h.b16 %v783
  %v789 = vunpack.c.l.b16 %v784
  %v790 = vunpack.c.h.b16 %v784
  %v791 = vpack.c.b16 %v787, %v787
  %v792 = vpack.c.b16 %v788, %v788
  %v793 = vpack.c.b16 %v789, %v789
  %v794 = vpack.c.b16 %v790, %v790
  %vm799 = vcmask 519168
  %800 = vst.msk [vmem:[%s5] sm:$0xf] %vm799, %v791
  %801 = vst.msk [vmem:[%s5 + $0x4] sm:$0xf] %vm799, %v792
  %802 = vst.msk [vmem:[%s5 + $0x8] sm:$0xf] %vm799, %v793
  %803 = vst.msk [vmem:[%s5 + $0xc] sm:$0xf] %vm799, %v794
  // Predicated region
  $region22: #{sac_forward.4} parent=0 // pred_check
    _
  $region23: #{sac_forward.4} parent=0 // pred_check_branch
    %805 = sbr.rel (0) target = $region25
  $region24: #{sac_forward.4} parent=0 // pred_region
    _
  $region25: #{sac_forward.4} parent=0 // pred_fallthru
    _
  // Predicated region
  $region26: #{sac_forward.4} parent=0 // pred_check
    _
  $region27: #{sac_forward.4} parent=0 // pred_check_branch
    %807 = sbr.rel (0) target = $region29
  $region28: #{sac_forward.4} parent=0 // pred_region
    _
  $region29: #{sac_forward.4} parent=0 // pred_fallthru
    _

// kernel: sac_forward.5
$region0: #{sac_forward.5}
  #allocation0 [shape = 'u32[]', space=smem, size = 0x4, offset = 0x4, fixed_abs, tag = 'smem constant byte address 0x4 - core index']
  #allocation1 [shape = 'u32[144,128]{1,0:T(1,128)}', space=vmem, size = 0x12000, scoped, tag = 'internal scratch']
  %s0 = inlined_call_operand.vmem [shape: bf16[8,1600], index: 0, kind: input, shape index: {}]
  %s1 = inlined_call_operand.vmem [shape: f32[2,8], index: 1, kind: input, shape index: {}]
  %s2 = inlined_call_operand.vmem [shape: bf16[1600,64], index: 2, kind: input, shape index: {}]
  %s3 = inlined_call_operand.vmem [shape: f32[1,64], index: 3, kind: input, shape index: {}]
  %s4 = inlined_call_operand.vmem [shape: f32[1,64], index: 4, kind: input, shape index: {}, may-alias: {4,8}]
  %s5 = inlined_call_operand.vmem [shape: f32[1,64], index: 5, kind: input, shape index: {}, may-alias: {5,9}]
  %s6 = inlined_call_operand.vmem [shape: bf16[9,64,64], index: 6, kind: input, shape index: {}]
  %s7 = inlined_call_operand.vmem [shape: f32[1,64], index: 7, kind: input, shape index: {}]
  %s8 = inlined_call_operand.vmem [shape: f32[1,64], index: 8, kind: input, shape index: {}, may-alias: {4,8}]
  %s9 = inlined_call_operand.vmem [shape: f32[1,64], index: 9, kind: input, shape index: {}, may-alias: {5,9}]
  %s10 = inlined_call_operand.vmem [shape: bf16[4,64,512], index: 10, kind: input, shape index: {}]
  %s11 = inlined_call_operand.vmem [shape: bf16[8,512], index: 11, kind: input, shape index: {}]
  %s12 = inlined_call_operand.vmem [shape: f32[1,512], index: 12, kind: input, shape index: {}]
  %s13 = inlined_call_operand.vmem [shape: bf16[512,768], index: 13, kind: input, shape index: {}]
  %s14 = inlined_call_operand.vmem [shape: f32[1,768], index: 14, kind: input, shape index: {}]
  %s15 = inlined_call_operand.vmem [shape: f32[1,768], index: 15, kind: input, shape index: {}]
  %s16 = inlined_call_operand.vmem [shape: f32[1,768], index: 16, kind: input, shape index: {}]
  %s17 = inlined_call_operand.vmem [shape: bf16[3,256,256], index: 17, kind: input, shape index: {}]
  %s18 = inlined_call_operand.vmem [shape: f32[3,1,256], index: 18, kind: input, shape index: {}]
  %s19 = inlined_call_operand.vmem [shape: f32[3,1,256], index: 19, kind: input, shape index: {}]
  %s20 = inlined_call_operand.vmem [shape: f32[3,1,256], index: 20, kind: input, shape index: {}]
  %s21 = inlined_call_operand.vmem [shape: bf16[3,256,4], index: 21, kind: input, shape index: {}]
  %s22 = inlined_call_operand.vmem [shape: f32[3,1,4], index: 22, kind: input, shape index: {}]
  %s23 = inlined_call_operand.vmem [shape: f32[3,2,4], index: 23, kind: output, shape index: {}]
  %s24 = sld [smem:[#allocation0]]
  $region102: #{sac_forward.5} parent=0
    _
  %s26 = ssub.s32 1, %s24
  %s27 = scalar_select 0, %s26, %s24
  // Predicated region
  $region2: #{sac_forward.5} parent=0 // pred_check
    _
  $region3: #{sac_forward.5} parent=0 // pred_check_branch
    %29 = sbr.rel (0) target = $region5
  $region4: #{sac_forward.5} parent=0 // pred_region
    _
  $region5: #{sac_forward.5} parent=0 // pred_fallthru
    _
  // Predicated region
  $region6: #{sac_forward.5} parent=0 // pred_check
    _
  $region7: #{sac_forward.5} parent=0 // pred_check_branch
    %31 = sbr.rel (0) target = $region9
  $region8: #{sac_forward.5} parent=0 // pred_region
    _
  $region9: #{sac_forward.5} parent=0 // pred_fallthru
    _
  // Predicated region
  $region10: #{sac_forward.5} parent=0 // pred_check
    _
  $region11: #{sac_forward.5} parent=0 // pred_check_branch
    %33 = sbr.rel (0) target = $region13
  $region12: #{sac_forward.5} parent=0 // pred_region
    _
  $region13: #{sac_forward.5} parent=0 // pred_fallthru
    _
  // Predicated region
  $region14: #{sac_forward.5} parent=0 // pred_check
    _
  $region15: #{sac_forward.5} parent=0 // pred_check_branch
    %35 = sbr.rel (0) target = $region17
  $region16: #{sac_forward.5} parent=0 // pred_region
    _
  $region17: #{sac_forward.5} parent=0 // pred_fallthru
    _
  // Predicated region
  $region18: #{sac_forward.5} parent=0 // pred_check
    _
  $region19: #{sac_forward.5} parent=0 // pred_check_branch
    %37 = sbr.rel (0) target = $region21
  $region20: #{sac_forward.5} parent=0 // pred_region
    _
  $region21: #{sac_forward.5} parent=0 // pred_fallthru
    _
  // Predicated region
  $region22: #{sac_forward.5} parent=0 // pred_check
    _
  $region23: #{sac_forward.5} parent=0 // pred_check_branch
    %39 = sbr.rel (0) target = $region25
  $region24: #{sac_forward.5} parent=0 // pred_region
    _
  $region25: #{sac_forward.5} parent=0 // pred_fallthru
    _
  // Predicated region
  $region26: #{sac_forward.5} parent=0 // pred_check
    _
  $region27: #{sac_forward.5} parent=0 // pred_check_branch
    %41 = sbr.rel (0) target = $region29
  $region28: #{sac_forward.5} parent=0 // pred_region
    _
  $region29: #{sac_forward.5} parent=0 // pred_fallthru
    _
  // Predicated region
  $region30: #{sac_forward.5} parent=0 // pred_check
    _
  $region31: #{sac_forward.5} parent=0 // pred_check_branch
    %43 = sbr.rel (0) target = $region33
  $region32: #{sac_forward.5} parent=0 // pred_region
    _
  $region33: #{sac_forward.5} parent=0 // pred_fallthru
    _
  // Predicated region
  $region34: #{sac_forward.5} parent=0 // pred_check
    _
  $region35: #{sac_forward.5} parent=0 // pred_check_branch
    %45 = sbr.rel (0) target = $region37
  $region36: #{sac_forward.5} parent=0 // pred_region
    _
  $region37: #{sac_forward.5} parent=0 // pred_fallthru
    _
  // Predicated region
  $region38: #{sac_forward.5} parent=0 // pred_check
    _
  $region39: #{sac_forward.5} parent=0 // pred_check_branch
    %47 = sbr.rel (0) target = $region41
  $region40: #{sac_forward.5} parent=0 // pred_region
    _
  $region41: #{sac_forward.5} parent=0 // pred_fallthru
    _
  // Predicated region
  $region42: #{sac_forward.5} parent=0 // pred_check
    _
  $region43: #{sac_forward.5} parent=0 // pred_check_branch
    %49 = sbr.rel (0) target = $region45
  $region44: #{sac_forward.5} parent=0 // pred_region
    _
  $region45: #{sac_forward.5} parent=0 // pred_fallthru
    _
  // Predicated region
  $region46: #{sac_forward.5} parent=0 // pred_check
    _
  $region47: #{sac_forward.5} parent=0 // pred_check_branch
    %51 = sbr.rel (0) target = $region49
  $region48: #{sac_forward.5} parent=0 // pred_region
    _
  $region49: #{sac_forward.5} parent=0 // pred_fallthru
    _
  // Predicated region
  $region50: #{sac_forward.5} parent=0 // pred_check
    _
  $region51: #{sac_forward.5} parent=0 // pred_check_branch
    %53 = sbr.rel (0) target = $region53
  $region52: #{sac_forward.5} parent=0 // pred_region
    _
  $region53: #{sac_forward.5} parent=0 // pred_fallthru
    _
  // Predicated region
  $region54: #{sac_forward.5} parent=0 // pred_check
    _
  $region55: #{sac_forward.5} parent=0 // pred_check_branch
    %55 = sbr.rel (0) target = $region57
  $region56: #{sac_forward.5} parent=0 // pred_region
    _
  $region57: #{sac_forward.5} parent=0 // pred_fallthru
    _
  // Predicated region
  $region58: #{sac_forward.5} parent=0 // pred_check
    _
  $region59: #{sac_forward.5} parent=0 // pred_check_branch
    %57 = sbr.rel (0) target = $region61
  $region60: #{sac_forward.5} parent=0 // pred_region
    _
  $region61: #{sac_forward.5} parent=0 // pred_fallthru
    _
  // Predicated region
  $region62: #{sac_forward.5} parent=0 // pred_check
    _
  $region63: #{sac_forward.5} parent=0 // pred_check_branch
    %59 = sbr.rel (0) target = $region65
  $region64: #{sac_forward.5} parent=0 // pred_region
    _
  $region65: #{sac_forward.5} parent=0 // pred_fallthru
    _
  // Predicated region
  $region66: #{sac_forward.5} parent=0 // pred_check
    _
  $region67: #{sac_forward.5} parent=0 // pred_check_branch
    %61 = sbr.rel (0) target = $region69
  $region68: #{sac_forward.5} parent=0 // pred_region
    _
  $region69: #{sac_forward.5} parent=0 // pred_fallthru
    _
  // Predicated region
  $region70: #{sac_forward.5} parent=0 // pred_check
    _
  $region71: #{sac_forward.5} parent=0 // pred_check_branch
    %63 = sbr.rel (0) target = $region73
  $region72: #{sac_forward.5} parent=0 // pred_region
    _
  $region73: #{sac_forward.5} parent=0 // pred_fallthru
    _
  // Predicated region
  $region74: #{sac_forward.5} parent=0 // pred_check
    _
  $region75: #{sac_forward.5} parent=0 // pred_check_branch
    %65 = sbr.rel (0) target = $region77
  $region76: #{sac_forward.5} parent=0 // pred_region
    _
  $region77: #{sac_forward.5} parent=0 // pred_fallthru
    _
  // Predicated region
  $region78: #{sac_forward.5} parent=0 // pred_check
    _
  $region79: #{sac_forward.5} parent=0 // pred_check_branch
    %67 = sbr.rel (0) target = $region81
  $region80: #{sac_forward.5} parent=0 // pred_region
    _
  $region81: #{sac_forward.5} parent=0 // pred_fallthru
    _
  // Predicated region
  $region82: #{sac_forward.5} parent=0 // pred_check
    _
  $region83: #{sac_forward.5} parent=0 // pred_check_branch
    %69 = sbr.rel (0) target = $region85
  $region84: #{sac_forward.5} parent=0 // pred_region
    _
  $region85: #{sac_forward.5} parent=0 // pred_fallthru
    _
  // Predicated region
  $region86: #{sac_forward.5} parent=0 // pred_check
    _
  $region87: #{sac_forward.5} parent=0 // pred_check_branch
    %71 = sbr.rel (0) target = $region89
  $region88: #{sac_forward.5} parent=0 // pred_region
    _
  $region89: #{sac_forward.5} parent=0 // pred_fallthru
    _
  // Predicated region
  $region90: #{sac_forward.5} parent=0 // pred_check
    _
  $region91: #{sac_forward.5} parent=0 // pred_check_branch
    %73 = sbr.rel (0) target = $region93
  $region92: #{sac_forward.5} parent=0 // pred_region
    _
  $region93: #{sac_forward.5} parent=0 // pred_fallthru
    _
  %v75 = vld [vmem:[%s0] sm:$0xff]
  %v76 = vld [vmem:[%s0 + $0x8] sm:$0xff]
  %v77 = vld [vmem:[%s0 + $0x10] sm:$0xff]
  %v78 = vld [vmem:[%s0 + $0x18] sm:$0xff]
  %v79 = vld [vmem:[%s0 + $0x20] sm:$0xff]
  %v80 = vld [vmem:[%s0 + $0x28] sm:$0xff]
  %v81 = vld [vmem:[%s0 + $0x30] sm:$0xf]
  %v82 = vld [vmem:[%s2] sm:$0xf]
  %v83 = vld [vmem:[%s2 + $0x4] sm:$0xf]
  %v84 = vld [vmem:[%s2 + $0x8] sm:$0xf]
  %v85 = vld [vmem:[%s2 + $0xc] sm:$0xf]
  %v86 = vld [vmem:[%s2 + $0x10] sm:$0xf]
  %v87 = vld [vmem:[%s2 + $0x14] sm:$0xf]
  %v88 = vld [vmem:[%s2 + $0x18] sm:$0xf]
  %v89 = vld [vmem:[%s2 + $0x1c] sm:$0xf]
  %v90 = vld [vmem:[%s2 + $0x20] sm:$0xf]
  %v91 = vld [vmem:[%s2 + $0x24] sm:$0xf]
  %v92 = vld [vmem:[%s2 + $0x28] sm:$0xf]
  %v93 = vld [vmem:[%s2 + $0x2c] sm:$0xf]
  %v94 = vld [vmem:[%s2 + $0x30] sm:$0xf]
  %v95 = vld [vmem:[%s2 + $0x34] sm:$0xf]
  %v96 = vld [vmem:[%s2 + $0x38] sm:$0xf]
  %v97 = vld [vmem:[%s2 + $0x3c] sm:$0xf]
  %v98 = vld [vmem:[%s2 + $0x40] sm:$0xf]
  %v99 = vld [vmem:[%s2 + $0x44] sm:$0xf]
  %v100 = vld [vmem:[%s2 + $0x48] sm:$0xf]
  %v101 = vld [vmem:[%s2 + $0x4c] sm:$0xf]
  %v102 = vld [vmem:[%s2 + $0x50] sm:$0xf]
  %v103 = vld [vmem:[%s2 + $0x54] sm:$0xf]
  %v104 = vld [vmem:[%s2 + $0x58] sm:$0xf]
  %v105 = vld [vmem:[%s2 + $0x5c] sm:$0xf]
  %v106 = vld [vmem:[%s2 + $0x60] sm:$0xf]
  %v107 = vld [vmem:[%s2 + $0x64] sm:$0xf]
  %v108 = vld [vmem:[%s2 + $0x68] sm:$0xf]
  %v109 = vld [vmem:[%s2 + $0x6c] sm:$0xf]
  %v110 = vld [vmem:[%s2 + $0x70] sm:$0xf]
  %v111 = vld [vmem:[%s2 + $0x74] sm:$0xf]
  %v112 = vld [vmem:[%s2 + $0x78] sm:$0xf]
  %v113 = vld [vmem:[%s2 + $0x7c] sm:$0xf]
  %v114 = vld [vmem:[%s2 + $0x80] sm:$0xf]
  %v115 = vld [vmem:[%s2 + $0x84] sm:$0xf]
  %v116 = vld [vmem:[%s2 + $0x88] sm:$0xf]
  %v117 = vld [vmem:[%s2 + $0x8c] sm:$0xf]
  %v118 = vld [vmem:[%s2 + $0x90] sm:$0xf]
  %v119 = vld [vmem:[%s2 + $0x94] sm:$0xf]
  %v120 = vld [vmem:[%s2 + $0x98] sm:$0xf]
  %v121 = vld [vmem:[%s2 + $0x9c] sm:$0xf]
  %v122 = vld [vmem:[%s2 + $0xa0] sm:$0xf]
  %v123 = vld [vmem:[%s2 + $0xa4] sm:$0xf]
  %v124 = vld [vmem:[%s2 + $0xa8] sm:$0xf]
  %v125 = vld [vmem:[%s2 + $0xac] sm:$0xf]
  %v126 = vld [vmem:[%s2 + $0xb0] sm:$0xf]
  %v127 = vld [vmem:[%s2 + $0xb4] sm:$0xf]
  %v128 = vld [vmem:[%s2 + $0xb8] sm:$0xf]
  %v129 = vld [vmem:[%s2 + $0xbc] sm:$0xf]
  %v130 = vld [vmem:[%s2 + $0xc0] sm:$0xf]
  %v131 = vld [vmem:[%s2 + $0xc4] sm:$0xf]
  %v132 = vld [vmem:[%s2 + $0xc8] sm:$0xf]
  %v133 = vld [vmem:[%s2 + $0xcc] sm:$0xf]
  %v134 = vld [vmem:[%s2 + $0xd0] sm:$0xf]
  %v135 = vld [vmem:[%s2 + $0xd4] sm:$0xf]
  %v136 = vld [vmem:[%s2 + $0xd8] sm:$0xf]
  %v137 = vld [vmem:[%s2 + $0xdc] sm:$0xf]
  %v138 = vld [vmem:[%s2 + $0xe0] sm:$0xf]
  %v139 = vld [vmem:[%s2 + $0xe4] sm:$0xf]
  %v140 = vld [vmem:[%s2 + $0xe8] sm:$0xf]
  %v141 = vld [vmem:[%s2 + $0xec] sm:$0xf]
  %v142 = vld [vmem:[%s2 + $0xf0] sm:$0xf]
  %v143 = vld [vmem:[%s2 + $0xf4] sm:$0xf]
  %v144 = vld [vmem:[%s2 + $0xf8] sm:$0xf]
  %v145 = vld [vmem:[%s2 + $0xfc] sm:$0xf]
  %v146 = vld [vmem:[%s2 + $0x100] sm:$0xf]
  %v147 = vld [vmem:[%s2 + $0x104] sm:$0xf]
  %v148 = vld [vmem:[%s2 + $0x108] sm:$0xf]
  %v149 = vld [vmem:[%s2 + $0x10c] sm:$0xf]
  %v150 = vld [vmem:[%s2 + $0x110] sm:$0xf]
  %v151 = vld [vmem:[%s2 + $0x114] sm:$0xf]
  %v152 = vld [vmem:[%s2 + $0x118] sm:$0xf]
  %v153 = vld [vmem:[%s2 + $0x11c] sm:$0xf]
  %v154 = vld [vmem:[%s2 + $0x120] sm:$0xf]
  %v155 = vld [vmem:[%s2 + $0x124] sm:$0xf]
  %v156 = vld [vmem:[%s2 + $0x128] sm:$0xf]
  %v157 = vld [vmem:[%s2 + $0x12c] sm:$0xf]
  %v158 = vld [vmem:[%s2 + $0x130] sm:$0xf]
  %v159 = vld [vmem:[%s2 + $0x134] sm:$0xf]
  %v160 = vld [vmem:[%s2 + $0x138] sm:$0xf]
  %v161 = vld [vmem:[%s2 + $0x13c] sm:$0xf]
  %v162 = vld [vmem:[%s2 + $0x140] sm:$0xf]
  %v163 = vld [vmem:[%s2 + $0x144] sm:$0xf]
  %v164 = vld [vmem:[%s2 + $0x148] sm:$0xf]
  %v165 = vld [vmem:[%s2 + $0x14c] sm:$0xf]
  %v166 = vld [vmem:[%s2 + $0x150] sm:$0xf]
  %v167 = vld [vmem:[%s2 + $0x154] sm:$0xf]
  %v168 = vld [vmem:[%s2 + $0x158] sm:$0xf]
  %v169 = vld [vmem:[%s2 + $0x15c] sm:$0xf]
  %v170 = vld [vmem:[%s2 + $0x160] sm:$0xf]
  %v171 = vld [vmem:[%s2 + $0x164] sm:$0xf]
  %v172 = vld [vmem:[%s2 + $0x168] sm:$0xf]
  %v173 = vld [vmem:[%s2 + $0x16c] sm:$0xf]
  %v174 = vld [vmem:[%s2 + $0x170] sm:$0xf]
  %v175 = vld [vmem:[%s2 + $0x174] sm:$0xf]
  %v176 = vld [vmem:[%s2 + $0x178] sm:$0xf]
  %v177 = vld [vmem:[%s2 + $0x17c] sm:$0xf]
  %v178 = vld [vmem:[%s2 + $0x180] sm:$0xf]
  %v179 = vld [vmem:[%s2 + $0x184] sm:$0xf]
  %v180 = vld [vmem:[%s2 + $0x188] sm:$0xf]
  %v181 = vld [vmem:[%s2 + $0x18c] sm:$0xf]
  %v182 = vld [vmem:[%s2 + $0x190] sm:$0xf]
  %v183 = vld [vmem:[%s2 + $0x194] sm:$0xf]
  %v184 = vld [vmem:[%s2 + $0x198] sm:$0xf]
  %v185 = vld [vmem:[%s2 + $0x19c] sm:$0xf]
  %v186 = vld [vmem:[%s2 + $0x1a0] sm:$0xf]
  %v187 = vld [vmem:[%s2 + $0x1a4] sm:$0xf]
  %v188 = vld [vmem:[%s2 + $0x1a8] sm:$0xf]
  %v189 = vld [vmem:[%s2 + $0x1ac] sm:$0xf]
  %v190 = vld [vmem:[%s2 + $0x1b0] sm:$0xf]
  %v191 = vld [vmem:[%s2 + $0x1b4] sm:$0xf]
  %v192 = vld [vmem:[%s2 + $0x1b8] sm:$0xf]
  %v193 = vld [vmem:[%s2 + $0x1bc] sm:$0xf]
  %v194 = vld [vmem:[%s2 + $0x1c0] sm:$0xf]
  %v195 = vld [vmem:[%s2 + $0x1c4] sm:$0xf]
  %v196 = vld [vmem:[%s2 + $0x1c8] sm:$0xf]
  %v197 = vld [vmem:[%s2 + $0x1cc] sm:$0xf]
  %v198 = vld [vmem:[%s2 + $0x1d0] sm:$0xf]
  %v199 = vld [vmem:[%s2 + $0x1d4] sm:$0xf]
  %v200 = vld [vmem:[%s2 + $0x1d8] sm:$0xf]
  %v201 = vld [vmem:[%s2 + $0x1dc] sm:$0xf]
  %v202 = vld [vmem:[%s2 + $0x1e0] sm:$0xf]
  %v203 = vld [vmem:[%s2 + $0x1e4] sm:$0xf]
  %v204 = vld [vmem:[%s2 + $0x1e8] sm:$0xf]
  %v205 = vld [vmem:[%s2 + $0x1ec] sm:$0xf]
  %v206 = vld [vmem:[%s2 + $0x1f0] sm:$0xf]
  %v207 = vld [vmem:[%s2 + $0x1f4] sm:$0xf]
  %v208 = vld [vmem:[%s2 + $0x1f8] sm:$0xf]
  %v209 = vld [vmem:[%s2 + $0x1fc] sm:$0xf]
  %v210 = vld [vmem:[%s2 + $0x200] sm:$0xf]
  %v211 = vld [vmem:[%s2 + $0x204] sm:$0xf]
  %v212 = vld [vmem:[%s2 + $0x208] sm:$0xf]
  %v213 = vld [vmem:[%s2 + $0x20c] sm:$0xf]
  %v214 = vld [vmem:[%s2 + $0x210] sm:$0xf]
  %v215 = vld [vmem:[%s2 + $0x214] sm:$0xf]
  %v216 = vld [vmem:[%s2 + $0x218] sm:$0xf]
  %v217 = vld [vmem:[%s2 + $0x21c] sm:$0xf]
  %v218 = vld [vmem:[%s2 + $0x220] sm:$0xf]
  %v219 = vld [vmem:[%s2 + $0x224] sm:$0xf]
  %v220 = vld [vmem:[%s2 + $0x228] sm:$0xf]
  %v221 = vld [vmem:[%s2 + $0x22c] sm:$0xf]
  %v222 = vld [vmem:[%s2 + $0x230] sm:$0xf]
  %v223 = vld [vmem:[%s2 + $0x234] sm:$0xf]
  %v224 = vld [vmem:[%s2 + $0x238] sm:$0xf]
  %v225 = vld [vmem:[%s2 + $0x23c] sm:$0xf]
  %v226 = vld [vmem:[%s2 + $0x240] sm:$0xf]
  %v227 = vld [vmem:[%s2 + $0x244] sm:$0xf]
  %v228 = vld [vmem:[%s2 + $0x248] sm:$0xf]
  %v229 = vld [vmem:[%s2 + $0x24c] sm:$0xf]
  %v230 = vld [vmem:[%s2 + $0x250] sm:$0xf]
  %v231 = vld [vmem:[%s2 + $0x254] sm:$0xf]
  %v232 = vld [vmem:[%s2 + $0x258] sm:$0xf]
  %v233 = vld [vmem:[%s2 + $0x25c] sm:$0xf]
  %v234 = vld [vmem:[%s2 + $0x260] sm:$0xf]
  %v235 = vld [vmem:[%s2 + $0x264] sm:$0xf]
  %v236 = vld [vmem:[%s2 + $0x268] sm:$0xf]
  %v237 = vld [vmem:[%s2 + $0x26c] sm:$0xf]
  %v238 = vld [vmem:[%s2 + $0x270] sm:$0xf]
  %v239 = vld [vmem:[%s2 + $0x274] sm:$0xf]
  %v240 = vld [vmem:[%s2 + $0x278] sm:$0xf]
  %v241 = vld [vmem:[%s2 + $0x27c] sm:$0xf]
  %v242 = vld [vmem:[%s2 + $0x280] sm:$0xf]
  %v243 = vld [vmem:[%s2 + $0x284] sm:$0xf]
  %v244 = vld [vmem:[%s2 + $0x288] sm:$0xf]
  %v245 = vld [vmem:[%s2 + $0x28c] sm:$0xf]
  %v246 = vld [vmem:[%s2 + $0x290] sm:$0xf]
  %v247 = vld [vmem:[%s2 + $0x294] sm:$0xf]
  %v248 = vld [vmem:[%s2 + $0x298] sm:$0xf]
  %v249 = vld [vmem:[%s2 + $0x29c] sm:$0xf]
  %v250 = vld [vmem:[%s2 + $0x2a0] sm:$0xf]
  %v251 = vld [vmem:[%s2 + $0x2a4] sm:$0xf]
  %v252 = vld [vmem:[%s2 + $0x2a8] sm:$0xf]
  %v253 = vld [vmem:[%s2 + $0x2ac] sm:$0xf]
  %v254 = vld [vmem:[%s2 + $0x2b0] sm:$0xf]
  %v255 = vld [vmem:[%s2 + $0x2b4] sm:$0xf]
  %v256 = vld [vmem:[%s2 + $0x2b8] sm:$0xf]
  %v257 = vld [vmem:[%s2 + $0x2bc] sm:$0xf]
  %v258 = vld [vmem:[%s2 + $0x2c0] sm:$0xf]
  %v259 = vld [vmem:[%s2 + $0x2c4] sm:$0xf]
  %v260 = vld [vmem:[%s2 + $0x2c8] sm:$0xf]
  %v261 = vld [vmem:[%s2 + $0x2cc] sm:$0xf]
  %v262 = vld [vmem:[%s2 + $0x2d0] sm:$0xf]
  %v263 = vld [vmem:[%s2 + $0x2d4] sm:$0xf]
  %v264 = vld [vmem:[%s2 + $0x2d8] sm:$0xf]
  %v265 = vld [vmem:[%s2 + $0x2dc] sm:$0xf]
  %v266 = vld [vmem:[%s2 + $0x2e0] sm:$0xf]
  %v267 = vld [vmem:[%s2 + $0x2e4] sm:$0xf]
  %v268 = vld [vmem:[%s2 + $0x2e8] sm:$0xf]
  %v269 = vld [vmem:[%s2 + $0x2ec] sm:$0xf]
  %v270 = vld [vmem:[%s2 + $0x2f0] sm:$0xf]
  %v271 = vld [vmem:[%s2 + $0x2f4] sm:$0xf]
  %v272 = vld [vmem:[%s2 + $0x2f8] sm:$0xf]
  %v273 = vld [vmem:[%s2 + $0x2fc] sm:$0xf]
  %v274 = vld [vmem:[%s2 + $0x300] sm:$0xf]
  %v275 = vld [vmem:[%s2 + $0x304] sm:$0xf]
  %v276 = vld [vmem:[%s2 + $0x308] sm:$0xf]
  %v277 = vld [vmem:[%s2 + $0x30c] sm:$0xf]
  %v278 = vld [vmem:[%s2 + $0x310] sm:$0xf]
  %v279 = vld [vmem:[%s2 + $0x314] sm:$0xf]
  %v280 = vld [vmem:[%s2 + $0x318] sm:$0xf]
  %v281 = vld [vmem:[%s2 + $0x31c] sm:$0xf]
  %v282 = vld [vmem:[%s3] sm:$0x1]
  %v284 = vlaneseq
  %v285 = vshrl.u32 %v284, 7
  %v286 = vsub.s32 0, %v285
  %v287 = vrot.slane %v282, %v286
  %v296 = vunpack.c.l.b16 %v75
  %v297 = vunpack.c.h.b16 %v75
  %v298 = vunpack.c.l.b16 %v76
  %v299 = vunpack.c.h.b16 %v76
  %v300 = vunpack.c.l.b16 %v77
  %v301 = vunpack.c.h.b16 %v77
  %v302 = vunpack.c.l.b16 %v78
  %v303 = vunpack.c.h.b16 %v78
  %v304 = vunpack.c.l.b16 %v79
  %v305 = vunpack.c.h.b16 %v79
  %v306 = vunpack.c.l.b16 %v80
  %v307 = vunpack.c.h.b16 %v80
  %v308 = vunpack.c.l.b16 %v81
  %v309 = vpack.c.b16 %v296, %v296
  %v310 = vpack.c.b16 %v297, %v297
  %v311 = vpack.c.b16 %v298, %v298
  %v312 = vpack.c.b16 %v299, %v299
  %v313 = vpack.c.b16 %v300, %v300
  %v314 = vpack.c.b16 %v301, %v301
  %v315 = vpack.c.b16 %v302, %v302
  %v316 = vpack.c.b16 %v303, %v303
  %v317 = vpack.c.b16 %v304, %v304
  %v318 = vpack.c.b16 %v305, %v305
  %v319 = vpack.c.b16 %v306, %v306
  %v320 = vpack.c.b16 %v307, %v307
  %v321 = vpack.c.b16 %v308, %v308
  %v534 = vunpack.c.l.b16 %v82
  %v535 = vunpack.c.l.b16 %v83
  %v536 = vunpack.c.l.b16 %v84
  %v537 = vunpack.c.l.b16 %v85
  %v538 = vunpack.c.l.b16 %v86
  %v539 = vunpack.c.l.b16 %v87
  %v540 = vunpack.c.l.b16 %v88
  %v541 = vunpack.c.l.b16 %v89
  %v542 = vunpack.c.l.b16 %v90
  %v543 = vunpack.c.l.b16 %v91
  %v544 = vunpack.c.l.b16 %v92
  %v545 = vunpack.c.l.b16 %v93
  %v546 = vunpack.c.l.b16 %v94
  %v547 = vunpack.c.l.b16 %v95
  %v548 = vunpack.c.l.b16 %v96
  %v549 = vunpack.c.l.b16 %v97
  %v550 = vunpack.c.l.b16 %v98
  %v551 = vunpack.c.l.b16 %v99
  %v552 = vunpack.c.l.b16 %v100
  %v553 = vunpack.c.l.b16 %v101
  %v554 = vunpack.c.l.b16 %v102
  %v555 = vunpack.c.l.b16 %v103
  %v556 = vunpack.c.l.b16 %v104
  %v557 = vunpack.c.l.b16 %v105
  %v558 = vunpack.c.l.b16 %v106
  %v559 = vunpack.c.l.b16 %v107
  %v560 = vunpack.c.l.b16 %v108
  %v561 = vunpack.c.l.b16 %v109
  %v562 = vunpack.c.l.b16 %v110
  %v563 = vunpack.c.l.b16 %v111
  %v564 = vunpack.c.l.b16 %v112
  %v565 = vunpack.c.l.b16 %v113
  %v566 = vunpack.c.l.b16 %v114
  %v567 = vunpack.c.l.b16 %v115
  %v568 = vunpack.c.l.b16 %v116
  %v569 = vunpack.c.l.b16 %v117
  %v570 = vunpack.c.l.b16 %v118
  %v571 = vunpack.c.l.b16 %v119
  %v572 = vunpack.c.l.b16 %v120
  %v573 = vunpack.c.l.b16 %v121
  %v574 = vunpack.c.l.b16 %v122
  %v575 = vunpack.c.l.b16 %v123
  %v576 = vunpack.c.l.b16 %v124
  %v577 = vunpack.c.l.b16 %v125
  %v578 = vunpack.c.l.b16 %v126
  %v579 = vunpack.c.l.b16 %v127
  %v580 = vunpack.c.l.b16 %v128
  %v581 = vunpack.c.l.b16 %v129
  %v582 = vunpack.c.l.b16 %v130
  %v583 = vunpack.c.l.b16 %v131
  %v584 = vunpack.c.l.b16 %v132
  %v585 = vunpack.c.l.b16 %v133
  %v586 = vunpack.c.l.b16 %v134
  %v587 = vunpack.c.l.b16 %v135
  %v588 = vunpack.c.l.b16 %v136
  %v589 = vunpack.c.l.b16 %v137
  %v590 = vunpack.c.l.b16 %v138
  %v591 = vunpack.c.l.b16 %v139
  %v592 = vunpack.c.l.b16 %v140
  %v593 = vunpack.c.l.b16 %v141
  %v594 = vunpack.c.l.b16 %v142
  %v595 = vunpack.c.l.b16 %v143
  %v596 = vunpack.c.l.b16 %v144
  %v597 = vunpack.c.l.b16 %v145
  %v598 = vunpack.c.l.b16 %v146
  %v599 = vunpack.c.l.b16 %v147
  %v600 = vunpack.c.l.b16 %v148
  %v601 = vunpack.c.l.b16 %v149
  %v602 = vunpack.c.l.b16 %v150
  %v603 = vunpack.c.l.b16 %v151
  %v604 = vunpack.c.l.b16 %v152
  %v605 = vunpack.c.l.b16 %v153
  %v606 = vunpack.c.l.b16 %v154
  %v607 = vunpack.c.l.b16 %v155
  %v608 = vunpack.c.l.b16 %v156
  %v609 = vunpack.c.l.b16 %v157
  %v610 = vunpack.c.l.b16 %v158
  %v611 = vunpack.c.l.b16 %v159
  %v612 = vunpack.c.l.b16 %v160
  %v613 = vunpack.c.l.b16 %v161
  %v614 = vunpack.c.l.b16 %v162
  %v615 = vunpack.c.l.b16 %v163
  %v616 = vunpack.c.l.b16 %v164
  %v617 = vunpack.c.l.b16 %v165
  %v618 = vunpack.c.l.b16 %v166
  %v619 = vunpack.c.l.b16 %v167
  %v620 = vunpack.c.l.b16 %v168
  %v621 = vunpack.c.l.b16 %v169
  %v622 = vunpack.c.l.b16 %v170
  %v623 = vunpack.c.l.b16 %v171
  %v624 = vunpack.c.l.b16 %v172
  %v625 = vunpack.c.l.b16 %v173
  %v626 = vunpack.c.l.b16 %v174
  %v627 = vunpack.c.l.b16 %v175
  %v628 = vunpack.c.l.b16 %v176
  %v629 = vunpack.c.l.b16 %v177
  %v630 = vunpack.c.l.b16 %v178
  %v631 = vunpack.c.l.b16 %v179
  %v632 = vunpack.c.l.b16 %v180
  %v633 = vunpack.c.l.b16 %v181
  %v634 = vunpack.c.l.b16 %v182
  %v635 = vunpack.c.l.b16 %v183
  %v636 = vunpack.c.l.b16 %v184
  %v637 = vunpack.c.l.b16 %v185
  %v638 = vunpack.c.l.b16 %v186
  %v639 = vunpack.c.l.b16 %v187
  %v640 = vunpack.c.l.b16 %v188
  %v641 = vunpack.c.l.b16 %v189
  %v642 = vunpack.c.l.b16 %v190
  %v643 = vunpack.c.l.b16 %v191
  %v644 = vunpack.c.l.b16 %v192
  %v645 = vunpack.c.l.b16 %v193
  %v646 = vunpack.c.l.b16 %v194
  %v647 = vunpack.c.l.b16 %v195
  %v648 = vunpack.c.l.b16 %v196
  %v649 = vunpack.c.l.b16 %v197
  %v650 = vunpack.c.l.b16 %v198
  %v651 = vunpack.c.l.b16 %v199
  %v652 = vunpack.c.l.b16 %v200
  %v653 = vunpack.c.l.b16 %v201
  %v654 = vunpack.c.l.b16 %v202
  %v655 = vunpack.c.l.b16 %v203
  %v656 = vunpack.c.l.b16 %v204
  %v657 = vunpack.c.l.b16 %v205
  %v658 = vunpack.c.l.b16 %v206
  %v659 = vunpack.c.l.b16 %v207
  %v660 = vunpack.c.l.b16 %v208
  %v661 = vunpack.c.l.b16 %v209
  %v662 = vunpack.c.l.b16 %v210
  %v663 = vunpack.c.l.b16 %v211
  %v664 = vunpack.c.l.b16 %v212
  %v665 = vunpack.c.l.b16 %v213
  %v666 = vunpack.c.l.b16 %v214
  %v667 = vunpack.c.l.b16 %v215
  %v668 = vunpack.c.l.b16 %v216
  %v669 = vunpack.c.l.b16 %v217
  %v670 = vunpack.c.l.b16 %v218
  %v671 = vunpack.c.l.b16 %v219
  %v672 = vunpack.c.l.b16 %v220
  %v673 = vunpack.c.l.b16 %v221
  %v674 = vunpack.c.l.b16 %v222
  %v675 = vunpack.c.l.b16 %v223
  %v676 = vunpack.c.l.b16 %v224
  %v677 = vunpack.c.l.b16 %v225
  %v678 = vunpack.c.l.b16 %v226
  %v679 = vunpack.c.l.b16 %v227
  %v680 = vunpack.c.l.b16 %v228
  %v681 = vunpack.c.l.b16 %v229
  %v682 = vunpack.c.l.b16 %v230
  %v683 = vunpack.c.l.b16 %v231
  %v684 = vunpack.c.l.b16 %v232
  %v685 = vunpack.c.l.b16 %v233
  %v686 = vunpack.c.l.b16 %v234
  %v687 = vunpack.c.l.b16 %v235
  %v688 = vunpack.c.l.b16 %v236
  %v689 = vunpack.c.l.b16 %v237
  %v690 = vunpack.c.l.b16 %v238
  %v691 = vunpack.c.l.b16 %v239
  %v692 = vunpack.c.l.b16 %v240
  %v693 = vunpack.c.l.b16 %v241
  %v694 = vunpack.c.l.b16 %v242
  %v695 = vunpack.c.l.b16 %v243
  %v696 = vunpack.c.l.b16 %v244
  %v697 = vunpack.c.l.b16 %v245
  %v698 = vunpack.c.l.b16 %v246
  %v699 = vunpack.c.l.b16 %v247
  %v700 = vunpack.c.l.b16 %v248
  %v701 = vunpack.c.l.b16 %v249
  %v702 = vunpack.c.l.b16 %v250
  %v703 = vunpack.c.l.b16 %v251
  %v704 = vunpack.c.l.b16 %v252
  %v705 = vunpack.c.l.b16 %v253
  %v706 = vunpack.c.l.b16 %v254
  %v707 = vunpack.c.l.b16 %v255
  %v708 = vunpack.c.l.b16 %v256
  %v709 = vunpack.c.l.b16 %v257
  %v710 = vunpack.c.l.b16 %v258
  %v711 = vunpack.c.l.b16 %v259
  %v712 = vunpack.c.l.b16 %v260
  %v713 = vunpack.c.l.b16 %v261
  %v714 = vunpack.c.l.b16 %v262
  %v715 = vunpack.c.l.b16 %v263
  %v716 = vunpack.c.l.b16 %v264
  %v717 = vunpack.c.l.b16 %v265
  %v718 = vunpack.c.l.b16 %v266
  %v719 = vunpack.c.l.b16 %v267
  %v720 = vunpack.c.l.b16 %v268
  %v721 = vunpack.c.l.b16 %v269
  %v722 = vunpack.c.l.b16 %v270
  %v723 = vunpack.c.l.b16 %v271
  %v724 = vunpack.c.l.b16 %v272
  %v725 = vunpack.c.l.b16 %v273
  %v726 = vunpack.c.l.b16 %v274
  %v727 = vunpack.c.l.b16 %v275
  %v728 = vunpack.c.l.b16 %v276
  %v729 = vunpack.c.l.b16 %v277
  %v730 = vunpack.c.l.b16 %v278
  %v731 = vunpack.c.l.b16 %v279
  %v732 = vunpack.c.l.b16 %v280
  %v733 = vunpack.c.l.b16 %v281
  %v734 = vpack.c.b16 %v535, %v534
  %v735 = vpack.c.b16 %v537, %v536
  %v736 = vpack.c.b16 %v539, %v538
  %v737 = vpack.c.b16 %v541, %v540
  %v738 = vpack.c.b16 %v543, %v542
  %v739 = vpack.c.b16 %v545, %v544
  %v740 = vpack.c.b16 %v547, %v546
  %v741 = vpack.c.b16 %v549, %v548
  %v742 = vpack.c.b16 %v551, %v550
  %v743 = vpack.c.b16 %v553, %v552
  %v744 = vpack.c.b16 %v555, %v554
  %v745 = vpack.c.b16 %v557, %v556
  %v746 = vpack.c.b16 %v559, %v558
  %v747 = vpack.c.b16 %v561, %v560
  %v748 = vpack.c.b16 %v563, %v562
  %v749 = vpack.c.b16 %v565, %v564
  %v750 = vpack.c.b16 %v567, %v566
  %v751 = vpack.c.b16 %v569, %v568
  %v752 = vpack.c.b16 %v571, %v570
  %v753 = vpack.c.b16 %v573, %v572
  %v754 = vpack.c.b16 %v575, %v574
  %v755 = vpack.c.b16 %v577, %v576
  %v756 = vpack.c.b16 %v579, %v578
  %v757 = vpack.c.b16 %v581, %v580
  %v758 = vpack.c.b16 %v583, %v582
  %v759 = vpack.c.b16 %v585, %v584
  %v760 = vpack.c.b16 %v587, %v586
  %v761 = vpack.c.b16 %v589, %v588
  %v762 = vpack.c.b16 %v591, %v590
  %v763 = vpack.c.b16 %v593, %v592
  %v764 = vpack.c.b16 %v595, %v594
  %v765 = vpack.c.b16 %v597, %v596
  %v766 = vpack.c.b16 %v599, %v598
  %v767 = vpack.c.b16 %v601, %v600
  %v768 = vpack.c.b16 %v603, %v602
  %v769 = vpack.c.b16 %v605, %v604
  %v770 = vpack.c.b16 %v607, %v606
  %v771 = vpack.c.b16 %v609, %v608
  %v772 = vpack.c.b16 %v611, %v610
  %v773 = vpack.c.b16 %v613, %v612
  %v774 = vpack.c.b16 %v615, %v614
  %v775 = vpack.c.b16 %v617, %v616
  %v776 = vpack.c.b16 %v619, %v618
  %v777 = vpack.c.b16 %v621, %v620
  %v778 = vpack.c.b16 %v623, %v622
  %v779 = vpack.c.b16 %v625, %v624
  %v780 = vpack.c.b16 %v627, %v626
  %v781 = vpack.c.b16 %v629, %v628
  %v782 = vpack.c.b16 %v631, %v630
  %v783 = vpack.c.b16 %v633, %v632
  %v784 = vpack.c.b16 %v635, %v634
  %v785 = vpack.c.b16 %v637, %v636
  %v786 = vpack.c.b16 %v639, %v638
  %v787 = vpack.c.b16 %v641, %v640
  %v788 = vpack.c.b16 %v643, %v642
  %v789 = vpack.c.b16 %v645, %v644
  %v790 = vpack.c.b16 %v647, %v646
  %v791 = vpack.c.b16 %v649, %v648
  %v792 = vpack.c.b16 %v651, %v650
  %v793 = vpack.c.b16 %v653, %v652
  %v794 = vpack.c.b16 %v655, %v654
  %v795 = vpack.c.b16 %v657, %v656
  %v796 = vpack.c.b16 %v659, %v658
  %v797 = vpack.c.b16 %v661, %v660
  %v798 = vpack.c.b16 %v663, %v662
  %v799 = vpack.c.b16 %v665, %v664
  %v800 = vpack.c.b16 %v667, %v666
  %v801 = vpack.c.b16 %v669, %v668
  %v802 = vpack.c.b16 %v671, %v670
  %v803 = vpack.c.b16 %v673, %v672
  %v804 = vpack.c.b16 %v675, %v674
  %v805 = vpack.c.b16 %v677, %v676
  %v806 = vpack.c.b16 %v679, %v678
  %v807 = vpack.c.b16 %v681, %v680
  %v808 = vpack.c.b16 %v683, %v682
  %v809 = vpack.c.b16 %v685, %v684
  %v810 = vpack.c.b16 %v687, %v686
  %v811 = vpack.c.b16 %v689, %v688
  %v812 = vpack.c.b16 %v691, %v690
  %v813 = vpack.c.b16 %v693, %v692
  %v814 = vpack.c.b16 %v695, %v694
  %v815 = vpack.c.b16 %v697, %v696
  %v816 = vpack.c.b16 %v699, %v698
  %v817 = vpack.c.b16 %v701, %v700
  %v818 = vpack.c.b16 %v703, %v702
  %v819 = vpack.c.b16 %v705, %v704
  %v820 = vpack.c.b16 %v707, %v706
  %v821 = vpack.c.b16 %v709, %v708
  %v822 = vpack.c.b16 %v711, %v710
  %v823 = vpack.c.b16 %v713, %v712
  %v824 = vpack.c.b16 %v715, %v714
  %v825 = vpack.c.b16 %v717, %v716
  %v826 = vpack.c.b16 %v719, %v718
  %v827 = vpack.c.b16 %v721, %v720
  %v828 = vpack.c.b16 %v723, %v722
  %v829 = vpack.c.b16 %v725, %v724
  %v830 = vpack.c.b16 %v727, %v726
  %v831 = vpack.c.b16 %v729, %v728
  %v832 = vpack.c.b16 %v731, %v730
  %v833 = vpack.c.b16 %v733, %v732
  %vm934 = vcmask 523264
  %v936 = vsel %vm934, %v321, 0
  %938 = vmatprep.subr.bf16.mxu0 0
  %939 = vmatpush1.bf16.msra.mxu0 %v741
  %940 = vmatprep.subr.bf16.mxu0 0
  %941 = vmatpush1.bf16.msra.mxu0 %v740
  %942 = vmatprep.subr.bf16.mxu0 0
  %943 = vmatpush1.bf16.msra.mxu0 %v739
  %944 = vmatprep.subr.bf16.mxu0 0
  %945 = vmatpush1.bf16.msra.mxu0 %v738
  %946 = vmatprep.subr.bf16.mxu0 0
  %947 = vmatpush1.bf16.msra.mxu0 %v737
  %948 = vmatprep.subr.bf16.mxu0 0
  %949 = vmatpush1.bf16.msra.mxu0 %v736
  %950 = vmatprep.subr.bf16.mxu0 0
  %951 = vmatpush1.bf16.msra.mxu0 %v735
  %952 = vmatprep.subr.bf16.mxu0 0
  %953 = vmatpush1.bf16.msra.mxu0 %v734
  %954 = vmatprep.subr.bf16.mxu0 0
  %955 = vmatpush2.bf16.msra.mxu0 %v749
  %956 = vmatprep.subr.bf16.mxu0 0
  %957 = vmatpush2.bf16.msra.mxu0 %v748
  %958 = vmatprep.subr.bf16.mxu0 0
  %959 = vmatpush2.bf16.msra.mxu0 %v747
  %960 = vmatprep.subr.bf16.mxu0 0
  %961 = vmatpush2.bf16.msra.mxu0 %v746
  %962 = vmatprep.subr.bf16.mxu0 0
  %963 = vmatpush2.bf16.msra.mxu0 %v745
  %964 = vmatprep.subr.bf16.mxu0 0
  %965 = vmatpush2.bf16.msra.mxu0 %v744
  %966 = vmatprep.subr.bf16.mxu0 0
  %967 = vmatpush2.bf16.msra.mxu0 %v743
  %968 = vmatprep.subr.bf16.mxu0 0
  %969 = vmatpush2.bf16.msra.mxu0 %v742
  %970 = vmatprep.mubr.bf16.mxu0 %v310
  %971 = vmatmul.mubr.bf16.gmra.mxu0 %v309
  %v972 = vpop.f32.mrf.mxu0
  %v973 = vadd.f32 %v287, %v972
  %v974 = vpop.f32.mrf.mxu0
  %v975 = vpop.f32.mrf.mxu0
  %v976 = vpop.f32.mrf.mxu0
  %977 = vdwg.mxu0
  %978 = vmatprep.subr.bf16.mxu0 0
  %979 = vmatpush1.bf16.msra.mxu0 %v757
  %980 = vmatprep.subr.bf16.mxu0 0
  %981 = vmatpush1.bf16.msra.mxu0 %v756
  %982 = vmatprep.subr.bf16.mxu0 0
  %983 = vmatpush1.bf16.msra.mxu0 %v755
  %984 = vmatprep.subr.bf16.mxu0 0
  %985 = vmatpush1.bf16.msra.mxu0 %v754
  %986 = vmatprep.subr.bf16.mxu0 0
  %987 = vmatpush1.bf16.msra.mxu0 %v753
  %988 = vmatprep.subr.bf16.mxu0 0
  %989 = vmatpush1.bf16.msra.mxu0 %v752
  %990 = vmatprep.subr.bf16.mxu0 0
  %991 = vmatpush1.bf16.msra.mxu0 %v751
  %992 = vmatprep.subr.bf16.mxu0 0
  %993 = vmatpush1.bf16.msra.mxu0 %v750
  %994 = vmatprep.subr.bf16.mxu0 0
  %995 = vmatpush2.bf16.msra.mxu0 %v765
  %996 = vmatprep.subr.bf16.mxu0 0
  %997 = vmatpush2.bf16.msra.mxu0 %v764
  %998 = vmatprep.subr.bf16.mxu0 0
  %999 = vmatpush2.bf16.msra.mxu0 %v763
  %1000 = vmatprep.subr.bf16.mxu0 0
  %1001 = vmatpush2.bf16.msra.mxu0 %v762
  %1002 = vmatprep.subr.bf16.mxu0 0
  %1003 = vmatpush2.bf16.msra.mxu0 %v761
  %1004 = vmatprep.subr.bf16.mxu0 0
  %1005 = vmatpush2.bf16.msra.mxu0 %v760
  %1006 = vmatprep.subr.bf16.mxu0 0
  %1007 = vmatpush2.bf16.msra.mxu0 %v759
  %1008 = vmatprep.subr.bf16.mxu0 0
  %1009 = vmatpush2.bf16.msra.mxu0 %v758
  %1010 = vmatprep.mubr.bf16.mxu0 %v312
  %1011 = vmatmul.mubr.bf16.gmra.mxu0 %v311
  %v1012 = vpop.f32.mrf.mxu0
  %v1013 = vadd.f32 %v973, %v1012
  %v1014 = vpop.f32.mrf.mxu0
  %v1015 = vpop.f32.mrf.mxu0
  %v1016 = vpop.f32.mrf.mxu0
  %1017 = vdwg.mxu0
  %1018 = vmatprep.subr.bf16.mxu0 0
  %1019 = vmatpush1.bf16.msra.mxu0 %v773
  %1020 = vmatprep.subr.bf16.mxu0 0
  %1021 = vmatpush1.bf16.msra.mxu0 %v772
  %1022 = vmatprep.subr.bf16.mxu0 0
  %1023 = vmatpush1.bf16.msra.mxu0 %v771
  %1024 = vmatprep.subr.bf16.mxu0 0
  %1025 = vmatpush1.bf16.msra.mxu0 %v770
  %1026 = vmatprep.subr.bf16.mxu0 0
  %1027 = vmatpush1.bf16.msra.mxu0 %v769
  %1028 = vmatprep.subr.bf16.mxu0 0
  %1029 = vmatpush1.bf16.msra.mxu0 %v768
  %1030 = vmatprep.subr.bf16.mxu0 0
  %1031 = vmatpush1.bf16.msra.mxu0 %v767
  %1032 = vmatprep.subr.bf16.mxu0 0
  %1033 = vmatpush1.bf16.msra.mxu0 %v766
  %1034 = vmatprep.subr.bf16.mxu0 0
  %1035 = vmatpush2.bf16.msra.mxu0 %v781
  %1036 = vmatprep.subr.bf16.mxu0 0
  %1037 = vmatpush2.bf16.msra.mxu0 %v780
  %1038 = vmatprep.subr.bf16.mxu0 0
  %1039 = vmatpush2.bf16.msra.mxu0 %v779
  %1040 = vmatprep.subr.bf16.mxu0 0
  %1041 = vmatpush2.bf16.msra.mxu0 %v778
  %1042 = vmatprep.subr.bf16.mxu0 0
  %1043 = vmatpush2.bf16.msra.mxu0 %v777
  %1044 = vmatprep.subr.bf16.mxu0 0
  %1045 = vmatpush2.bf16.msra.mxu0 %v776
  %1046 = vmatprep.subr.bf16.mxu0 0
  %1047 = vmatpush2.bf16.msra.mxu0 %v775
  %1048 = vmatprep.subr.bf16.mxu0 0
  %1049 = vmatpush2.bf16.msra.mxu0 %v774
  %1050 = vmatprep.mubr.bf16.mxu0 %v314
  %1051 = vmatmul.mubr.bf16.gmra.mxu0 %v313
  %v1052 = vpop.f32.mrf.mxu0
  %v1053 = vadd.f32 %v1013, %v1052
  %v1054 = vpop.f32.mrf.mxu0
  %v1055 = vpop.f32.mrf.mxu0
  %v1056 = vpop.f32.mrf.mxu0
  %1057 = vdwg.mxu0
  %1058 = vmatprep.subr.bf16.mxu0 0
  %1059 = vmatpush1.bf16.msra.mxu0 %v789
  %1060 = vmatprep.subr.bf16.mxu0 0
  %1061 = vmatpush1.bf16.msra.mxu0 %v788
  %1062 = vmatprep.subr.bf16.mxu0 0
  %1063 = vmatpush1.bf16.msra.mxu0 %v787
  %1064 = vmatprep.subr.bf16.mxu0 0
  %1065 = vmatpush1.bf16.msra.mxu0 %v786
  %1066 = vmatprep.subr.bf16.mxu0 0
  %1067 = vmatpush1.bf16.msra.mxu0 %v785
  %1068 = vmatprep.subr.bf16.mxu0 0
  %1069 = vmatpush1.bf16.msra.mxu0 %v784
  %1070 = vmatprep.subr.bf16.mxu0 0
  %1071 = vmatpush1.bf16.msra.mxu0 %v783
  %1072 = vmatprep.subr.bf16.mxu0 0
  %1073 = vmatpush1.bf16.msra.mxu0 %v782
  %1074 = vmatprep.subr.bf16.mxu0 0
  %1075 = vmatpush2.bf16.msra.mxu0 %v797
  %1076 = vmatprep.subr.bf16.mxu0 0
  %1077 = vmatpush2.bf16.msra.mxu0 %v796
  %1078 = vmatprep.subr.bf16.mxu0 0
  %1079 = vmatpush2.bf16.msra.mxu0 %v795
  %1080 = vmatprep.subr.bf16.mxu0 0
  %1081 = vmatpush2.bf16.msra.mxu0 %v794
  %1082 = vmatprep.subr.bf16.mxu0 0
  %1083 = vmatpush2.bf16.msra.mxu0 %v793
  %1084 = vmatprep.subr.bf16.mxu0 0
  %1085 = vmatpush2.bf16.msra.mxu0 %v792
  %1086 = vmatprep.subr.bf16.mxu0 0
  %1087 = vmatpush2.bf16.msra.mxu0 %v791
  %1088 = vmatprep.subr.bf16.mxu0 0
  %1089 = vmatpush2.bf16.msra.mxu0 %v790
  %1090 = vmatprep.mubr.bf16.mxu0 %v316
  %1091 = vmatmul.mubr.bf16.gmra.mxu0 %v315
  %v1092 = vpop.f32.mrf.mxu0
  %v1093 = vadd.f32 %v1053, %v1092
  %v1094 = vpop.f32.mrf.mxu0
  %v1095 = vpop.f32.mrf.mxu0
  %v1096 = vpop.f32.mrf.mxu0
  %1097 = vdwg.mxu0
  %1098 = vmatprep.subr.bf16.mxu0 0
  %1099 = vmatpush1.bf16.msra.mxu0 %v805
  %1100 = vmatprep.subr.bf16.mxu0 0
  %1101 = vmatpush1.bf16.msra.mxu0 %v804
  %1102 = vmatprep.subr.bf16.mxu0 0
  %1103 = vmatpush1.bf16.msra.mxu0 %v803
  %1104 = vmatprep.subr.bf16.mxu0 0
  %1105 = vmatpush1.bf16.msra.mxu0 %v802
  %1106 = vmatprep.subr.bf16.mxu0 0
  %1107 = vmatpush1.bf16.msra.mxu0 %v801
  %1108 = vmatprep.subr.bf16.mxu0 0
  %1109 = vmatpush1.bf16.msra.mxu0 %v800
  %1110 = vmatprep.subr.bf16.mxu0 0
  %1111 = vmatpush1.bf16.msra.mxu0 %v799
  %1112 = vmatprep.subr.bf16.mxu0 0
  %1113 = vmatpush1.bf16.msra.mxu0 %v798
  %1114 = vmatprep.subr.bf16.mxu0 0
  %1115 = vmatpush2.bf16.msra.mxu0 %v813
  %1116 = vmatprep.subr.bf16.mxu0 0
  %1117 = vmatpush2.bf16.msra.mxu0 %v812
  %1118 = vmatprep.subr.bf16.mxu0 0
  %1119 = vmatpush2.bf16.msra.mxu0 %v811
  %1120 = vmatprep.subr.bf16.mxu0 0
  %1121 = vmatpush2.bf16.msra.mxu0 %v810
  %1122 = vmatprep.subr.bf16.mxu0 0
  %1123 = vmatpush2.bf16.msra.mxu0 %v809
  %1124 = vmatprep.subr.bf16.mxu0 0
  %1125 = vmatpush2.bf16.msra.mxu0 %v808
  %1126 = vmatprep.subr.bf16.mxu0 0
  %1127 = vmatpush2.bf16.msra.mxu0 %v807
  %1128 = vmatprep.subr.bf16.mxu0 0
  %1129 = vmatpush2.bf16.msra.mxu0 %v806
  %1130 = vmatprep.mubr.bf16.mxu0 %v318
  %1131 = vmatmul.mubr.bf16.gmra.mxu0 %v317
  %v1132 = vpop.f32.mrf.mxu0
  %v1133 = vadd.f32 %v1093, %v1132
  %v1134 = vpop.f32.mrf.mxu0
  %v1135 = vpop.f32.mrf.mxu0
  %v1136 = vpop.f32.mrf.mxu0
  %1137 = vdwg.mxu0
  %1138 = vmatprep.subr.bf16.mxu0 0
  %1139 = vmatpush1.bf16.msra.mxu0 %v821
  %1140 = vmatprep.subr.bf16.mxu0 0
  %1141 = vmatpush1.bf16.msra.mxu0 %v820
  %1142 = vmatprep.subr.bf16.mxu0 0
  %1143 = vmatpush1.bf16.msra.mxu0 %v819
  %1144 = vmatprep.subr.bf16.mxu0 0
  %1145 = vmatpush1.bf16.msra.mxu0 %v818
  %1146 = vmatprep.subr.bf16.mxu0 0
  %1147 = vmatpush1.bf16.msra.mxu0 %v817
  %1148 = vmatprep.subr.bf16.mxu0 0
  %1149 = vmatpush1.bf16.msra.mxu0 %v816
  %1150 = vmatprep.subr.bf16.mxu0 0
  %1151 = vmatpush1.bf16.msra.mxu0 %v815
  %1152 = vmatprep.subr.bf16.mxu0 0
  %1153 = vmatpush1.bf16.msra.mxu0 %v814
  %1154 = vmatprep.subr.bf16.mxu0 0
  %1155 = vmatpush2.bf16.msra.mxu0 %v829
  %1156 = vmatprep.subr.bf16.mxu0 0
  %1157 = vmatpush2.bf16.msra.mxu0 %v828
  %1158 = vmatprep.subr.bf16.mxu0 0
  %1159 = vmatpush2.bf16.msra.mxu0 %v827
  %1160 = vmatprep.subr.bf16.mxu0 0
  %1161 = vmatpush2.bf16.msra.mxu0 %v826
  %1162 = vmatprep.subr.bf16.mxu0 0
  %1163 = vmatpush2.bf16.msra.mxu0 %v825
  %1164 = vmatprep.subr.bf16.mxu0 0
  %1165 = vmatpush2.bf16.msra.mxu0 %v824
  %1166 = vmatprep.subr.bf16.mxu0 0
  %1167 = vmatpush2.bf16.msra.mxu0 %v823
  %1168 = vmatprep.subr.bf16.mxu0 0
  %1169 = vmatpush2.bf16.msra.mxu0 %v822
  %1170 = vmatprep.mubr.bf16.mxu0 %v320
  %1171 = vmatmul.mubr.bf16.gmra.mxu0 %v319
  %v1172 = vpop.f32.mrf.mxu0
  %v1173 = vadd.f32 %v1133, %v1172
  %v1174 = vpop.f32.mrf.mxu0
  %v1175 = vpop.f32.mrf.mxu0
  %v1176 = vpop.f32.mrf.mxu0
  %1177 = vdwg.mxu0
  %1178 = vmatprep.subr.bf16.mxu0 0
  %1179 = vmatpush1.bf16.msra.mxu0 0
  %1180 = vmatprep.subr.bf16.mxu0 0
  %1181 = vmatpush1.bf16.msra.mxu0 0
  %1182 = vmatprep.subr.bf16.mxu0 0
  %1183 = vmatpush1.bf16.msra.mxu0 0
  %1184 = vmatprep.subr.bf16.mxu0 0
  %1185 = vmatpush1.bf16.msra.mxu0 0
  %1186 = vmatprep.subr.bf16.mxu0 0
  %1187 = vmatpush1.bf16.msra.mxu0 %v833
  %1188 = vmatprep.subr.bf16.mxu0 0
  %1189 = vmatpush1.bf16.msra.mxu0 %v832
  %1190 = vmatprep.subr.bf16.mxu0 0
  %1191 = vmatpush1.bf16.msra.mxu0 %v831
  %1192 = vmatprep.subr.bf16.mxu0 0
  %1193 = vmatpush1.bf16.msra.mxu0 %v830
  %1194 = vmatprep.subr.bf16.mxu0 0
  %1195 = vmatpush2.bf16.msra.mxu0 0
  %1196 = vmatprep.subr.bf16.mxu0 0
  %1197 = vmatpush2.bf16.msra.mxu0 0
  %1198 = vmatprep.subr.bf16.mxu0 0
  %1199 = vmatpush2.bf16.msra.mxu0 0
  %1200 = vmatprep.subr.bf16.mxu0 0
  %1201 = vmatpush2.bf16.msra.mxu0 0
  %1202 = vmatprep.subr.bf16.mxu0 0
  %1203 = vmatpush2.bf16.msra.mxu0 0
  %1204 = vmatprep.subr.bf16.mxu0 0
  %1205 = vmatpush2.bf16.msra.mxu0 0
  %1206 = vmatprep.subr.bf16.mxu0 0
  %1207 = vmatpush2.bf16.msra.mxu0 0
  %1208 = vmatprep.subr.bf16.mxu0 0
  %1209 = vmatpush2.bf16.msra.mxu0 0
  %1210 = vmatprep.mubr.bf16.mxu0 0
  %1211 = vmatmul.mubr.bf16.gmra.mxu0 %v936
  %v1212 = vpop.f32.mrf.mxu0
  %v1213 = vadd.f32 %v1173, %v1212
  %v1214 = vpop.f32.mrf.mxu0
  %v1215 = vpop.f32.mrf.mxu0
  %v1216 = vpop.f32.mrf.mxu0
  %1217 = vdwg.mxu0
  %v1218 = vld [vmem:[%s4] sm:$0x1]
  %v1219 = vld [vmem:[%s5] sm:$0x1]
  %v1220 = vsel %vm934, %v1213, 0.0
  %v1221 = vrot.slane %v1220, 4
  %v1222 = vadd.f32 %v1220, %v1221
  %v1223 = vrot.slane %v1222, 2
  %v1224 = vadd.f32 %v1222, %v1223
  %v1225 = vrot.slane %v1224, 1
  %v1226 = vadd.f32 %v1224, %v1225
  %v1227 = vmul.f32 %v1226, 0.125
  %v1228 = vsub.f32 %v1213, %v1227
  %v1229 = vmul.f32 %v1228, %v1228
  %v1230 = vsel %vm934, %v1229, 0.0
  %v1231 = vrot.slane %v1230, 4
  %v1232 = vadd.f32 %v1230, %v1231
  %v1233 = vrot.slane %v1232, 2
  %v1234 = vadd.f32 %v1232, %v1233
  %v1235 = vrot.slane %v1234, 1
  %v1236 = vadd.f32 %v1234, %v1235
  %v1237 = vmul.f32 %v1236, 0.125
  %v1238 = vadd.f32 %v1237, 1e-05
  %v1239 = vrsqrt.pop %v1238
  %v1240 = vmul.f32 %v1218, %v1239
  %v1242 = vlaneseq
  %v1243 = vshrl.u32 %v1242, 7
  %v1244 = vsub.s32 0, %v1243
  %v1245 = vrot.slane %v1240, %v1244
  %v1247 = vmul.f32 %v1228, %v1245
  %v1249 = vlaneseq
  %v1250 = vshrl.u32 %v1249, 7
  %v1251 = vsub.s32 0, %v1250
  %v1252 = vrot.slane %v1219, %v1251
  %v1254 = vadd.f32 %v1247, %v1252
  %v1255 = vmax.f32 %v1254, 0.0
  %v1256 = vpack.c.bf16 %v1255, %v1255
  %s1257 = scalar_lea.vmem %s6, 128
  %v1258 = vld [vmem:[%s1257] sm:$0xf]
  %v1259 = vld [vmem:[%s1257 + $0x4] sm:$0xf]
  %v1260 = vld [vmem:[%s1257 + $0x8] sm:$0xf]
  %v1261 = vld [vmem:[%s1257 + $0xc] sm:$0xf]
  %v1262 = vld [vmem:[%s1257 + $0x10] sm:$0xf]
  %v1263 = vld [vmem:[%s1257 + $0x14] sm:$0xf]
  %v1264 = vld [vmem:[%s1257 + $0x18] sm:$0xf]
  %v1265 = vld [vmem:[%s1257 + $0x1c] sm:$0xf]
  %s1266 = scalar_lea.vmem %s6, 160
  %v1267 = vld [vmem:[%s1266] sm:$0xf]
  %v1268 = vld [vmem:[%s1266 + $0x4] sm:$0xf]
  %v1269 = vld [vmem:[%s1266 + $0x8] sm:$0xf]
  %v1270 = vld [vmem:[%s1266 + $0xc] sm:$0xf]
  %v1271 = vld [vmem:[%s1266 + $0x10] sm:$0xf]
  %v1272 = vld [vmem:[%s1266 + $0x14] sm:$0xf]
  %v1273 = vld [vmem:[%s1266 + $0x18] sm:$0xf]
  %v1274 = vld [vmem:[%s1266 + $0x1c] sm:$0xf]
  %v1276 = vrot.slane %v1256, 1
  %v1285 = vunpack.c.l.b16 %v1267
  %v1286 = vunpack.c.l.b16 %v1268
  %v1287 = vunpack.c.l.b16 %v1269
  %v1288 = vunpack.c.l.b16 %v1270
  %v1289 = vunpack.c.l.b16 %v1271
  %v1290 = vunpack.c.l.b16 %v1272
  %v1291 = vunpack.c.l.b16 %v1273
  %v1292 = vunpack.c.l.b16 %v1274
  %v1293 = vpack.c.b16 %v1286, %v1285
  %v1294 = vpack.c.b16 %v1288, %v1287
  %v1295 = vpack.c.b16 %v1290, %v1289
  %v1296 = vpack.c.b16 %v1292, %v1291
  %v1302 = vsel %vm934, %v1276, 0
  %1304 = vmatprep.subr.bf16.mxu0 0
  %1305 = vmatpush1.bf16.msra.mxu0 0
  %1306 = vmatprep.subr.bf16.mxu0 0
  %1307 = vmatpush1.bf16.msra.mxu0 0
  %1308 = vmatprep.subr.bf16.mxu0 0
  %1309 = vmatpush1.bf16.msra.mxu0 0
  %1310 = vmatprep.subr.bf16.mxu0 0
  %1311 = vmatpush1.bf16.msra.mxu0 0
  %1312 = vmatprep.subr.bf16.mxu0 0
  %1313 = vmatpush1.bf16.msra.mxu0 %v1296
  %1314 = vmatprep.subr.bf16.mxu0 0
  %1315 = vmatpush1.bf16.msra.mxu0 %v1295
  %1316 = vmatprep.subr.bf16.mxu0 0
  %1317 = vmatpush1.bf16.msra.mxu0 %v1294
  %1318 = vmatprep.subr.bf16.mxu0 0
  %1319 = vmatpush1.bf16.msra.mxu0 %v1293
  %1320 = vmatprep.subr.bf16.mxu0 0
  %1321 = vmatpush2.bf16.msra.mxu0 0
  %1322 = vmatprep.subr.bf16.mxu0 0
  %1323 = vmatpush2.bf16.msra.mxu0 0
  %1324 = vmatprep.subr.bf16.mxu0 0
  %1325 = vmatpush2.bf16.msra.mxu0 0
  %1326 = vmatprep.subr.bf16.mxu0 0
  %1327 = vmatpush2.bf16.msra.mxu0 0
  %1328 = vmatprep.subr.bf16.mxu0 0
  %1329 = vmatpush2.bf16.msra.mxu0 0
  %1330 = vmatprep.subr.bf16.mxu0 0
  %1331 = vmatpush2.bf16.msra.mxu0 0
  %1332 = vmatprep.subr.bf16.mxu0 0
  %1333 = vmatpush2.bf16.msra.mxu0 0
  %1334 = vmatprep.subr.bf16.mxu0 0
  %1335 = vmatpush2.bf16.msra.mxu0 0
  %1336 = vmatprep.mubr.bf16.mxu0 0
  %1337 = vmatmul.mubr.bf16.gmra.mxu0 %v1302
  %v1338 = vpop.f32.mrf.mxu0
  %v1339 = vadd.f32 0.0, %v1338
  %v1340 = vpop.f32.mrf.mxu0
  %v1341 = vpop.f32.mrf.mxu0
  %v1342 = vpop.f32.mrf.mxu0
  %1343 = vdwg.mxu0
  %v1352 = vunpack.c.l.b16 %v1258
  %v1353 = vunpack.c.l.b16 %v1259
  %v1354 = vunpack.c.l.b16 %v1260
  %v1355 = vunpack.c.l.b16 %v1261
  %v1356 = vunpack.c.l.b16 %v1262
  %v1357 = vunpack.c.l.b16 %v1263
  %v1358 = vunpack.c.l.b16 %v1264
  %v1359 = vunpack.c.l.b16 %v1265
  %v1360 = vpack.c.b16 %v1353, %v1352
  %v1361 = vpack.c.b16 %v1355, %v1354
  %v1362 = vpack.c.b16 %v1357, %v1356
  %v1363 = vpack.c.b16 %v1359, %v1358
  %v1369 = vsel %vm934, %v1256, 0
  %1371 = vmatprep.subr.bf16.mxu0 0
  %1372 = vmatpush1.bf16.msra.mxu0 0
  %1373 = vmatprep.subr.bf16.mxu0 0
  %1374 = vmatpush1.bf16.msra.mxu0 0
  %1375 = vmatprep.subr.bf16.mxu0 0
  %1376 = vmatpush1.bf16.msra.mxu0 0
  %1377 = vmatprep.subr.bf16.mxu0 0
  %1378 = vmatpush1.bf16.msra.mxu0 0
  %1379 = vmatprep.subr.bf16.mxu0 0
  %1380 = vmatpush1.bf16.msra.mxu0 %v1363
  %1381 = vmatprep.subr.bf16.mxu0 0
  %1382 = vmatpush1.bf16.msra.mxu0 %v1362
  %1383 = vmatprep.subr.bf16.mxu0 0
  %1384 = vmatpush1.bf16.msra.mxu0 %v1361
  %1385 = vmatprep.subr.bf16.mxu0 0
  %1386 = vmatpush1.bf16.msra.mxu0 %v1360
  %1387 = vmatprep.subr.bf16.mxu0 0
  %1388 = vmatpush2.bf16.msra.mxu0 0
  %1389 = vmatprep.subr.bf16.mxu0 0
  %1390 = vmatpush2.bf16.msra.mxu0 0
  %1391 = vmatprep.subr.bf16.mxu0 0
  %1392 = vmatpush2.bf16.msra.mxu0 0
  %1393 = vmatprep.subr.bf16.mxu0 0
  %1394 = vmatpush2.bf16.msra.mxu0 0
  %1395 = vmatprep.subr.bf16.mxu0 0
  %1396 = vmatpush2.bf16.msra.mxu0 0
  %1397 = vmatprep.subr.bf16.mxu0 0
  %1398 = vmatpush2.bf16.msra.mxu0 0
  %1399 = vmatprep.subr.bf16.mxu0 0
  %1400 = vmatpush2.bf16.msra.mxu0 0
  %1401 = vmatprep.subr.bf16.mxu0 0
  %1402 = vmatpush2.bf16.msra.mxu0 0
  %1403 = vmatprep.mubr.bf16.mxu0 0
  %1404 = vmatmul.mubr.bf16.gmra.mxu0 %v1369
  %v1405 = vpop.f32.mrf.mxu0
  %v1406 = vadd.f32 %v1339, %v1405
  %v1407 = vpop.f32.mrf.mxu0
  %v1408 = vpop.f32.mrf.mxu0
  %v1409 = vpop.f32.mrf.mxu0
  %1410 = vdwg.mxu0
  %s1411 = scalar_lea.vmem %s6, 224
  %v1412 = vld [vmem:[%s1411] sm:$0xf]
  %v1413 = vld [vmem:[%s1411 + $0x4] sm:$0xf]
  %v1414 = vld [vmem:[%s1411 + $0x8] sm:$0xf]
  %v1415 = vld [vmem:[%s1411 + $0xc] sm:$0xf]
  %v1416 = vld [vmem:[%s1411 + $0x10] sm:$0xf]
  %v1417 = vld [vmem:[%s1411 + $0x14] sm:$0xf]
  %v1418 = vld [vmem:[%s1411 + $0x18] sm:$0xf]
  %v1419 = vld [vmem:[%s1411 + $0x1c] sm:$0xf]
  %v1420 = vrot.slane %v1256, 2
  %v1429 = vunpack.c.l.b16 %v1412
  %v1430 = vunpack.c.l.b16 %v1413
  %v1431 = vunpack.c.l.b16 %v1414
  %v1432 = vunpack.c.l.b16 %v1415
  %v1433 = vunpack.c.l.b16 %v1416
  %v1434 = vunpack.c.l.b16 %v1417
  %v1435 = vunpack.c.l.b16 %v1418
  %v1436 = vunpack.c.l.b16 %v1419
  %v1437 = vpack.c.b16 %v1430, %v1429
  %v1438 = vpack.c.b16 %v1432, %v1431
  %v1439 = vpack.c.b16 %v1434, %v1433
  %v1440 = vpack.c.b16 %v1436, %v1435
  %v1446 = vsel %vm934, %v1420, 0
  %1448 = vmatprep.subr.bf16.mxu0 0
  %1449 = vmatpush1.bf16.msra.mxu0 0
  %1450 = vmatprep.subr.bf16.mxu0 0
  %1451 = vmatpush1.bf16.msra.mxu0 0
  %1452 = vmatprep.subr.bf16.mxu0 0
  %1453 = vmatpush1.bf16.msra.mxu0 0
  %1454 = vmatprep.subr.bf16.mxu0 0
  %1455 = vmatpush1.bf16.msra.mxu0 0
  %1456 = vmatprep.subr.bf16.mxu0 0
  %1457 = vmatpush1.bf16.msra.mxu0 %v1440
  %1458 = vmatprep.subr.bf16.mxu0 0
  %1459 = vmatpush1.bf16.msra.mxu0 %v1439
  %1460 = vmatprep.subr.bf16.mxu0 0
  %1461 = vmatpush1.bf16.msra.mxu0 %v1438
  %1462 = vmatprep.subr.bf16.mxu0 0
  %1463 = vmatpush1.bf16.msra.mxu0 %v1437
  %1464 = vmatprep.subr.bf16.mxu0 0
  %1465 = vmatpush2.bf16.msra.mxu0 0
  %1466 = vmatprep.subr.bf16.mxu0 0
  %1467 = vmatpush2.bf16.msra.mxu0 0
  %1468 = vmatprep.subr.bf16.mxu0 0
  %1469 = vmatpush2.bf16.msra.mxu0 0
  %1470 = vmatprep.subr.bf16.mxu0 0
  %1471 = vmatpush2.bf16.msra.mxu0 0
  %1472 = vmatprep.subr.bf16.mxu0 0
  %1473 = vmatpush2.bf16.msra.mxu0 0
  %1474 = vmatprep.subr.bf16.mxu0 0
  %1475 = vmatpush2.bf16.msra.mxu0 0
  %1476 = vmatprep.subr.bf16.mxu0 0
  %1477 = vmatpush2.bf16.msra.mxu0 0
  %1478 = vmatprep.subr.bf16.mxu0 0
  %1479 = vmatpush2.bf16.msra.mxu0 0
  %1480 = vmatprep.mubr.bf16.mxu0 0
  %1481 = vmatmul.mubr.bf16.gmra.mxu0 %v1446
  %v1482 = vpop.f32.mrf.mxu0
  %v1483 = vadd.f32 0.0, %v1482
  %v1484 = vpop.f32.mrf.mxu0
  %v1485 = vpop.f32.mrf.mxu0
  %v1486 = vpop.f32.mrf.mxu0
  %1487 = vdwg.mxu0
  %v1488 = vadd.f32 %v1406, %v1483
  %s1489 = scalar_lea.vmem %s6, 256
  %v1490 = vld [vmem:[%s1489] sm:$0xf]
  %v1491 = vld [vmem:[%s1489 + $0x4] sm:$0xf]
  %v1492 = vld [vmem:[%s1489 + $0x8] sm:$0xf]
  %v1493 = vld [vmem:[%s1489 + $0xc] sm:$0xf]
  %v1494 = vld [vmem:[%s1489 + $0x10] sm:$0xf]
  %v1495 = vld [vmem:[%s1489 + $0x14] sm:$0xf]
  %v1496 = vld [vmem:[%s1489 + $0x18] sm:$0xf]
  %v1497 = vld [vmem:[%s1489 + $0x1c] sm:$0xf]
  %v1498 = vrot.slane %v1256, 3
  %v1507 = vunpack.c.l.b16 %v1490
  %v1508 = vunpack.c.l.b16 %v1491
  %v1509 = vunpack.c.l.b16 %v1492
  %v1510 = vunpack.c.l.b16 %v1493
  %v1511 = vunpack.c.l.b16 %v1494
  %v1512 = vunpack.c.l.b16 %v1495
  %v1513 = vunpack.c.l.b16 %v1496
  %v1514 = vunpack.c.l.b16 %v1497
  %v1515 = vpack.c.b16 %v1508, %v1507
  %v1516 = vpack.c.b16 %v1510, %v1509
  %v1517 = vpack.c.b16 %v1512, %v1511
  %v1518 = vpack.c.b16 %v1514, %v1513
  %v1524 = vsel %vm934, %v1498, 0
  %1526 = vmatprep.subr.bf16.mxu0 0
  %1527 = vmatpush1.bf16.msra.mxu0 0
  %1528 = vmatprep.subr.bf16.mxu0 0
  %1529 = vmatpush1.bf16.msra.mxu0 0
  %1530 = vmatprep.subr.bf16.mxu0 0
  %1531 = vmatpush1.bf16.msra.mxu0 0
  %1532 = vmatprep.subr.bf16.mxu0 0
  %1533 = vmatpush1.bf16.msra.mxu0 0
  %1534 = vmatprep.subr.bf16.mxu0 0
  %1535 = vmatpush1.bf16.msra.mxu0 %v1518
  %1536 = vmatprep.subr.bf16.mxu0 0
  %1537 = vmatpush1.bf16.msra.mxu0 %v1517
  %1538 = vmatprep.subr.bf16.mxu0 0
  %1539 = vmatpush1.bf16.msra.mxu0 %v1516
  %1540 = vmatprep.subr.bf16.mxu0 0
  %1541 = vmatpush1.bf16.msra.mxu0 %v1515
  %1542 = vmatprep.subr.bf16.mxu0 0
  %1543 = vmatpush2.bf16.msra.mxu0 0
  %1544 = vmatprep.subr.bf16.mxu0 0
  %1545 = vmatpush2.bf16.msra.mxu0 0
  %1546 = vmatprep.subr.bf16.mxu0 0
  %1547 = vmatpush2.bf16.msra.mxu0 0
  %1548 = vmatprep.subr.bf16.mxu0 0
  %1549 = vmatpush2.bf16.msra.mxu0 0
  %1550 = vmatprep.subr.bf16.mxu0 0
  %1551 = vmatpush2.bf16.msra.mxu0 0
  %1552 = vmatprep.subr.bf16.mxu0 0
  %1553 = vmatpush2.bf16.msra.mxu0 0
  %1554 = vmatprep.subr.bf16.mxu0 0
  %1555 = vmatpush2.bf16.msra.mxu0 0
  %1556 = vmatprep.subr.bf16.mxu0 0
  %1557 = vmatpush2.bf16.msra.mxu0 0
  %1558 = vmatprep.mubr.bf16.mxu0 0
  %1559 = vmatmul.mubr.bf16.gmra.mxu0 %v1524
  %v1560 = vpop.f32.mrf.mxu0
  %v1561 = vadd.f32 0.0, %v1560
  %v1562 = vpop.f32.mrf.mxu0
  %v1563 = vpop.f32.mrf.mxu0
  %v1564 = vpop.f32.mrf.mxu0
  %1565 = vdwg.mxu0
  %v1566 = vadd.f32 %v1488, %v1561
  %s1567 = scalar_lea.vmem %s6, 96
  %v1568 = vld [vmem:[%s1567] sm:$0xf]
  %v1569 = vld [vmem:[%s1567 + $0x4] sm:$0xf]
  %v1570 = vld [vmem:[%s1567 + $0x8] sm:$0xf]
  %v1571 = vld [vmem:[%s1567 + $0xc] sm:$0xf]
  %v1572 = vld [vmem:[%s1567 + $0x10] sm:$0xf]
  %v1573 = vld [vmem:[%s1567 + $0x14] sm:$0xf]
  %v1574 = vld [vmem:[%s1567 + $0x18] sm:$0xf]
  %v1575 = vld [vmem:[%s1567 + $0x1c] sm:$0xf]
  %1576 = vmatprep.subr.bf16.mxu0 0
  %1577 = vmatpush1.bf16.msra.mxu0 0
  %1578 = vmatprep.subr.bf16.mxu0 0
  %1579 = vmatpush1.bf16.msra.mxu0 0
  %1580 = vmatprep.subr.bf16.mxu0 0
  %1581 = vmatpush1.bf16.msra.mxu0 0
  %1582 = vmatprep.subr.bf16.mxu0 0
  %1583 = vmatpush1.bf16.msra.mxu0 0
  %1584 = vmatprep.subr.bf16.mxu0 0
  %1585 = vmatpush1.bf16.msra.mxu0 %v1363
  %1586 = vmatprep.subr.bf16.mxu0 0
  %1587 = vmatpush1.bf16.msra.mxu0 %v1362
  %1588 = vmatprep.subr.bf16.mxu0 0
  %1589 = vmatpush1.bf16.msra.mxu0 %v1361
  %1590 = vmatprep.subr.bf16.mxu0 0
  %1591 = vmatpush1.bf16.msra.mxu0 %v1360
  %1592 = vmatprep.subr.bf16.mxu0 0
  %1593 = vmatpush2.bf16.msra.mxu0 0
  %1594 = vmatprep.subr.bf16.mxu0 0
  %1595 = vmatpush2.bf16.msra.mxu0 0
  %1596 = vmatprep.subr.bf16.mxu0 0
  %1597 = vmatpush2.bf16.msra.mxu0 0
  %1598 = vmatprep.subr.bf16.mxu0 0
  %1599 = vmatpush2.bf16.msra.mxu0 0
  %1600 = vmatprep.subr.bf16.mxu0 0
  %1601 = vmatpush2.bf16.msra.mxu0 0
  %1602 = vmatprep.subr.bf16.mxu0 0
  %1603 = vmatpush2.bf16.msra.mxu0 0
  %1604 = vmatprep.subr.bf16.mxu0 0
  %1605 = vmatpush2.bf16.msra.mxu0 0
  %1606 = vmatprep.subr.bf16.mxu0 0
  %1607 = vmatpush2.bf16.msra.mxu0 0
  %1608 = vmatprep.mubr.bf16.mxu0 0
  %1609 = vmatmul.mubr.bf16.gmra.mxu0 %v1302
  %v1610 = vpop.f32.mrf.mxu0
  %v1611 = vadd.f32 0.0, %v1610
  %v1612 = vpop.f32.mrf.mxu0
  %v1613 = vpop.f32.mrf.mxu0
  %v1614 = vpop.f32.mrf.mxu0
  %1615 = vdwg.mxu0
  %v1624 = vunpack.c.l.b16 %v1568
  %v1625 = vunpack.c.l.b16 %v1569
  %v1626 = vunpack.c.l.b16 %v1570
  %v1627 = vunpack.c.l.b16 %v1571
  %v1628 = vunpack.c.l.b16 %v1572
  %v1629 = vunpack.c.l.b16 %v1573
  %v1630 = vunpack.c.l.b16 %v1574
  %v1631 = vunpack.c.l.b16 %v1575
  %v1632 = vpack.c.b16 %v1625, %v1624
  %v1633 = vpack.c.b16 %v1627, %v1626
  %v1634 = vpack.c.b16 %v1629, %v1628
  %v1635 = vpack.c.b16 %v1631, %v1630
  %1640 = vmatprep.subr.bf16.mxu0 0
  %1641 = vmatpush1.bf16.msra.mxu0 0
  %1642 = vmatprep.subr.bf16.mxu0 0
  %1643 = vmatpush1.bf16.msra.mxu0 0
  %1644 = vmatprep.subr.bf16.mxu0 0
  %1645 = vmatpush1.bf16.msra.mxu0 0
  %1646 = vmatprep.subr.bf16.mxu0 0
  %1647 = vmatpush1.bf16.msra.mxu0 0
  %1648 = vmatprep.subr.bf16.mxu0 0
  %1649 = vmatpush1.bf16.msra.mxu0 %v1635
  %1650 = vmatprep.subr.bf16.mxu0 0
  %1651 = vmatpush1.bf16.msra.mxu0 %v1634
  %1652 = vmatprep.subr.bf16.mxu0 0
  %1653 = vmatpush1.bf16.msra.mxu0 %v1633
  %1654 = vmatprep.subr.bf16.mxu0 0
  %1655 = vmatpush1.bf16.msra.mxu0 %v1632
  %1656 = vmatprep.subr.bf16.mxu0 0
  %1657 = vmatpush2.bf16.msra.mxu0 0
  %1658 = vmatprep.subr.bf16.mxu0 0
  %1659 = vmatpush2.bf16.msra.mxu0 0
  %1660 = vmatprep.subr.bf16.mxu0 0
  %1661 = vmatpush2.bf16.msra.mxu0 0
  %1662 = vmatprep.subr.bf16.mxu0 0
  %1663 = vmatpush2.bf16.msra.mxu0 0
  %1664 = vmatprep.subr.bf16.mxu0 0
  %1665 = vmatpush2.bf16.msra.mxu0 0
  %1666 = vmatprep.subr.bf16.mxu0 0
  %1667 = vmatpush2.bf16.msra.mxu0 0
  %1668 = vmatprep.subr.bf16.mxu0 0
  %1669 = vmatpush2.bf16.msra.mxu0 0
  %1670 = vmatprep.subr.bf16.mxu0 0
  %1671 = vmatpush2.bf16.msra.mxu0 0
  %1672 = vmatprep.mubr.bf16.mxu0 0
  %1673 = vmatmul.mubr.bf16.gmra.mxu0 %v1369
  %v1674 = vpop.f32.mrf.mxu0
  %v1675 = vadd.f32 %v1611, %v1674
  %v1676 = vpop.f32.mrf.mxu0
  %v1677 = vpop.f32.mrf.mxu0
  %v1678 = vpop.f32.mrf.mxu0
  %1679 = vdwg.mxu0
  %s1680 = scalar_lea.vmem %s6, 192
  %v1681 = vld [vmem:[%s1680] sm:$0xf]
  %v1682 = vld [vmem:[%s1680 + $0x4] sm:$0xf]
  %v1683 = vld [vmem:[%s1680 + $0x8] sm:$0xf]
  %v1684 = vld [vmem:[%s1680 + $0xc] sm:$0xf]
  %v1685 = vld [vmem:[%s1680 + $0x10] sm:$0xf]
  %v1686 = vld [vmem:[%s1680 + $0x14] sm:$0xf]
  %v1687 = vld [vmem:[%s1680 + $0x18] sm:$0xf]
  %v1688 = vld [vmem:[%s1680 + $0x1c] sm:$0xf]
  %v1697 = vunpack.c.l.b16 %v1681
  %v1698 = vunpack.c.l.b16 %v1682
  %v1699 = vunpack.c.l.b16 %v1683
  %v1700 = vunpack.c.l.b16 %v1684
  %v1701 = vunpack.c.l.b16 %v1685
  %v1702 = vunpack.c.l.b16 %v1686
  %v1703 = vunpack.c.l.b16 %v1687
  %v1704 = vunpack.c.l.b16 %v1688
  %v1705 = vpack.c.b16 %v1698, %v1697
  %v1706 = vpack.c.b16 %v1700, %v1699
  %v1707 = vpack.c.b16 %v1702, %v1701
  %v1708 = vpack.c.b16 %v1704, %v1703
  %1713 = vmatprep.subr.bf16.mxu0 0
  %1714 = vmatpush1.bf16.msra.mxu0 0
  %1715 = vmatprep.subr.bf16.mxu0 0
  %1716 = vmatpush1.bf16.msra.mxu0 0
  %1717 = vmatprep.subr.bf16.mxu0 0
  %1718 = vmatpush1.bf16.msra.mxu0 0
  %1719 = vmatprep.subr.bf16.mxu0 0
  %1720 = vmatpush1.bf16.msra.mxu0 0
  %1721 = vmatprep.subr.bf16.mxu0 0
  %1722 = vmatpush1.bf16.msra.mxu0 %v1708
  %1723 = vmatprep.subr.bf16.mxu0 0
  %1724 = vmatpush1.bf16.msra.mxu0 %v1707
  %1725 = vmatprep.subr.bf16.mxu0 0
  %1726 = vmatpush1.bf16.msra.mxu0 %v1706
  %1727 = vmatprep.subr.bf16.mxu0 0
  %1728 = vmatpush1.bf16.msra.mxu0 %v1705
  %1729 = vmatprep.subr.bf16.mxu0 0
  %1730 = vmatpush2.bf16.msra.mxu0 0
  %1731 = vmatprep.subr.bf16.mxu0 0
  %1732 = vmatpush2.bf16.msra.mxu0 0
  %1733 = vmatprep.subr.bf16.mxu0 0
  %1734 = vmatpush2.bf16.msra.mxu0 0
  %1735 = vmatprep.subr.bf16.mxu0 0
  %1736 = vmatpush2.bf16.msra.mxu0 0
  %1737 = vmatprep.subr.bf16.mxu0 0
  %1738 = vmatpush2.bf16.msra.mxu0 0
  %1739 = vmatprep.subr.bf16.mxu0 0
  %1740 = vmatpush2.bf16.msra.mxu0 0
  %1741 = vmatprep.subr.bf16.mxu0 0
  %1742 = vmatpush2.bf16.msra.mxu0 0
  %1743 = vmatprep.subr.bf16.mxu0 0
  %1744 = vmatpush2.bf16.msra.mxu0 0
  %1745 = vmatprep.mubr.bf16.mxu0 0
  %1746 = vmatmul.mubr.bf16.gmra.mxu0 %v1446
  %v1747 = vpop.f32.mrf.mxu0
  %v1748 = vadd.f32 0.0, %v1747
  %v1749 = vpop.f32.mrf.mxu0
  %v1750 = vpop.f32.mrf.mxu0
  %v1751 = vpop.f32.mrf.mxu0
  %1752 = vdwg.mxu0
  %v1753 = vadd.f32 %v1675, %v1748
  %1754 = vmatprep.subr.bf16.mxu0 0
  %1755 = vmatpush1.bf16.msra.mxu0 0
  %1756 = vmatprep.subr.bf16.mxu0 0
  %1757 = vmatpush1.bf16.msra.mxu0 0
  %1758 = vmatprep.subr.bf16.mxu0 0
  %1759 = vmatpush1.bf16.msra.mxu0 0
  %1760 = vmatprep.subr.bf16.mxu0 0
  %1761 = vmatpush1.bf16.msra.mxu0 0
  %1762 = vmatprep.subr.bf16.mxu0 0
  %1763 = vmatpush1.bf16.msra.mxu0 %v1440
  %1764 = vmatprep.subr.bf16.mxu0 0
  %1765 = vmatpush1.bf16.msra.mxu0 %v1439
  %1766 = vmatprep.subr.bf16.mxu0 0
  %1767 = vmatpush1.bf16.msra.mxu0 %v1438
  %1768 = vmatprep.subr.bf16.mxu0 0
  %1769 = vmatpush1.bf16.msra.mxu0 %v1437
  %1770 = vmatprep.subr.bf16.mxu0 0
  %1771 = vmatpush2.bf16.msra.mxu0 0
  %1772 = vmatprep.subr.bf16.mxu0 0
  %1773 = vmatpush2.bf16.msra.mxu0 0
  %1774 = vmatprep.subr.bf16.mxu0 0
  %1775 = vmatpush2.bf16.msra.mxu0 0
  %1776 = vmatprep.subr.bf16.mxu0 0
  %1777 = vmatpush2.bf16.msra.mxu0 0
  %1778 = vmatprep.subr.bf16.mxu0 0
  %1779 = vmatpush2.bf16.msra.mxu0 0
  %1780 = vmatprep.subr.bf16.mxu0 0
  %1781 = vmatpush2.bf16.msra.mxu0 0
  %1782 = vmatprep.subr.bf16.mxu0 0
  %1783 = vmatpush2.bf16.msra.mxu0 0
  %1784 = vmatprep.subr.bf16.mxu0 0
  %1785 = vmatpush2.bf16.msra.mxu0 0
  %1786 = vmatprep.mubr.bf16.mxu0 0
  %1787 = vmatmul.mubr.bf16.gmra.mxu0 %v1524
  %v1788 = vpop.f32.mrf.mxu0
  %v1789 = vadd.f32 0.0, %v1788
  %v1790 = vpop.f32.mrf.mxu0
  %v1791 = vpop.f32.mrf.mxu0
  %v1792 = vpop.f32.mrf.mxu0
  %1793 = vdwg.mxu0
  %v1794 = vadd.f32 %v1753, %v1789
  %s1795 = scalar_lea.vmem %s6, 32
  %v1796 = vld [vmem:[%s1795] sm:$0xf]
  %v1797 = vld [vmem:[%s1795 + $0x4] sm:$0xf]
  %v1798 = vld [vmem:[%s1795 + $0x8] sm:$0xf]
  %v1799 = vld [vmem:[%s1795 + $0xc] sm:$0xf]
  %v1800 = vld [vmem:[%s1795 + $0x10] sm:$0xf]
  %v1801 = vld [vmem:[%s1795 + $0x14] sm:$0xf]
  %v1802 = vld [vmem:[%s1795 + $0x18] sm:$0xf]
  %v1803 = vld [vmem:[%s1795 + $0x1c] sm:$0xf]
  %s1804 = scalar_lea.vmem %s6, 64
  %v1805 = vld [vmem:[%s1804] sm:$0xf]
  %v1806 = vld [vmem:[%s1804 + $0x4] sm:$0xf]
  %v1807 = vld [vmem:[%s1804 + $0x8] sm:$0xf]
  %v1808 = vld [vmem:[%s1804 + $0xc] sm:$0xf]
  %v1809 = vld [vmem:[%s1804 + $0x10] sm:$0xf]
  %v1810 = vld [vmem:[%s1804 + $0x14] sm:$0xf]
  %v1811 = vld [vmem:[%s1804 + $0x18] sm:$0xf]
  %v1812 = vld [vmem:[%s1804 + $0x1c] sm:$0xf]
  %v1821 = vunpack.c.l.b16 %v1805
  %v1822 = vunpack.c.l.b16 %v1806
  %v1823 = vunpack.c.l.b16 %v1807
  %v1824 = vunpack.c.l.b16 %v1808
  %v1825 = vunpack.c.l.b16 %v1809
  %v1826 = vunpack.c.l.b16 %v1810
  %v1827 = vunpack.c.l.b16 %v1811
  %v1828 = vunpack.c.l.b16 %v1812
  %v1829 = vpack.c.b16 %v1822, %v1821
  %v1830 = vpack.c.b16 %v1824, %v1823
  %v1831 = vpack.c.b16 %v1826, %v1825
  %v1832 = vpack.c.b16 %v1828, %v1827
  %1837 = vmatprep.subr.bf16.mxu0 0
  %1838 = vmatpush1.bf16.msra.mxu0 0
  %1839 = vmatprep.subr.bf16.mxu0 0
  %1840 = vmatpush1.bf16.msra.mxu0 0
  %1841 = vmatprep.subr.bf16.mxu0 0
  %1842 = vmatpush1.bf16.msra.mxu0 0
  %1843 = vmatprep.subr.bf16.mxu0 0
  %1844 = vmatpush1.bf16.msra.mxu0 0
  %1845 = vmatprep.subr.bf16.mxu0 0
  %1846 = vmatpush1.bf16.msra.mxu0 %v1832
  %1847 = vmatprep.subr.bf16.mxu0 0
  %1848 = vmatpush1.bf16.msra.mxu0 %v1831
  %1849 = vmatprep.subr.bf16.mxu0 0
  %1850 = vmatpush1.bf16.msra.mxu0 %v1830
  %1851 = vmatprep.subr.bf16.mxu0 0
  %1852 = vmatpush1.bf16.msra.mxu0 %v1829
  %1853 = vmatprep.subr.bf16.mxu0 0
  %1854 = vmatpush2.bf16.msra.mxu0 0
  %1855 = vmatprep.subr.bf16.mxu0 0
  %1856 = vmatpush2.bf16.msra.mxu0 0
  %1857 = vmatprep.subr.bf16.mxu0 0
  %1858 = vmatpush2.bf16.msra.mxu0 0
  %1859 = vmatprep.subr.bf16.mxu0 0
  %1860 = vmatpush2.bf16.msra.mxu0 0
  %1861 = vmatprep.subr.bf16.mxu0 0
  %1862 = vmatpush2.bf16.msra.mxu0 0
  %1863 = vmatprep.subr.bf16.mxu0 0
  %1864 = vmatpush2.bf16.msra.mxu0 0
  %1865 = vmatprep.subr.bf16.mxu0 0
  %1866 = vmatpush2.bf16.msra.mxu0 0
  %1867 = vmatprep.subr.bf16.mxu0 0
  %1868 = vmatpush2.bf16.msra.mxu0 0
  %1869 = vmatprep.mubr.bf16.mxu0 0
  %1870 = vmatmul.mubr.bf16.gmra.mxu0 %v1302
  %v1871 = vpop.f32.mrf.mxu0
  %v1872 = vadd.f32 0.0, %v1871
  %v1873 = vpop.f32.mrf.mxu0
  %v1874 = vpop.f32.mrf.mxu0
  %v1875 = vpop.f32.mrf.mxu0
  %1876 = vdwg.mxu0
  %v1885 = vunpack.c.l.b16 %v1796
  %v1886 = vunpack.c.l.b16 %v1797
  %v1887 = vunpack.c.l.b16 %v1798
  %v1888 = vunpack.c.l.b16 %v1799
  %v1889 = vunpack.c.l.b16 %v1800
  %v1890 = vunpack.c.l.b16 %v1801
  %v1891 = vunpack.c.l.b16 %v1802
  %v1892 = vunpack.c.l.b16 %v1803
  %v1893 = vpack.c.b16 %v1886, %v1885
  %v1894 = vpack.c.b16 %v1888, %v1887
  %v1895 = vpack.c.b16 %v1890, %v1889
  %v1896 = vpack.c.b16 %v1892, %v1891
  %1901 = vmatprep.subr.bf16.mxu0 0
  %1902 = vmatpush1.bf16.msra.mxu0 0
  %1903 = vmatprep.subr.bf16.mxu0 0
  %1904 = vmatpush1.bf16.msra.mxu0 0
  %1905 = vmatprep.subr.bf16.mxu0 0
  %1906 = vmatpush1.bf16.msra.mxu0 0
  %1907 = vmatprep.subr.bf16.mxu0 0
  %1908 = vmatpush1.bf16.msra.mxu0 0
  %1909 = vmatprep.subr.bf16.mxu0 0
  %1910 = vmatpush1.bf16.msra.mxu0 %v1896
  %1911 = vmatprep.subr.bf16.mxu0 0
  %1912 = vmatpush1.bf16.msra.mxu0 %v1895
  %1913 = vmatprep.subr.bf16.mxu0 0
  %1914 = vmatpush1.bf16.msra.mxu0 %v1894
  %1915 = vmatprep.subr.bf16.mxu0 0
  %1916 = vmatpush1.bf16.msra.mxu0 %v1893
  %1917 = vmatprep.subr.bf16.mxu0 0
  %1918 = vmatpush2.bf16.msra.mxu0 0
  %1919 = vmatprep.subr.bf16.mxu0 0
  %1920 = vmatpush2.bf16.msra.mxu0 0
  %1921 = vmatprep.subr.bf16.mxu0 0
  %1922 = vmatpush2.bf16.msra.mxu0 0
  %1923 = vmatprep.subr.bf16.mxu0 0
  %1924 = vmatpush2.bf16.msra.mxu0 0
  %1925 = vmatprep.subr.bf16.mxu0 0
  %1926 = vmatpush2.bf16.msra.mxu0 0
  %1927 = vmatprep.subr.bf16.mxu0 0
  %1928 = vmatpush2.bf16.msra.mxu0 0
  %1929 = vmatprep.subr.bf16.mxu0 0
  %1930 = vmatpush2.bf16.msra.mxu0 0
  %1931 = vmatprep.subr.bf16.mxu0 0
  %1932 = vmatpush2.bf16.msra.mxu0 0
  %1933 = vmatprep.mubr.bf16.mxu0 0
  %1934 = vmatmul.mubr.bf16.gmra.mxu0 %v1369
  %v1935 = vpop.f32.mrf.mxu0
  %v1936 = vadd.f32 %v1872, %v1935
  %v1937 = vpop.f32.mrf.mxu0
  %v1938 = vpop.f32.mrf.mxu0
  %v1939 = vpop.f32.mrf.mxu0
  %1940 = vdwg.mxu0
  %1941 = vmatprep.subr.bf16.mxu0 0
  %1942 = vmatpush1.bf16.msra.mxu0 0
  %1943 = vmatprep.subr.bf16.mxu0 0
  %1944 = vmatpush1.bf16.msra.mxu0 0
  %1945 = vmatprep.subr.bf16.mxu0 0
  %1946 = vmatpush1.bf16.msra.mxu0 0
  %1947 = vmatprep.subr.bf16.mxu0 0
  %1948 = vmatpush1.bf16.msra.mxu0 0
  %1949 = vmatprep.subr.bf16.mxu0 0
  %1950 = vmatpush1.bf16.msra.mxu0 %v1363
  %1951 = vmatprep.subr.bf16.mxu0 0
  %1952 = vmatpush1.bf16.msra.mxu0 %v1362
  %1953 = vmatprep.subr.bf16.mxu0 0
  %1954 = vmatpush1.bf16.msra.mxu0 %v1361
  %1955 = vmatprep.subr.bf16.mxu0 0
  %1956 = vmatpush1.bf16.msra.mxu0 %v1360
  %1957 = vmatprep.subr.bf16.mxu0 0
  %1958 = vmatpush2.bf16.msra.mxu0 0
  %1959 = vmatprep.subr.bf16.mxu0 0
  %1960 = vmatpush2.bf16.msra.mxu0 0
  %1961 = vmatprep.subr.bf16.mxu0 0
  %1962 = vmatpush2.bf16.msra.mxu0 0
  %1963 = vmatprep.subr.bf16.mxu0 0
  %1964 = vmatpush2.bf16.msra.mxu0 0
  %1965 = vmatprep.subr.bf16.mxu0 0
  %1966 = vmatpush2.bf16.msra.mxu0 0
  %1967 = vmatprep.subr.bf16.mxu0 0
  %1968 = vmatpush2.bf16.msra.mxu0 0
  %1969 = vmatprep.subr.bf16.mxu0 0
  %1970 = vmatpush2.bf16.msra.mxu0 0
  %1971 = vmatprep.subr.bf16.mxu0 0
  %1972 = vmatpush2.bf16.msra.mxu0 0
  %1973 = vmatprep.mubr.bf16.mxu0 0
  %1974 = vmatmul.mubr.bf16.gmra.mxu0 %v1446
  %v1975 = vpop.f32.mrf.mxu0
  %v1976 = vadd.f32 0.0, %v1975
  %v1977 = vpop.f32.mrf.mxu0
  %v1978 = vpop.f32.mrf.mxu0
  %v1979 = vpop.f32.mrf.mxu0
  %1980 = vdwg.mxu0
  %v1981 = vadd.f32 %v1936, %v1976
  %1982 = vmatprep.subr.bf16.mxu0 0
  %1983 = vmatpush1.bf16.msra.mxu0 0
  %1984 = vmatprep.subr.bf16.mxu0 0
  %1985 = vmatpush1.bf16.msra.mxu0 0
  %1986 = vmatprep.subr.bf16.mxu0 0
  %1987 = vmatpush1.bf16.msra.mxu0 0
  %1988 = vmatprep.subr.bf16.mxu0 0
  %1989 = vmatpush1.bf16.msra.mxu0 0
  %1990 = vmatprep.subr.bf16.mxu0 0
  %1991 = vmatpush1.bf16.msra.mxu0 %v1296
  %1992 = vmatprep.subr.bf16.mxu0 0
  %1993 = vmatpush1.bf16.msra.mxu0 %v1295
  %1994 = vmatprep.subr.bf16.mxu0 0
  %1995 = vmatpush1.bf16.msra.mxu0 %v1294
  %1996 = vmatprep.subr.bf16.mxu0 0
  %1997 = vmatpush1.bf16.msra.mxu0 %v1293
  %1998 = vmatprep.subr.bf16.mxu0 0
  %1999 = vmatpush2.bf16.msra.mxu0 0
  %2000 = vmatprep.subr.bf16.mxu0 0
  %2001 = vmatpush2.bf16.msra.mxu0 0
  %2002 = vmatprep.subr.bf16.mxu0 0
  %2003 = vmatpush2.bf16.msra.mxu0 0
  %2004 = vmatprep.subr.bf16.mxu0 0
  %2005 = vmatpush2.bf16.msra.mxu0 0
  %2006 = vmatprep.subr.bf16.mxu0 0
  %2007 = vmatpush2.bf16.msra.mxu0 0
  %2008 = vmatprep.subr.bf16.mxu0 0
  %2009 = vmatpush2.bf16.msra.mxu0 0
  %2010 = vmatprep.subr.bf16.mxu0 0
  %2011 = vmatpush2.bf16.msra.mxu0 0
  %2012 = vmatprep.subr.bf16.mxu0 0
  %2013 = vmatpush2.bf16.msra.mxu0 0
  %2014 = vmatprep.mubr.bf16.mxu0 0
  %2015 = vmatmul.mubr.bf16.gmra.mxu0 %v1524
  %v2016 = vpop.f32.mrf.mxu0
  %v2017 = vadd.f32 0.0, %v2016
  %v2018 = vpop.f32.mrf.mxu0
  %v2019 = vpop.f32.mrf.mxu0
  %v2020 = vpop.f32.mrf.mxu0
  %2021 = vdwg.mxu0
  %v2022 = vadd.f32 %v1981, %v2017
  %v2023 = vld [vmem:[%s6] sm:$0xf]
  %v2024 = vld [vmem:[%s6 + $0x4] sm:$0xf]
  %v2025 = vld [vmem:[%s6 + $0x8] sm:$0xf]
  %v2026 = vld [vmem:[%s6 + $0xc] sm:$0xf]
  %v2027 = vld [vmem:[%s6 + $0x10] sm:$0xf]
  %v2028 = vld [vmem:[%s6 + $0x14] sm:$0xf]
  %v2029 = vld [vmem:[%s6 + $0x18] sm:$0xf]
  %v2030 = vld [vmem:[%s6 + $0x1c] sm:$0xf]
  %2031 = vmatprep.subr.bf16.mxu0 0
  %2032 = vmatpush1.bf16.msra.mxu0 0
  %2033 = vmatprep.subr.bf16.mxu0 0
  %2034 = vmatpush1.bf16.msra.mxu0 0
  %2035 = vmatprep.subr.bf16.mxu0 0
  %2036 = vmatpush1.bf16.msra.mxu0 0
  %2037 = vmatprep.subr.bf16.mxu0 0
  %2038 = vmatpush1.bf16.msra.mxu0 0
  %2039 = vmatprep.subr.bf16.mxu0 0
  %2040 = vmatpush1.bf16.msra.mxu0 %v1896
  %2041 = vmatprep.subr.bf16.mxu0 0
  %2042 = vmatpush1.bf16.msra.mxu0 %v1895
  %2043 = vmatprep.subr.bf16.mxu0 0
  %2044 = vmatpush1.bf16.msra.mxu0 %v1894
  %2045 = vmatprep.subr.bf16.mxu0 0
  %2046 = vmatpush1.bf16.msra.mxu0 %v1893
  %2047 = vmatprep.subr.bf16.mxu0 0
  %2048 = vmatpush2.bf16.msra.mxu0 0
  %2049 = vmatprep.subr.bf16.mxu0 0
  %2050 = vmatpush2.bf16.msra.mxu0 0
  %2051 = vmatprep.subr.bf16.mxu0 0
  %2052 = vmatpush2.bf16.msra.mxu0 0
  %2053 = vmatprep.subr.bf16.mxu0 0
  %2054 = vmatpush2.bf16.msra.mxu0 0
  %2055 = vmatprep.subr.bf16.mxu0 0
  %2056 = vmatpush2.bf16.msra.mxu0 0
  %2057 = vmatprep.subr.bf16.mxu0 0
  %2058 = vmatpush2.bf16.msra.mxu0 0
  %2059 = vmatprep.subr.bf16.mxu0 0
  %2060 = vmatpush2.bf16.msra.mxu0 0
  %2061 = vmatprep.subr.bf16.mxu0 0
  %2062 = vmatpush2.bf16.msra.mxu0 0
  %2063 = vmatprep.mubr.bf16.mxu0 0
  %2064 = vmatmul.mubr.bf16.gmra.mxu0 %v1302
  %v2065 = vpop.f32.mrf.mxu0
  %v2066 = vadd.f32 0.0, %v2065
  %v2067 = vpop.f32.mrf.mxu0
  %v2068 = vpop.f32.mrf.mxu0
  %v2069 = vpop.f32.mrf.mxu0
  %2070 = vdwg.mxu0
  %v2079 = vunpack.c.l.b16 %v2023
  %v2080 = vunpack.c.l.b16 %v2024
  %v2081 = vunpack.c.l.b16 %v2025
  %v2082 = vunpack.c.l.b16 %v2026
  %v2083 = vunpack.c.l.b16 %v2027
  %v2084 = vunpack.c.l.b16 %v2028
  %v2085 = vunpack.c.l.b16 %v2029
  %v2086 = vunpack.c.l.b16 %v2030
  %v2087 = vpack.c.b16 %v2080, %v2079
  %v2088 = vpack.c.b16 %v2082, %v2081
  %v2089 = vpack.c.b16 %v2084, %v2083
  %v2090 = vpack.c.b16 %v2086, %v2085
  %2095 = vmatprep.subr.bf16.mxu0 0
  %2096 = vmatpush1.bf16.msra.mxu0 0
  %2097 = vmatprep.subr.bf16.mxu0 0
  %2098 = vmatpush1.bf16.msra.mxu0 0
  %2099 = vmatprep.subr.bf16.mxu0 0
  %2100 = vmatpush1.bf16.msra.mxu0 0
  %2101 = vmatprep.subr.bf16.mxu0 0
  %2102 = vmatpush1.bf16.msra.mxu0 0
  %2103 = vmatprep.subr.bf16.mxu0 0
  %2104 = vmatpush1.bf16.msra.mxu0 %v2090
  %2105 = vmatprep.subr.bf16.mxu0 0
  %2106 = vmatpush1.bf16.msra.mxu0 %v2089
  %2107 = vmatprep.subr.bf16.mxu0 0
  %2108 = vmatpush1.bf16.msra.mxu0 %v2088
  %2109 = vmatprep.subr.bf16.mxu0 0
  %2110 = vmatpush1.bf16.msra.mxu0 %v2087
  %2111 = vmatprep.subr.bf16.mxu0 0
  %2112 = vmatpush2.bf16.msra.mxu0 0
  %2113 = vmatprep.subr.bf16.mxu0 0
  %2114 = vmatpush2.bf16.msra.mxu0 0
  %2115 = vmatprep.subr.bf16.mxu0 0
  %2116 = vmatpush2.bf16.msra.mxu0 0
  %2117 = vmatprep.subr.bf16.mxu0 0
  %2118 = vmatpush2.bf16.msra.mxu0 0
  %2119 = vmatprep.subr.bf16.mxu0 0
  %2120 = vmatpush2.bf16.msra.mxu0 0
  %2121 = vmatprep.subr.bf16.mxu0 0
  %2122 = vmatpush2.bf16.msra.mxu0 0
  %2123 = vmatprep.subr.bf16.mxu0 0
  %2124 = vmatpush2.bf16.msra.mxu0 0
  %2125 = vmatprep.subr.bf16.mxu0 0
  %2126 = vmatpush2.bf16.msra.mxu0 0
  %2127 = vmatprep.mubr.bf16.mxu0 0
  %2128 = vmatmul.mubr.bf16.gmra.mxu0 %v1369
  %v2129 = vpop.f32.mrf.mxu0
  %v2130 = vadd.f32 %v2066, %v2129
  %v2131 = vpop.f32.mrf.mxu0
  %v2132 = vpop.f32.mrf.mxu0
  %v2133 = vpop.f32.mrf.mxu0
  %2134 = vdwg.mxu0
  %2135 = vmatprep.subr.bf16.mxu0 0
  %2136 = vmatpush1.bf16.msra.mxu0 0
  %2137 = vmatprep.subr.bf16.mxu0 0
  %2138 = vmatpush1.bf16.msra.mxu0 0
  %2139 = vmatprep.subr.bf16.mxu0 0
  %2140 = vmatpush1.bf16.msra.mxu0 0
  %2141 = vmatprep.subr.bf16.mxu0 0
  %2142 = vmatpush1.bf16.msra.mxu0 0
  %2143 = vmatprep.subr.bf16.mxu0 0
  %2144 = vmatpush1.bf16.msra.mxu0 %v1635
  %2145 = vmatprep.subr.bf16.mxu0 0
  %2146 = vmatpush1.bf16.msra.mxu0 %v1634
  %2147 = vmatprep.subr.bf16.mxu0 0
  %2148 = vmatpush1.bf16.msra.mxu0 %v1633
  %2149 = vmatprep.subr.bf16.mxu0 0
  %2150 = vmatpush1.bf16.msra.mxu0 %v1632
  %2151 = vmatprep.subr.bf16.mxu0 0
  %2152 = vmatpush2.bf16.msra.mxu0 0
  %2153 = vmatprep.subr.bf16.mxu0 0
  %2154 = vmatpush2.bf16.msra.mxu0 0
  %2155 = vmatprep.subr.bf16.mxu0 0
  %2156 = vmatpush2.bf16.msra.mxu0 0
  %2157 = vmatprep.subr.bf16.mxu0 0
  %2158 = vmatpush2.bf16.msra.mxu0 0
  %2159 = vmatprep.subr.bf16.mxu0 0
  %2160 = vmatpush2.bf16.msra.mxu0 0
  %2161 = vmatprep.subr.bf16.mxu0 0
  %2162 = vmatpush2.bf16.msra.mxu0 0
  %2163 = vmatprep.subr.bf16.mxu0 0
  %2164 = vmatpush2.bf16.msra.mxu0 0
  %2165 = vmatprep.subr.bf16.mxu0 0
  %2166 = vmatpush2.bf16.msra.mxu0 0
  %2167 = vmatprep.mubr.bf16.mxu0 0
  %2168 = vmatmul.mubr.bf16.gmra.mxu0 %v1446
  %v2169 = vpop.f32.mrf.mxu0
  %v2170 = vadd.f32 0.0, %v2169
  %v2171 = vpop.f32.mrf.mxu0
  %v2172 = vpop.f32.mrf.mxu0
  %v2173 = vpop.f32.mrf.mxu0
  %2174 = vdwg.mxu0
  %v2175 = vadd.f32 %v2130, %v2170
  %2176 = vmatprep.subr.bf16.mxu0 0
  %2177 = vmatpush1.bf16.msra.mxu0 0
  %2178 = vmatprep.subr.bf16.mxu0 0
  %2179 = vmatpush1.bf16.msra.mxu0 0
  %2180 = vmatprep.subr.bf16.mxu0 0
  %2181 = vmatpush1.bf16.msra.mxu0 0
  %2182 = vmatprep.subr.bf16.mxu0 0
  %2183 = vmatpush1.bf16.msra.mxu0 0
  %2184 = vmatprep.subr.bf16.mxu0 0
  %2185 = vmatpush1.bf16.msra.mxu0 %v1363
  %2186 = vmatprep.subr.bf16.mxu0 0
  %2187 = vmatpush1.bf16.msra.mxu0 %v1362
  %2188 = vmatprep.subr.bf16.mxu0 0
  %2189 = vmatpush1.bf16.msra.mxu0 %v1361
  %2190 = vmatprep.subr.bf16.mxu0 0
  %2191 = vmatpush1.bf16.msra.mxu0 %v1360
  %2192 = vmatprep.subr.bf16.mxu0 0
  %2193 = vmatpush2.bf16.msra.mxu0 0
  %2194 = vmatprep.subr.bf16.mxu0 0
  %2195 = vmatpush2.bf16.msra.mxu0 0
  %2196 = vmatprep.subr.bf16.mxu0 0
  %2197 = vmatpush2.bf16.msra.mxu0 0
  %2198 = vmatprep.subr.bf16.mxu0 0
  %2199 = vmatpush2.bf16.msra.mxu0 0
  %2200 = vmatprep.subr.bf16.mxu0 0
  %2201 = vmatpush2.bf16.msra.mxu0 0
  %2202 = vmatprep.subr.bf16.mxu0 0
  %2203 = vmatpush2.bf16.msra.mxu0 0
  %2204 = vmatprep.subr.bf16.mxu0 0
  %2205 = vmatpush2.bf16.msra.mxu0 0
  %2206 = vmatprep.subr.bf16.mxu0 0
  %2207 = vmatpush2.bf16.msra.mxu0 0
  %2208 = vmatprep.mubr.bf16.mxu0 0
  %2209 = vmatmul.mubr.bf16.gmra.mxu0 %v1524
  %v2210 = vpop.f32.mrf.mxu0
  %v2211 = vadd.f32 0.0, %v2210
  %v2212 = vpop.f32.mrf.mxu0
  %v2213 = vpop.f32.mrf.mxu0
  %v2214 = vpop.f32.mrf.mxu0
  %2215 = vdwg.mxu0
  %v2216 = vadd.f32 %v2175, %v2211
  %v2218 = vrot.slane %v1794, 6
  %v2221 = vrot.slane %v2022, 4
  %v2224 = vrot.slane %v2216, 2
  %vm2226 = vcmask 1041408
  %v2227 = vsel %vm2226, %v1566, %v2218
  %vm2228 = vcmask 1043456
  %v2229 = vsel %vm2228, %v2227, %v2221
  %vm2230 = vcmask 1045504
  %v2231 = vsel %vm2230, %v2229, %v2224
  %v2232 = vld [vmem:[%s7] sm:$0x1]
  %v2234 = vlaneseq
  %v2235 = vshrl.u32 %v2234, 7
  %v2236 = vsub.s32 0, %v2235
  %v2237 = vrot.slane %v2232, %v2236
  %v2239 = vadd.f32 %v2231, %v2237
  %v2240 = vld [vmem:[%s8] sm:$0x1]
  %v2241 = vld [vmem:[%s9] sm:$0x1]
  %v2242 = vsel %vm934, %v2239, 0.0
  %v2243 = vrot.slane %v2242, 4
  %v2244 = vadd.f32 %v2242, %v2243
  %v2245 = vrot.slane %v2244, 2
  %v2246 = vadd.f32 %v2244, %v2245
  %v2247 = vrot.slane %v2246, 1
  %v2248 = vadd.f32 %v2246, %v2247
  %v2249 = vmul.f32 %v2248, 0.125
  %v2250 = vsub.f32 %v2239, %v2249
  %v2251 = vmul.f32 %v2250, %v2250
  %v2252 = vsel %vm934, %v2251, 0.0
  %v2253 = vrot.slane %v2252, 4
  %v2254 = vadd.f32 %v2252, %v2253
  %v2255 = vrot.slane %v2254, 2
  %v2256 = vadd.f32 %v2254, %v2255
  %v2257 = vrot.slane %v2256, 1
  %v2258 = vadd.f32 %v2256, %v2257
  %v2259 = vmul.f32 %v2258, 0.125
  %v2260 = vadd.f32 %v2259, 1e-05
  %v2261 = vrsqrt.pop %v2260
  %v2262 = vmul.f32 %v2240, %v2261
  %v2264 = vlaneseq
  %v2265 = vshrl.u32 %v2264, 7
  %v2266 = vsub.s32 0, %v2265
  %v2267 = vrot.slane %v2262, %v2266
  %v2269 = vmul.f32 %v2250, %v2267
  %v2271 = vlaneseq
  %v2272 = vshrl.u32 %v2271, 7
  %v2273 = vsub.s32 0, %v2272
  %v2274 = vrot.slane %v2241, %v2273
  %v2276 = vadd.f32 %v2269, %v2274
  %v2277 = vmax.f32 %v2276, 0.0
  %v2278 = vpack.c.bf16 %v2277, %v2277
  %v2279 = vld [vmem:[%s1] sm:$0x3]
  %v2280 = vpack.c.bf16 %v2279, %v2279
  %v2281 = vld [vmem:[%s11] sm:$0xff]
  %v2282 = vld [vmem:[%s11 + $0x8] sm:$0xff]
  %v2283 = vld [vmem:[%s10] sm:$0xff]
  %v2284 = vld [vmem:[%s10 + $0x8] sm:$0xff]
  %v2285 = vld [vmem:[%s10 + $0x10] sm:$0xff]
  %v2286 = vld [vmem:[%s10 + $0x18] sm:$0xff]
  %v2287 = vld [vmem:[%s10 + $0x20] sm:$0xff]
  %v2288 = vld [vmem:[%s10 + $0x28] sm:$0xff]
  %v2289 = vld [vmem:[%s10 + $0x30] sm:$0xff]
  %v2290 = vld [vmem:[%s10 + $0x38] sm:$0xff]
  %v2291 = vld [vmem:[%s10 + $0x40] sm:$0xff]
  %v2292 = vld [vmem:[%s10 + $0x48] sm:$0xff]
  %v2293 = vld [vmem:[%s10 + $0x50] sm:$0xff]
  %v2294 = vld [vmem:[%s10 + $0x58] sm:$0xff]
  %v2295 = vld [vmem:[%s10 + $0x60] sm:$0xff]
  %v2296 = vld [vmem:[%s10 + $0x68] sm:$0xff]
  %v2297 = vld [vmem:[%s10 + $0x70] sm:$0xff]
  %v2298 = vld [vmem:[%s10 + $0x78] sm:$0xff]
  %v2315 = vunpack.c.l.b16 %v2283
  %v2316 = vunpack.c.h.b16 %v2283
  %v2317 = vunpack.c.l.b16 %v2284
  %v2318 = vunpack.c.h.b16 %v2284
  %v2319 = vunpack.c.l.b16 %v2285
  %v2320 = vunpack.c.h.b16 %v2285
  %v2321 = vunpack.c.l.b16 %v2286
  %v2322 = vunpack.c.h.b16 %v2286
  %v2323 = vunpack.c.l.b16 %v2287
  %v2324 = vunpack.c.h.b16 %v2287
  %v2325 = vunpack.c.l.b16 %v2288
  %v2326 = vunpack.c.h.b16 %v2288
  %v2327 = vunpack.c.l.b16 %v2289
  %v2328 = vunpack.c.h.b16 %v2289
  %v2329 = vunpack.c.l.b16 %v2290
  %v2330 = vunpack.c.h.b16 %v2290
  %v2331 = vunpack.c.l.b16 %v2291
  %v2332 = vunpack.c.h.b16 %v2291
  %v2333 = vunpack.c.l.b16 %v2292
  %v2334 = vunpack.c.h.b16 %v2292
  %v2335 = vunpack.c.l.b16 %v2293
  %v2336 = vunpack.c.h.b16 %v2293
  %v2337 = vunpack.c.l.b16 %v2294
  %v2338 = vunpack.c.h.b16 %v2294
  %v2339 = vunpack.c.l.b16 %v2295
  %v2340 = vunpack.c.h.b16 %v2295
  %v2341 = vunpack.c.l.b16 %v2296
  %v2342 = vunpack.c.h.b16 %v2296
  %v2343 = vunpack.c.l.b16 %v2297
  %v2344 = vunpack.c.h.b16 %v2297
  %v2345 = vunpack.c.l.b16 %v2298
  %v2346 = vunpack.c.h.b16 %v2298
  %v2347 = vpack.c.b16 %v2319, %v2315
  %v2348 = vpack.c.b16 %v2320, %v2316
  %v2349 = vpack.c.b16 %v2321, %v2317
  %v2350 = vpack.c.b16 %v2322, %v2318
  %v2351 = vpack.c.b16 %v2327, %v2323
  %v2352 = vpack.c.b16 %v2328, %v2324
  %v2353 = vpack.c.b16 %v2329, %v2325
  %v2354 = vpack.c.b16 %v2330, %v2326
  %v2355 = vpack.c.b16 %v2335, %v2331
  %v2356 = vpack.c.b16 %v2336, %v2332
  %v2357 = vpack.c.b16 %v2337, %v2333
  %v2358 = vpack.c.b16 %v2338, %v2334
  %v2359 = vpack.c.b16 %v2343, %v2339
  %v2360 = vpack.c.b16 %v2344, %v2340
  %v2361 = vpack.c.b16 %v2345, %v2341
  %v2362 = vpack.c.b16 %v2346, %v2342
  %v2380 = vsel %vm934, %v2278, 0
  %2382 = vmatprep.subr.bf16.mxu0 0
  %2383 = vmatpush1.bf16.msra.mxu0 0
  %2384 = vmatprep.subr.bf16.mxu0 0
  %2385 = vmatpush1.bf16.msra.mxu0 0
  %2386 = vmatprep.subr.bf16.mxu0 0
  %2387 = vmatpush1.bf16.msra.mxu0 0
  %2388 = vmatprep.subr.bf16.mxu0 0
  %2389 = vmatpush1.bf16.msra.mxu0 0
  %2390 = vmatprep.subr.bf16.mxu0 %v2360
  %2391 = vmatpush1.bf16.msra.mxu0 %v2359
  %2392 = vmatprep.subr.bf16.mxu0 %v2356
  %2393 = vmatpush1.bf16.msra.mxu0 %v2355
  %2394 = vmatprep.subr.bf16.mxu0 %v2352
  %2395 = vmatpush1.bf16.msra.mxu0 %v2351
  %2396 = vmatprep.subr.bf16.mxu0 %v2348
  %2397 = vmatpush1.bf16.msra.mxu0 %v2347
  %2398 = vmatprep.subr.bf16.mxu0 0
  %2399 = vmatpush2.bf16.msra.mxu0 0
  %2400 = vmatprep.subr.bf16.mxu0 0
  %2401 = vmatpush2.bf16.msra.mxu0 0
  %2402 = vmatprep.subr.bf16.mxu0 0
  %2403 = vmatpush2.bf16.msra.mxu0 0
  %2404 = vmatprep.subr.bf16.mxu0 0
  %2405 = vmatpush2.bf16.msra.mxu0 0
  %2406 = vmatprep.subr.bf16.mxu0 0
  %2407 = vmatpush2.bf16.msra.mxu0 0
  %2408 = vmatprep.subr.bf16.mxu0 0
  %2409 = vmatpush2.bf16.msra.mxu0 0
  %2410 = vmatprep.subr.bf16.mxu0 0
  %2411 = vmatpush2.bf16.msra.mxu0 0
  %2412 = vmatprep.subr.bf16.mxu0 0
  %2413 = vmatpush2.bf16.msra.mxu0 0
  %2414 = vmatprep.mubr.bf16.mxu0 0
  %2415 = vmatmul.mubr.bf16.gmra.mxu0 %v2380
  %v2416 = vpop.f32.mrf.mxu0
  %v2417 = vadd.f32 0.0, %v2416
  %v2418 = vpop.f32.mrf.mxu0
  %v2419 = vadd.f32 0.0, %v2418
  %v2420 = vpop.f32.mrf.mxu0
  %v2421 = vpop.f32.mrf.mxu0
  %2422 = vdwg.mxu0
  %2423 = vmatprep.subr.bf16.mxu0 0
  %2424 = vmatpush1.bf16.msra.mxu0 0
  %2425 = vmatprep.subr.bf16.mxu0 0
  %2426 = vmatpush1.bf16.msra.mxu0 0
  %2427 = vmatprep.subr.bf16.mxu0 0
  %2428 = vmatpush1.bf16.msra.mxu0 0
  %2429 = vmatprep.subr.bf16.mxu0 0
  %2430 = vmatpush1.bf16.msra.mxu0 0
  %2431 = vmatprep.subr.bf16.mxu0 %v2362
  %2432 = vmatpush1.bf16.msra.mxu0 %v2361
  %2433 = vmatprep.subr.bf16.mxu0 %v2358
  %2434 = vmatpush1.bf16.msra.mxu0 %v2357
  %2435 = vmatprep.subr.bf16.mxu0 %v2354
  %2436 = vmatpush1.bf16.msra.mxu0 %v2353
  %2437 = vmatprep.subr.bf16.mxu0 %v2350
  %2438 = vmatpush1.bf16.msra.mxu0 %v2349
  %2439 = vmatprep.subr.bf16.mxu0 0
  %2440 = vmatpush2.bf16.msra.mxu0 0
  %2441 = vmatprep.subr.bf16.mxu0 0
  %2442 = vmatpush2.bf16.msra.mxu0 0
  %2443 = vmatprep.subr.bf16.mxu0 0
  %2444 = vmatpush2.bf16.msra.mxu0 0
  %2445 = vmatprep.subr.bf16.mxu0 0
  %2446 = vmatpush2.bf16.msra.mxu0 0
  %2447 = vmatprep.subr.bf16.mxu0 0
  %2448 = vmatpush2.bf16.msra.mxu0 0
  %2449 = vmatprep.subr.bf16.mxu0 0
  %2450 = vmatpush2.bf16.msra.mxu0 0
  %2451 = vmatprep.subr.bf16.mxu0 0
  %2452 = vmatpush2.bf16.msra.mxu0 0
  %2453 = vmatprep.subr.bf16.mxu0 0
  %2454 = vmatpush2.bf16.msra.mxu0 0
  %2455 = vmatprep.mubr.bf16.mxu0 0
  %2456 = vmatmul.mubr.bf16.gmra.mxu0 %v2380
  %v2457 = vpop.f32.mrf.mxu0
  %v2458 = vadd.f32 0.0, %v2457
  %v2459 = vpop.f32.mrf.mxu0
  %v2460 = vadd.f32 0.0, %v2459
  %v2461 = vpop.f32.mrf.mxu0
  %v2462 = vpop.f32.mrf.mxu0
  %2463 = vdwg.mxu0
  %v2466 = vunpack.c.l.b16 %v2281
  %v2467 = vunpack.c.h.b16 %v2281
  %v2468 = vunpack.c.l.b16 %v2282
  %v2469 = vunpack.c.h.b16 %v2282
  %v2470 = vpack.c.b16 %v2466, %v2466
  %v2471 = vpack.c.b16 %v2467, %v2467
  %v2472 = vpack.c.b16 %v2468, %v2468
  %v2473 = vpack.c.b16 %v2469, %v2469
  %vm2474 = vcmask 64512
  %v2476 = vsel %vm2474, %v2280, 0
  %v2479 = vsel %vm2228, %v2470, 0
  %v2482 = vsel %vm2228, %v2471, 0
  %v2485 = vsel %vm2228, %v2472, 0
  %v2488 = vsel %vm2228, %v2473, 0
  %2490 = vmatprep.subr.bf16.mxu0 0
  %2491 = vmatpush1.bf16.msra.mxu0 0
  %2492 = vmatprep.subr.bf16.mxu0 0
  %2493 = vmatpush1.bf16.msra.mxu0 0
  %2494 = vmatprep.subr.bf16.mxu0 0
  %2495 = vmatpush1.bf16.msra.mxu0 0
  %2496 = vmatprep.subr.bf16.mxu0 0
  %2497 = vmatpush1.bf16.msra.mxu0 0
  %2498 = vmatprep.subr.bf16.mxu0 0
  %2499 = vmatpush1.bf16.msra.mxu0 0
  %2500 = vmatprep.subr.bf16.mxu0 0
  %2501 = vmatpush1.bf16.msra.mxu0 0
  %2502 = vmatprep.subr.bf16.mxu0 0
  %2503 = vmatpush1.bf16.msra.mxu0 0
  %2504 = vmatprep.subr.bf16.mxu0 %v2482
  %2505 = vmatpush1.bf16.msra.mxu0 %v2479
  %2506 = vmatprep.subr.bf16.mxu0 0
  %2507 = vmatpush2.bf16.msra.mxu0 0
  %2508 = vmatprep.subr.bf16.mxu0 0
  %2509 = vmatpush2.bf16.msra.mxu0 0
  %2510 = vmatprep.subr.bf16.mxu0 0
  %2511 = vmatpush2.bf16.msra.mxu0 0
  %2512 = vmatprep.subr.bf16.mxu0 0
  %2513 = vmatpush2.bf16.msra.mxu0 0
  %2514 = vmatprep.subr.bf16.mxu0 0
  %2515 = vmatpush2.bf16.msra.mxu0 0
  %2516 = vmatprep.subr.bf16.mxu0 0
  %2517 = vmatpush2.bf16.msra.mxu0 0
  %2518 = vmatprep.subr.bf16.mxu0 0
  %2519 = vmatpush2.bf16.msra.mxu0 0
  %2520 = vmatprep.subr.bf16.mxu0 0
  %2521 = vmatpush2.bf16.msra.mxu0 0
  %2522 = vmatprep.mubr.bf16.mxu0 0
  %2523 = vmatmul.mubr.bf16.gmra.mxu0 %v2476
  %v2524 = vpop.f32.mrf.mxu0
  %v2525 = vadd.f32 %v2417, %v2524
  %v2526 = vpop.f32.mrf.mxu0
  %v2527 = vadd.f32 %v2419, %v2526
  %v2528 = vpop.f32.mrf.mxu0
  %v2529 = vpop.f32.mrf.mxu0
  %2530 = vdwg.mxu0
  %2531 = vmatprep.subr.bf16.mxu0 0
  %2532 = vmatpush1.bf16.msra.mxu0 0
  %2533 = vmatprep.subr.bf16.mxu0 0
  %2534 = vmatpush1.bf16.msra.mxu0 0
  %2535 = vmatprep.subr.bf16.mxu0 0
  %2536 = vmatpush1.bf16.msra.mxu0 0
  %2537 = vmatprep.subr.bf16.mxu0 0
  %2538 = vmatpush1.bf16.msra.mxu0 0
  %2539 = vmatprep.subr.bf16.mxu0 0
  %2540 = vmatpush1.bf16.msra.mxu0 0
  %2541 = vmatprep.subr.bf16.mxu0 0
  %2542 = vmatpush1.bf16.msra.mxu0 0
  %2543 = vmatprep.subr.bf16.mxu0 0
  %2544 = vmatpush1.bf16.msra.mxu0 0
  %2545 = vmatprep.subr.bf16.mxu0 %v2488
  %2546 = vmatpush1.bf16.msra.mxu0 %v2485
  %2547 = vmatprep.subr.bf16.mxu0 0
  %2548 = vmatpush2.bf16.msra.mxu0 0
  %2549 = vmatprep.subr.bf16.mxu0 0
  %2550 = vmatpush2.bf16.msra.mxu0 0
  %2551 = vmatprep.subr.bf16.mxu0 0
  %2552 = vmatpush2.bf16.msra.mxu0 0
  %2553 = vmatprep.subr.bf16.mxu0 0
  %2554 = vmatpush2.bf16.msra.mxu0 0
  %2555 = vmatprep.subr.bf16.mxu0 0
  %2556 = vmatpush2.bf16.msra.mxu0 0
  %2557 = vmatprep.subr.bf16.mxu0 0
  %2558 = vmatpush2.bf16.msra.mxu0 0
  %2559 = vmatprep.subr.bf16.mxu0 0
  %2560 = vmatpush2.bf16.msra.mxu0 0
  %2561 = vmatprep.subr.bf16.mxu0 0
  %2562 = vmatpush2.bf16.msra.mxu0 0
  %2563 = vmatprep.mubr.bf16.mxu0 0
  %2564 = vmatmul.mubr.bf16.gmra.mxu0 %v2476
  %v2565 = vpop.f32.mrf.mxu0
  %v2566 = vadd.f32 %v2458, %v2565
  %v2567 = vpop.f32.mrf.mxu0
  %v2568 = vadd.f32 %v2460, %v2567
  %v2569 = vpop.f32.mrf.mxu0
  %v2570 = vpop.f32.mrf.mxu0
  %2571 = vdwg.mxu0
  %s2572 = scalar_lea.vmem %s10, 128
  %v2573 = vld [vmem:[%s2572] sm:$0xff]
  %v2574 = vld [vmem:[%s2572 + $0x8] sm:$0xff]
  %v2575 = vld [vmem:[%s2572 + $0x10] sm:$0xff]
  %v2576 = vld [vmem:[%s2572 + $0x18] sm:$0xff]
  %v2577 = vld [vmem:[%s2572 + $0x20] sm:$0xff]
  %v2578 = vld [vmem:[%s2572 + $0x28] sm:$0xff]
  %v2579 = vld [vmem:[%s2572 + $0x30] sm:$0xff]
  %v2580 = vld [vmem:[%s2572 + $0x38] sm:$0xff]
  %v2581 = vld [vmem:[%s2572 + $0x40] sm:$0xff]
  %v2582 = vld [vmem:[%s2572 + $0x48] sm:$0xff]
  %v2583 = vld [vmem:[%s2572 + $0x50] sm:$0xff]
  %v2584 = vld [vmem:[%s2572 + $0x58] sm:$0xff]
  %v2585 = vld [vmem:[%s2572 + $0x60] sm:$0xff]
  %v2586 = vld [vmem:[%s2572 + $0x68] sm:$0xff]
  %v2587 = vld [vmem:[%s2572 + $0x70] sm:$0xff]
  %v2588 = vld [vmem:[%s2572 + $0x78] sm:$0xff]
  %v2590 = vrot.slane %v2278, 1
  %v2607 = vunpack.c.l.b16 %v2573
  %v2608 = vunpack.c.h.b16 %v2573
  %v2609 = vunpack.c.l.b16 %v2574
  %v2610 = vunpack.c.h.b16 %v2574
  %v2611 = vunpack.c.l.b16 %v2575
  %v2612 = vunpack.c.h.b16 %v2575
  %v2613 = vunpack.c.l.b16 %v2576
  %v2614 = vunpack.c.h.b16 %v2576
  %v2615 = vunpack.c.l.b16 %v2577
  %v2616 = vunpack.c.h.b16 %v2577
  %v2617 = vunpack.c.l.b16 %v2578
  %v2618 = vunpack.c.h.b16 %v2578
  %v2619 = vunpack.c.l.b16 %v2579
  %v2620 = vunpack.c.h.b16 %v2579
  %v2621 = vunpack.c.l.b16 %v2580
  %v2622 = vunpack.c.h.b16 %v2580
  %v2623 = vunpack.c.l.b16 %v2581
  %v2624 = vunpack.c.h.b16 %v2581
  %v2625 = vunpack.c.l.b16 %v2582
  %v2626 = vunpack.c.h.b16 %v2582
  %v2627 = vunpack.c.l.b16 %v2583
  %v2628 = vunpack.c.h.b16 %v2583
  %v2629 = vunpack.c.l.b16 %v2584
  %v2630 = vunpack.c.h.b16 %v2584
  %v2631 = vunpack.c.l.b16 %v2585
  %v2632 = vunpack.c.h.b16 %v2585
  %v2633 = vunpack.c.l.b16 %v2586
  %v2634 = vunpack.c.h.b16 %v2586
  %v2635 = vunpack.c.l.b16 %v2587
  %v2636 = vunpack.c.h.b16 %v2587
  %v2637 = vunpack.c.l.b16 %v2588
  %v2638 = vunpack.c.h.b16 %v2588
  %v2639 = vpack.c.b16 %v2611, %v2607
  %v2640 = vpack.c.b16 %v2612, %v2608
  %v2641 = vpack.c.b16 %v2613, %v2609
  %v2642 = vpack.c.b16 %v2614, %v2610
  %v2643 = vpack.c.b16 %v2619, %v2615
  %v2644 = vpack.c.b16 %v2620, %v2616
  %v2645 = vpack.c.b16 %v2621, %v2617
  %v2646 = vpack.c.b16 %v2622, %v2618
  %v2647 = vpack.c.b16 %v2627, %v2623
  %v2648 = vpack.c.b16 %v2628, %v2624
  %v2649 = vpack.c.b16 %v2629, %v2625
  %v2650 = vpack.c.b16 %v2630, %v2626
  %v2651 = vpack.c.b16 %v2635, %v2631
  %v2652 = vpack.c.b16 %v2636, %v2632
  %v2653 = vpack.c.b16 %v2637, %v2633
  %v2654 = vpack.c.b16 %v2638, %v2634
  %v2672 = vsel %vm934, %v2590, 0
  %2674 = vmatprep.subr.bf16.mxu0 0
  %2675 = vmatpush1.bf16.msra.mxu0 0
  %2676 = vmatprep.subr.bf16.mxu0 0
  %2677 = vmatpush1.bf16.msra.mxu0 0
  %2678 = vmatprep.subr.bf16.mxu0 0
  %2679 = vmatpush1.bf16.msra.mxu0 0
  %2680 = vmatprep.subr.bf16.mxu0 0
  %2681 = vmatpush1.bf16.msra.mxu0 0
  %2682 = vmatprep.subr.bf16.mxu0 %v2652
  %2683 = vmatpush1.bf16.msra.mxu0 %v2651
  %2684 = vmatprep.subr.bf16.mxu0 %v2648
  %2685 = vmatpush1.bf16.msra.mxu0 %v2647
  %2686 = vmatprep.subr.bf16.mxu0 %v2644
  %2687 = vmatpush1.bf16.msra.mxu0 %v2643
  %2688 = vmatprep.subr.bf16.mxu0 %v2640
  %2689 = vmatpush1.bf16.msra.mxu0 %v2639
  %2690 = vmatprep.subr.bf16.mxu0 0
  %2691 = vmatpush2.bf16.msra.mxu0 0
  %2692 = vmatprep.subr.bf16.mxu0 0
  %2693 = vmatpush2.bf16.msra.mxu0 0
  %2694 = vmatprep.subr.bf16.mxu0 0
  %2695 = vmatpush2.bf16.msra.mxu0 0
  %2696 = vmatprep.subr.bf16.mxu0 0
  %2697 = vmatpush2.bf16.msra.mxu0 0
  %2698 = vmatprep.subr.bf16.mxu0 0
  %2699 = vmatpush2.bf16.msra.mxu0 0
  %2700 = vmatprep.subr.bf16.mxu0 0
  %2701 = vmatpush2.bf16.msra.mxu0 0
  %2702 = vmatprep.subr.bf16.mxu0 0
  %2703 = vmatpush2.bf16.msra.mxu0 0
  %2704 = vmatprep.subr.bf16.mxu0 0
  %2705 = vmatpush2.bf16.msra.mxu0 0
  %2706 = vmatprep.mubr.bf16.mxu0 0
  %2707 = vmatmul.mubr.bf16.gmra.mxu0 %v2672
  %v2708 = vpop.f32.mrf.mxu0
  %v2709 = vadd.f32 0.0, %v2708
  %v2710 = vpop.f32.mrf.mxu0
  %v2711 = vadd.f32 0.0, %v2710
  %v2712 = vpop.f32.mrf.mxu0
  %v2713 = vpop.f32.mrf.mxu0
  %2714 = vdwg.mxu0
  %2715 = vmatprep.subr.bf16.mxu0 0
  %2716 = vmatpush1.bf16.msra.mxu0 0
  %2717 = vmatprep.subr.bf16.mxu0 0
  %2718 = vmatpush1.bf16.msra.mxu0 0
  %2719 = vmatprep.subr.bf16.mxu0 0
  %2720 = vmatpush1.bf16.msra.mxu0 0
  %2721 = vmatprep.subr.bf16.mxu0 0
  %2722 = vmatpush1.bf16.msra.mxu0 0
  %2723 = vmatprep.subr.bf16.mxu0 %v2654
  %2724 = vmatpush1.bf16.msra.mxu0 %v2653
  %2725 = vmatprep.subr.bf16.mxu0 %v2650
  %2726 = vmatpush1.bf16.msra.mxu0 %v2649
  %2727 = vmatprep.subr.bf16.mxu0 %v2646
  %2728 = vmatpush1.bf16.msra.mxu0 %v2645
  %2729 = vmatprep.subr.bf16.mxu0 %v2642
  %2730 = vmatpush1.bf16.msra.mxu0 %v2641
  %2731 = vmatprep.subr.bf16.mxu0 0
  %2732 = vmatpush2.bf16.msra.mxu0 0
  %2733 = vmatprep.subr.bf16.mxu0 0
  %2734 = vmatpush2.bf16.msra.mxu0 0
  %2735 = vmatprep.subr.bf16.mxu0 0
  %2736 = vmatpush2.bf16.msra.mxu0 0
  %2737 = vmatprep.subr.bf16.mxu0 0
  %2738 = vmatpush2.bf16.msra.mxu0 0
  %2739 = vmatprep.subr.bf16.mxu0 0
  %2740 = vmatpush2.bf16.msra.mxu0 0
  %2741 = vmatprep.subr.bf16.mxu0 0
  %2742 = vmatpush2.bf16.msra.mxu0 0
  %2743 = vmatprep.subr.bf16.mxu0 0
  %2744 = vmatpush2.bf16.msra.mxu0 0
  %2745 = vmatprep.subr.bf16.mxu0 0
  %2746 = vmatpush2.bf16.msra.mxu0 0
  %2747 = vmatprep.mubr.bf16.mxu0 0
  %2748 = vmatmul.mubr.bf16.gmra.mxu0 %v2672
  %v2749 = vpop.f32.mrf.mxu0
  %v2750 = vadd.f32 0.0, %v2749
  %v2751 = vpop.f32.mrf.mxu0
  %v2752 = vadd.f32 0.0, %v2751
  %v2753 = vpop.f32.mrf.mxu0
  %v2754 = vpop.f32.mrf.mxu0
  %2755 = vdwg.mxu0
  %v2756 = vadd.f32 %v2525, %v2709
  %v2757 = vadd.f32 %v2527, %v2711
  %v2758 = vadd.f32 %v2566, %v2750
  %v2759 = vadd.f32 %v2568, %v2752
  %s2760 = scalar_lea.vmem %s10, 256
  %v2761 = vld [vmem:[%s2760] sm:$0xff]
  %v2762 = vld [vmem:[%s2760 + $0x8] sm:$0xff]
  %v2763 = vld [vmem:[%s2760 + $0x10] sm:$0xff]
  %v2764 = vld [vmem:[%s2760 + $0x18] sm:$0xff]
  %v2765 = vld [vmem:[%s2760 + $0x20] sm:$0xff]
  %v2766 = vld [vmem:[%s2760 + $0x28] sm:$0xff]
  %v2767 = vld [vmem:[%s2760 + $0x30] sm:$0xff]
  %v2768 = vld [vmem:[%s2760 + $0x38] sm:$0xff]
  %v2769 = vld [vmem:[%s2760 + $0x40] sm:$0xff]
  %v2770 = vld [vmem:[%s2760 + $0x48] sm:$0xff]
  %v2771 = vld [vmem:[%s2760 + $0x50] sm:$0xff]
  %v2772 = vld [vmem:[%s2760 + $0x58] sm:$0xff]
  %v2773 = vld [vmem:[%s2760 + $0x60] sm:$0xff]
  %v2774 = vld [vmem:[%s2760 + $0x68] sm:$0xff]
  %v2775 = vld [vmem:[%s2760 + $0x70] sm:$0xff]
  %v2776 = vld [vmem:[%s2760 + $0x78] sm:$0xff]
  %v2777 = vrot.slane %v2278, 2
  %v2794 = vunpack.c.l.b16 %v2761
  %v2795 = vunpack.c.h.b16 %v2761
  %v2796 = vunpack.c.l.b16 %v2762
  %v2797 = vunpack.c.h.b16 %v2762
  %v2798 = vunpack.c.l.b16 %v2763
  %v2799 = vunpack.c.h.b16 %v2763
  %v2800 = vunpack.c.l.b16 %v2764
  %v2801 = vunpack.c.h.b16 %v2764
  %v2802 = vunpack.c.l.b16 %v2765
  %v2803 = vunpack.c.h.b16 %v2765
  %v2804 = vunpack.c.l.b16 %v2766
  %v2805 = vunpack.c.h.b16 %v2766
  %v2806 = vunpack.c.l.b16 %v2767
  %v2807 = vunpack.c.h.b16 %v2767
  %v2808 = vunpack.c.l.b16 %v2768
  %v2809 = vunpack.c.h.b16 %v2768
  %v2810 = vunpack.c.l.b16 %v2769
  %v2811 = vunpack.c.h.b16 %v2769
  %v2812 = vunpack.c.l.b16 %v2770
  %v2813 = vunpack.c.h.b16 %v2770
  %v2814 = vunpack.c.l.b16 %v2771
  %v2815 = vunpack.c.h.b16 %v2771
  %v2816 = vunpack.c.l.b16 %v2772
  %v2817 = vunpack.c.h.b16 %v2772
  %v2818 = vunpack.c.l.b16 %v2773
  %v2819 = vunpack.c.h.b16 %v2773
  %v2820 = vunpack.c.l.b16 %v2774
  %v2821 = vunpack.c.h.b16 %v2774
  %v2822 = vunpack.c.l.b16 %v2775
  %v2823 = vunpack.c.h.b16 %v2775
  %v2824 = vunpack.c.l.b16 %v2776
  %v2825 = vunpack.c.h.b16 %v2776
  %v2826 = vpack.c.b16 %v2798, %v2794
  %v2827 = vpack.c.b16 %v2799, %v2795
  %v2828 = vpack.c.b16 %v2800, %v2796
  %v2829 = vpack.c.b16 %v2801, %v2797
  %v2830 = vpack.c.b16 %v2806, %v2802
  %v2831 = vpack.c.b16 %v2807, %v2803
  %v2832 = vpack.c.b16 %v2808, %v2804
  %v2833 = vpack.c.b16 %v2809, %v2805
  %v2834 = vpack.c.b16 %v2814, %v2810
  %v2835 = vpack.c.b16 %v2815, %v2811
  %v2836 = vpack.c.b16 %v2816, %v2812
  %v2837 = vpack.c.b16 %v2817, %v2813
  %v2838 = vpack.c.b16 %v2822, %v2818
  %v2839 = vpack.c.b16 %v2823, %v2819
  %v2840 = vpack.c.b16 %v2824, %v2820
  %v2841 = vpack.c.b16 %v2825, %v2821
  %v2859 = vsel %vm934, %v2777, 0
  %2861 = vmatprep.subr.bf16.mxu0 0
  %2862 = vmatpush1.bf16.msra.mxu0 0
  %2863 = vmatprep.subr.bf16.mxu0 0
  %2864 = vmatpush1.bf16.msra.mxu0 0
  %2865 = vmatprep.subr.bf16.mxu0 0
  %2866 = vmatpush1.bf16.msra.mxu0 0
  %2867 = vmatprep.subr.bf16.mxu0 0
  %2868 = vmatpush1.bf16.msra.mxu0 0
  %2869 = vmatprep.subr.bf16.mxu0 %v2839
  %2870 = vmatpush1.bf16.msra.mxu0 %v2838
  %2871 = vmatprep.subr.bf16.mxu0 %v2835
  %2872 = vmatpush1.bf16.msra.mxu0 %v2834
  %2873 = vmatprep.subr.bf16.mxu0 %v2831
  %2874 = vmatpush1.bf16.msra.mxu0 %v2830
  %2875 = vmatprep.subr.bf16.mxu0 %v2827
  %2876 = vmatpush1.bf16.msra.mxu0 %v2826
  %2877 = vmatprep.subr.bf16.mxu0 0
  %2878 = vmatpush2.bf16.msra.mxu0 0
  %2879 = vmatprep.subr.bf16.mxu0 0
  %2880 = vmatpush2.bf16.msra.mxu0 0
  %2881 = vmatprep.subr.bf16.mxu0 0
  %2882 = vmatpush2.bf16.msra.mxu0 0
  %2883 = vmatprep.subr.bf16.mxu0 0
  %2884 = vmatpush2.bf16.msra.mxu0 0
  %2885 = vmatprep.subr.bf16.mxu0 0
  %2886 = vmatpush2.bf16.msra.mxu0 0
  %2887 = vmatprep.subr.bf16.mxu0 0
  %2888 = vmatpush2.bf16.msra.mxu0 0
  %2889 = vmatprep.subr.bf16.mxu0 0
  %2890 = vmatpush2.bf16.msra.mxu0 0
  %2891 = vmatprep.subr.bf16.mxu0 0
  %2892 = vmatpush2.bf16.msra.mxu0 0
  %2893 = vmatprep.mubr.bf16.mxu0 0
  %2894 = vmatmul.mubr.bf16.gmra.mxu0 %v2859
  %v2895 = vpop.f32.mrf.mxu0
  %v2896 = vadd.f32 0.0, %v2895
  %v2897 = vpop.f32.mrf.mxu0
  %v2898 = vadd.f32 0.0, %v2897
  %v2899 = vpop.f32.mrf.mxu0
  %v2900 = vpop.f32.mrf.mxu0
  %2901 = vdwg.mxu0
  %2902 = vmatprep.subr.bf16.mxu0 0
  %2903 = vmatpush1.bf16.msra.mxu0 0
  %2904 = vmatprep.subr.bf16.mxu0 0
  %2905 = vmatpush1.bf16.msra.mxu0 0
  %2906 = vmatprep.subr.bf16.mxu0 0
  %2907 = vmatpush1.bf16.msra.mxu0 0
  %2908 = vmatprep.subr.bf16.mxu0 0
  %2909 = vmatpush1.bf16.msra.mxu0 0
  %2910 = vmatprep.subr.bf16.mxu0 %v2841
  %2911 = vmatpush1.bf16.msra.mxu0 %v2840
  %2912 = vmatprep.subr.bf16.mxu0 %v2837
  %2913 = vmatpush1.bf16.msra.mxu0 %v2836
  %2914 = vmatprep.subr.bf16.mxu0 %v2833
  %2915 = vmatpush1.bf16.msra.mxu0 %v2832
  %2916 = vmatprep.subr.bf16.mxu0 %v2829
  %2917 = vmatpush1.bf16.msra.mxu0 %v2828
  %2918 = vmatprep.subr.bf16.mxu0 0
  %2919 = vmatpush2.bf16.msra.mxu0 0
  %2920 = vmatprep.subr.bf16.mxu0 0
  %2921 = vmatpush2.bf16.msra.mxu0 0
  %2922 = vmatprep.subr.bf16.mxu0 0
  %2923 = vmatpush2.bf16.msra.mxu0 0
  %2924 = vmatprep.subr.bf16.mxu0 0
  %2925 = vmatpush2.bf16.msra.mxu0 0
  %2926 = vmatprep.subr.bf16.mxu0 0
  %2927 = vmatpush2.bf16.msra.mxu0 0
  %2928 = vmatprep.subr.bf16.mxu0 0
  %2929 = vmatpush2.bf16.msra.mxu0 0
  %2930 = vmatprep.subr.bf16.mxu0 0
  %2931 = vmatpush2.bf16.msra.mxu0 0
  %2932 = vmatprep.subr.bf16.mxu0 0
  %2933 = vmatpush2.bf16.msra.mxu0 0
  %2934 = vmatprep.mubr.bf16.mxu0 0
  %2935 = vmatmul.mubr.bf16.gmra.mxu0 %v2859
  %v2936 = vpop.f32.mrf.mxu0
  %v2937 = vadd.f32 0.0, %v2936
  %v2938 = vpop.f32.mrf.mxu0
  %v2939 = vadd.f32 0.0, %v2938
  %v2940 = vpop.f32.mrf.mxu0
  %v2941 = vpop.f32.mrf.mxu0
  %2942 = vdwg.mxu0
  %v2943 = vadd.f32 %v2756, %v2896
  %v2944 = vadd.f32 %v2757, %v2898
  %v2945 = vadd.f32 %v2758, %v2937
  %v2946 = vadd.f32 %v2759, %v2939
  %s2947 = scalar_lea.vmem %s10, 384
  %v2948 = vld [vmem:[%s2947] sm:$0xff]
  %v2949 = vld [vmem:[%s2947 + $0x8] sm:$0xff]
  %v2950 = vld [vmem:[%s2947 + $0x10] sm:$0xff]
  %v2951 = vld [vmem:[%s2947 + $0x18] sm:$0xff]
  %v2952 = vld [vmem:[%s2947 + $0x20] sm:$0xff]
  %v2953 = vld [vmem:[%s2947 + $0x28] sm:$0xff]
  %v2954 = vld [vmem:[%s2947 + $0x30] sm:$0xff]
  %v2955 = vld [vmem:[%s2947 + $0x38] sm:$0xff]
  %v2956 = vld [vmem:[%s2947 + $0x40] sm:$0xff]
  %v2957 = vld [vmem:[%s2947 + $0x48] sm:$0xff]
  %v2958 = vld [vmem:[%s2947 + $0x50] sm:$0xff]
  %v2959 = vld [vmem:[%s2947 + $0x58] sm:$0xff]
  %v2960 = vld [vmem:[%s2947 + $0x60] sm:$0xff]
  %v2961 = vld [vmem:[%s2947 + $0x68] sm:$0xff]
  %v2962 = vld [vmem:[%s2947 + $0x70] sm:$0xff]
  %v2963 = vld [vmem:[%s2947 + $0x78] sm:$0xff]
  %v2964 = vrot.slane %v2278, 3
  %v2981 = vunpack.c.l.b16 %v2948
  %v2982 = vunpack.c.h.b16 %v2948
  %v2983 = vunpack.c.l.b16 %v2949
  %v2984 = vunpack.c.h.b16 %v2949
  %v2985 = vunpack.c.l.b16 %v2950
  %v2986 = vunpack.c.h.b16 %v2950
  %v2987 = vunpack.c.l.b16 %v2951
  %v2988 = vunpack.c.h.b16 %v2951
  %v2989 = vunpack.c.l.b16 %v2952
  %v2990 = vunpack.c.h.b16 %v2952
  %v2991 = vunpack.c.l.b16 %v2953
  %v2992 = vunpack.c.h.b16 %v2953
  %v2993 = vunpack.c.l.b16 %v2954
  %v2994 = vunpack.c.h.b16 %v2954
  %v2995 = vunpack.c.l.b16 %v2955
  %v2996 = vunpack.c.h.b16 %v2955
  %v2997 = vunpack.c.l.b16 %v2956
  %v2998 = vunpack.c.h.b16 %v2956
  %v2999 = vunpack.c.l.b16 %v2957
  %v3000 = vunpack.c.h.b16 %v2957
  %v3001 = vunpack.c.l.b16 %v2958
  %v3002 = vunpack.c.h.b16 %v2958
  %v3003 = vunpack.c.l.b16 %v2959
  %v3004 = vunpack.c.h.b16 %v2959
  %v3005 = vunpack.c.l.b16 %v2960
  %v3006 = vunpack.c.h.b16 %v2960
  %v3007 = vunpack.c.l.b16 %v2961
  %v3008 = vunpack.c.h.b16 %v2961
  %v3009 = vunpack.c.l.b16 %v2962
  %v3010 = vunpack.c.h.b16 %v2962
  %v3011 = vunpack.c.l.b16 %v2963
  %v3012 = vunpack.c.h.b16 %v2963
  %v3013 = vpack.c.b16 %v2985, %v2981
  %v3014 = vpack.c.b16 %v2986, %v2982
  %v3015 = vpack.c.b16 %v2987, %v2983
  %v3016 = vpack.c.b16 %v2988, %v2984
  %v3017 = vpack.c.b16 %v2993, %v2989
  %v3018 = vpack.c.b16 %v2994, %v2990
  %v3019 = vpack.c.b16 %v2995, %v2991
  %v3020 = vpack.c.b16 %v2996, %v2992
  %v3021 = vpack.c.b16 %v3001, %v2997
  %v3022 = vpack.c.b16 %v3002, %v2998
  %v3023 = vpack.c.b16 %v3003, %v2999
  %v3024 = vpack.c.b16 %v3004, %v3000
  %v3025 = vpack.c.b16 %v3009, %v3005
  %v3026 = vpack.c.b16 %v3010, %v3006
  %v3027 = vpack.c.b16 %v3011, %v3007
  %v3028 = vpack.c.b16 %v3012, %v3008
  %v3046 = vsel %vm934, %v2964, 0
  %3048 = vmatprep.subr.bf16.mxu0 0
  %3049 = vmatpush1.bf16.msra.mxu0 0
  %3050 = vmatprep.subr.bf16.mxu0 0
  %3051 = vmatpush1.bf16.msra.mxu0 0
  %3052 = vmatprep.subr.bf16.mxu0 0
  %3053 = vmatpush1.bf16.msra.mxu0 0
  %3054 = vmatprep.subr.bf16.mxu0 0
  %3055 = vmatpush1.bf16.msra.mxu0 0
  %3056 = vmatprep.subr.bf16.mxu0 %v3026
  %3057 = vmatpush1.bf16.msra.mxu0 %v3025
  %3058 = vmatprep.subr.bf16.mxu0 %v3022
  %3059 = vmatpush1.bf16.msra.mxu0 %v3021
  %3060 = vmatprep.subr.bf16.mxu0 %v3018
  %3061 = vmatpush1.bf16.msra.mxu0 %v3017
  %3062 = vmatprep.subr.bf16.mxu0 %v3014
  %3063 = vmatpush1.bf16.msra.mxu0 %v3013
  %3064 = vmatprep.subr.bf16.mxu0 0
  %3065 = vmatpush2.bf16.msra.mxu0 0
  %3066 = vmatprep.subr.bf16.mxu0 0
  %3067 = vmatpush2.bf16.msra.mxu0 0
  %3068 = vmatprep.subr.bf16.mxu0 0
  %3069 = vmatpush2.bf16.msra.mxu0 0
  %3070 = vmatprep.subr.bf16.mxu0 0
  %3071 = vmatpush2.bf16.msra.mxu0 0
  %3072 = vmatprep.subr.bf16.mxu0 0
  %3073 = vmatpush2.bf16.msra.mxu0 0
  %3074 = vmatprep.subr.bf16.mxu0 0
  %3075 = vmatpush2.bf16.msra.mxu0 0
  %3076 = vmatprep.subr.bf16.mxu0 0
  %3077 = vmatpush2.bf16.msra.mxu0 0
  %3078 = vmatprep.subr.bf16.mxu0 0
  %3079 = vmatpush2.bf16.msra.mxu0 0
  %3080 = vmatprep.mubr.bf16.mxu0 0
  %3081 = vmatmul.mubr.bf16.gmra.mxu0 %v3046
  %v3082 = vpop.f32.mrf.mxu0
  %v3083 = vadd.f32 0.0, %v3082
  %v3084 = vpop.f32.mrf.mxu0
  %v3085 = vadd.f32 0.0, %v3084
  %v3086 = vpop.f32.mrf.mxu0
  %v3087 = vpop.f32.mrf.mxu0
  %3088 = vdwg.mxu0
  %3089 = vmatprep.subr.bf16.mxu0 0
  %3090 = vmatpush1.bf16.msra.mxu0 0
  %3091 = vmatprep.subr.bf16.mxu0 0
  %3092 = vmatpush1.bf16.msra.mxu0 0
  %3093 = vmatprep.subr.bf16.mxu0 0
  %3094 = vmatpush1.bf16.msra.mxu0 0
  %3095 = vmatprep.subr.bf16.mxu0 0
  %3096 = vmatpush1.bf16.msra.mxu0 0
  %3097 = vmatprep.subr.bf16.mxu0 %v3028
  %3098 = vmatpush1.bf16.msra.mxu0 %v3027
  %3099 = vmatprep.subr.bf16.mxu0 %v3024
  %3100 = vmatpush1.bf16.msra.mxu0 %v3023
  %3101 = vmatprep.subr.bf16.mxu0 %v3020
  %3102 = vmatpush1.bf16.msra.mxu0 %v3019
  %3103 = vmatprep.subr.bf16.mxu0 %v3016
  %3104 = vmatpush1.bf16.msra.mxu0 %v3015
  %3105 = vmatprep.subr.bf16.mxu0 0
  %3106 = vmatpush2.bf16.msra.mxu0 0
  %3107 = vmatprep.subr.bf16.mxu0 0
  %3108 = vmatpush2.bf16.msra.mxu0 0
  %3109 = vmatprep.subr.bf16.mxu0 0
  %3110 = vmatpush2.bf16.msra.mxu0 0
  %3111 = vmatprep.subr.bf16.mxu0 0
  %3112 = vmatpush2.bf16.msra.mxu0 0
  %3113 = vmatprep.subr.bf16.mxu0 0
  %3114 = vmatpush2.bf16.msra.mxu0 0
  %3115 = vmatprep.subr.bf16.mxu0 0
  %3116 = vmatpush2.bf16.msra.mxu0 0
  %3117 = vmatprep.subr.bf16.mxu0 0
  %3118 = vmatpush2.bf16.msra.mxu0 0
  %3119 = vmatprep.subr.bf16.mxu0 0
  %3120 = vmatpush2.bf16.msra.mxu0 0
  %3121 = vmatprep.mubr.bf16.mxu0 0
  %3122 = vmatmul.mubr.bf16.gmra.mxu0 %v3046
  %v3123 = vpop.f32.mrf.mxu0
  %v3124 = vadd.f32 0.0, %v3123
  %v3125 = vpop.f32.mrf.mxu0
  %v3126 = vadd.f32 0.0, %v3125
  %v3127 = vpop.f32.mrf.mxu0
  %v3128 = vpop.f32.mrf.mxu0
  %3129 = vdwg.mxu0
  %v3130 = vadd.f32 %v2943, %v3083
  %v3131 = vadd.f32 %v2944, %v3085
  %v3132 = vadd.f32 %v2945, %v3124
  %v3133 = vadd.f32 %v2946, %v3126
  %v3134 = vld [vmem:[%s12] sm:$0xf]
  %v3136 = vlaneseq
  %v3137 = vshrl.u32 %v3136, 7
  %v3138 = vsub.s32 0, %v3137
  %v3139 = vrot.slane %v3134, %v3138
  %v3140 = vlaneseq
  %v3141 = vshrl.u32 %v3140, 7
  %v3142 = vsub.s32 1, %v3141
  %v3143 = vrot.slane %v3134, %v3142
  %v3144 = vlaneseq
  %v3145 = vshrl.u32 %v3144, 7
  %v3146 = vsub.s32 2, %v3145
  %v3147 = vrot.slane %v3134, %v3146
  %v3148 = vlaneseq
  %v3149 = vshrl.u32 %v3148, 7
  %v3150 = vsub.s32 3, %v3149
  %v3151 = vrot.slane %v3134, %v3150
  %v3156 = vadd.f32 %v3130, %v3139
  %v3157 = vadd.f32 %v3131, %v3143
  %v3158 = vadd.f32 %v3132, %v3147
  %v3159 = vadd.f32 %v3133, %v3151
  %v3160 = vpack.c.bf16 %v3156, %v3156
  %v3161 = vpack.c.bf16 %v3157, %v3157
  %v3162 = vpack.c.bf16 %v3158, %v3158
  %v3163 = vpack.c.bf16 %v3159, %v3159
  %v3164 = vld [vmem:[%s13] sm:$0xff]
  %v3165 = vld [vmem:[%s13 + $0x8] sm:$0xff]
  %v3166 = vld [vmem:[%s13 + $0x10] sm:$0xff]
  %v3167 = vld [vmem:[%s13 + $0x18] sm:$0xff]
  %v3168 = vld [vmem:[%s13 + $0x20] sm:$0xff]
  %v3169 = vld [vmem:[%s13 + $0x28] sm:$0xff]
  %v3170 = vld [vmem:[%s13 + $0x30] sm:$0xff]
  %v3171 = vld [vmem:[%s13 + $0x38] sm:$0xff]
  %v3172 = vld [vmem:[%s13 + $0x40] sm:$0xff]
  %v3173 = vld [vmem:[%s13 + $0x48] sm:$0xff]
  %v3174 = vld [vmem:[%s13 + $0x50] sm:$0xff]
  %v3175 = vld [vmem:[%s13 + $0x58] sm:$0xff]
  %v3176 = vld [vmem:[%s13 + $0x60] sm:$0xff]
  %v3177 = vld [vmem:[%s13 + $0x68] sm:$0xff]
  %v3178 = vld [vmem:[%s13 + $0x70] sm:$0xff]
  %v3179 = vld [vmem:[%s13 + $0x78] sm:$0xff]
  %v3180 = vld [vmem:[%s13 + $0x80] sm:$0xff]
  %v3181 = vld [vmem:[%s13 + $0x88] sm:$0xff]
  %v3182 = vld [vmem:[%s13 + $0x90] sm:$0xff]
  %v3183 = vld [vmem:[%s13 + $0x98] sm:$0xff]
  %v3184 = vld [vmem:[%s13 + $0xa0] sm:$0xff]
  %v3185 = vld [vmem:[%s13 + $0xa8] sm:$0xff]
  %v3186 = vld [vmem:[%s13 + $0xb0] sm:$0xff]
  %v3187 = vld [vmem:[%s13 + $0xb8] sm:$0xff]
  %v3188 = vld [vmem:[%s13 + $0xc0] sm:$0xff]
  %v3189 = vld [vmem:[%s13 + $0xc8] sm:$0xff]
  %v3190 = vld [vmem:[%s13 + $0xd0] sm:$0xff]
  %v3191 = vld [vmem:[%s13 + $0xd8] sm:$0xff]
  %v3192 = vld [vmem:[%s13 + $0xe0] sm:$0xff]
  %v3193 = vld [vmem:[%s13 + $0xe8] sm:$0xff]
  %v3194 = vld [vmem:[%s13 + $0xf0] sm:$0xff]
  %v3195 = vld [vmem:[%s13 + $0xf8] sm:$0xff]
  %v3196 = vld [vmem:[%s13 + $0x100] sm:$0xff]
  %v3197 = vld [vmem:[%s13 + $0x108] sm:$0xff]
  %v3198 = vld [vmem:[%s13 + $0x110] sm:$0xff]
  %v3199 = vld [vmem:[%s13 + $0x118] sm:$0xff]
  %v3200 = vld [vmem:[%s13 + $0x120] sm:$0xff]
  %v3201 = vld [vmem:[%s13 + $0x128] sm:$0xff]
  %v3202 = vld [vmem:[%s13 + $0x130] sm:$0xff]
  %v3203 = vld [vmem:[%s13 + $0x138] sm:$0xff]
  %v3204 = vld [vmem:[%s13 + $0x140] sm:$0xff]
  %v3205 = vld [vmem:[%s13 + $0x148] sm:$0xff]
  %v3206 = vld [vmem:[%s13 + $0x150] sm:$0xff]
  %v3207 = vld [vmem:[%s13 + $0x158] sm:$0xff]
  %v3208 = vld [vmem:[%s13 + $0x160] sm:$0xff]
  %v3209 = vld [vmem:[%s13 + $0x168] sm:$0xff]
  %v3210 = vld [vmem:[%s13 + $0x170] sm:$0xff]
  %v3211 = vld [vmem:[%s13 + $0x178] sm:$0xff]
  %v3212 = vld [vmem:[%s13 + $0x180] sm:$0xff]
  %v3213 = vld [vmem:[%s13 + $0x188] sm:$0xff]
  %v3214 = vld [vmem:[%s13 + $0x190] sm:$0xff]
  %v3215 = vld [vmem:[%s13 + $0x198] sm:$0xff]
  %v3216 = vld [vmem:[%s13 + $0x1a0] sm:$0xff]
  %v3217 = vld [vmem:[%s13 + $0x1a8] sm:$0xff]
  %v3218 = vld [vmem:[%s13 + $0x1b0] sm:$0xff]
  %v3219 = vld [vmem:[%s13 + $0x1b8] sm:$0xff]
  %v3220 = vld [vmem:[%s13 + $0x1c0] sm:$0xff]
  %v3221 = vld [vmem:[%s13 + $0x1c8] sm:$0xff]
  %v3222 = vld [vmem:[%s13 + $0x1d0] sm:$0xff]
  %v3223 = vld [vmem:[%s13 + $0x1d8] sm:$0xff]
  %v3224 = vld [vmem:[%s13 + $0x1e0] sm:$0xff]
  %v3225 = vld [vmem:[%s13 + $0x1e8] sm:$0xff]
  %v3226 = vld [vmem:[%s13 + $0x1f0] sm:$0xff]
  %v3227 = vld [vmem:[%s13 + $0x1f8] sm:$0xff]
  %v3228 = vld [vmem:[%s13 + $0x200] sm:$0xff]
  %v3229 = vld [vmem:[%s13 + $0x208] sm:$0xff]
  %v3230 = vld [vmem:[%s13 + $0x210] sm:$0xff]
  %v3231 = vld [vmem:[%s13 + $0x218] sm:$0xff]
  %v3232 = vld [vmem:[%s13 + $0x220] sm:$0xff]
  %v3233 = vld [vmem:[%s13 + $0x228] sm:$0xff]
  %v3234 = vld [vmem:[%s13 + $0x230] sm:$0xff]
  %v3235 = vld [vmem:[%s13 + $0x238] sm:$0xff]
  %v3236 = vld [vmem:[%s13 + $0x240] sm:$0xff]
  %v3237 = vld [vmem:[%s13 + $0x248] sm:$0xff]
  %v3238 = vld [vmem:[%s13 + $0x250] sm:$0xff]
  %v3239 = vld [vmem:[%s13 + $0x258] sm:$0xff]
  %v3240 = vld [vmem:[%s13 + $0x260] sm:$0xff]
  %v3241 = vld [vmem:[%s13 + $0x268] sm:$0xff]
  %v3242 = vld [vmem:[%s13 + $0x270] sm:$0xff]
  %v3243 = vld [vmem:[%s13 + $0x278] sm:$0xff]
  %v3244 = vld [vmem:[%s13 + $0x280] sm:$0xff]
  %v3245 = vld [vmem:[%s13 + $0x288] sm:$0xff]
  %v3246 = vld [vmem:[%s13 + $0x290] sm:$0xff]
  %v3247 = vld [vmem:[%s13 + $0x298] sm:$0xff]
  %v3248 = vld [vmem:[%s13 + $0x2a0] sm:$0xff]
  %v3249 = vld [vmem:[%s13 + $0x2a8] sm:$0xff]
  %v3250 = vld [vmem:[%s13 + $0x2b0] sm:$0xff]
  %v3251 = vld [vmem:[%s13 + $0x2b8] sm:$0xff]
  %v3252 = vld [vmem:[%s13 + $0x2c0] sm:$0xff]
  %v3253 = vld [vmem:[%s13 + $0x2c8] sm:$0xff]
  %v3254 = vld [vmem:[%s13 + $0x2d0] sm:$0xff]
  %v3255 = vld [vmem:[%s13 + $0x2d8] sm:$0xff]
  %v3256 = vld [vmem:[%s13 + $0x2e0] sm:$0xff]
  %v3257 = vld [vmem:[%s13 + $0x2e8] sm:$0xff]
  %v3258 = vld [vmem:[%s13 + $0x2f0] sm:$0xff]
  %v3259 = vld [vmem:[%s13 + $0x2f8] sm:$0xff]
  %v3260 = vld [vmem:[%s13 + $0x300] sm:$0xff]
  %v3261 = vld [vmem:[%s13 + $0x308] sm:$0xff]
  %v3262 = vld [vmem:[%s13 + $0x310] sm:$0xff]
  %v3263 = vld [vmem:[%s13 + $0x318] sm:$0xff]
  %v3264 = vld [vmem:[%s13 + $0x320] sm:$0xff]
  %v3265 = vld [vmem:[%s13 + $0x328] sm:$0xff]
  %v3266 = vld [vmem:[%s13 + $0x330] sm:$0xff]
  %v3267 = vld [vmem:[%s13 + $0x338] sm:$0xff]
  %v3268 = vld [vmem:[%s13 + $0x340] sm:$0xff]
  %v3269 = vld [vmem:[%s13 + $0x348] sm:$0xff]
  %v3270 = vld [vmem:[%s13 + $0x350] sm:$0xff]
  %v3271 = vld [vmem:[%s13 + $0x358] sm:$0xff]
  %v3272 = vld [vmem:[%s13 + $0x360] sm:$0xff]
  %v3273 = vld [vmem:[%s13 + $0x368] sm:$0xff]
  %v3274 = vld [vmem:[%s13 + $0x370] sm:$0xff]
  %v3275 = vld [vmem:[%s13 + $0x378] sm:$0xff]
  %v3276 = vld [vmem:[%s13 + $0x380] sm:$0xff]
  %v3277 = vld [vmem:[%s13 + $0x388] sm:$0xff]
  %v3278 = vld [vmem:[%s13 + $0x390] sm:$0xff]
  %v3279 = vld [vmem:[%s13 + $0x398] sm:$0xff]
  %v3280 = vld [vmem:[%s13 + $0x3a0] sm:$0xff]
  %v3281 = vld [vmem:[%s13 + $0x3a8] sm:$0xff]
  %v3282 = vld [vmem:[%s13 + $0x3b0] sm:$0xff]
  %v3283 = vld [vmem:[%s13 + $0x3b8] sm:$0xff]
  %v3284 = vld [vmem:[%s13 + $0x3c0] sm:$0xff]
  %v3285 = vld [vmem:[%s13 + $0x3c8] sm:$0xff]
  %v3286 = vld [vmem:[%s13 + $0x3d0] sm:$0xff]
  %v3287 = vld [vmem:[%s13 + $0x3d8] sm:$0xff]
  %v3288 = vld [vmem:[%s13 + $0x3e0] sm:$0xff]
  %v3289 = vld [vmem:[%s13 + $0x3e8] sm:$0xff]
  %v3290 = vld [vmem:[%s13 + $0x3f0] sm:$0xff]
  %v3291 = vld [vmem:[%s13 + $0x3f8] sm:$0xff]
  %v3292 = vld [vmem:[%s13 + $0x400] sm:$0xff]
  %v3293 = vld [vmem:[%s13 + $0x408] sm:$0xff]
  %v3294 = vld [vmem:[%s13 + $0x410] sm:$0xff]
  %v3295 = vld [vmem:[%s13 + $0x418] sm:$0xff]
  %v3296 = vld [vmem:[%s13 + $0x420] sm:$0xff]
  %v3297 = vld [vmem:[%s13 + $0x428] sm:$0xff]
  %v3298 = vld [vmem:[%s13 + $0x430] sm:$0xff]
  %v3299 = vld [vmem:[%s13 + $0x438] sm:$0xff]
  %v3300 = vld [vmem:[%s13 + $0x440] sm:$0xff]
  %v3301 = vld [vmem:[%s13 + $0x448] sm:$0xff]
  %v3302 = vld [vmem:[%s13 + $0x450] sm:$0xff]
  %v3303 = vld [vmem:[%s13 + $0x458] sm:$0xff]
  %v3304 = vld [vmem:[%s13 + $0x460] sm:$0xff]
  %v3305 = vld [vmem:[%s13 + $0x468] sm:$0xff]
  %v3306 = vld [vmem:[%s13 + $0x470] sm:$0xff]
  %v3307 = vld [vmem:[%s13 + $0x478] sm:$0xff]
  %v3308 = vld [vmem:[%s13 + $0x480] sm:$0xff]
  %v3309 = vld [vmem:[%s13 + $0x488] sm:$0xff]
  %v3310 = vld [vmem:[%s13 + $0x490] sm:$0xff]
  %v3311 = vld [vmem:[%s13 + $0x498] sm:$0xff]
  %v3312 = vld [vmem:[%s13 + $0x4a0] sm:$0xff]
  %v3313 = vld [vmem:[%s13 + $0x4a8] sm:$0xff]
  %v3314 = vld [vmem:[%s13 + $0x4b0] sm:$0xff]
  %v3315 = vld [vmem:[%s13 + $0x4b8] sm:$0xff]
  %v3316 = vld [vmem:[%s13 + $0x4c0] sm:$0xff]
  %v3317 = vld [vmem:[%s13 + $0x4c8] sm:$0xff]
  %v3318 = vld [vmem:[%s13 + $0x4d0] sm:$0xff]
  %v3319 = vld [vmem:[%s13 + $0x4d8] sm:$0xff]
  %v3320 = vld [vmem:[%s13 + $0x4e0] sm:$0xff]
  %v3321 = vld [vmem:[%s13 + $0x4e8] sm:$0xff]
  %v3322 = vld [vmem:[%s13 + $0x4f0] sm:$0xff]
  %v3323 = vld [vmem:[%s13 + $0x4f8] sm:$0xff]
  %v3324 = vld [vmem:[%s13 + $0x500] sm:$0xff]
  %v3325 = vld [vmem:[%s13 + $0x508] sm:$0xff]
  %v3326 = vld [vmem:[%s13 + $0x510] sm:$0xff]
  %v3327 = vld [vmem:[%s13 + $0x518] sm:$0xff]
  %v3328 = vld [vmem:[%s13 + $0x520] sm:$0xff]
  %v3329 = vld [vmem:[%s13 + $0x528] sm:$0xff]
  %v3330 = vld [vmem:[%s13 + $0x530] sm:$0xff]
  %v3331 = vld [vmem:[%s13 + $0x538] sm:$0xff]
  %v3332 = vld [vmem:[%s13 + $0x540] sm:$0xff]
  %v3333 = vld [vmem:[%s13 + $0x548] sm:$0xff]
  %v3334 = vld [vmem:[%s13 + $0x550] sm:$0xff]
  %v3335 = vld [vmem:[%s13 + $0x558] sm:$0xff]
  %v3336 = vld [vmem:[%s13 + $0x560] sm:$0xff]
  %v3337 = vld [vmem:[%s13 + $0x568] sm:$0xff]
  %v3338 = vld [vmem:[%s13 + $0x570] sm:$0xff]
  %v3339 = vld [vmem:[%s13 + $0x578] sm:$0xff]
  %v3340 = vld [vmem:[%s13 + $0x580] sm:$0xff]
  %v3341 = vld [vmem:[%s13 + $0x588] sm:$0xff]
  %v3342 = vld [vmem:[%s13 + $0x590] sm:$0xff]
  %v3343 = vld [vmem:[%s13 + $0x598] sm:$0xff]
  %v3344 = vld [vmem:[%s13 + $0x5a0] sm:$0xff]
  %v3345 = vld [vmem:[%s13 + $0x5a8] sm:$0xff]
  %v3346 = vld [vmem:[%s13 + $0x5b0] sm:$0xff]
  %v3347 = vld [vmem:[%s13 + $0x5b8] sm:$0xff]
  %v3348 = vld [vmem:[%s13 + $0x5c0] sm:$0xff]
  %v3349 = vld [vmem:[%s13 + $0x5c8] sm:$0xff]
  %v3350 = vld [vmem:[%s13 + $0x5d0] sm:$0xff]
  %v3351 = vld [vmem:[%s13 + $0x5d8] sm:$0xff]
  %v3352 = vld [vmem:[%s13 + $0x5e0] sm:$0xff]
  %v3353 = vld [vmem:[%s13 + $0x5e8] sm:$0xff]
  %v3354 = vld [vmem:[%s13 + $0x5f0] sm:$0xff]
  %v3355 = vld [vmem:[%s13 + $0x5f8] sm:$0xff]
  %v3356 = vld [vmem:[%s14] sm:$0x3f]
  %v3358 = vlaneseq
  %v3359 = vshrl.u32 %v3358, 7
  %v3360 = vsub.s32 0, %v3359
  %v3361 = vrot.slane %v3356, %v3360
  %v3362 = vlaneseq
  %v3363 = vshrl.u32 %v3362, 7
  %v3364 = vsub.s32 1, %v3363
  %v3365 = vrot.slane %v3356, %v3364
  %v3366 = vlaneseq
  %v3367 = vshrl.u32 %v3366, 7
  %v3368 = vsub.s32 2, %v3367
  %v3369 = vrot.slane %v3356, %v3368
  %v3370 = vlaneseq
  %v3371 = vshrl.u32 %v3370, 7
  %v3372 = vsub.s32 3, %v3371
  %v3373 = vrot.slane %v3356, %v3372
  %v3374 = vlaneseq
  %v3375 = vshrl.u32 %v3374, 7
  %v3376 = vsub.s32 4, %v3375
  %v3377 = vrot.slane %v3356, %v3376
  %v3378 = vlaneseq
  %v3379 = vshrl.u32 %v3378, 7
  %v3380 = vsub.s32 5, %v3379
  %v3381 = vrot.slane %v3356, %v3380
  %v3580 = vunpack.c.l.b16 %v3164
  %v3581 = vunpack.c.h.b16 %v3164
  %v3582 = vunpack.c.l.b16 %v3165
  %v3583 = vunpack.c.h.b16 %v3165
  %v3584 = vunpack.c.l.b16 %v3166
  %v3585 = vunpack.c.h.b16 %v3166
  %v3586 = vunpack.c.l.b16 %v3167
  %v3587 = vunpack.c.h.b16 %v3167
  %v3588 = vunpack.c.l.b16 %v3168
  %v3589 = vunpack.c.h.b16 %v3168
  %v3590 = vunpack.c.l.b16 %v3169
  %v3591 = vunpack.c.h.b16 %v3169
  %v3592 = vunpack.c.l.b16 %v3170
  %v3593 = vunpack.c.h.b16 %v3170
  %v3594 = vunpack.c.l.b16 %v3171
  %v3595 = vunpack.c.h.b16 %v3171
  %v3596 = vunpack.c.l.b16 %v3172
  %v3597 = vunpack.c.h.b16 %v3172
  %v3598 = vunpack.c.l.b16 %v3173
  %v3599 = vunpack.c.h.b16 %v3173
  %v3600 = vunpack.c.l.b16 %v3174
  %v3601 = vunpack.c.h.b16 %v3174
  %v3602 = vunpack.c.l.b16 %v3175
  %v3603 = vunpack.c.h.b16 %v3175
  %v3604 = vunpack.c.l.b16 %v3176
  %v3605 = vunpack.c.h.b16 %v3176
  %v3606 = vunpack.c.l.b16 %v3177
  %v3607 = vunpack.c.h.b16 %v3177
  %v3608 = vunpack.c.l.b16 %v3178
  %v3609 = vunpack.c.h.b16 %v3178
  %v3610 = vunpack.c.l.b16 %v3179
  %v3611 = vunpack.c.h.b16 %v3179
  %v3612 = vunpack.c.l.b16 %v3180
  %v3613 = vunpack.c.h.b16 %v3180
  %v3614 = vunpack.c.l.b16 %v3181
  %v3615 = vunpack.c.h.b16 %v3181
  %v3616 = vunpack.c.l.b16 %v3182
  %v3617 = vunpack.c.h.b16 %v3182
  %v3618 = vunpack.c.l.b16 %v3183
  %v3619 = vunpack.c.h.b16 %v3183
  %v3620 = vunpack.c.l.b16 %v3184
  %v3621 = vunpack.c.h.b16 %v3184
  %v3622 = vunpack.c.l.b16 %v3185
  %v3623 = vunpack.c.h.b16 %v3185
  %v3624 = vunpack.c.l.b16 %v3186
  %v3625 = vunpack.c.h.b16 %v3186
  %v3626 = vunpack.c.l.b16 %v3187
  %v3627 = vunpack.c.h.b16 %v3187
  %v3628 = vunpack.c.l.b16 %v3188
  %v3629 = vunpack.c.h.b16 %v3188
  %v3630 = vunpack.c.l.b16 %v3189
  %v3631 = vunpack.c.h.b16 %v3189
  %v3632 = vunpack.c.l.b16 %v3190
  %v3633 = vunpack.c.h.b16 %v3190
  %v3634 = vunpack.c.l.b16 %v3191
  %v3635 = vunpack.c.h.b16 %v3191
  %v3636 = vunpack.c.l.b16 %v3192
  %v3637 = vunpack.c.h.b16 %v3192
  %v3638 = vunpack.c.l.b16 %v3193
  %v3639 = vunpack.c.h.b16 %v3193
  %v3640 = vunpack.c.l.b16 %v3194
  %v3641 = vunpack.c.h.b16 %v3194
  %v3642 = vunpack.c.l.b16 %v3195
  %v3643 = vunpack.c.h.b16 %v3195
  %v3644 = vunpack.c.l.b16 %v3196
  %v3645 = vunpack.c.h.b16 %v3196
  %v3646 = vunpack.c.l.b16 %v3197
  %v3647 = vunpack.c.h.b16 %v3197
  %v3648 = vunpack.c.l.b16 %v3198
  %v3649 = vunpack.c.h.b16 %v3198
  %v3650 = vunpack.c.l.b16 %v3199
  %v3651 = vunpack.c.h.b16 %v3199
  %v3652 = vunpack.c.l.b16 %v3200
  %v3653 = vunpack.c.h.b16 %v3200
  %v3654 = vunpack.c.l.b16 %v3201
  %v3655 = vunpack.c.h.b16 %v3201
  %v3656 = vunpack.c.l.b16 %v3202
  %v3657 = vunpack.c.h.b16 %v3202
  %v3658 = vunpack.c.l.b16 %v3203
  %v3659 = vunpack.c.h.b16 %v3203
  %v3660 = vunpack.c.l.b16 %v3204
  %v3661 = vunpack.c.h.b16 %v3204
  %v3662 = vunpack.c.l.b16 %v3205
  %v3663 = vunpack.c.h.b16 %v3205
  %v3664 = vunpack.c.l.b16 %v3206
  %v3665 = vunpack.c.h.b16 %v3206
  %v3666 = vunpack.c.l.b16 %v3207
  %v3667 = vunpack.c.h.b16 %v3207
  %v3668 = vunpack.c.l.b16 %v3208
  %v3669 = vunpack.c.h.b16 %v3208
  %v3670 = vunpack.c.l.b16 %v3209
  %v3671 = vunpack.c.h.b16 %v3209
  %v3672 = vunpack.c.l.b16 %v3210
  %v3673 = vunpack.c.h.b16 %v3210
  %v3674 = vunpack.c.l.b16 %v3211
  %v3675 = vunpack.c.h.b16 %v3211
  %v3676 = vunpack.c.l.b16 %v3212
  %v3677 = vunpack.c.h.b16 %v3212
  %v3678 = vunpack.c.l.b16 %v3213
  %v3679 = vunpack.c.h.b16 %v3213
  %v3680 = vunpack.c.l.b16 %v3214
  %v3681 = vunpack.c.h.b16 %v3214
  %v3682 = vunpack.c.l.b16 %v3215
  %v3683 = vunpack.c.h.b16 %v3215
  %v3684 = vunpack.c.l.b16 %v3216
  %v3685 = vunpack.c.h.b16 %v3216
  %v3686 = vunpack.c.l.b16 %v3217
  %v3687 = vunpack.c.h.b16 %v3217
  %v3688 = vunpack.c.l.b16 %v3218
  %v3689 = vunpack.c.h.b16 %v3218
  %v3690 = vunpack.c.l.b16 %v3219
  %v3691 = vunpack.c.h.b16 %v3219
  %v3692 = vunpack.c.l.b16 %v3220
  %v3693 = vunpack.c.h.b16 %v3220
  %v3694 = vunpack.c.l.b16 %v3221
  %v3695 = vunpack.c.h.b16 %v3221
  %v3696 = vunpack.c.l.b16 %v3222
  %v3697 = vunpack.c.h.b16 %v3222
  %v3698 = vunpack.c.l.b16 %v3223
  %v3699 = vunpack.c.h.b16 %v3223
  %v3700 = vunpack.c.l.b16 %v3224
  %v3701 = vunpack.c.h.b16 %v3224
  %v3702 = vunpack.c.l.b16 %v3225
  %v3703 = vunpack.c.h.b16 %v3225
  %v3704 = vunpack.c.l.b16 %v3226
  %v3705 = vunpack.c.h.b16 %v3226
  %v3706 = vunpack.c.l.b16 %v3227
  %v3707 = vunpack.c.h.b16 %v3227
  %v3708 = vunpack.c.l.b16 %v3228
  %v3709 = vunpack.c.h.b16 %v3228
  %v3710 = vunpack.c.l.b16 %v3229
  %v3711 = vunpack.c.h.b16 %v3229
  %v3712 = vunpack.c.l.b16 %v3230
  %v3713 = vunpack.c.h.b16 %v3230
  %v3714 = vunpack.c.l.b16 %v3231
  %v3715 = vunpack.c.h.b16 %v3231
  %v3716 = vunpack.c.l.b16 %v3232
  %v3717 = vunpack.c.h.b16 %v3232
  %v3718 = vunpack.c.l.b16 %v3233
  %v3719 = vunpack.c.h.b16 %v3233
  %v3720 = vunpack.c.l.b16 %v3234
  %v3721 = vunpack.c.h.b16 %v3234
  %v3722 = vunpack.c.l.b16 %v3235
  %v3723 = vunpack.c.h.b16 %v3235
  %v3724 = vunpack.c.l.b16 %v3236
  %v3725 = vunpack.c.h.b16 %v3236
  %v3726 = vunpack.c.l.b16 %v3237
  %v3727 = vunpack.c.h.b16 %v3237
  %v3728 = vunpack.c.l.b16 %v3238
  %v3729 = vunpack.c.h.b16 %v3238
  %v3730 = vunpack.c.l.b16 %v3239
  %v3731 = vunpack.c.h.b16 %v3239
  %v3732 = vunpack.c.l.b16 %v3240
  %v3733 = vunpack.c.h.b16 %v3240
  %v3734 = vunpack.c.l.b16 %v3241
  %v3735 = vunpack.c.h.b16 %v3241
  %v3736 = vunpack.c.l.b16 %v3242
  %v3737 = vunpack.c.h.b16 %v3242
  %v3738 = vunpack.c.l.b16 %v3243
  %v3739 = vunpack.c.h.b16 %v3243
  %v3740 = vunpack.c.l.b16 %v3244
  %v3741 = vunpack.c.h.b16 %v3244
  %v3742 = vunpack.c.l.b16 %v3245
  %v3743 = vunpack.c.h.b16 %v3245
  %v3744 = vunpack.c.l.b16 %v3246
  %v3745 = vunpack.c.h.b16 %v3246
  %v3746 = vunpack.c.l.b16 %v3247
  %v3747 = vunpack.c.h.b16 %v3247
  %v3748 = vunpack.c.l.b16 %v3248
  %v3749 = vunpack.c.h.b16 %v3248
  %v3750 = vunpack.c.l.b16 %v3249
  %v3751 = vunpack.c.h.b16 %v3249
  %v3752 = vunpack.c.l.b16 %v3250
  %v3753 = vunpack.c.h.b16 %v3250
  %v3754 = vunpack.c.l.b16 %v3251
  %v3755 = vunpack.c.h.b16 %v3251
  %v3756 = vunpack.c.l.b16 %v3252
  %v3757 = vunpack.c.h.b16 %v3252
  %v3758 = vunpack.c.l.b16 %v3253
  %v3759 = vunpack.c.h.b16 %v3253
  %v3760 = vunpack.c.l.b16 %v3254
  %v3761 = vunpack.c.h.b16 %v3254
  %v3762 = vunpack.c.l.b16 %v3255
  %v3763 = vunpack.c.h.b16 %v3255
  %v3764 = vunpack.c.l.b16 %v3256
  %v3765 = vunpack.c.h.b16 %v3256
  %v3766 = vunpack.c.l.b16 %v3257
  %v3767 = vunpack.c.h.b16 %v3257
  %v3768 = vunpack.c.l.b16 %v3258
  %v3769 = vunpack.c.h.b16 %v3258
  %v3770 = vunpack.c.l.b16 %v3259
  %v3771 = vunpack.c.h.b16 %v3259
  %v3772 = vunpack.c.l.b16 %v3260
  %v3773 = vunpack.c.h.b16 %v3260
  %v3774 = vunpack.c.l.b16 %v3261
  %v3775 = vunpack.c.h.b16 %v3261
  %v3776 = vunpack.c.l.b16 %v3262
  %v3777 = vunpack.c.h.b16 %v3262
  %v3778 = vunpack.c.l.b16 %v3263
  %v3779 = vunpack.c.h.b16 %v3263
  %v3780 = vunpack.c.l.b16 %v3264
  %v3781 = vunpack.c.h.b16 %v3264
  %v3782 = vunpack.c.l.b16 %v3265
  %v3783 = vunpack.c.h.b16 %v3265
  %v3784 = vunpack.c.l.b16 %v3266
  %v3785 = vunpack.c.h.b16 %v3266
  %v3786 = vunpack.c.l.b16 %v3267
  %v3787 = vunpack.c.h.b16 %v3267
  %v3788 = vunpack.c.l.b16 %v3268
  %v3789 = vunpack.c.h.b16 %v3268
  %v3790 = vunpack.c.l.b16 %v3269
  %v3791 = vunpack.c.h.b16 %v3269
  %v3792 = vunpack.c.l.b16 %v3270
  %v3793 = vunpack.c.h.b16 %v3270
  %v3794 = vunpack.c.l.b16 %v3271
  %v3795 = vunpack.c.h.b16 %v3271
  %v3796 = vunpack.c.l.b16 %v3272
  %v3797 = vunpack.c.h.b16 %v3272
  %v3798 = vunpack.c.l.b16 %v3273
  %v3799 = vunpack.c.h.b16 %v3273
  %v3800 = vunpack.c.l.b16 %v3274
  %v3801 = vunpack.c.h.b16 %v3274
  %v3802 = vunpack.c.l.b16 %v3275
  %v3803 = vunpack.c.h.b16 %v3275
  %v3804 = vunpack.c.l.b16 %v3276
  %v3805 = vunpack.c.h.b16 %v3276
  %v3806 = vunpack.c.l.b16 %v3277
  %v3807 = vunpack.c.h.b16 %v3277
  %v3808 = vunpack.c.l.b16 %v3278
  %v3809 = vunpack.c.h.b16 %v3278
  %v3810 = vunpack.c.l.b16 %v3279
  %v3811 = vunpack.c.h.b16 %v3279
  %v3812 = vunpack.c.l.b16 %v3280
  %v3813 = vunpack.c.h.b16 %v3280
  %v3814 = vunpack.c.l.b16 %v3281
  %v3815 = vunpack.c.h.b16 %v3281
  %v3816 = vunpack.c.l.b16 %v3282
  %v3817 = vunpack.c.h.b16 %v3282
  %v3818 = vunpack.c.l.b16 %v3283
  %v3819 = vunpack.c.h.b16 %v3283
  %v3820 = vunpack.c.l.b16 %v3284
  %v3821 = vunpack.c.h.b16 %v3284
  %v3822 = vunpack.c.l.b16 %v3285
  %v3823 = vunpack.c.h.b16 %v3285
  %v3824 = vunpack.c.l.b16 %v3286
  %v3825 = vunpack.c.h.b16 %v3286
  %v3826 = vunpack.c.l.b16 %v3287
  %v3827 = vunpack.c.h.b16 %v3287
  %v3828 = vunpack.c.l.b16 %v3288
  %v3829 = vunpack.c.h.b16 %v3288
  %v3830 = vunpack.c.l.b16 %v3289
  %v3831 = vunpack.c.h.b16 %v3289
  %v3832 = vunpack.c.l.b16 %v3290
  %v3833 = vunpack.c.h.b16 %v3290
  %v3834 = vunpack.c.l.b16 %v3291
  %v3835 = vunpack.c.h.b16 %v3291
  %v3836 = vunpack.c.l.b16 %v3292
  %v3837 = vunpack.c.h.b16 %v3292
  %v3838 = vunpack.c.l.b16 %v3293
  %v3839 = vunpack.c.h.b16 %v3293
  %v3840 = vunpack.c.l.b16 %v3294
  %v3841 = vunpack.c.h.b16 %v3294
  %v3842 = vunpack.c.l.b16 %v3295
  %v3843 = vunpack.c.h.b16 %v3295
  %v3844 = vunpack.c.l.b16 %v3296
  %v3845 = vunpack.c.h.b16 %v3296
  %v3846 = vunpack.c.l.b16 %v3297
  %v3847 = vunpack.c.h.b16 %v3297
  %v3848 = vunpack.c.l.b16 %v3298
  %v3849 = vunpack.c.h.b16 %v3298
  %v3850 = vunpack.c.l.b16 %v3299
  %v3851 = vunpack.c.h.b16 %v3299
  %v3852 = vunpack.c.l.b16 %v3300
  %v3853 = vunpack.c.h.b16 %v3300
  %v3854 = vunpack.c.l.b16 %v3301
  %v3855 = vunpack.c.h.b16 %v3301
  %v3856 = vunpack.c.l.b16 %v3302
  %v3857 = vunpack.c.h.b16 %v3302
  %v3858 = vunpack.c.l.b16 %v3303
  %v3859 = vunpack.c.h.b16 %v3303
  %v3860 = vunpack.c.l.b16 %v3304
  %v3861 = vunpack.c.h.b16 %v3304
  %v3862 = vunpack.c.l.b16 %v3305
  %v3863 = vunpack.c.h.b16 %v3305
  %v3864 = vunpack.c.l.b16 %v3306
  %v3865 = vunpack.c.h.b16 %v3306
  %v3866 = vunpack.c.l.b16 %v3307
  %v3867 = vunpack.c.h.b16 %v3307
  %v3868 = vunpack.c.l.b16 %v3308
  %v3869 = vunpack.c.h.b16 %v3308
  %v3870 = vunpack.c.l.b16 %v3309
  %v3871 = vunpack.c.h.b16 %v3309
  %v3872 = vunpack.c.l.b16 %v3310
  %v3873 = vunpack.c.h.b16 %v3310
  %v3874 = vunpack.c.l.b16 %v3311
  %v3875 = vunpack.c.h.b16 %v3311
  %v3876 = vunpack.c.l.b16 %v3312
  %v3877 = vunpack.c.h.b16 %v3312
  %v3878 = vunpack.c.l.b16 %v3313
  %v3879 = vunpack.c.h.b16 %v3313
  %v3880 = vunpack.c.l.b16 %v3314
  %v3881 = vunpack.c.h.b16 %v3314
  %v3882 = vunpack.c.l.b16 %v3315
  %v3883 = vunpack.c.h.b16 %v3315
  %v3884 = vunpack.c.l.b16 %v3316
  %v3885 = vunpack.c.h.b16 %v3316
  %v3886 = vunpack.c.l.b16 %v3317
  %v3887 = vunpack.c.h.b16 %v3317
  %v3888 = vunpack.c.l.b16 %v3318
  %v3889 = vunpack.c.h.b16 %v3318
  %v3890 = vunpack.c.l.b16 %v3319
  %v3891 = vunpack.c.h.b16 %v3319
  %v3892 = vunpack.c.l.b16 %v3320
  %v3893 = vunpack.c.h.b16 %v3320
  %v3894 = vunpack.c.l.b16 %v3321
  %v3895 = vunpack.c.h.b16 %v3321
  %v3896 = vunpack.c.l.b16 %v3322
  %v3897 = vunpack.c.h.b16 %v3322
  %v3898 = vunpack.c.l.b16 %v3323
  %v3899 = vunpack.c.h.b16 %v3323
  %v3900 = vunpack.c.l.b16 %v3324
  %v3901 = vunpack.c.h.b16 %v3324
  %v3902 = vunpack.c.l.b16 %v3325
  %v3903 = vunpack.c.h.b16 %v3325
  %v3904 = vunpack.c.l.b16 %v3326
  %v3905 = vunpack.c.h.b16 %v3326
  %v3906 = vunpack.c.l.b16 %v3327
  %v3907 = vunpack.c.h.b16 %v3327
  %v3908 = vunpack.c.l.b16 %v3328
  %v3909 = vunpack.c.h.b16 %v3328
  %v3910 = vunpack.c.l.b16 %v3329
  %v3911 = vunpack.c.h.b16 %v3329
  %v3912 = vunpack.c.l.b16 %v3330
  %v3913 = vunpack.c.h.b16 %v3330
  %v3914 = vunpack.c.l.b16 %v3331
  %v3915 = vunpack.c.h.b16 %v3331
  %v3916 = vunpack.c.l.b16 %v3332
  %v3917 = vunpack.c.h.b16 %v3332
  %v3918 = vunpack.c.l.b16 %v3333
  %v3919 = vunpack.c.h.b16 %v3333
  %v3920 = vunpack.c.l.b16 %v3334
  %v3921 = vunpack.c.h.b16 %v3334
  %v3922 = vunpack.c.l.b16 %v3335
  %v3923 = vunpack.c.h.b16 %v3335
  %v3924 = vunpack.c.l.b16 %v3336
  %v3925 = vunpack.c.h.b16 %v3336
  %v3926 = vunpack.c.l.b16 %v3337
  %v3927 = vunpack.c.h.b16 %v3337
  %v3928 = vunpack.c.l.b16 %v3338
  %v3929 = vunpack.c.h.b16 %v3338
  %v3930 = vunpack.c.l.b16 %v3339
  %v3931 = vunpack.c.h.b16 %v3339
  %v3932 = vunpack.c.l.b16 %v3340
  %v3933 = vunpack.c.h.b16 %v3340
  %v3934 = vunpack.c.l.b16 %v3341
  %v3935 = vunpack.c.h.b16 %v3341
  %v3936 = vunpack.c.l.b16 %v3342
  %v3937 = vunpack.c.h.b16 %v3342
  %v3938 = vunpack.c.l.b16 %v3343
  %v3939 = vunpack.c.h.b16 %v3343
  %v3940 = vunpack.c.l.b16 %v3344
  %v3941 = vunpack.c.h.b16 %v3344
  %v3942 = vunpack.c.l.b16 %v3345
  %v3943 = vunpack.c.h.b16 %v3345
  %v3944 = vunpack.c.l.b16 %v3346
  %v3945 = vunpack.c.h.b16 %v3346
  %v3946 = vunpack.c.l.b16 %v3347
  %v3947 = vunpack.c.h.b16 %v3347
  %v3948 = vunpack.c.l.b16 %v3348
  %v3949 = vunpack.c.h.b16 %v3348
  %v3950 = vunpack.c.l.b16 %v3349
  %v3951 = vunpack.c.h.b16 %v3349
  %v3952 = vunpack.c.l.b16 %v3350
  %v3953 = vunpack.c.h.b16 %v3350
  %v3954 = vunpack.c.l.b16 %v3351
  %v3955 = vunpack.c.h.b16 %v3351
  %v3956 = vunpack.c.l.b16 %v3352
  %v3957 = vunpack.c.h.b16 %v3352
  %v3958 = vunpack.c.l.b16 %v3353
  %v3959 = vunpack.c.h.b16 %v3353
  %v3960 = vunpack.c.l.b16 %v3354
  %v3961 = vunpack.c.h.b16 %v3354
  %v3962 = vunpack.c.l.b16 %v3355
  %v3963 = vunpack.c.h.b16 %v3355
  %v3964 = vpack.c.b16 %v3586, %v3580
  %v3965 = vpack.c.b16 %v3587, %v3581
  %v3966 = vpack.c.b16 %v3588, %v3582
  %v3967 = vpack.c.b16 %v3589, %v3583
  %v3968 = vpack.c.b16 %v3590, %v3584
  %v3969 = vpack.c.b16 %v3591, %v3585
  %v3970 = vpack.c.b16 %v3598, %v3592
  %v3971 = vpack.c.b16 %v3599, %v3593
  %v3972 = vpack.c.b16 %v3600, %v3594
  %v3973 = vpack.c.b16 %v3601, %v3595
  %v3974 = vpack.c.b16 %v3602, %v3596
  %v3975 = vpack.c.b16 %v3603, %v3597
  %v3976 = vpack.c.b16 %v3610, %v3604
  %v3977 = vpack.c.b16 %v3611, %v3605
  %v3978 = vpack.c.b16 %v3612, %v3606
  %v3979 = vpack.c.b16 %v3613, %v3607
  %v3980 = vpack.c.b16 %v3614, %v3608
  %v3981 = vpack.c.b16 %v3615, %v3609
  %v3982 = vpack.c.b16 %v3622, %v3616
  %v3983 = vpack.c.b16 %v3623, %v3617
  %v3984 = vpack.c.b16 %v3624, %v3618
  %v3985 = vpack.c.b16 %v3625, %v3619
  %v3986 = vpack.c.b16 %v3626, %v3620
  %v3987 = vpack.c.b16 %v3627, %v3621
  %v3988 = vpack.c.b16 %v3634, %v3628
  %v3989 = vpack.c.b16 %v3635, %v3629
  %v3990 = vpack.c.b16 %v3636, %v3630
  %v3991 = vpack.c.b16 %v3637, %v3631
  %v3992 = vpack.c.b16 %v3638, %v3632
  %v3993 = vpack.c.b16 %v3639, %v3633
  %v3994 = vpack.c.b16 %v3646, %v3640
  %v3995 = vpack.c.b16 %v3647, %v3641
  %v3996 = vpack.c.b16 %v3648, %v3642
  %v3997 = vpack.c.b16 %v3649, %v3643
  %v3998 = vpack.c.b16 %v3650, %v3644
  %v3999 = vpack.c.b16 %v3651, %v3645
  %v4000 = vpack.c.b16 %v3658, %v3652
  %v4001 = vpack.c.b16 %v3659, %v3653
  %v4002 = vpack.c.b16 %v3660, %v3654
  %v4003 = vpack.c.b16 %v3661, %v3655
  %v4004 = vpack.c.b16 %v3662, %v3656
  %v4005 = vpack.c.b16 %v3663, %v3657
  %v4006 = vpack.c.b16 %v3670, %v3664
  %v4007 = vpack.c.b16 %v3671, %v3665
  %v4008 = vpack.c.b16 %v3672, %v3666
  %v4009 = vpack.c.b16 %v3673, %v3667
  %v4010 = vpack.c.b16 %v3674, %v3668
  %v4011 = vpack.c.b16 %v3675, %v3669
  %v4012 = vpack.c.b16 %v3682, %v3676
  %v4013 = vpack.c.b16 %v3683, %v3677
  %v4014 = vpack.c.b16 %v3684, %v3678
  %v4015 = vpack.c.b16 %v3685, %v3679
  %v4016 = vpack.c.b16 %v3686, %v3680
  %v4017 = vpack.c.b16 %v3687, %v3681
  %v4018 = vpack.c.b16 %v3694, %v3688
  %v4019 = vpack.c.b16 %v3695, %v3689
  %v4020 = vpack.c.b16 %v3696, %v3690
  %v4021 = vpack.c.b16 %v3697, %v3691
  %v4022 = vpack.c.b16 %v3698, %v3692
  %v4023 = vpack.c.b16 %v3699, %v3693
  %v4024 = vpack.c.b16 %v3706, %v3700
  %v4025 = vpack.c.b16 %v3707, %v3701
  %v4026 = vpack.c.b16 %v3708, %v3702
  %v4027 = vpack.c.b16 %v3709, %v3703
  %v4028 = vpack.c.b16 %v3710, %v3704
  %v4029 = vpack.c.b16 %v3711, %v3705
  %v4030 = vpack.c.b16 %v3718, %v3712
  %v4031 = vpack.c.b16 %v3719, %v3713
  %v4032 = vpack.c.b16 %v3720, %v3714
  %v4033 = vpack.c.b16 %v3721, %v3715
  %v4034 = vpack.c.b16 %v3722, %v3716
  %v4035 = vpack.c.b16 %v3723, %v3717
  %v4036 = vpack.c.b16 %v3730, %v3724
  %v4037 = vpack.c.b16 %v3731, %v3725
  %v4038 = vpack.c.b16 %v3732, %v3726
  %v4039 = vpack.c.b16 %v3733, %v3727
  %v4040 = vpack.c.b16 %v3734, %v3728
  %v4041 = vpack.c.b16 %v3735, %v3729
  %v4042 = vpack.c.b16 %v3742, %v3736
  %v4043 = vpack.c.b16 %v3743, %v3737
  %v4044 = vpack.c.b16 %v3744, %v3738
  %v4045 = vpack.c.b16 %v3745, %v3739
  %v4046 = vpack.c.b16 %v3746, %v3740
  %v4047 = vpack.c.b16 %v3747, %v3741
  %v4048 = vpack.c.b16 %v3754, %v3748
  %v4049 = vpack.c.b16 %v3755, %v3749
  %v4050 = vpack.c.b16 %v3756, %v3750
  %v4051 = vpack.c.b16 %v3757, %v3751
  %v4052 = vpack.c.b16 %v3758, %v3752
  %v4053 = vpack.c.b16 %v3759, %v3753
  %v4054 = vpack.c.b16 %v3766, %v3760
  %v4055 = vpack.c.b16 %v3767, %v3761
  %v4056 = vpack.c.b16 %v3768, %v3762
  %v4057 = vpack.c.b16 %v3769, %v3763
  %v4058 = vpack.c.b16 %v3770, %v3764
  %v4059 = vpack.c.b16 %v3771, %v3765
  %v4060 = vpack.c.b16 %v3778, %v3772
  %v4061 = vpack.c.b16 %v3779, %v3773
  %v4062 = vpack.c.b16 %v3780, %v3774
  %v4063 = vpack.c.b16 %v3781, %v3775
  %v4064 = vpack.c.b16 %v3782, %v3776
  %v4065 = vpack.c.b16 %v3783, %v3777
  %v4066 = vpack.c.b16 %v3790, %v3784
  %v4067 = vpack.c.b16 %v3791, %v3785
  %v4068 = vpack.c.b16 %v3792, %v3786
  %v4069 = vpack.c.b16 %v3793, %v3787
  %v4070 = vpack.c.b16 %v3794, %v3788
  %v4071 = vpack.c.b16 %v3795, %v3789
  %v4072 = vpack.c.b16 %v3802, %v3796
  %v4073 = vpack.c.b16 %v3803, %v3797
  %v4074 = vpack.c.b16 %v3804, %v3798
  %v4075 = vpack.c.b16 %v3805, %v3799
  %v4076 = vpack.c.b16 %v3806, %v3800
  %v4077 = vpack.c.b16 %v3807, %v3801
  %v4078 = vpack.c.b16 %v3814, %v3808
  %v4079 = vpack.c.b16 %v3815, %v3809
  %v4080 = vpack.c.b16 %v3816, %v3810
  %v4081 = vpack.c.b16 %v3817, %v3811
  %v4082 = vpack.c.b16 %v3818, %v3812
  %v4083 = vpack.c.b16 %v3819, %v3813
  %v4084 = vpack.c.b16 %v3826, %v3820
  %v4085 = vpack.c.b16 %v3827, %v3821
  %v4086 = vpack.c.b16 %v3828, %v3822
  %v4087 = vpack.c.b16 %v3829, %v3823
  %v4088 = vpack.c.b16 %v3830, %v3824
  %v4089 = vpack.c.b16 %v3831, %v3825
  %v4090 = vpack.c.b16 %v3838, %v3832
  %v4091 = vpack.c.b16 %v3839, %v3833
  %v4092 = vpack.c.b16 %v3840, %v3834
  %v4093 = vpack.c.b16 %v3841, %v3835
  %v4094 = vpack.c.b16 %v3842, %v3836
  %v4095 = vpack.c.b16 %v3843, %v3837
  %v4096 = vpack.c.b16 %v3850, %v3844
  %v4097 = vpack.c.b16 %v3851, %v3845
  %v4098 = vpack.c.b16 %v3852, %v3846
  %v4099 = vpack.c.b16 %v3853, %v3847
  %v4100 = vpack.c.b16 %v3854, %v3848
  %v4101 = vpack.c.b16 %v3855, %v3849
  %v4102 = vpack.c.b16 %v3862, %v3856
  %v4103 = vpack.c.b16 %v3863, %v3857
  %v4104 = vpack.c.b16 %v3864, %v3858
  %v4105 = vpack.c.b16 %v3865, %v3859
  %v4106 = vpack.c.b16 %v3866, %v3860
  %v4107 = vpack.c.b16 %v3867, %v3861
  %v4108 = vpack.c.b16 %v3874, %v3868
  %v4109 = vpack.c.b16 %v3875, %v3869
  %v4110 = vpack.c.b16 %v3876, %v3870
  %v4111 = vpack.c.b16 %v3877, %v3871
  %v4112 = vpack.c.b16 %v3878, %v3872
  %v4113 = vpack.c.b16 %v3879, %v3873
  %v4114 = vpack.c.b16 %v3886, %v3880
  %v4115 = vpack.c.b16 %v3887, %v3881
  %v4116 = vpack.c.b16 %v3888, %v3882
  %v4117 = vpack.c.b16 %v3889, %v3883
  %v4118 = vpack.c.b16 %v3890, %v3884
  %v4119 = vpack.c.b16 %v3891, %v3885
  %v4120 = vpack.c.b16 %v3898, %v3892
  %v4121 = vpack.c.b16 %v3899, %v3893
  %v4122 = vpack.c.b16 %v3900, %v3894
  %v4123 = vpack.c.b16 %v3901, %v3895
  %v4124 = vpack.c.b16 %v3902, %v3896
  %v4125 = vpack.c.b16 %v3903, %v3897
  %v4126 = vpack.c.b16 %v3910, %v3904
  %v4127 = vpack.c.b16 %v3911, %v3905
  %v4128 = vpack.c.b16 %v3912, %v3906
  %v4129 = vpack.c.b16 %v3913, %v3907
  %v4130 = vpack.c.b16 %v3914, %v3908
  %v4131 = vpack.c.b16 %v3915, %v3909
  %v4132 = vpack.c.b16 %v3922, %v3916
  %v4133 = vpack.c.b16 %v3923, %v3917
  %v4134 = vpack.c.b16 %v3924, %v3918
  %v4135 = vpack.c.b16 %v3925, %v3919
  %v4136 = vpack.c.b16 %v3926, %v3920
  %v4137 = vpack.c.b16 %v3927, %v3921
  %v4138 = vpack.c.b16 %v3934, %v3928
  %v4139 = vpack.c.b16 %v3935, %v3929
  %v4140 = vpack.c.b16 %v3936, %v3930
  %v4141 = vpack.c.b16 %v3937, %v3931
  %v4142 = vpack.c.b16 %v3938, %v3932
  %v4143 = vpack.c.b16 %v3939, %v3933
  %v4144 = vpack.c.b16 %v3946, %v3940
  %v4145 = vpack.c.b16 %v3947, %v3941
  %v4146 = vpack.c.b16 %v3948, %v3942
  %v4147 = vpack.c.b16 %v3949, %v3943
  %v4148 = vpack.c.b16 %v3950, %v3944
  %v4149 = vpack.c.b16 %v3951, %v3945
  %v4150 = vpack.c.b16 %v3958, %v3952
  %v4151 = vpack.c.b16 %v3959, %v3953
  %v4152 = vpack.c.b16 %v3960, %v3954
  %v4153 = vpack.c.b16 %v3961, %v3955
  %v4154 = vpack.c.b16 %v3962, %v3956
  %v4155 = vpack.c.b16 %v3963, %v3957
  %4348 = vmatprep.subr.bf16.mxu0 %v4007
  %4349 = vmatpush1.bf16.msra.mxu0 %v4006
  %4350 = vmatprep.subr.bf16.mxu0 %v4001
  %4351 = vmatpush1.bf16.msra.mxu0 %v4000
  %4352 = vmatprep.subr.bf16.mxu0 %v3995
  %4353 = vmatpush1.bf16.msra.mxu0 %v3994
  %4354 = vmatprep.subr.bf16.mxu0 %v3989
  %4355 = vmatpush1.bf16.msra.mxu0 %v3988
  %4356 = vmatprep.subr.bf16.mxu0 %v3983
  %4357 = vmatpush1.bf16.msra.mxu0 %v3982
  %4358 = vmatprep.subr.bf16.mxu0 %v3977
  %4359 = vmatpush1.bf16.msra.mxu0 %v3976
  %4360 = vmatprep.subr.bf16.mxu0 %v3971
  %4361 = vmatpush1.bf16.msra.mxu0 %v3970
  %4362 = vmatprep.subr.bf16.mxu0 %v3965
  %4363 = vmatpush1.bf16.msra.mxu0 %v3964
  %4364 = vmatprep.subr.bf16.mxu0 %v4055
  %4365 = vmatpush2.bf16.msra.mxu0 %v4054
  %4366 = vmatprep.subr.bf16.mxu0 %v4049
  %4367 = vmatpush2.bf16.msra.mxu0 %v4048
  %4368 = vmatprep.subr.bf16.mxu0 %v4043
  %4369 = vmatpush2.bf16.msra.mxu0 %v4042
  %4370 = vmatprep.subr.bf16.mxu0 %v4037
  %4371 = vmatpush2.bf16.msra.mxu0 %v4036
  %4372 = vmatprep.subr.bf16.mxu0 %v4031
  %4373 = vmatpush2.bf16.msra.mxu0 %v4030
  %4374 = vmatprep.subr.bf16.mxu0 %v4025
  %4375 = vmatpush2.bf16.msra.mxu0 %v4024
  %4376 = vmatprep.subr.bf16.mxu0 %v4019
  %4377 = vmatpush2.bf16.msra.mxu0 %v4018
  %4378 = vmatprep.subr.bf16.mxu0 %v4013
  %4379 = vmatpush2.bf16.msra.mxu0 %v4012
  %4380 = vmatprep.mubr.bf16.mxu0 %v3161
  %4381 = vmatmul.mubr.bf16.gmra.mxu0 %v3160
  %v4382 = vpop.f32.mrf.mxu0
  %v4383 = vadd.f32 %v3361, %v4382
  %v4384 = vpop.f32.mrf.mxu0
  %v4385 = vadd.f32 %v3365, %v4384
  %v4386 = vpop.f32.mrf.mxu0
  %v4387 = vpop.f32.mrf.mxu0
  %4388 = vdwg.mxu0
  %4389 = vmatprep.subr.bf16.mxu0 %v4103
  %4390 = vmatpush1.bf16.msra.mxu0 %v4102
  %4391 = vmatprep.subr.bf16.mxu0 %v4097
  %4392 = vmatpush1.bf16.msra.mxu0 %v4096
  %4393 = vmatprep.subr.bf16.mxu0 %v4091
  %4394 = vmatpush1.bf16.msra.mxu0 %v4090
  %4395 = vmatprep.subr.bf16.mxu0 %v4085
  %4396 = vmatpush1.bf16.msra.mxu0 %v4084
  %4397 = vmatprep.subr.bf16.mxu0 %v4079
  %4398 = vmatpush1.bf16.msra.mxu0 %v4078
  %4399 = vmatprep.subr.bf16.mxu0 %v4073
  %4400 = vmatpush1.bf16.msra.mxu0 %v4072
  %4401 = vmatprep.subr.bf16.mxu0 %v4067
  %4402 = vmatpush1.bf16.msra.mxu0 %v4066
  %4403 = vmatprep.subr.bf16.mxu0 %v4061
  %4404 = vmatpush1.bf16.msra.mxu0 %v4060
  %4405 = vmatprep.subr.bf16.mxu0 %v4151
  %4406 = vmatpush2.bf16.msra.mxu0 %v4150
  %4407 = vmatprep.subr.bf16.mxu0 %v4145
  %4408 = vmatpush2.bf16.msra.mxu0 %v4144
  %4409 = vmatprep.subr.bf16.mxu0 %v4139
  %4410 = vmatpush2.bf16.msra.mxu0 %v4138
  %4411 = vmatprep.subr.bf16.mxu0 %v4133
  %4412 = vmatpush2.bf16.msra.mxu0 %v4132
  %4413 = vmatprep.subr.bf16.mxu0 %v4127
  %4414 = vmatpush2.bf16.msra.mxu0 %v4126
  %4415 = vmatprep.subr.bf16.mxu0 %v4121
  %4416 = vmatpush2.bf16.msra.mxu0 %v4120
  %4417 = vmatprep.subr.bf16.mxu0 %v4115
  %4418 = vmatpush2.bf16.msra.mxu0 %v4114
  %4419 = vmatprep.subr.bf16.mxu0 %v4109
  %4420 = vmatpush2.bf16.msra.mxu0 %v4108
  %4421 = vmatprep.mubr.bf16.mxu0 %v3163
  %4422 = vmatmul.mubr.bf16.gmra.mxu0 %v3162
  %v4423 = vpop.f32.mrf.mxu0
  %v4424 = vadd.f32 %v4383, %v4423
  %v4425 = vpop.f32.mrf.mxu0
  %v4426 = vadd.f32 %v4385, %v4425
  %v4427 = vpop.f32.mrf.mxu0
  %v4428 = vpop.f32.mrf.mxu0
  %4429 = vdwg.mxu0
  %4430 = vmatprep.subr.bf16.mxu0 %v4009
  %4431 = vmatpush1.bf16.msra.mxu0 %v4008
  %4432 = vmatprep.subr.bf16.mxu0 %v4003
  %4433 = vmatpush1.bf16.msra.mxu0 %v4002
  %4434 = vmatprep.subr.bf16.mxu0 %v3997
  %4435 = vmatpush1.bf16.msra.mxu0 %v3996
  %4436 = vmatprep.subr.bf16.mxu0 %v3991
  %4437 = vmatpush1.bf16.msra.mxu0 %v3990
  %4438 = vmatprep.subr.bf16.mxu0 %v3985
  %4439 = vmatpush1.bf16.msra.mxu0 %v3984
  %4440 = vmatprep.subr.bf16.mxu0 %v3979
  %4441 = vmatpush1.bf16.msra.mxu0 %v3978
  %4442 = vmatprep.subr.bf16.mxu0 %v3973
  %4443 = vmatpush1.bf16.msra.mxu0 %v3972
  %4444 = vmatprep.subr.bf16.mxu0 %v3967
  %4445 = vmatpush1.bf16.msra.mxu0 %v3966
  %4446 = vmatprep.subr.bf16.mxu0 %v4057
  %4447 = vmatpush2.bf16.msra.mxu0 %v4056
  %4448 = vmatprep.subr.bf16.mxu0 %v4051
  %4449 = vmatpush2.bf16.msra.mxu0 %v4050
  %4450 = vmatprep.subr.bf16.mxu0 %v4045
  %4451 = vmatpush2.bf16.msra.mxu0 %v4044
  %4452 = vmatprep.subr.bf16.mxu0 %v4039
  %4453 = vmatpush2.bf16.msra.mxu0 %v4038
  %4454 = vmatprep.subr.bf16.mxu0 %v4033
  %4455 = vmatpush2.bf16.msra.mxu0 %v4032
  %4456 = vmatprep.subr.bf16.mxu0 %v4027
  %4457 = vmatpush2.bf16.msra.mxu0 %v4026
  %4458 = vmatprep.subr.bf16.mxu0 %v4021
  %4459 = vmatpush2.bf16.msra.mxu0 %v4020
  %4460 = vmatprep.subr.bf16.mxu0 %v4015
  %4461 = vmatpush2.bf16.msra.mxu0 %v4014
  %4462 = vmatprep.mubr.bf16.mxu0 %v3161
  %4463 = vmatmul.mubr.bf16.gmra.mxu0 %v3160
  %v4464 = vpop.f32.mrf.mxu0
  %v4465 = vadd.f32 %v3369, %v4464
  %v4466 = vpop.f32.mrf.mxu0
  %v4467 = vadd.f32 %v3373, %v4466
  %v4468 = vpop.f32.mrf.mxu0
  %v4469 = vpop.f32.mrf.mxu0
  %4470 = vdwg.mxu0
  %4471 = vmatprep.subr.bf16.mxu0 %v4105
  %4472 = vmatpush1.bf16.msra.mxu0 %v4104
  %4473 = vmatprep.subr.bf16.mxu0 %v4099
  %4474 = vmatpush1.bf16.msra.mxu0 %v4098
  %4475 = vmatprep.subr.bf16.mxu0 %v4093
  %4476 = vmatpush1.bf16.msra.mxu0 %v4092
  %4477 = vmatprep.subr.bf16.mxu0 %v4087
  %4478 = vmatpush1.bf16.msra.mxu0 %v4086
  %4479 = vmatprep.subr.bf16.mxu0 %v4081
  %4480 = vmatpush1.bf16.msra.mxu0 %v4080
  %4481 = vmatprep.subr.bf16.mxu0 %v4075
  %4482 = vmatpush1.bf16.msra.mxu0 %v4074
  %4483 = vmatprep.subr.bf16.mxu0 %v4069
  %4484 = vmatpush1.bf16.msra.mxu0 %v4068
  %4485 = vmatprep.subr.bf16.mxu0 %v4063
  %4486 = vmatpush1.bf16.msra.mxu0 %v4062
  %4487 = vmatprep.subr.bf16.mxu0 %v4153
  %4488 = vmatpush2.bf16.msra.mxu0 %v4152
  %4489 = vmatprep.subr.bf16.mxu0 %v4147
  %4490 = vmatpush2.bf16.msra.mxu0 %v4146
  %4491 = vmatprep.subr.bf16.mxu0 %v4141
  %4492 = vmatpush2.bf16.msra.mxu0 %v4140
  %4493 = vmatprep.subr.bf16.mxu0 %v4135
  %4494 = vmatpush2.bf16.msra.mxu0 %v4134
  %4495 = vmatprep.subr.bf16.mxu0 %v4129
  %4496 = vmatpush2.bf16.msra.mxu0 %v4128
  %4497 = vmatprep.subr.bf16.mxu0 %v4123
  %4498 = vmatpush2.bf16.msra.mxu0 %v4122
  %4499 = vmatprep.subr.bf16.mxu0 %v4117
  %4500 = vmatpush2.bf16.msra.mxu0 %v4116
  %4501 = vmatprep.subr.bf16.mxu0 %v4111
  %4502 = vmatpush2.bf16.msra.mxu0 %v4110
  %4503 = vmatprep.mubr.bf16.mxu0 %v3163
  %4504 = vmatmul.mubr.bf16.gmra.mxu0 %v3162
  %v4505 = vpop.f32.mrf.mxu0
  %v4506 = vadd.f32 %v4465, %v4505
  %v4507 = vpop.f32.mrf.mxu0
  %v4508 = vadd.f32 %v4467, %v4507
  %v4509 = vpop.f32.mrf.mxu0
  %v4510 = vpop.f32.mrf.mxu0
  %4511 = vdwg.mxu0
  %4512 = vmatprep.subr.bf16.mxu0 %v4011
  %4513 = vmatpush1.bf16.msra.mxu0 %v4010
  %4514 = vmatprep.subr.bf16.mxu0 %v4005
  %4515 = vmatpush1.bf16.msra.mxu0 %v4004
  %4516 = vmatprep.subr.bf16.mxu0 %v3999
  %4517 = vmatpush1.bf16.msra.mxu0 %v3998
  %4518 = vmatprep.subr.bf16.mxu0 %v3993
  %4519 = vmatpush1.bf16.msra.mxu0 %v3992
  %4520 = vmatprep.subr.bf16.mxu0 %v3987
  %4521 = vmatpush1.bf16.msra.mxu0 %v3986
  %4522 = vmatprep.subr.bf16.mxu0 %v3981
  %4523 = vmatpush1.bf16.msra.mxu0 %v3980
  %4524 = vmatprep.subr.bf16.mxu0 %v3975
  %4525 = vmatpush1.bf16.msra.mxu0 %v3974
  %4526 = vmatprep.subr.bf16.mxu0 %v3969
  %4527 = vmatpush1.bf16.msra.mxu0 %v3968
  %4528 = vmatprep.subr.bf16.mxu0 %v4059
  %4529 = vmatpush2.bf16.msra.mxu0 %v4058
  %4530 = vmatprep.subr.bf16.mxu0 %v4053
  %4531 = vmatpush2.bf16.msra.mxu0 %v4052
  %4532 = vmatprep.subr.bf16.mxu0 %v4047
  %4533 = vmatpush2.bf16.msra.mxu0 %v4046
  %4534 = vmatprep.subr.bf16.mxu0 %v4041
  %4535 = vmatpush2.bf16.msra.mxu0 %v4040
  %4536 = vmatprep.subr.bf16.mxu0 %v4035
  %4537 = vmatpush2.bf16.msra.mxu0 %v4034
  %4538 = vmatprep.subr.bf16.mxu0 %v4029
  %4539 = vmatpush2.bf16.msra.mxu0 %v4028
  %4540 = vmatprep.subr.bf16.mxu0 %v4023
  %4541 = vmatpush2.bf16.msra.mxu0 %v4022
  %4542 = vmatprep.subr.bf16.mxu0 %v4017
  %4543 = vmatpush2.bf16.msra.mxu0 %v4016
  %4544 = vmatprep.mubr.bf16.mxu0 %v3161
  %4545 = vmatmul.mubr.bf16.gmra.mxu0 %v3160
  %v4546 = vpop.f32.mrf.mxu0
  %v4547 = vadd.f32 %v3377, %v4546
  %v4548 = vpop.f32.mrf.mxu0
  %v4549 = vadd.f32 %v3381, %v4548
  %v4550 = vpop.f32.mrf.mxu0
  %v4551 = vpop.f32.mrf.mxu0
  %4552 = vdwg.mxu0
  %4553 = vmatprep.subr.bf16.mxu0 %v4107
  %4554 = vmatpush1.bf16.msra.mxu0 %v4106
  %4555 = vmatprep.subr.bf16.mxu0 %v4101
  %4556 = vmatpush1.bf16.msra.mxu0 %v4100
  %4557 = vmatprep.subr.bf16.mxu0 %v4095
  %4558 = vmatpush1.bf16.msra.mxu0 %v4094
  %4559 = vmatprep.subr.bf16.mxu0 %v4089
  %4560 = vmatpush1.bf16.msra.mxu0 %v4088
  %4561 = vmatprep.subr.bf16.mxu0 %v4083
  %4562 = vmatpush1.bf16.msra.mxu0 %v4082
  %4563 = vmatprep.subr.bf16.mxu0 %v4077
  %4564 = vmatpush1.bf16.msra.mxu0 %v4076
  %4565 = vmatprep.subr.bf16.mxu0 %v4071
  %4566 = vmatpush1.bf16.msra.mxu0 %v4070
  %4567 = vmatprep.subr.bf16.mxu0 %v4065
  %4568 = vmatpush1.bf16.msra.mxu0 %v4064
  %4569 = vmatprep.subr.bf16.mxu0 %v4155
  %4570 = vmatpush2.bf16.msra.mxu0 %v4154
  %4571 = vmatprep.subr.bf16.mxu0 %v4149
  %4572 = vmatpush2.bf16.msra.mxu0 %v4148
  %4573 = vmatprep.subr.bf16.mxu0 %v4143
  %4574 = vmatpush2.bf16.msra.mxu0 %v4142
  %4575 = vmatprep.subr.bf16.mxu0 %v4137
  %4576 = vmatpush2.bf16.msra.mxu0 %v4136
  %4577 = vmatprep.subr.bf16.mxu0 %v4131
  %4578 = vmatpush2.bf16.msra.mxu0 %v4130
  %4579 = vmatprep.subr.bf16.mxu0 %v4125
  %4580 = vmatpush2.bf16.msra.mxu0 %v4124
  %4581 = vmatprep.subr.bf16.mxu0 %v4119
  %4582 = vmatpush2.bf16.msra.mxu0 %v4118
  %4583 = vmatprep.subr.bf16.mxu0 %v4113
  %4584 = vmatpush2.bf16.msra.mxu0 %v4112
  %4585 = vmatprep.mubr.bf16.mxu0 %v3163
  %4586 = vmatmul.mubr.bf16.gmra.mxu0 %v3162
  %v4587 = vpop.f32.mrf.mxu0
  %v4588 = vadd.f32 %v4547, %v4587
  %v4589 = vpop.f32.mrf.mxu0
  %v4590 = vadd.f32 %v4549, %v4589
  %v4591 = vpop.f32.mrf.mxu0
  %v4592 = vpop.f32.mrf.mxu0
  %4593 = vdwg.mxu0
  %v4594 = vld [vmem:[%s15] sm:$0x3f]
  %v4595 = vld [vmem:[%s16] sm:$0x3f]
  %v4596 = vsel %vm2226, %v4424, 0.0
  %v4597 = vrot.slane %v4596, 4
  %v4598 = vadd.f32 %v4596, %v4597
  %v4599 = vrot.slane %v4598, 2
  %v4600 = vadd.f32 %v4598, %v4599
  %v4601 = vrot.slane %v4600, 1
  %v4602 = vadd.f32 %v4600, %v4601
  %v4603 = vsel %vm2226, %v4426, 0.0
  %v4604 = vrot.slane %v4603, 4
  %v4605 = vadd.f32 %v4603, %v4604
  %v4606 = vrot.slane %v4605, 2
  %v4607 = vadd.f32 %v4605, %v4606
  %v4608 = vrot.slane %v4607, 1
  %v4609 = vadd.f32 %v4607, %v4608
  %v4610 = vsel %vm2226, %v4506, 0.0
  %v4611 = vrot.slane %v4610, 4
  %v4612 = vadd.f32 %v4610, %v4611
  %v4613 = vrot.slane %v4612, 2
  %v4614 = vadd.f32 %v4612, %v4613
  %v4615 = vrot.slane %v4614, 1
  %v4616 = vadd.f32 %v4614, %v4615
  %v4617 = vsel %vm2226, %v4508, 0.0
  %v4618 = vrot.slane %v4617, 4
  %v4619 = vadd.f32 %v4617, %v4618
  %v4620 = vrot.slane %v4619, 2
  %v4621 = vadd.f32 %v4619, %v4620
  %v4622 = vrot.slane %v4621, 1
  %v4623 = vadd.f32 %v4621, %v4622
  %v4624 = vsel %vm2226, %v4588, 0.0
  %v4625 = vrot.slane %v4624, 4
  %v4626 = vadd.f32 %v4624, %v4625
  %v4627 = vrot.slane %v4626, 2
  %v4628 = vadd.f32 %v4626, %v4627
  %v4629 = vrot.slane %v4628, 1
  %v4630 = vadd.f32 %v4628, %v4629
  %v4631 = vsel %vm2226, %v4590, 0.0
  %v4632 = vrot.slane %v4631, 4
  %v4633 = vadd.f32 %v4631, %v4632
  %v4634 = vrot.slane %v4633, 2
  %v4635 = vadd.f32 %v4633, %v4634
  %v4636 = vrot.slane %v4635, 1
  %v4637 = vadd.f32 %v4635, %v4636
  %v4638 = vmul.f32 %v4602, 0.5
  %v4639 = vmul.f32 %v4609, 0.5
  %v4640 = vmul.f32 %v4616, 0.5
  %v4641 = vmul.f32 %v4623, 0.5
  %v4642 = vmul.f32 %v4630, 0.5
  %v4643 = vmul.f32 %v4637, 0.5
  %v4644 = vsub.f32 %v4424, %v4638
  %v4645 = vsub.f32 %v4426, %v4639
  %v4646 = vsub.f32 %v4506, %v4640
  %v4647 = vsub.f32 %v4508, %v4641
  %v4648 = vsub.f32 %v4588, %v4642
  %v4649 = vsub.f32 %v4590, %v4643
  %v4650 = vmul.f32 %v4644, %v4644
  %v4651 = vmul.f32 %v4645, %v4645
  %v4652 = vmul.f32 %v4646, %v4646
  %v4653 = vmul.f32 %v4647, %v4647
  %v4654 = vmul.f32 %v4648, %v4648
  %v4655 = vmul.f32 %v4649, %v4649
  %v4656 = vsel %vm2226, %v4650, 0.0
  %v4657 = vrot.slane %v4656, 4
  %v4658 = vadd.f32 %v4656, %v4657
  %v4659 = vrot.slane %v4658, 2
  %v4660 = vadd.f32 %v4658, %v4659
  %v4661 = vrot.slane %v4660, 1
  %v4662 = vadd.f32 %v4660, %v4661
  %v4663 = vsel %vm2226, %v4651, 0.0
  %v4664 = vrot.slane %v4663, 4
  %v4665 = vadd.f32 %v4663, %v4664
  %v4666 = vrot.slane %v4665, 2
  %v4667 = vadd.f32 %v4665, %v4666
  %v4668 = vrot.slane %v4667, 1
  %v4669 = vadd.f32 %v4667, %v4668
  %v4670 = vsel %vm2226, %v4652, 0.0
  %v4671 = vrot.slane %v4670, 4
  %v4672 = vadd.f32 %v4670, %v4671
  %v4673 = vrot.slane %v4672, 2
  %v4674 = vadd.f32 %v4672, %v4673
  %v4675 = vrot.slane %v4674, 1
  %v4676 = vadd.f32 %v4674, %v4675
  %v4677 = vsel %vm2226, %v4653, 0.0
  %v4678 = vrot.slane %v4677, 4
  %v4679 = vadd.f32 %v4677, %v4678
  %v4680 = vrot.slane %v4679, 2
  %v4681 = vadd.f32 %v4679, %v4680
  %v4682 = vrot.slane %v4681, 1
  %v4683 = vadd.f32 %v4681, %v4682
  %v4684 = vsel %vm2226, %v4654, 0.0
  %v4685 = vrot.slane %v4684, 4
  %v4686 = vadd.f32 %v4684, %v4685
  %v4687 = vrot.slane %v4686, 2
  %v4688 = vadd.f32 %v4686, %v4687
  %v4689 = vrot.slane %v4688, 1
  %v4690 = vadd.f32 %v4688, %v4689
  %v4691 = vsel %vm2226, %v4655, 0.0
  %v4692 = vrot.slane %v4691, 4
  %v4693 = vadd.f32 %v4691, %v4692
  %v4694 = vrot.slane %v4693, 2
  %v4695 = vadd.f32 %v4693, %v4694
  %v4696 = vrot.slane %v4695, 1
  %v4697 = vadd.f32 %v4695, %v4696
  %v4698 = vmul.f32 %v4662, 0.5
  %v4699 = vmul.f32 %v4669, 0.5
  %v4700 = vmul.f32 %v4676, 0.5
  %v4701 = vmul.f32 %v4683, 0.5
  %v4702 = vmul.f32 %v4690, 0.5
  %v4703 = vmul.f32 %v4697, 0.5
  %v4704 = vadd.f32 %v4698, 1e-05
  %v4705 = vadd.f32 %v4699, 1e-05
  %v4706 = vadd.f32 %v4700, 1e-05
  %v4707 = vadd.f32 %v4701, 1e-05
  %v4708 = vadd.f32 %v4702, 1e-05
  %v4709 = vadd.f32 %v4703, 1e-05
  %v4710 = vrsqrt.pop %v4704
  %v4711 = vrsqrt.pop %v4705
  %v4712 = vrsqrt.pop %v4706
  %v4713 = vrsqrt.pop %v4707
  %v4714 = vrsqrt.pop %v4708
  %v4715 = vrsqrt.pop %v4709
  %v4722 = vcombine.low %v4710, %v4711
  %v4723 = vcombine.low %v4712, %v4713
  %v4724 = vcombine.low %v4714, %v4715
  %v4726 = vunpack.c.l.s4 1966171168
  %v4727 = vunpack.c.0.s8 %v4726
  %v4728 = vlaneseq
  %v4729 = vshrl.u32 %v4728, 7
  %v4730 = vsub.s32 %v4727, %v4729
  %v4731 = vrot.slane %v4722, %v4730
  %v4733 = vunpack.c.l.s4 1966171168
  %v4734 = vunpack.c.0.s8 %v4733
  %v4735 = vlaneseq
  %v4736 = vshrl.u32 %v4735, 7
  %v4737 = vsub.s32 %v4734, %v4736
  %v4738 = vrot.slane %v4723, %v4737
  %v4740 = vunpack.c.l.s4 1966171168
  %v4741 = vunpack.c.0.s8 %v4740
  %v4742 = vlaneseq
  %v4743 = vshrl.u32 %v4742, 7
  %v4744 = vsub.s32 %v4741, %v4743
  %v4745 = vrot.slane %v4724, %v4744
  %v4746 = vcombine.low %v4731, %v4738
  %v4748 = vunpack.c.l.s4 1966171168
  %v4749 = vunpack.c.0.s8 %v4748
  %v4750 = vlaneseq
  %v4751 = vshrl.u32 %v4750, 7
  %v4752 = vsub.s32 %v4749, %v4751
  %v4753 = vrot.slane %v4746, %v4752
  %v4755 = vunpack.c.l.s4 1966171168
  %v4756 = vunpack.c.0.s8 %v4755
  %v4757 = vlaneseq
  %v4758 = vshrl.u32 %v4757, 7
  %v4759 = vsub.s32 %v4756, %v4758
  %v4760 = vrot.slane %v4745, %v4759
  %v4761 = vcombine.low %v4753, %v4760
  %v4763 = vmul.f32 %v4594, %v4761
  %v4765 = vlaneseq
  %v4766 = vshrl.u32 %v4765, 7
  %v4767 = vsub.s32 0, %v4766
  %v4768 = vrot.slane %v4763, %v4767
  %v4769 = vlaneseq
  %v4770 = vshrl.u32 %v4769, 7
  %v4771 = vsub.s32 1, %v4770
  %v4772 = vrot.slane %v4763, %v4771
  %v4773 = vlaneseq
  %v4774 = vshrl.u32 %v4773, 7
  %v4775 = vsub.s32 2, %v4774
  %v4776 = vrot.slane %v4763, %v4775
  %v4777 = vlaneseq
  %v4778 = vshrl.u32 %v4777, 7
  %v4779 = vsub.s32 3, %v4778
  %v4780 = vrot.slane %v4763, %v4779
  %v4781 = vlaneseq
  %v4782 = vshrl.u32 %v4781, 7
  %v4783 = vsub.s32 4, %v4782
  %v4784 = vrot.slane %v4763, %v4783
  %v4785 = vlaneseq
  %v4786 = vshrl.u32 %v4785, 7
  %v4787 = vsub.s32 5, %v4786
  %v4788 = vrot.slane %v4763, %v4787
  %v4795 = vmul.f32 %v4644, %v4768
  %v4796 = vmul.f32 %v4645, %v4772
  %v4797 = vmul.f32 %v4646, %v4776
  %v4798 = vmul.f32 %v4647, %v4780
  %v4799 = vmul.f32 %v4648, %v4784
  %v4800 = vmul.f32 %v4649, %v4788
  %v4802 = vlaneseq
  %v4803 = vshrl.u32 %v4802, 7
  %v4804 = vsub.s32 0, %v4803
  %v4805 = vrot.slane %v4595, %v4804
  %v4806 = vlaneseq
  %v4807 = vshrl.u32 %v4806, 7
  %v4808 = vsub.s32 1, %v4807
  %v4809 = vrot.slane %v4595, %v4808
  %v4810 = vlaneseq
  %v4811 = vshrl.u32 %v4810, 7
  %v4812 = vsub.s32 2, %v4811
  %v4813 = vrot.slane %v4595, %v4812
  %v4814 = vlaneseq
  %v4815 = vshrl.u32 %v4814, 7
  %v4816 = vsub.s32 3, %v4815
  %v4817 = vrot.slane %v4595, %v4816
  %v4818 = vlaneseq
  %v4819 = vshrl.u32 %v4818, 7
  %v4820 = vsub.s32 4, %v4819
  %v4821 = vrot.slane %v4595, %v4820
  %v4822 = vlaneseq
  %v4823 = vshrl.u32 %v4822, 7
  %v4824 = vsub.s32 5, %v4823
  %v4825 = vrot.slane %v4595, %v4824
  %v4832 = vadd.f32 %v4795, %v4805
  %v4833 = vadd.f32 %v4796, %v4809
  %v4834 = vadd.f32 %v4797, %v4813
  %v4835 = vadd.f32 %v4798, %v4817
  %v4836 = vadd.f32 %v4799, %v4821
  %v4837 = vadd.f32 %v4800, %v4825
  %v4838 = vmax.f32 %v4832, 0.0
  %v4839 = vmax.f32 %v4833, 0.0
  %v4840 = vmax.f32 %v4834, 0.0
  %v4841 = vmax.f32 %v4835, 0.0
  %v4842 = vmax.f32 %v4836, 0.0
  %v4843 = vmax.f32 %v4837, 0.0
  %v4844 = vpack.c.bf16 %v4838, %v4838
  %v4845 = vpack.c.bf16 %v4839, %v4839
  %v4846 = vpack.c.bf16 %v4840, %v4840
  %v4847 = vpack.c.bf16 %v4841, %v4841
  %v4848 = vpack.c.bf16 %v4842, %v4842
  %v4849 = vpack.c.bf16 %v4843, %v4843
  %v4850 = vld [vmem:[%s17] sm:$0xff]
  %v4851 = vld [vmem:[%s17 + $0x8] sm:$0xff]
  %v4852 = vld [vmem:[%s17 + $0x10] sm:$0xff]
  %v4853 = vld [vmem:[%s17 + $0x18] sm:$0xff]
  %v4854 = vld [vmem:[%s17 + $0x20] sm:$0xff]
  %v4855 = vld [vmem:[%s17 + $0x28] sm:$0xff]
  %v4856 = vld [vmem:[%s17 + $0x30] sm:$0xff]
  %v4857 = vld [vmem:[%s17 + $0x38] sm:$0xff]
  %v4858 = vld [vmem:[%s17 + $0x40] sm:$0xff]
  %v4859 = vld [vmem:[%s17 + $0x48] sm:$0xff]
  %v4860 = vld [vmem:[%s17 + $0x50] sm:$0xff]
  %v4861 = vld [vmem:[%s17 + $0x58] sm:$0xff]
  %v4862 = vld [vmem:[%s17 + $0x60] sm:$0xff]
  %v4863 = vld [vmem:[%s17 + $0x68] sm:$0xff]
  %v4864 = vld [vmem:[%s17 + $0x70] sm:$0xff]
  %v4865 = vld [vmem:[%s17 + $0x78] sm:$0xff]
  %v4866 = vld [vmem:[%s17 + $0x80] sm:$0xff]
  %v4867 = vld [vmem:[%s17 + $0x88] sm:$0xff]
  %v4868 = vld [vmem:[%s17 + $0x90] sm:$0xff]
  %v4869 = vld [vmem:[%s17 + $0x98] sm:$0xff]
  %v4870 = vld [vmem:[%s17 + $0xa0] sm:$0xff]
  %v4871 = vld [vmem:[%s17 + $0xa8] sm:$0xff]
  %v4872 = vld [vmem:[%s17 + $0xb0] sm:$0xff]
  %v4873 = vld [vmem:[%s17 + $0xb8] sm:$0xff]
  %v4874 = vld [vmem:[%s17 + $0xc0] sm:$0xff]
  %v4875 = vld [vmem:[%s17 + $0xc8] sm:$0xff]
  %v4876 = vld [vmem:[%s17 + $0xd0] sm:$0xff]
  %v4877 = vld [vmem:[%s17 + $0xd8] sm:$0xff]
  %v4878 = vld [vmem:[%s17 + $0xe0] sm:$0xff]
  %v4879 = vld [vmem:[%s17 + $0xe8] sm:$0xff]
  %v4880 = vld [vmem:[%s17 + $0xf0] sm:$0xff]
  %v4881 = vld [vmem:[%s17 + $0xf8] sm:$0xff]
  %v4882 = vld [vmem:[%s18] sm:$0x3]
  %v4884 = vlaneseq
  %v4885 = vshrl.u32 %v4884, 7
  %v4886 = vsub.s32 0, %v4885
  %v4887 = vrot.slane %v4882, %v4886
  %v4888 = vlaneseq
  %v4889 = vshrl.u32 %v4888, 7
  %v4890 = vsub.s32 1, %v4889
  %v4891 = vrot.slane %v4882, %v4890
  %v4926 = vunpack.c.l.b16 %v4850
  %v4927 = vunpack.c.h.b16 %v4850
  %v4928 = vunpack.c.l.b16 %v4851
  %v4929 = vunpack.c.h.b16 %v4851
  %v4930 = vunpack.c.l.b16 %v4852
  %v4931 = vunpack.c.h.b16 %v4852
  %v4932 = vunpack.c.l.b16 %v4853
  %v4933 = vunpack.c.h.b16 %v4853
  %v4934 = vunpack.c.l.b16 %v4854
  %v4935 = vunpack.c.h.b16 %v4854
  %v4936 = vunpack.c.l.b16 %v4855
  %v4937 = vunpack.c.h.b16 %v4855
  %v4938 = vunpack.c.l.b16 %v4856
  %v4939 = vunpack.c.h.b16 %v4856
  %v4940 = vunpack.c.l.b16 %v4857
  %v4941 = vunpack.c.h.b16 %v4857
  %v4942 = vunpack.c.l.b16 %v4858
  %v4943 = vunpack.c.h.b16 %v4858
  %v4944 = vunpack.c.l.b16 %v4859
  %v4945 = vunpack.c.h.b16 %v4859
  %v4946 = vunpack.c.l.b16 %v4860
  %v4947 = vunpack.c.h.b16 %v4860
  %v4948 = vunpack.c.l.b16 %v4861
  %v4949 = vunpack.c.h.b16 %v4861
  %v4950 = vunpack.c.l.b16 %v4862
  %v4951 = vunpack.c.h.b16 %v4862
  %v4952 = vunpack.c.l.b16 %v4863
  %v4953 = vunpack.c.h.b16 %v4863
  %v4954 = vunpack.c.l.b16 %v4864
  %v4955 = vunpack.c.h.b16 %v4864
  %v4956 = vunpack.c.l.b16 %v4865
  %v4957 = vunpack.c.h.b16 %v4865
  %v4958 = vunpack.c.l.b16 %v4866
  %v4959 = vunpack.c.h.b16 %v4866
  %v4960 = vunpack.c.l.b16 %v4867
  %v4961 = vunpack.c.h.b16 %v4867
  %v4962 = vunpack.c.l.b16 %v4868
  %v4963 = vunpack.c.h.b16 %v4868
  %v4964 = vunpack.c.l.b16 %v4869
  %v4965 = vunpack.c.h.b16 %v4869
  %v4966 = vunpack.c.l.b16 %v4870
  %v4967 = vunpack.c.h.b16 %v4870
  %v4968 = vunpack.c.l.b16 %v4871
  %v4969 = vunpack.c.h.b16 %v4871
  %v4970 = vunpack.c.l.b16 %v4872
  %v4971 = vunpack.c.h.b16 %v4872
  %v4972 = vunpack.c.l.b16 %v4873
  %v4973 = vunpack.c.h.b16 %v4873
  %v4974 = vunpack.c.l.b16 %v4874
  %v4975 = vunpack.c.h.b16 %v4874
  %v4976 = vunpack.c.l.b16 %v4875
  %v4977 = vunpack.c.h.b16 %v4875
  %v4978 = vunpack.c.l.b16 %v4876
  %v4979 = vunpack.c.h.b16 %v4876
  %v4980 = vunpack.c.l.b16 %v4877
  %v4981 = vunpack.c.h.b16 %v4877
  %v4982 = vunpack.c.l.b16 %v4878
  %v4983 = vunpack.c.h.b16 %v4878
  %v4984 = vunpack.c.l.b16 %v4879
  %v4985 = vunpack.c.h.b16 %v4879
  %v4986 = vunpack.c.l.b16 %v4880
  %v4987 = vunpack.c.h.b16 %v4880
  %v4988 = vunpack.c.l.b16 %v4881
  %v4989 = vunpack.c.h.b16 %v4881
  %v4990 = vpack.c.b16 %v4928, %v4926
  %v4991 = vpack.c.b16 %v4929, %v4927
  %v4992 = vpack.c.b16 %v4932, %v4930
  %v4993 = vpack.c.b16 %v4933, %v4931
  %v4994 = vpack.c.b16 %v4936, %v4934
  %v4995 = vpack.c.b16 %v4937, %v4935
  %v4996 = vpack.c.b16 %v4940, %v4938
  %v4997 = vpack.c.b16 %v4941, %v4939
  %v4998 = vpack.c.b16 %v4944, %v4942
  %v4999 = vpack.c.b16 %v4945, %v4943
  %v5000 = vpack.c.b16 %v4948, %v4946
  %v5001 = vpack.c.b16 %v4949, %v4947
  %v5002 = vpack.c.b16 %v4952, %v4950
  %v5003 = vpack.c.b16 %v4953, %v4951
  %v5004 = vpack.c.b16 %v4956, %v4954
  %v5005 = vpack.c.b16 %v4957, %v4955
  %v5006 = vpack.c.b16 %v4960, %v4958
  %v5007 = vpack.c.b16 %v4961, %v4959
  %v5008 = vpack.c.b16 %v4964, %v4962
  %v5009 = vpack.c.b16 %v4965, %v4963
  %v5010 = vpack.c.b16 %v4968, %v4966
  %v5011 = vpack.c.b16 %v4969, %v4967
  %v5012 = vpack.c.b16 %v4972, %v4970
  %v5013 = vpack.c.b16 %v4973, %v4971
  %v5014 = vpack.c.b16 %v4976, %v4974
  %v5015 = vpack.c.b16 %v4977, %v4975
  %v5016 = vpack.c.b16 %v4980, %v4978
  %v5017 = vpack.c.b16 %v4981, %v4979
  %v5018 = vpack.c.b16 %v4984, %v4982
  %v5019 = vpack.c.b16 %v4985, %v4983
  %v5020 = vpack.c.b16 %v4988, %v4986
  %v5021 = vpack.c.b16 %v4989, %v4987
  %5054 = vmatprep.subr.bf16.mxu0 %v5005
  %5055 = vmatpush1.bf16.msra.mxu0 %v5004
  %5056 = vmatprep.subr.bf16.mxu0 %v5003
  %5057 = vmatpush1.bf16.msra.mxu0 %v5002
  %5058 = vmatprep.subr.bf16.mxu0 %v5001
  %5059 = vmatpush1.bf16.msra.mxu0 %v5000
  %5060 = vmatprep.subr.bf16.mxu0 %v4999
  %5061 = vmatpush1.bf16.msra.mxu0 %v4998
  %5062 = vmatprep.subr.bf16.mxu0 %v4997
  %5063 = vmatpush1.bf16.msra.mxu0 %v4996
  %5064 = vmatprep.subr.bf16.mxu0 %v4995
  %5065 = vmatpush1.bf16.msra.mxu0 %v4994
  %5066 = vmatprep.subr.bf16.mxu0 %v4993
  %5067 = vmatpush1.bf16.msra.mxu0 %v4992
  %5068 = vmatprep.subr.bf16.mxu0 %v4991
  %5069 = vmatpush1.bf16.msra.mxu0 %v4990
  %5070 = vmatprep.subr.bf16.mxu0 %v5021
  %5071 = vmatpush2.bf16.msra.mxu0 %v5020
  %5072 = vmatprep.subr.bf16.mxu0 %v5019
  %5073 = vmatpush2.bf16.msra.mxu0 %v5018
  %5074 = vmatprep.subr.bf16.mxu0 %v5017
  %5075 = vmatpush2.bf16.msra.mxu0 %v5016
  %5076 = vmatprep.subr.bf16.mxu0 %v5015
  %5077 = vmatpush2.bf16.msra.mxu0 %v5014
  %5078 = vmatprep.subr.bf16.mxu0 %v5013
  %5079 = vmatpush2.bf16.msra.mxu0 %v5012
  %5080 = vmatprep.subr.bf16.mxu0 %v5011
  %5081 = vmatpush2.bf16.msra.mxu0 %v5010
  %5082 = vmatprep.subr.bf16.mxu0 %v5009
  %5083 = vmatpush2.bf16.msra.mxu0 %v5008
  %5084 = vmatprep.subr.bf16.mxu0 %v5007
  %5085 = vmatpush2.bf16.msra.mxu0 %v5006
  %5086 = vmatprep.mubr.bf16.mxu0 %v4845
  %5087 = vmatmul.mubr.bf16.gmra.mxu0 %v4844
  %v5088 = vpop.f32.mrf.mxu0
  %v5089 = vadd.f32 %v4887, %v5088
  %v5090 = vpop.f32.mrf.mxu0
  %v5091 = vadd.f32 %v4891, %v5090
  %v5092 = vpop.f32.mrf.mxu0
  %v5093 = vpop.f32.mrf.mxu0
  %5094 = vdwg.mxu0
  %v5095 = vld [vmem:[%s19] sm:$0x3]
  %v5096 = vld [vmem:[%s20] sm:$0x3]
  %v5097 = vsel %vm2226, %v5089, 0.0
  %v5098 = vrot.slane %v5097, 4
  %v5099 = vadd.f32 %v5097, %v5098
  %v5100 = vrot.slane %v5099, 2
  %v5101 = vadd.f32 %v5099, %v5100
  %v5102 = vrot.slane %v5101, 1
  %v5103 = vadd.f32 %v5101, %v5102
  %v5104 = vsel %vm2226, %v5091, 0.0
  %v5105 = vrot.slane %v5104, 4
  %v5106 = vadd.f32 %v5104, %v5105
  %v5107 = vrot.slane %v5106, 2
  %v5108 = vadd.f32 %v5106, %v5107
  %v5109 = vrot.slane %v5108, 1
  %v5110 = vadd.f32 %v5108, %v5109
  %v5111 = vmul.f32 %v5103, 0.5
  %v5112 = vmul.f32 %v5110, 0.5
  %v5113 = vsub.f32 %v5089, %v5111
  %v5114 = vsub.f32 %v5091, %v5112
  %v5115 = vmul.f32 %v5113, %v5113
  %v5116 = vmul.f32 %v5114, %v5114
  %v5117 = vsel %vm2226, %v5115, 0.0
  %v5118 = vrot.slane %v5117, 4
  %v5119 = vadd.f32 %v5117, %v5118
  %v5120 = vrot.slane %v5119, 2
  %v5121 = vadd.f32 %v5119, %v5120
  %v5122 = vrot.slane %v5121, 1
  %v5123 = vadd.f32 %v5121, %v5122
  %v5124 = vsel %vm2226, %v5116, 0.0
  %v5125 = vrot.slane %v5124, 4
  %v5126 = vadd.f32 %v5124, %v5125
  %v5127 = vrot.slane %v5126, 2
  %v5128 = vadd.f32 %v5126, %v5127
  %v5129 = vrot.slane %v5128, 1
  %v5130 = vadd.f32 %v5128, %v5129
  %v5131 = vmul.f32 %v5123, 0.5
  %v5132 = vmul.f32 %v5130, 0.5
  %v5133 = vadd.f32 %v5131, 1e-05
  %v5134 = vadd.f32 %v5132, 1e-05
  %v5135 = vrsqrt.pop %v5133
  %v5136 = vrsqrt.pop %v5134
  %v5139 = vcombine.low %v5135, %v5136
  %v5141 = vunpack.c.l.s4 1966171168
  %v5142 = vunpack.c.0.s8 %v5141
  %v5143 = vlaneseq
  %v5144 = vshrl.u32 %v5143, 7
  %v5145 = vsub.s32 %v5142, %v5144
  %v5146 = vrot.slane %v5139, %v5145
  %v5148 = vunpack.c.l.s4 1966171168
  %v5149 = vunpack.c.0.s8 %v5148
  %v5150 = vlaneseq
  %v5151 = vshrl.u32 %v5150, 7
  %v5152 = vsub.s32 %v5149, %v5151
  %v5153 = vrot.slane %v5146, %v5152
  %v5155 = vmul.f32 %v5095, %v5153
  %v5157 = vlaneseq
  %v5158 = vshrl.u32 %v5157, 7
  %v5159 = vsub.s32 0, %v5158
  %v5160 = vrot.slane %v5155, %v5159
  %v5161 = vlaneseq
  %v5162 = vshrl.u32 %v5161, 7
  %v5163 = vsub.s32 1, %v5162
  %v5164 = vrot.slane %v5155, %v5163
  %v5167 = vmul.f32 %v5113, %v5160
  %v5168 = vmul.f32 %v5114, %v5164
  %v5170 = vlaneseq
  %v5171 = vshrl.u32 %v5170, 7
  %v5172 = vsub.s32 0, %v5171
  %v5173 = vrot.slane %v5096, %v5172
  %v5174 = vlaneseq
  %v5175 = vshrl.u32 %v5174, 7
  %v5176 = vsub.s32 1, %v5175
  %v5177 = vrot.slane %v5096, %v5176
  %v5180 = vadd.f32 %v5167, %v5173
  %v5181 = vadd.f32 %v5168, %v5177
  %v5182 = vmax.f32 %v5180, 0.0
  %v5183 = vmax.f32 %v5181, 0.0
  %v5184 = vpack.c.bf16 %v5182, %v5182
  %v5185 = vpack.c.bf16 %v5183, %v5183
  %v5186 = vld [vmem:[%s21] sm:$0xf]
  %v5187 = vld [vmem:[%s21 + $0x4] sm:$0xf]
  %v5188 = vld [vmem:[%s21 + $0x8] sm:$0xf]
  %v5189 = vld [vmem:[%s21 + $0xc] sm:$0xf]
  %v5190 = vld [vmem:[%s21 + $0x10] sm:$0xf]
  %v5191 = vld [vmem:[%s21 + $0x14] sm:$0xf]
  %v5192 = vld [vmem:[%s21 + $0x18] sm:$0xf]
  %v5193 = vld [vmem:[%s21 + $0x1c] sm:$0xf]
  %v5194 = vld [vmem:[%s21 + $0x20] sm:$0xf]
  %v5195 = vld [vmem:[%s21 + $0x24] sm:$0xf]
  %v5196 = vld [vmem:[%s21 + $0x28] sm:$0xf]
  %v5197 = vld [vmem:[%s21 + $0x2c] sm:$0xf]
  %v5198 = vld [vmem:[%s21 + $0x30] sm:$0xf]
  %v5199 = vld [vmem:[%s21 + $0x34] sm:$0xf]
  %v5200 = vld [vmem:[%s21 + $0x38] sm:$0xf]
  %v5201 = vld [vmem:[%s21 + $0x3c] sm:$0xf]
  %v5202 = vld [vmem:[%s21 + $0x40] sm:$0xf]
  %v5203 = vld [vmem:[%s21 + $0x44] sm:$0xf]
  %v5204 = vld [vmem:[%s21 + $0x48] sm:$0xf]
  %v5205 = vld [vmem:[%s21 + $0x4c] sm:$0xf]
  %v5206 = vld [vmem:[%s21 + $0x50] sm:$0xf]
  %v5207 = vld [vmem:[%s21 + $0x54] sm:$0xf]
  %v5208 = vld [vmem:[%s21 + $0x58] sm:$0xf]
  %v5209 = vld [vmem:[%s21 + $0x5c] sm:$0xf]
  %v5210 = vld [vmem:[%s21 + $0x60] sm:$0xf]
  %v5211 = vld [vmem:[%s21 + $0x64] sm:$0xf]
  %v5212 = vld [vmem:[%s21 + $0x68] sm:$0xf]
  %v5213 = vld [vmem:[%s21 + $0x6c] sm:$0xf]
  %v5214 = vld [vmem:[%s21 + $0x70] sm:$0xf]
  %v5215 = vld [vmem:[%s21 + $0x74] sm:$0xf]
  %v5216 = vld [vmem:[%s21 + $0x78] sm:$0xf]
  %v5217 = vld [vmem:[%s21 + $0x7c] sm:$0xf]
  %v5218 = vld [vmem:[%s22] sm:$0x1]
  %v5220 = vlaneseq
  %v5221 = vshrl.u32 %v5220, 7
  %v5222 = vsub.s32 0, %v5221
  %v5223 = vrot.slane %v5218, %v5222
  %v5257 = vunpack.c.l.b16 %v5186
  %v5258 = vunpack.c.l.b16 %v5187
  %v5259 = vunpack.c.l.b16 %v5188
  %v5260 = vunpack.c.l.b16 %v5189
  %v5261 = vunpack.c.l.b16 %v5190
  %v5262 = vunpack.c.l.b16 %v5191
  %v5263 = vunpack.c.l.b16 %v5192
  %v5264 = vunpack.c.l.b16 %v5193
  %v5265 = vunpack.c.l.b16 %v5194
  %v5266 = vunpack.c.l.b16 %v5195
  %v5267 = vunpack.c.l.b16 %v5196
  %v5268 = vunpack.c.l.b16 %v5197
  %v5269 = vunpack.c.l.b16 %v5198
  %v5270 = vunpack.c.l.b16 %v5199
  %v5271 = vunpack.c.l.b16 %v5200
  %v5272 = vunpack.c.l.b16 %v5201
  %v5273 = vunpack.c.l.b16 %v5202
  %v5274 = vunpack.c.l.b16 %v5203
  %v5275 = vunpack.c.l.b16 %v5204
  %v5276 = vunpack.c.l.b16 %v5205
  %v5277 = vunpack.c.l.b16 %v5206
  %v5278 = vunpack.c.l.b16 %v5207
  %v5279 = vunpack.c.l.b16 %v5208
  %v5280 = vunpack.c.l.b16 %v5209
  %v5281 = vunpack.c.l.b16 %v5210
  %v5282 = vunpack.c.l.b16 %v5211
  %v5283 = vunpack.c.l.b16 %v5212
  %v5284 = vunpack.c.l.b16 %v5213
  %v5285 = vunpack.c.l.b16 %v5214
  %v5286 = vunpack.c.l.b16 %v5215
  %v5287 = vunpack.c.l.b16 %v5216
  %v5288 = vunpack.c.l.b16 %v5217
  %v5289 = vpack.c.b16 %v5258, %v5257
  %v5290 = vpack.c.b16 %v5260, %v5259
  %v5291 = vpack.c.b16 %v5262, %v5261
  %v5292 = vpack.c.b16 %v5264, %v5263
  %v5293 = vpack.c.b16 %v5266, %v5265
  %v5294 = vpack.c.b16 %v5268, %v5267
  %v5295 = vpack.c.b16 %v5270, %v5269
  %v5296 = vpack.c.b16 %v5272, %v5271
  %v5297 = vpack.c.b16 %v5274, %v5273
  %v5298 = vpack.c.b16 %v5276, %v5275
  %v5299 = vpack.c.b16 %v5278, %v5277
  %v5300 = vpack.c.b16 %v5280, %v5279
  %v5301 = vpack.c.b16 %v5282, %v5281
  %v5302 = vpack.c.b16 %v5284, %v5283
  %v5303 = vpack.c.b16 %v5286, %v5285
  %v5304 = vpack.c.b16 %v5288, %v5287
  %5321 = vmatprep.subr.bf16.mxu0 0
  %5322 = vmatpush1.bf16.msra.mxu0 %v5296
  %5323 = vmatprep.subr.bf16.mxu0 0
  %5324 = vmatpush1.bf16.msra.mxu0 %v5295
  %5325 = vmatprep.subr.bf16.mxu0 0
  %5326 = vmatpush1.bf16.msra.mxu0 %v5294
  %5327 = vmatprep.subr.bf16.mxu0 0
  %5328 = vmatpush1.bf16.msra.mxu0 %v5293
  %5329 = vmatprep.subr.bf16.mxu0 0
  %5330 = vmatpush1.bf16.msra.mxu0 %v5292
  %5331 = vmatprep.subr.bf16.mxu0 0
  %5332 = vmatpush1.bf16.msra.mxu0 %v5291
  %5333 = vmatprep.subr.bf16.mxu0 0
  %5334 = vmatpush1.bf16.msra.mxu0 %v5290
  %5335 = vmatprep.subr.bf16.mxu0 0
  %5336 = vmatpush1.bf16.msra.mxu0 %v5289
  %5337 = vmatprep.subr.bf16.mxu0 0
  %5338 = vmatpush2.bf16.msra.mxu0 %v5304
  %5339 = vmatprep.subr.bf16.mxu0 0
  %5340 = vmatpush2.bf16.msra.mxu0 %v5303
  %5341 = vmatprep.subr.bf16.mxu0 0
  %5342 = vmatpush2.bf16.msra.mxu0 %v5302
  %5343 = vmatprep.subr.bf16.mxu0 0
  %5344 = vmatpush2.bf16.msra.mxu0 %v5301
  %5345 = vmatprep.subr.bf16.mxu0 0
  %5346 = vmatpush2.bf16.msra.mxu0 %v5300
  %5347 = vmatprep.subr.bf16.mxu0 0
  %5348 = vmatpush2.bf16.msra.mxu0 %v5299
  %5349 = vmatprep.subr.bf16.mxu0 0
  %5350 = vmatpush2.bf16.msra.mxu0 %v5298
  %5351 = vmatprep.subr.bf16.mxu0 0
  %5352 = vmatpush2.bf16.msra.mxu0 %v5297
  %5353 = vmatprep.mubr.bf16.mxu0 %v5185
  %5354 = vmatmul.mubr.bf16.gmra.mxu0 %v5184
  %v5355 = vpop.f32.mrf.mxu0
  %v5356 = vadd.f32 %v5223, %v5355
  %v5357 = vpop.f32.mrf.mxu0
  %v5358 = vpop.f32.mrf.mxu0
  %v5359 = vpop.f32.mrf.mxu0
  %5360 = vdwg.mxu0
  %vm5361 = vcmask 25600
  %5362 = vst.msk [vmem:[%s23] sm:$0x3] %vm5361, %v5356
  %s5363 = scalar_lea.vmem %s17, 256
  %v5364 = vld [vmem:[%s5363] sm:$0xff]
  %v5365 = vld [vmem:[%s5363 + $0x8] sm:$0xff]
  %v5366 = vld [vmem:[%s5363 + $0x10] sm:$0xff]
  %v5367 = vld [vmem:[%s5363 + $0x18] sm:$0xff]
  %v5368 = vld [vmem:[%s5363 + $0x20] sm:$0xff]
  %v5369 = vld [vmem:[%s5363 + $0x28] sm:$0xff]
  %v5370 = vld [vmem:[%s5363 + $0x30] sm:$0xff]
  %v5371 = vld [vmem:[%s5363 + $0x38] sm:$0xff]
  %v5372 = vld [vmem:[%s5363 + $0x40] sm:$0xff]
  %v5373 = vld [vmem:[%s5363 + $0x48] sm:$0xff]
  %v5374 = vld [vmem:[%s5363 + $0x50] sm:$0xff]
  %v5375 = vld [vmem:[%s5363 + $0x58] sm:$0xff]
  %v5376 = vld [vmem:[%s5363 + $0x60] sm:$0xff]
  %v5377 = vld [vmem:[%s5363 + $0x68] sm:$0xff]
  %v5378 = vld [vmem:[%s5363 + $0x70] sm:$0xff]
  %v5379 = vld [vmem:[%s5363 + $0x78] sm:$0xff]
  %v5380 = vld [vmem:[%s5363 + $0x80] sm:$0xff]
  %v5381 = vld [vmem:[%s5363 + $0x88] sm:$0xff]
  %v5382 = vld [vmem:[%s5363 + $0x90] sm:$0xff]
  %v5383 = vld [vmem:[%s5363 + $0x98] sm:$0xff]
  %v5384 = vld [vmem:[%s5363 + $0xa0] sm:$0xff]
  %v5385 = vld [vmem:[%s5363 + $0xa8] sm:$0xff]
  %v5386 = vld [vmem:[%s5363 + $0xb0] sm:$0xff]
  %v5387 = vld [vmem:[%s5363 + $0xb8] sm:$0xff]
  %v5388 = vld [vmem:[%s5363 + $0xc0] sm:$0xff]
  %v5389 = vld [vmem:[%s5363 + $0xc8] sm:$0xff]
  %v5390 = vld [vmem:[%s5363 + $0xd0] sm:$0xff]
  %v5391 = vld [vmem:[%s5363 + $0xd8] sm:$0xff]
  %v5392 = vld [vmem:[%s5363 + $0xe0] sm:$0xff]
  %v5393 = vld [vmem:[%s5363 + $0xe8] sm:$0xff]
  %v5394 = vld [vmem:[%s5363 + $0xf0] sm:$0xff]
  %v5395 = vld [vmem:[%s5363 + $0xf8] sm:$0xff]
  %s5396 = scalar_lea.vmem %s18, 2
  %v5397 = vld [vmem:[%s5396] sm:$0x3]
  %v5399 = vlaneseq
  %v5400 = vshrl.u32 %v5399, 7
  %v5401 = vsub.s32 0, %v5400
  %v5402 = vrot.slane %v5397, %v5401
  %v5403 = vlaneseq
  %v5404 = vshrl.u32 %v5403, 7
  %v5405 = vsub.s32 1, %v5404
  %v5406 = vrot.slane %v5397, %v5405
  %v5441 = vunpack.c.l.b16 %v5364
  %v5442 = vunpack.c.h.b16 %v5364
  %v5443 = vunpack.c.l.b16 %v5365
  %v5444 = vunpack.c.h.b16 %v5365
  %v5445 = vunpack.c.l.b16 %v5366
  %v5446 = vunpack.c.h.b16 %v5366
  %v5447 = vunpack.c.l.b16 %v5367
  %v5448 = vunpack.c.h.b16 %v5367
  %v5449 = vunpack.c.l.b16 %v5368
  %v5450 = vunpack.c.h.b16 %v5368
  %v5451 = vunpack.c.l.b16 %v5369
  %v5452 = vunpack.c.h.b16 %v5369
  %v5453 = vunpack.c.l.b16 %v5370
  %v5454 = vunpack.c.h.b16 %v5370
  %v5455 = vunpack.c.l.b16 %v5371
  %v5456 = vunpack.c.h.b16 %v5371
  %v5457 = vunpack.c.l.b16 %v5372
  %v5458 = vunpack.c.h.b16 %v5372
  %v5459 = vunpack.c.l.b16 %v5373
  %v5460 = vunpack.c.h.b16 %v5373
  %v5461 = vunpack.c.l.b16 %v5374
  %v5462 = vunpack.c.h.b16 %v5374
  %v5463 = vunpack.c.l.b16 %v5375
  %v5464 = vunpack.c.h.b16 %v5375
  %v5465 = vunpack.c.l.b16 %v5376
  %v5466 = vunpack.c.h.b16 %v5376
  %v5467 = vunpack.c.l.b16 %v5377
  %v5468 = vunpack.c.h.b16 %v5377
  %v5469 = vunpack.c.l.b16 %v5378
  %v5470 = vunpack.c.h.b16 %v5378
  %v5471 = vunpack.c.l.b16 %v5379
  %v5472 = vunpack.c.h.b16 %v5379
  %v5473 = vunpack.c.l.b16 %v5380
  %v5474 = vunpack.c.h.b16 %v5380
  %v5475 = vunpack.c.l.b16 %v5381
  %v5476 = vunpack.c.h.b16 %v5381
  %v5477 = vunpack.c.l.b16 %v5382
  %v5478 = vunpack.c.h.b16 %v5382
  %v5479 = vunpack.c.l.b16 %v5383
  %v5480 = vunpack.c.h.b16 %v5383
  %v5481 = vunpack.c.l.b16 %v5384
  %v5482 = vunpack.c.h.b16 %v5384
  %v5483 = vunpack.c.l.b16 %v5385
  %v5484 = vunpack.c.h.b16 %v5385
  %v5485 = vunpack.c.l.b16 %v5386
  %v5486 = vunpack.c.h.b16 %v5386
  %v5487 = vunpack.c.l.b16 %v5387
  %v5488 = vunpack.c.h.b16 %v5387
  %v5489 = vunpack.c.l.b16 %v5388
  %v5490 = vunpack.c.h.b16 %v5388
  %v5491 = vunpack.c.l.b16 %v5389
  %v5492 = vunpack.c.h.b16 %v5389
  %v5493 = vunpack.c.l.b16 %v5390
  %v5494 = vunpack.c.h.b16 %v5390
  %v5495 = vunpack.c.l.b16 %v5391
  %v5496 = vunpack.c.h.b16 %v5391
  %v5497 = vunpack.c.l.b16 %v5392
  %v5498 = vunpack.c.h.b16 %v5392
  %v5499 = vunpack.c.l.b16 %v5393
  %v5500 = vunpack.c.h.b16 %v5393
  %v5501 = vunpack.c.l.b16 %v5394
  %v5502 = vunpack.c.h.b16 %v5394
  %v5503 = vunpack.c.l.b16 %v5395
  %v5504 = vunpack.c.h.b16 %v5395
  %v5505 = vpack.c.b16 %v5443, %v5441
  %v5506 = vpack.c.b16 %v5444, %v5442
  %v5507 = vpack.c.b16 %v5447, %v5445
  %v5508 = vpack.c.b16 %v5448, %v5446
  %v5509 = vpack.c.b16 %v5451, %v5449
  %v5510 = vpack.c.b16 %v5452, %v5450
  %v5511 = vpack.c.b16 %v5455, %v5453
  %v5512 = vpack.c.b16 %v5456, %v5454
  %v5513 = vpack.c.b16 %v5459, %v5457
  %v5514 = vpack.c.b16 %v5460, %v5458
  %v5515 = vpack.c.b16 %v5463, %v5461
  %v5516 = vpack.c.b16 %v5464, %v5462
  %v5517 = vpack.c.b16 %v5467, %v5465
  %v5518 = vpack.c.b16 %v5468, %v5466
  %v5519 = vpack.c.b16 %v5471, %v5469
  %v5520 = vpack.c.b16 %v5472, %v5470
  %v5521 = vpack.c.b16 %v5475, %v5473
  %v5522 = vpack.c.b16 %v5476, %v5474
  %v5523 = vpack.c.b16 %v5479, %v5477
  %v5524 = vpack.c.b16 %v5480, %v5478
  %v5525 = vpack.c.b16 %v5483, %v5481
  %v5526 = vpack.c.b16 %v5484, %v5482
  %v5527 = vpack.c.b16 %v5487, %v5485
  %v5528 = vpack.c.b16 %v5488, %v5486
  %v5529 = vpack.c.b16 %v5491, %v5489
  %v5530 = vpack.c.b16 %v5492, %v5490
  %v5531 = vpack.c.b16 %v5495, %v5493
  %v5532 = vpack.c.b16 %v5496, %v5494
  %v5533 = vpack.c.b16 %v5499, %v5497
  %v5534 = vpack.c.b16 %v5500, %v5498
  %v5535 = vpack.c.b16 %v5503, %v5501
  %v5536 = vpack.c.b16 %v5504, %v5502
  %5569 = vmatprep.subr.bf16.mxu0 %v5520
  %5570 = vmatpush1.bf16.msra.mxu0 %v5519
  %5571 = vmatprep.subr.bf16.mxu0 %v5518
  %5572 = vmatpush1.bf16.msra.mxu0 %v5517
  %5573 = vmatprep.subr.bf16.mxu0 %v5516
  %5574 = vmatpush1.bf16.msra.mxu0 %v5515
  %5575 = vmatprep.subr.bf16.mxu0 %v5514
  %5576 = vmatpush1.bf16.msra.mxu0 %v5513
  %5577 = vmatprep.subr.bf16.mxu0 %v5512
  %5578 = vmatpush1.bf16.msra.mxu0 %v5511
  %5579 = vmatprep.subr.bf16.mxu0 %v5510
  %5580 = vmatpush1.bf16.msra.mxu0 %v5509
  %5581 = vmatprep.subr.bf16.mxu0 %v5508
  %5582 = vmatpush1.bf16.msra.mxu0 %v5507
  %5583 = vmatprep.subr.bf16.mxu0 %v5506
  %5584 = vmatpush1.bf16.msra.mxu0 %v5505
  %5585 = vmatprep.subr.bf16.mxu0 %v5536
  %5586 = vmatpush2.bf16.msra.mxu0 %v5535
  %5587 = vmatprep.subr.bf16.mxu0 %v5534
  %5588 = vmatpush2.bf16.msra.mxu0 %v5533
  %5589 = vmatprep.subr.bf16.mxu0 %v5532
  %5590 = vmatpush2.bf16.msra.mxu0 %v5531
  %5591 = vmatprep.subr.bf16.mxu0 %v5530
  %5592 = vmatpush2.bf16.msra.mxu0 %v5529
  %5593 = vmatprep.subr.bf16.mxu0 %v5528
  %5594 = vmatpush2.bf16.msra.mxu0 %v5527
  %5595 = vmatprep.subr.bf16.mxu0 %v5526
  %5596 = vmatpush2.bf16.msra.mxu0 %v5525
  %5597 = vmatprep.subr.bf16.mxu0 %v5524
  %5598 = vmatpush2.bf16.msra.mxu0 %v5523
  %5599 = vmatprep.subr.bf16.mxu0 %v5522
  %5600 = vmatpush2.bf16.msra.mxu0 %v5521
  %5601 = vmatprep.mubr.bf16.mxu0 %v4847
  %5602 = vmatmul.mubr.bf16.gmra.mxu0 %v4846
  %v5603 = vpop.f32.mrf.mxu0
  %v5604 = vadd.f32 %v5402, %v5603
  %v5605 = vpop.f32.mrf.mxu0
  %v5606 = vadd.f32 %v5406, %v5605
  %v5607 = vpop.f32.mrf.mxu0
  %v5608 = vpop.f32.mrf.mxu0
  %5609 = vdwg.mxu0
  %s5610 = scalar_lea.vmem %s19, 2
  %v5611 = vld [vmem:[%s5610] sm:$0x3]
  %s5612 = scalar_lea.vmem %s20, 2
  %v5613 = vld [vmem:[%s5612] sm:$0x3]
  %v5614 = vsel %vm2226, %v5604, 0.0
  %v5615 = vrot.slane %v5614, 4
  %v5616 = vadd.f32 %v5614, %v5615
  %v5617 = vrot.slane %v5616, 2
  %v5618 = vadd.f32 %v5616, %v5617
  %v5619 = vrot.slane %v5618, 1
  %v5620 = vadd.f32 %v5618, %v5619
  %v5621 = vsel %vm2226, %v5606, 0.0
  %v5622 = vrot.slane %v5621, 4
  %v5623 = vadd.f32 %v5621, %v5622
  %v5624 = vrot.slane %v5623, 2
  %v5625 = vadd.f32 %v5623, %v5624
  %v5626 = vrot.slane %v5625, 1
  %v5627 = vadd.f32 %v5625, %v5626
  %v5628 = vmul.f32 %v5620, 0.5
  %v5629 = vmul.f32 %v5627, 0.5
  %v5630 = vsub.f32 %v5604, %v5628
  %v5631 = vsub.f32 %v5606, %v5629
  %v5632 = vmul.f32 %v5630, %v5630
  %v5633 = vmul.f32 %v5631, %v5631
  %v5634 = vsel %vm2226, %v5632, 0.0
  %v5635 = vrot.slane %v5634, 4
  %v5636 = vadd.f32 %v5634, %v5635
  %v5637 = vrot.slane %v5636, 2
  %v5638 = vadd.f32 %v5636, %v5637
  %v5639 = vrot.slane %v5638, 1
  %v5640 = vadd.f32 %v5638, %v5639
  %v5641 = vsel %vm2226, %v5633, 0.0
  %v5642 = vrot.slane %v5641, 4
  %v5643 = vadd.f32 %v5641, %v5642
  %v5644 = vrot.slane %v5643, 2
  %v5645 = vadd.f32 %v5643, %v5644
  %v5646 = vrot.slane %v5645, 1
  %v5647 = vadd.f32 %v5645, %v5646
  %v5648 = vmul.f32 %v5640, 0.5
  %v5649 = vmul.f32 %v5647, 0.5
  %v5650 = vadd.f32 %v5648, 1e-05
  %v5651 = vadd.f32 %v5649, 1e-05
  %v5652 = vrsqrt.pop %v5650
  %v5653 = vrsqrt.pop %v5651
  %v5656 = vcombine.low %v5652, %v5653
  %v5658 = vunpack.c.l.s4 1966171168
  %v5659 = vunpack.c.0.s8 %v5658
  %v5660 = vlaneseq
  %v5661 = vshrl.u32 %v5660, 7
  %v5662 = vsub.s32 %v5659, %v5661
  %v5663 = vrot.slane %v5656, %v5662
  %v5665 = vunpack.c.l.s4 1966171168
  %v5666 = vunpack.c.0.s8 %v5665
  %v5667 = vlaneseq
  %v5668 = vshrl.u32 %v5667, 7
  %v5669 = vsub.s32 %v5666, %v5668
  %v5670 = vrot.slane %v5663, %v5669
  %v5672 = vmul.f32 %v5611, %v5670
  %v5674 = vlaneseq
  %v5675 = vshrl.u32 %v5674, 7
  %v5676 = vsub.s32 0, %v5675
  %v5677 = vrot.slane %v5672, %v5676
  %v5678 = vlaneseq
  %v5679 = vshrl.u32 %v5678, 7
  %v5680 = vsub.s32 1, %v5679
  %v5681 = vrot.slane %v5672, %v5680
  %v5684 = vmul.f32 %v5630, %v5677
  %v5685 = vmul.f32 %v5631, %v5681
  %v5687 = vlaneseq
  %v5688 = vshrl.u32 %v5687, 7
  %v5689 = vsub.s32 0, %v5688
  %v5690 = vrot.slane %v5613, %v5689
  %v5691 = vlaneseq
  %v5692 = vshrl.u32 %v5691, 7
  %v5693 = vsub.s32 1, %v5692
  %v5694 = vrot.slane %v5613, %v5693
  %v5697 = vadd.f32 %v5684, %v5690
  %v5698 = vadd.f32 %v5685, %v5694
  %v5699 = vmax.f32 %v5697, 0.0
  %v5700 = vmax.f32 %v5698, 0.0
  %v5701 = vpack.c.bf16 %v5699, %v5699
  %v5702 = vpack.c.bf16 %v5700, %v5700
  %s5703 = scalar_lea.vmem %s21, 128
  %v5704 = vld [vmem:[%s5703] sm:$0xf]
  %v5705 = vld [vmem:[%s5703 + $0x4] sm:$0xf]
  %v5706 = vld [vmem:[%s5703 + $0x8] sm:$0xf]
  %v5707 = vld [vmem:[%s5703 + $0xc] sm:$0xf]
  %v5708 = vld [vmem:[%s5703 + $0x10] sm:$0xf]
  %v5709 = vld [vmem:[%s5703 + $0x14] sm:$0xf]
  %v5710 = vld [vmem:[%s5703 + $0x18] sm:$0xf]
  %v5711 = vld [vmem:[%s5703 + $0x1c] sm:$0xf]
  %v5712 = vld [vmem:[%s5703 + $0x20] sm:$0xf]
  %v5713 = vld [vmem:[%s5703 + $0x24] sm:$0xf]
  %v5714 = vld [vmem:[%s5703 + $0x28] sm:$0xf]
  %v5715 = vld [vmem:[%s5703 + $0x2c] sm:$0xf]
  %v5716 = vld [vmem:[%s5703 + $0x30] sm:$0xf]
  %v5717 = vld [vmem:[%s5703 + $0x34] sm:$0xf]
  %v5718 = vld [vmem:[%s5703 + $0x38] sm:$0xf]
  %v5719 = vld [vmem:[%s5703 + $0x3c] sm:$0xf]
  %v5720 = vld [vmem:[%s5703 + $0x40] sm:$0xf]
  %v5721 = vld [vmem:[%s5703 + $0x44] sm:$0xf]
  %v5722 = vld [vmem:[%s5703 + $0x48] sm:$0xf]
  %v5723 = vld [vmem:[%s5703 + $0x4c] sm:$0xf]
  %v5724 = vld [vmem:[%s5703 + $0x50] sm:$0xf]
  %v5725 = vld [vmem:[%s5703 + $0x54] sm:$0xf]
  %v5726 = vld [vmem:[%s5703 + $0x58] sm:$0xf]
  %v5727 = vld [vmem:[%s5703 + $0x5c] sm:$0xf]
  %v5728 = vld [vmem:[%s5703 + $0x60] sm:$0xf]
  %v5729 = vld [vmem:[%s5703 + $0x64] sm:$0xf]
  %v5730 = vld [vmem:[%s5703 + $0x68] sm:$0xf]
  %v5731 = vld [vmem:[%s5703 + $0x6c] sm:$0xf]
  %v5732 = vld [vmem:[%s5703 + $0x70] sm:$0xf]
  %v5733 = vld [vmem:[%s5703 + $0x74] sm:$0xf]
  %v5734 = vld [vmem:[%s5703 + $0x78] sm:$0xf]
  %v5735 = vld [vmem:[%s5703 + $0x7c] sm:$0xf]
  %s5736 = scalar_lea.vmem %s22, 1
  %v5737 = vld [vmem:[%s5736] sm:$0x1]
  %v5739 = vlaneseq
  %v5740 = vshrl.u32 %v5739, 7
  %v5741 = vsub.s32 0, %v5740
  %v5742 = vrot.slane %v5737, %v5741
  %v5776 = vunpack.c.l.b16 %v5704
  %v5777 = vunpack.c.l.b16 %v5705
  %v5778 = vunpack.c.l.b16 %v5706
  %v5779 = vunpack.c.l.b16 %v5707
  %v5780 = vunpack.c.l.b16 %v5708
  %v5781 = vunpack.c.l.b16 %v5709
  %v5782 = vunpack.c.l.b16 %v5710
  %v5783 = vunpack.c.l.b16 %v5711
  %v5784 = vunpack.c.l.b16 %v5712
  %v5785 = vunpack.c.l.b16 %v5713
  %v5786 = vunpack.c.l.b16 %v5714
  %v5787 = vunpack.c.l.b16 %v5715
  %v5788 = vunpack.c.l.b16 %v5716
  %v5789 = vunpack.c.l.b16 %v5717
  %v5790 = vunpack.c.l.b16 %v5718
  %v5791 = vunpack.c.l.b16 %v5719
  %v5792 = vunpack.c.l.b16 %v5720
  %v5793 = vunpack.c.l.b16 %v5721
  %v5794 = vunpack.c.l.b16 %v5722
  %v5795 = vunpack.c.l.b16 %v5723
  %v5796 = vunpack.c.l.b16 %v5724
  %v5797 = vunpack.c.l.b16 %v5725
  %v5798 = vunpack.c.l.b16 %v5726
  %v5799 = vunpack.c.l.b16 %v5727
  %v5800 = vunpack.c.l.b16 %v5728
  %v5801 = vunpack.c.l.b16 %v5729
  %v5802 = vunpack.c.l.b16 %v5730
  %v5803 = vunpack.c.l.b16 %v5731
  %v5804 = vunpack.c.l.b16 %v5732
  %v5805 = vunpack.c.l.b16 %v5733
  %v5806 = vunpack.c.l.b16 %v5734
  %v5807 = vunpack.c.l.b16 %v5735
  %v5808 = vpack.c.b16 %v5777, %v5776
  %v5809 = vpack.c.b16 %v5779, %v5778
  %v5810 = vpack.c.b16 %v5781, %v5780
  %v5811 = vpack.c.b16 %v5783, %v5782
  %v5812 = vpack.c.b16 %v5785, %v5784
  %v5813 = vpack.c.b16 %v5787, %v5786
  %v5814 = vpack.c.b16 %v5789, %v5788
  %v5815 = vpack.c.b16 %v5791, %v5790
  %v5816 = vpack.c.b16 %v5793, %v5792
  %v5817 = vpack.c.b16 %v5795, %v5794
  %v5818 = vpack.c.b16 %v5797, %v5796
  %v5819 = vpack.c.b16 %v5799, %v5798
  %v5820 = vpack.c.b16 %v5801, %v5800
  %v5821 = vpack.c.b16 %v5803, %v5802
  %v5822 = vpack.c.b16 %v5805, %v5804
  %v5823 = vpack.c.b16 %v5807, %v5806
  %5840 = vmatprep.subr.bf16.mxu0 0
  %5841 = vmatpush1.bf16.msra.mxu0 %v5815
  %5842 = vmatprep.subr.bf16.mxu0 0
  %5843 = vmatpush1.bf16.msra.mxu0 %v5814
  %5844 = vmatprep.subr.bf16.mxu0 0
  %5845 = vmatpush1.bf16.msra.mxu0 %v5813
  %5846 = vmatprep.subr.bf16.mxu0 0
  %5847 = vmatpush1.bf16.msra.mxu0 %v5812
  %5848 = vmatprep.subr.bf16.mxu0 0
  %5849 = vmatpush1.bf16.msra.mxu0 %v5811
  %5850 = vmatprep.subr.bf16.mxu0 0
  %5851 = vmatpush1.bf16.msra.mxu0 %v5810
  %5852 = vmatprep.subr.bf16.mxu0 0
  %5853 = vmatpush1.bf16.msra.mxu0 %v5809
  %5854 = vmatprep.subr.bf16.mxu0 0
  %5855 = vmatpush1.bf16.msra.mxu0 %v5808
  %5856 = vmatprep.subr.bf16.mxu0 0
  %5857 = vmatpush2.bf16.msra.mxu0 %v5823
  %5858 = vmatprep.subr.bf16.mxu0 0
  %5859 = vmatpush2.bf16.msra.mxu0 %v5822
  %5860 = vmatprep.subr.bf16.mxu0 0
  %5861 = vmatpush2.bf16.msra.mxu0 %v5821
  %5862 = vmatprep.subr.bf16.mxu0 0
  %5863 = vmatpush2.bf16.msra.mxu0 %v5820
  %5864 = vmatprep.subr.bf16.mxu0 0
  %5865 = vmatpush2.bf16.msra.mxu0 %v5819
  %5866 = vmatprep.subr.bf16.mxu0 0
  %5867 = vmatpush2.bf16.msra.mxu0 %v5818
  %5868 = vmatprep.subr.bf16.mxu0 0
  %5869 = vmatpush2.bf16.msra.mxu0 %v5817
  %5870 = vmatprep.subr.bf16.mxu0 0
  %5871 = vmatpush2.bf16.msra.mxu0 %v5816
  %5872 = vmatprep.mubr.bf16.mxu0 %v5702
  %5873 = vmatmul.mubr.bf16.gmra.mxu0 %v5701
  %v5874 = vpop.f32.mrf.mxu0
  %v5875 = vadd.f32 %v5742, %v5874
  %v5876 = vpop.f32.mrf.mxu0
  %v5877 = vpop.f32.mrf.mxu0
  %v5878 = vpop.f32.mrf.mxu0
  %5879 = vdwg.mxu0
  %s5880 = scalar_lea.vmem %s23, 2
  %5881 = vst.msk [vmem:[%s5880] sm:$0x3] %vm5361, %v5875
  %s5882 = scalar_lea.vmem %s17, 512
  %v5883 = vld [vmem:[%s5882] sm:$0xff]
  %v5884 = vld [vmem:[%s5882 + $0x8] sm:$0xff]
  %v5885 = vld [vmem:[%s5882 + $0x10] sm:$0xff]
  %v5886 = vld [vmem:[%s5882 + $0x18] sm:$0xff]
  %v5887 = vld [vmem:[%s5882 + $0x20] sm:$0xff]
  %v5888 = vld [vmem:[%s5882 + $0x28] sm:$0xff]
  %v5889 = vld [vmem:[%s5882 + $0x30] sm:$0xff]
  %v5890 = vld [vmem:[%s5882 + $0x38] sm:$0xff]
  %v5891 = vld [vmem:[%s5882 + $0x40] sm:$0xff]
  %v5892 = vld [vmem:[%s5882 + $0x48] sm:$0xff]
  %v5893 = vld [vmem:[%s5882 + $0x50] sm:$0xff]
  %v5894 = vld [vmem:[%s5882 + $0x58] sm:$0xff]
  %v5895 = vld [vmem:[%s5882 + $0x60] sm:$0xff]
  %v5896 = vld [vmem:[%s5882 + $0x68] sm:$0xff]
  %v5897 = vld [vmem:[%s5882 + $0x70] sm:$0xff]
  %v5898 = vld [vmem:[%s5882 + $0x78] sm:$0xff]
  %v5899 = vld [vmem:[%s5882 + $0x80] sm:$0xff]
  %v5900 = vld [vmem:[%s5882 + $0x88] sm:$0xff]
  %v5901 = vld [vmem:[%s5882 + $0x90] sm:$0xff]
  %v5902 = vld [vmem:[%s5882 + $0x98] sm:$0xff]
  %v5903 = vld [vmem:[%s5882 + $0xa0] sm:$0xff]
  %v5904 = vld [vmem:[%s5882 + $0xa8] sm:$0xff]
  %v5905 = vld [vmem:[%s5882 + $0xb0] sm:$0xff]
  %v5906 = vld [vmem:[%s5882 + $0xb8] sm:$0xff]
  %v5907 = vld [vmem:[%s5882 + $0xc0] sm:$0xff]
  %v5908 = vld [vmem:[%s5882 + $0xc8] sm:$0xff]
  %v5909 = vld [vmem:[%s5882 + $0xd0] sm:$0xff]
  %v5910 = vld [vmem:[%s5882 + $0xd8] sm:$0xff]
  %v5911 = vld [vmem:[%s5882 + $0xe0] sm:$0xff]
  %v5912 = vld [vmem:[%s5882 + $0xe8] sm:$0xff]
  %v5913 = vld [vmem:[%s5882 + $0xf0] sm:$0xff]
  %v5914 = vld [vmem:[%s5882 + $0xf8] sm:$0xff]
  %s5915 = scalar_lea.vmem %s18, 4
  %v5916 = vld [vmem:[%s5915] sm:$0x3]
  %v5918 = vlaneseq
  %v5919 = vshrl.u32 %v5918, 7
  %v5920 = vsub.s32 0, %v5919
  %v5921 = vrot.slane %v5916, %v5920
  %v5922 = vlaneseq
  %v5923 = vshrl.u32 %v5922, 7
  %v5924 = vsub.s32 1, %v5923
  %v5925 = vrot.slane %v5916, %v5924
  %v5960 = vunpack.c.l.b16 %v5883
  %v5961 = vunpack.c.h.b16 %v5883
  %v5962 = vunpack.c.l.b16 %v5884
  %v5963 = vunpack.c.h.b16 %v5884
  %v5964 = vunpack.c.l.b16 %v5885
  %v5965 = vunpack.c.h.b16 %v5885
  %v5966 = vunpack.c.l.b16 %v5886
  %v5967 = vunpack.c.h.b16 %v5886
  %v5968 = vunpack.c.l.b16 %v5887
  %v5969 = vunpack.c.h.b16 %v5887
  %v5970 = vunpack.c.l.b16 %v5888
  %v5971 = vunpack.c.h.b16 %v5888
  %v5972 = vunpack.c.l.b16 %v5889
  %v5973 = vunpack.c.h.b16 %v5889
  %v5974 = vunpack.c.l.b16 %v5890
  %v5975 = vunpack.c.h.b16 %v5890
  %v5976 = vunpack.c.l.b16 %v5891
  %v5977 = vunpack.c.h.b16 %v5891
  %v5978 = vunpack.c.l.b16 %v5892
  %v5979 = vunpack.c.h.b16 %v5892
  %v5980 = vunpack.c.l.b16 %v5893
  %v5981 = vunpack.c.h.b16 %v5893
  %v5982 = vunpack.c.l.b16 %v5894
  %v5983 = vunpack.c.h.b16 %v5894
  %v5984 = vunpack.c.l.b16 %v5895
  %v5985 = vunpack.c.h.b16 %v5895
  %v5986 = vunpack.c.l.b16 %v5896
  %v5987 = vunpack.c.h.b16 %v5896
  %v5988 = vunpack.c.l.b16 %v5897
  %v5989 = vunpack.c.h.b16 %v5897
  %v5990 = vunpack.c.l.b16 %v5898
  %v5991 = vunpack.c.h.b16 %v5898
  %v5992 = vunpack.c.l.b16 %v5899
  %v5993 = vunpack.c.h.b16 %v5899
  %v5994 = vunpack.c.l.b16 %v5900
  %v5995 = vunpack.c.h.b16 %v5900
  %v5996 = vunpack.c.l.b16 %v5901
  %v5997 = vunpack.c.h.b16 %v5901
  %v5998 = vunpack.c.l.b16 %v5902
  %v5999 = vunpack.c.h.b16 %v5902
  %v6000 = vunpack.c.l.b16 %v5903
  %v6001 = vunpack.c.h.b16 %v5903
  %v6002 = vunpack.c.l.b16 %v5904
  %v6003 = vunpack.c.h.b16 %v5904
  %v6004 = vunpack.c.l.b16 %v5905
  %v6005 = vunpack.c.h.b16 %v5905
  %v6006 = vunpack.c.l.b16 %v5906
  %v6007 = vunpack.c.h.b16 %v5906
  %v6008 = vunpack.c.l.b16 %v5907
  %v6009 = vunpack.c.h.b16 %v5907
  %v6010 = vunpack.c.l.b16 %v5908
  %v6011 = vunpack.c.h.b16 %v5908
  %v6012 = vunpack.c.l.b16 %v5909
  %v6013 = vunpack.c.h.b16 %v5909
  %v6014 = vunpack.c.l.b16 %v5910
  %v6015 = vunpack.c.h.b16 %v5910
  %v6016 = vunpack.c.l.b16 %v5911
  %v6017 = vunpack.c.h.b16 %v5911
  %v6018 = vunpack.c.l.b16 %v5912
  %v6019 = vunpack.c.h.b16 %v5912
  %v6020 = vunpack.c.l.b16 %v5913
  %v6021 = vunpack.c.h.b16 %v5913
  %v6022 = vunpack.c.l.b16 %v5914
  %v6023 = vunpack.c.h.b16 %v5914
  %v6024 = vpack.c.b16 %v5962, %v5960
  %v6025 = vpack.c.b16 %v5963, %v5961
  %v6026 = vpack.c.b16 %v5966, %v5964
  %v6027 = vpack.c.b16 %v5967, %v5965
  %v6028 = vpack.c.b16 %v5970, %v5968
  %v6029 = vpack.c.b16 %v5971, %v5969
  %v6030 = vpack.c.b16 %v5974, %v5972
  %v6031 = vpack.c.b16 %v5975, %v5973
  %v6032 = vpack.c.b16 %v5978, %v5976
  %v6033 = vpack.c.b16 %v5979, %v5977
  %v6034 = vpack.c.b16 %v5982, %v5980
  %v6035 = vpack.c.b16 %v5983, %v5981
  %v6036 = vpack.c.b16 %v5986, %v5984
  %v6037 = vpack.c.b16 %v5987, %v5985
  %v6038 = vpack.c.b16 %v5990, %v5988
  %v6039 = vpack.c.b16 %v5991, %v5989
  %v6040 = vpack.c.b16 %v5994, %v5992
  %v6041 = vpack.c.b16 %v5995, %v5993
  %v6042 = vpack.c.b16 %v5998, %v5996
  %v6043 = vpack.c.b16 %v5999, %v5997
  %v6044 = vpack.c.b16 %v6002, %v6000
  %v6045 = vpack.c.b16 %v6003, %v6001
  %v6046 = vpack.c.b16 %v6006, %v6004
  %v6047 = vpack.c.b16 %v6007, %v6005
  %v6048 = vpack.c.b16 %v6010, %v6008
  %v6049 = vpack.c.b16 %v6011, %v6009
  %v6050 = vpack.c.b16 %v6014, %v6012
  %v6051 = vpack.c.b16 %v6015, %v6013
  %v6052 = vpack.c.b16 %v6018, %v6016
  %v6053 = vpack.c.b16 %v6019, %v6017
  %v6054 = vpack.c.b16 %v6022, %v6020
  %v6055 = vpack.c.b16 %v6023, %v6021
  %6088 = vmatprep.subr.bf16.mxu0 %v6039
  %6089 = vmatpush1.bf16.msra.mxu0 %v6038
  %6090 = vmatprep.subr.bf16.mxu0 %v6037
  %6091 = vmatpush1.bf16.msra.mxu0 %v6036
  %6092 = vmatprep.subr.bf16.mxu0 %v6035
  %6093 = vmatpush1.bf16.msra.mxu0 %v6034
  %6094 = vmatprep.subr.bf16.mxu0 %v6033
  %6095 = vmatpush1.bf16.msra.mxu0 %v6032
  %6096 = vmatprep.subr.bf16.mxu0 %v6031
  %6097 = vmatpush1.bf16.msra.mxu0 %v6030
  %6098 = vmatprep.subr.bf16.mxu0 %v6029
  %6099 = vmatpush1.bf16.msra.mxu0 %v6028
  %6100 = vmatprep.subr.bf16.mxu0 %v6027
  %6101 = vmatpush1.bf16.msra.mxu0 %v6026
  %6102 = vmatprep.subr.bf16.mxu0 %v6025
  %6103 = vmatpush1.bf16.msra.mxu0 %v6024
  %6104 = vmatprep.subr.bf16.mxu0 %v6055
  %6105 = vmatpush2.bf16.msra.mxu0 %v6054
  %6106 = vmatprep.subr.bf16.mxu0 %v6053
  %6107 = vmatpush2.bf16.msra.mxu0 %v6052
  %6108 = vmatprep.subr.bf16.mxu0 %v6051
  %6109 = vmatpush2.bf16.msra.mxu0 %v6050
  %6110 = vmatprep.subr.bf16.mxu0 %v6049
  %6111 = vmatpush2.bf16.msra.mxu0 %v6048
  %6112 = vmatprep.subr.bf16.mxu0 %v6047
  %6113 = vmatpush2.bf16.msra.mxu0 %v6046
  %6114 = vmatprep.subr.bf16.mxu0 %v6045
  %6115 = vmatpush2.bf16.msra.mxu0 %v6044
  %6116 = vmatprep.subr.bf16.mxu0 %v6043
  %6117 = vmatpush2.bf16.msra.mxu0 %v6042
  %6118 = vmatprep.subr.bf16.mxu0 %v6041
  %6119 = vmatpush2.bf16.msra.mxu0 %v6040
  %6120 = vmatprep.mubr.bf16.mxu0 %v4849
  %6121 = vmatmul.mubr.bf16.gmra.mxu0 %v4848
  %v6122 = vpop.f32.mrf.mxu0
  %v6123 = vadd.f32 %v5921, %v6122
  %v6124 = vpop.f32.mrf.mxu0
  %v6125 = vadd.f32 %v5925, %v6124
  %v6126 = vpop.f32.mrf.mxu0
  %v6127 = vpop.f32.mrf.mxu0
  %6128 = vdwg.mxu0
  %s6129 = scalar_lea.vmem %s19, 4
  %v6130 = vld [vmem:[%s6129] sm:$0x3]
  %s6131 = scalar_lea.vmem %s20, 4
  %v6132 = vld [vmem:[%s6131] sm:$0x3]
  %v6133 = vsel %vm2226, %v6123, 0.0
  %v6134 = vrot.slane %v6133, 4
  %v6135 = vadd.f32 %v6133, %v6134
  %v6136 = vrot.slane %v6135, 2
  %v6137 = vadd.f32 %v6135, %v6136
  %v6138 = vrot.slane %v6137, 1
  %v6139 = vadd.f32 %v6137, %v6138
  %v6140 = vsel %vm2226, %v6125, 0.0
  %v6141 = vrot.slane %v6140, 4
  %v6142 = vadd.f32 %v6140, %v6141
  %v6143 = vrot.slane %v6142, 2
  %v6144 = vadd.f32 %v6142, %v6143
  %v6145 = vrot.slane %v6144, 1
  %v6146 = vadd.f32 %v6144, %v6145
  %v6147 = vmul.f32 %v6139, 0.5
  %v6148 = vmul.f32 %v6146, 0.5
  %v6149 = vsub.f32 %v6123, %v6147
  %v6150 = vsub.f32 %v6125, %v6148
  %v6151 = vmul.f32 %v6149, %v6149
  %v6152 = vmul.f32 %v6150, %v6150
  %v6153 = vsel %vm2226, %v6151, 0.0
  %v6154 = vrot.slane %v6153, 4
  %v6155 = vadd.f32 %v6153, %v6154
  %v6156 = vrot.slane %v6155, 2
  %v6157 = vadd.f32 %v6155, %v6156
  %v6158 = vrot.slane %v6157, 1
  %v6159 = vadd.f32 %v6157, %v6158
  %v6160 = vsel %vm2226, %v6152, 0.0
  %v6161 = vrot.slane %v6160, 4
  %v6162 = vadd.f32 %v6160, %v6161
  %v6163 = vrot.slane %v6162, 2
  %v6164 = vadd.f32 %v6162, %v6163
  %v6165 = vrot.slane %v6164, 1
  %v6166 = vadd.f32 %v6164, %v6165
  %v6167 = vmul.f32 %v6159, 0.5
  %v6168 = vmul.f32 %v6166, 0.5
  %v6169 = vadd.f32 %v6167, 1e-05
  %v6170 = vadd.f32 %v6168, 1e-05
  %v6171 = vrsqrt.pop %v6169
  %v6172 = vrsqrt.pop %v6170
  %v6175 = vcombine.low %v6171, %v6172
  %v6177 = vunpack.c.l.s4 1966171168
  %v6178 = vunpack.c.0.s8 %v6177
  %v6179 = vlaneseq
  %v6180 = vshrl.u32 %v6179, 7
  %v6181 = vsub.s32 %v6178, %v6180
  %v6182 = vrot.slane %v6175, %v6181
  %v6184 = vunpack.c.l.s4 1966171168
  %v6185 = vunpack.c.0.s8 %v6184
  %v6186 = vlaneseq
  %v6187 = vshrl.u32 %v6186, 7
  %v6188 = vsub.s32 %v6185, %v6187
  %v6189 = vrot.slane %v6182, %v6188
  %v6191 = vmul.f32 %v6130, %v6189
  %v6193 = vlaneseq
  %v6194 = vshrl.u32 %v6193, 7
  %v6195 = vsub.s32 0, %v6194
  %v6196 = vrot.slane %v6191, %v6195
  %v6197 = vlaneseq
  %v6198 = vshrl.u32 %v6197, 7
  %v6199 = vsub.s32 1, %v6198
  %v6200 = vrot.slane %v6191, %v6199
  %v6203 = vmul.f32 %v6149, %v6196
  %v6204 = vmul.f32 %v6150, %v6200
  %v6206 = vlaneseq
  %v6207 = vshrl.u32 %v6206, 7
  %v6208 = vsub.s32 0, %v6207
  %v6209 = vrot.slane %v6132, %v6208
  %v6210 = vlaneseq
  %v6211 = vshrl.u32 %v6210, 7
  %v6212 = vsub.s32 1, %v6211
  %v6213 = vrot.slane %v6132, %v6212
  %v6216 = vadd.f32 %v6203, %v6209
  %v6217 = vadd.f32 %v6204, %v6213
  %v6218 = vmax.f32 %v6216, 0.0
  %v6219 = vmax.f32 %v6217, 0.0
  %v6220 = vpack.c.bf16 %v6218, %v6218
  %v6221 = vpack.c.bf16 %v6219, %v6219
  %s6222 = scalar_lea.vmem %s21, 256
  %v6223 = vld [vmem:[%s6222] sm:$0xf]
  %v6224 = vld [vmem:[%s6222 + $0x4] sm:$0xf]
  %v6225 = vld [vmem:[%s6222 + $0x8] sm:$0xf]
  %v6226 = vld [vmem:[%s6222 + $0xc] sm:$0xf]
  %v6227 = vld [vmem:[%s6222 + $0x10] sm:$0xf]
  %v6228 = vld [vmem:[%s6222 + $0x14] sm:$0xf]
  %v6229 = vld [vmem:[%s6222 + $0x18] sm:$0xf]
  %v6230 = vld [vmem:[%s6222 + $0x1c] sm:$0xf]
  %v6231 = vld [vmem:[%s6222 + $0x20] sm:$0xf]
  %v6232 = vld [vmem:[%s6222 + $0x24] sm:$0xf]
  %v6233 = vld [vmem:[%s6222 + $0x28] sm:$0xf]
  %v6234 = vld [vmem:[%s6222 + $0x2c] sm:$0xf]
  %v6235 = vld [vmem:[%s6222 + $0x30] sm:$0xf]
  %v6236 = vld [vmem:[%s6222 + $0x34] sm:$0xf]
  %v6237 = vld [vmem:[%s6222 + $0x38] sm:$0xf]
  %v6238 = vld [vmem:[%s6222 + $0x3c] sm:$0xf]
  %v6239 = vld [vmem:[%s6222 + $0x40] sm:$0xf]
  %v6240 = vld [vmem:[%s6222 + $0x44] sm:$0xf]
  %v6241 = vld [vmem:[%s6222 + $0x48] sm:$0xf]
  %v6242 = vld [vmem:[%s6222 + $0x4c] sm:$0xf]
  %v6243 = vld [vmem:[%s6222 + $0x50] sm:$0xf]
  %v6244 = vld [vmem:[%s6222 + $0x54] sm:$0xf]
  %v6245 = vld [vmem:[%s6222 + $0x58] sm:$0xf]
  %v6246 = vld [vmem:[%s6222 + $0x5c] sm:$0xf]
  %v6247 = vld [vmem:[%s6222 + $0x60] sm:$0xf]
  %v6248 = vld [vmem:[%s6222 + $0x64] sm:$0xf]
  %v6249 = vld [vmem:[%s6222 + $0x68] sm:$0xf]
  %v6250 = vld [vmem:[%s6222 + $0x6c] sm:$0xf]
  %v6251 = vld [vmem:[%s6222 + $0x70] sm:$0xf]
  %v6252 = vld [vmem:[%s6222 + $0x74] sm:$0xf]
  %v6253 = vld [vmem:[%s6222 + $0x78] sm:$0xf]
  %v6254 = vld [vmem:[%s6222 + $0x7c] sm:$0xf]
  %s6255 = scalar_lea.vmem %s22, 2
  %v6256 = vld [vmem:[%s6255] sm:$0x1]
  %v6258 = vlaneseq
  %v6259 = vshrl.u32 %v6258, 7
  %v6260 = vsub.s32 0, %v6259
  %v6261 = vrot.slane %v6256, %v6260
  %v6295 = vunpack.c.l.b16 %v6223
  %v6296 = vunpack.c.l.b16 %v6224
  %v6297 = vunpack.c.l.b16 %v6225
  %v6298 = vunpack.c.l.b16 %v6226
  %v6299 = vunpack.c.l.b16 %v6227
  %v6300 = vunpack.c.l.b16 %v6228
  %v6301 = vunpack.c.l.b16 %v6229
  %v6302 = vunpack.c.l.b16 %v6230
  %v6303 = vunpack.c.l.b16 %v6231
  %v6304 = vunpack.c.l.b16 %v6232
  %v6305 = vunpack.c.l.b16 %v6233
  %v6306 = vunpack.c.l.b16 %v6234
  %v6307 = vunpack.c.l.b16 %v6235
  %v6308 = vunpack.c.l.b16 %v6236
  %v6309 = vunpack.c.l.b16 %v6237
  %v6310 = vunpack.c.l.b16 %v6238
  %v6311 = vunpack.c.l.b16 %v6239
  %v6312 = vunpack.c.l.b16 %v6240
  %v6313 = vunpack.c.l.b16 %v6241
  %v6314 = vunpack.c.l.b16 %v6242
  %v6315 = vunpack.c.l.b16 %v6243
  %v6316 = vunpack.c.l.b16 %v6244
  %v6317 = vunpack.c.l.b16 %v6245
  %v6318 = vunpack.c.l.b16 %v6246
  %v6319 = vunpack.c.l.b16 %v6247
  %v6320 = vunpack.c.l.b16 %v6248
  %v6321 = vunpack.c.l.b16 %v6249
  %v6322 = vunpack.c.l.b16 %v6250
  %v6323 = vunpack.c.l.b16 %v6251
  %v6324 = vunpack.c.l.b16 %v6252
  %v6325 = vunpack.c.l.b16 %v6253
  %v6326 = vunpack.c.l.b16 %v6254
  %v6327 = vpack.c.b16 %v6296, %v6295
  %v6328 = vpack.c.b16 %v6298, %v6297
  %v6329 = vpack.c.b16 %v6300, %v6299
  %v6330 = vpack.c.b16 %v6302, %v6301
  %v6331 = vpack.c.b16 %v6304, %v6303
  %v6332 = vpack.c.b16 %v6306, %v6305
  %v6333 = vpack.c.b16 %v6308, %v6307
  %v6334 = vpack.c.b16 %v6310, %v6309
  %v6335 = vpack.c.b16 %v6312, %v6311
  %v6336 = vpack.c.b16 %v6314, %v6313
  %v6337 = vpack.c.b16 %v6316, %v6315
  %v6338 = vpack.c.b16 %v6318, %v6317
  %v6339 = vpack.c.b16 %v6320, %v6319
  %v6340 = vpack.c.b16 %v6322, %v6321
  %v6341 = vpack.c.b16 %v6324, %v6323
  %v6342 = vpack.c.b16 %v6326, %v6325
  %6359 = vmatprep.subr.bf16.mxu0 0
  %6360 = vmatpush1.bf16.msra.mxu0 %v6334
  %6361 = vmatprep.subr.bf16.mxu0 0
  %6362 = vmatpush1.bf16.msra.mxu0 %v6333
  %6363 = vmatprep.subr.bf16.mxu0 0
  %6364 = vmatpush1.bf16.msra.mxu0 %v6332
  %6365 = vmatprep.subr.bf16.mxu0 0
  %6366 = vmatpush1.bf16.msra.mxu0 %v6331
  %6367 = vmatprep.subr.bf16.mxu0 0
  %6368 = vmatpush1.bf16.msra.mxu0 %v6330
  %6369 = vmatprep.subr.bf16.mxu0 0
  %6370 = vmatpush1.bf16.msra.mxu0 %v6329
  %6371 = vmatprep.subr.bf16.mxu0 0
  %6372 = vmatpush1.bf16.msra.mxu0 %v6328
  %6373 = vmatprep.subr.bf16.mxu0 0
  %6374 = vmatpush1.bf16.msra.mxu0 %v6327
  %6375 = vmatprep.subr.bf16.mxu0 0
  %6376 = vmatpush2.bf16.msra.mxu0 %v6342
  %6377 = vmatprep.subr.bf16.mxu0 0
  %6378 = vmatpush2.bf16.msra.mxu0 %v6341
  %6379 = vmatprep.subr.bf16.mxu0 0
  %6380 = vmatpush2.bf16.msra.mxu0 %v6340
  %6381 = vmatprep.subr.bf16.mxu0 0
  %6382 = vmatpush2.bf16.msra.mxu0 %v6339
  %6383 = vmatprep.subr.bf16.mxu0 0
  %6384 = vmatpush2.bf16.msra.mxu0 %v6338
  %6385 = vmatprep.subr.bf16.mxu0 0
  %6386 = vmatpush2.bf16.msra.mxu0 %v6337
  %6387 = vmatprep.subr.bf16.mxu0 0
  %6388 = vmatpush2.bf16.msra.mxu0 %v6336
  %6389 = vmatprep.subr.bf16.mxu0 0
  %6390 = vmatpush2.bf16.msra.mxu0 %v6335
  %6391 = vmatprep.mubr.bf16.mxu0 %v6221
  %6392 = vmatmul.mubr.bf16.gmra.mxu0 %v6220
  %v6393 = vpop.f32.mrf.mxu0
  %v6394 = vadd.f32 %v6261, %v6393
  %v6395 = vpop.f32.mrf.mxu0
  %v6396 = vpop.f32.mrf.mxu0
  %v6397 = vpop.f32.mrf.mxu0
  %6398 = vdwg.mxu0
  %s6399 = scalar_lea.vmem %s23, 4
  %6400 = vst.msk [vmem:[%s6399] sm:$0x3] %vm5361, %v6394
  // Predicated region
  $region94: #{sac_forward.5} parent=0 // pred_check
    _
  $region95: #{sac_forward.5} parent=0 // pred_check_branch
    %6402 = sbr.rel (0) target = $region97
  $region96: #{sac_forward.5} parent=0 // pred_region
    _
  $region97: #{sac_forward.5} parent=0 // pred_fallthru
    _
  // Predicated region
  $region98: #{sac_forward.5} parent=0 // pred_check
    _
  $region99: #{sac_forward.5} parent=0 // pred_check_branch
    %6404 = sbr.rel (0) target = $region101
  $region100: #{sac_forward.5} parent=0 // pred_region
    _
  $region101: #{sac_forward.5} parent=0 // pred_fallthru
    _

</llo_original>
